<compile_context>
chip_gen: v6e
topology: v6e:2x2x1
jax: 0.10.0
libtpu: 0.0.40
codegen_flags: <defaults>
</compile_context>

<pallas_src>
import functools

import jax
import jax.numpy as jnp
from jax import lax
from jax.experimental import pallas as pl
from jax.experimental.pallas import tpu as pltpu


# ----------------------------------------------------------------------------
# Pallas kernel: in-kernel im2col + block-real complex matmul + bias (+ ReLU)
# ----------------------------------------------------------------------------
def _conv_kernel(x_ref, w_ref, b_ref, o_ref, *, kh, kw, th, relu):
    """One (batch, row-tile) grid step of a stride-1 complex conv.

    x_ref: (1, Hp, Wp, C2)   bf16  padded NHWC input, channels = [re | im]
    w_ref: (kh*kw*C2, N)     bf16  block-real weight, rows tap-major
    b_ref: (1, N)            f32   folded complex bias [br-bi | br+bi]
    o_ref: (1, th, Wo, N)    bf16 (ReLU layers) / f32 (OutConv)
    """
    C2 = x_ref.shape[3]
    Wo = o_ref.shape[2]
    N = o_ref.shape[3]
    row0 = pl.program_id(1) * th

    bias = b_ref[...]                                              # (1, N) f32
    # Per-tap weight slabs, loaded once per grid step.
    w_taps = [w_ref[pl.ds(t * C2, C2), :] for t in range(kh * kw)]

    def row_body(i, carry):
        acc = jnp.zeros((Wo, N), jnp.float32)
        for t in range(kh * kw):
            dy, dx = t // kw, t % kw
            win = x_ref[0, row0 + i + dy, pl.ds(dx, Wo), :]        # (Wo, C2)
            acc = acc + jnp.dot(win, w_taps[t],
                                preferred_element_type=jnp.float32)
        out = acc + bias                                           # f32 epilogue
        if relu:
            out = jnp.maximum(out, 0.0)
        o_ref[0, i, :, :] = out.astype(o_ref.dtype)
        return carry

    lax.fori_loop(0, th, row_body, None)


def _pick_tile_h(ho):
    for th in (8, 4, 2, 1):
        if ho % th == 0:
            return th
    return 1


def _pallas_conv(xp, w, b, *, kh, kw, relu, out_dtype):
    """Stride-1 'valid' conv of the padded NHWC input against a prepped weight."""
    B, Hp, Wp, C2 = xp.shape
    K, N = w.shape
    Ho = Hp - kh + 1
    Wo = Wp - kw + 1
    th = _pick_tile_h(Ho)
    kernel = functools.partial(_conv_kernel, kh=kh, kw=kw, th=th, relu=relu)

    out_itemsize = 2 if out_dtype == jnp.bfloat16 else 4
    flops = 2 * B * Ho * Wo * K * N
    bytes_accessed = xp.size * 2 + w.size * 2 + B * Ho * Wo * N * out_itemsize

    return pl.pallas_call(
        kernel,
        out_shape=jax.ShapeDtypeStruct((B, Ho, Wo, N), out_dtype),
        grid=(B, Ho // th),
        in_specs=[
            # Whole padded image per batch element: it is re-DMAed only when the
            # batch block index changes (the index_map ignores the row axis).
            pl.BlockSpec((1, Hp, Wp, C2), lambda bb, rr: (bb, 0, 0, 0)),
            pl.BlockSpec((K, N), lambda bb, rr: (0, 0)),
            pl.BlockSpec((1, N), lambda bb, rr: (0, 0)),
        ],
        out_specs=pl.BlockSpec((1, th, Wo, N), lambda bb, rr: (bb, rr, 0, 0)),
        compiler_params=pltpu.CompilerParams(
            dimension_semantics=("parallel", "parallel"),
            vmem_limit_bytes=32 * 1024 * 1024,
        ),
        cost_estimate=pl.CostEstimate(flops=int(flops), transcendentals=0,
                                      bytes_accessed=int(bytes_accessed)),
    )(xp, w, b)


# ----------------------------------------------------------------------------
# Layer wrappers (XLA glue: spatial padding, pixel shuffle, subsample, concat)
# ----------------------------------------------------------------------------
def complex_conv_layer(x, layer, *, relu=True, stride=1):
    """One ComplexConvLayer: complex conv / transposed conv (+ ComplexReLU)."""
    if layer['deconv']:
        # Sub-pixel transposed conv (k=3, stride=2, padding=1, output_padding=1):
        # a k=2 stride-1 conv on x padded by 1 on the high side yields the 4
        # output phases; they are interleaved by a cheap XLA pixel shuffle.
        xp = jnp.pad(x, ((0, 0), (0, 1), (0, 1), (0, 0)))
    else:
        p = (layer['kh'] - 1) // 2
        xp = jnp.pad(x, ((0, 0), (p, p), (p, p), (0, 0)))

    out_dtype = jnp.bfloat16 if relu else jnp.float32
    y = _pallas_conv(xp, layer['W'], layer['b'], kh=layer['kh'], kw=layer['kw'],
                     relu=relu, out_dtype=out_dtype)

    if layer['deconv']:
        B, Ho, Wo, _ = y.shape
        c2 = 2 * layer['cout']
        y = y.reshape(B, Ho, Wo, 2, 2, c2)
        y = jnp.transpose(y, (0, 1, 3, 2, 4, 5)).reshape(B, 2 * Ho, 2 * Wo, c2)
    if stride == 2:
        # TODO(synk): phase-decompose the stride-2 convs in-kernel instead of
        # computing the stride-1 result and subsampling in XLA.
        y = y[:, ::2, ::2, :]
    return y


def complex_concat(a, b):
    """torch.cat along the complex-channel dim for [re | im]-packed tensors."""
    ca = a.shape[-1] // 2
    cb = b.shape[-1] // 2
    return jnp.concatenate([a[..., :ca], b[..., :cb], a[..., ca:], b[..., cb:]],
                           axis=-1)


# ----------------------------------------------------------------------------
# Weight preprocessing (done once): block-real matrices matching the kernel's
# tap-major / [re | im] im2col ordering.
# ----------------------------------------------------------------------------
def _block_real_matrix(wr, wi):
    """(kh, kw, Cin, Cout) direct-conv weights -> block-real matmul matrix.

    Rows are tap-major with per-tap channel order [re | im]; columns are
    [real outputs | imag outputs]:  [Pr|Pi] @ [[Wr, Wi], [-Wi, Wr]] = [Or|Oi].
    """
    kh, kw, cin, cout = wr.shape
    re_rows = jnp.concatenate([wr, wi], axis=-1)         # fed by real channels
    im_rows = jnp.concatenate([-wi, wr], axis=-1)        # fed by imag channels
    big = jnp.concatenate([re_rows, im_rows], axis=2)    # (kh, kw, 2cin, 2cout)
    return big.reshape(kh * kw * 2 * cin, 2 * cout)


def _folded_bias(p):
    # apply_complex with biased sub-convs => effective biases (br-bi, br+bi).
    return jnp.concatenate([p['br'] - p['bi'], p['br'] + p['bi']])


def _prep_conv(p):
    wr = jnp.transpose(p['wr'], (2, 3, 1, 0))            # (kh, kw, Cin, Cout)
    wi = jnp.transpose(p['wi'], (2, 3, 1, 0))
    W = _block_real_matrix(wr, wi).astype(jnp.bfloat16)
    b = _folded_bias(p).reshape(1, -1).astype(jnp.float32)
    return dict(W=W, b=b, kh=wr.shape[0], kw=wr.shape[1],
                cout=p['br'].shape[0], deconv=False)


def _subpixel_filters(kf):
    """(3,3,Cin,Cout) flipped deconv filter -> 4 per-phase 2x2 sub-filters."""
    phases = []
    for py in (0, 1):
        rows = (1,) if py == 0 else (0, 2)
        for px in (0, 1):
            cols = (1,) if px == 0 else (0, 2)
            g = jnp.zeros((2, 2) + kf.shape[2:], kf.dtype)
            for a, dy in enumerate(rows):
                for bb, dx in enumerate(cols):
                    g = g.at[a, bb].set(kf[dy, dx])
            phases.append(g)
    return phases


def _prep_deconv(p):
    # ConvTranspose2d(k=3, s=2, padding=1, output_padding=1) weight
    # (Cin, Cout, 3, 3): flip spatially -> equivalent direct-conv filter, then
    # split into the 4 sub-pixel phase filters (each 2x2).
    kf_r = jnp.transpose(p['wr'][:, :, ::-1, ::-1], (2, 3, 0, 1))
    kf_i = jnp.transpose(p['wi'][:, :, ::-1, ::-1], (2, 3, 0, 1))
    mats = [_block_real_matrix(gr, gi)
            for gr, gi in zip(_subpixel_filters(kf_r), _subpixel_filters(kf_i))]
    W = jnp.concatenate(mats, axis=1).astype(jnp.bfloat16)   # (2*2*2Cin, 4*2Cout)
    b = jnp.tile(_folded_bias(p), 4).reshape(1, -1).astype(jnp.float32)
    return dict(W=W, b=b, kh=2, kw=2, cout=p['br'].shape[0], deconv=True)


def _prep_layer(p):
    return _prep_deconv(p) if p['transpose'] else _prep_conv(p)


# ----------------------------------------------------------------------------
# Parameters (deterministic, synthetic)
# ----------------------------------------------------------------------------
def _init_complex_conv(key, cin, cout, k, transpose=False, scale=0.1):
    k1, k2, k3, k4 = jax.random.split(key, 4)
    shape = (cin, cout, k, k) if transpose else (cout, cin, k, k)
    return dict(
        wr=scale * jax.random.normal(k1, shape, jnp.float32),
        wi=scale * jax.random.normal(k2, shape, jnp.float32),
        br=scale * jax.random.normal(k3, (cout,), jnp.float32),
        bi=scale * jax.random.normal(k4, (cout,), jnp.float32),
        transpose=transpose,
    )


def init_params(key, k=3, CB_layers=(3, 3, 3), FM_num=(4, 8, 16)):
    In_channels = [1, FM_num[0], FM_num[1]]
    keys = iter(jax.random.split(key, 32))
    raw = {}
    for i in range(3):
        layers = []
        for j in range(CB_layers[i]):
            cin = In_channels[i] if j == 0 else FM_num[i]
            layers.append(_init_complex_conv(next(keys), cin, FM_num[i], k))
        raw[f'ConvB{i + 1}'] = layers
    for i in range(2):
        raw[f'DownConv{i + 1}'] = _init_complex_conv(next(keys), In_channels[i],
                                                     FM_num[i], k)
    raw['UpConv1'] = _init_complex_conv(next(keys), FM_num[2], FM_num[1], k,
                                        transpose=True)
    raw['UpConv2'] = _init_complex_conv(next(keys), FM_num[1] * 2, FM_num[0], k,
                                        transpose=True)
    raw['OutConv'] = _init_complex_conv(next(keys), FM_num[0] * 2, 1, k)

    prep = {name: ([_prep_layer(p) for p in val] if isinstance(val, list)
                   else _prep_layer(val))
            for name, val in raw.items()}
    return prep, raw


# ----------------------------------------------------------------------------
# ComplexUNet forward (bn_flag=False -> no BatchNorm modules)
# ----------------------------------------------------------------------------
def complex_unet_forward(x, params):
    """x: complex64 (B, H, W). Returns complex64 (B, H, W)."""
    # TODO(synk): the class docstring mentions FFT + matrix dot-multiply, but the
    # reference forward() does not perform them, so they are intentionally omitted.
    x0 = jnp.stack([jnp.real(x), jnp.imag(x)], axis=-1).astype(jnp.bfloat16)

    def run_block(t, layers):
        # TODO(synk): fuse the 3 layers of each ConvB into one kernel (keep the
        # intermediate activations in VMEM scratch) to drop two HBM round-trips.
        for p in layers:
            t = complex_conv_layer(t, p, relu=True)
        return t

    x1 = run_block(x0, params['ConvB1'])
    d2 = complex_conv_layer(x0, params['DownConv1'], relu=True, stride=2)
    x2 = run_block(d2, params['ConvB2'])
    d4 = complex_conv_layer(d2, params['DownConv2'], relu=True, stride=2)
    x3 = run_block(d4, params['ConvB3'])

    u1 = complex_conv_layer(x3, params['UpConv1'], relu=True)
    u2 = complex_conv_layer(complex_concat(x2, u1), params['UpConv2'], relu=True)
    x4 = complex_conv_layer(complex_concat(x1, u2), params['OutConv'], relu=False)

    return lax.complex(x4[..., 0], x4[..., 1])


# ----------------------------------------------------------------------------
# Pure-JAX (XLA conv) f32 reference for a correctness check
# ----------------------------------------------------------------------------
def _ref_conv(x, w, *, stride=1, padding=((1, 1), (1, 1)), lhs_dilation=(1, 1)):
    return lax.conv_general_dilated(
        x, w, window_strides=(stride, stride), padding=padding,
        lhs_dilation=lhs_dilation,
        dimension_numbers=('NHWC', 'HWIO', 'NHWC'))


def _ref_complex_layer(xr, xi, p, *, stride=1, relu=True):
    if p['transpose']:
        wr = jnp.transpose(p['wr'][:, :, ::-1, ::-1], (2, 3, 0, 1))
        wi = jnp.transpose(p['wi'][:, :, ::-1, ::-1], (2, 3, 0, 1))
        conv = functools.partial(_ref_conv, padding=((1, 2), (1, 2)),
                                 lhs_dilation=(2, 2))
    else:
        wr = jnp.transpose(p['wr'], (2, 3, 1, 0))
        wi = jnp.transpose(p['wi'], (2, 3, 1, 0))
        conv = functools.partial(_ref_conv, stride=stride)
    yr = (conv(xr, wr) + p['br']) - (conv(xi, wi) + p['bi'])
    yi = (conv(xi, wr) + p['br']) + (conv(xr, wi) + p['bi'])
    if relu:
        yr, yi = jnp.maximum(yr, 0.0), jnp.maximum(yi, 0.0)
    return yr, yi


def reference_forward(x, raw):
    xr, xi = jnp.real(x)[..., None], jnp.imag(x)[..., None]

    def block(r, i, layers):
        for p in layers:
            r, i = _ref_complex_layer(r, i, p)
        return r, i

    x1r, x1i = block(xr, xi, raw['ConvB1'])
    d2r, d2i = _ref_complex_layer(xr, xi, raw['DownConv1'], stride=2)
    x2r, x2i = block(d2r, d2i, raw['ConvB2'])
    d4r, d4i = _ref_complex_layer(d2r, d2i, raw['DownConv2'], stride=2)
    x3r, x3i = block(d4r, d4i, raw['ConvB3'])
    u1r, u1i = _ref_complex_layer(x3r, x3i, raw['UpConv1'])
    u2r, u2i = _ref_complex_layer(jnp.concatenate([x2r, u1r], -1),
                                  jnp.concatenate([x2i, u1i], -1),
                                  raw['UpConv2'])
    yr, yi = _ref_complex_layer(jnp.concatenate([x1r, u2r], -1),
                                jnp.concatenate([x1i, u2i], -1),
                                raw['OutConv'], relu=False)
    return lax.complex(yr[..., 0], yi[..., 0])


# ----------------------------------------------------------------------------
if __name__ == "__main__":
    key = jax.random.PRNGKey(0)
    B, H, W = 2, 16, 16
    kx1, kx2, kp = jax.random.split(key, 3)
    x = lax.complex(jax.random.normal(kx1, (B, H, W), jnp.float32),
                    jax.random.normal(kx2, (B, H, W), jnp.float32))
    params, raw = init_params(kp, k=3, CB_layers=(3, 3, 3), FM_num=(4, 8, 16))

    fwd = jax.jit(lambda xx: complex_unet_forward(xx, params))
    out = jax.block_until_ready(fwd(x))

    assert out.shape == (B, H, W), out.shape
    assert out.dtype == jnp.complex64, out.dtype
    assert bool(jnp.all(jnp.isfinite(jnp.real(out)) & jnp.isfinite(jnp.imag(out))))

    # Loose-tolerance check vs. an f32 XLA-conv reference (kernels use bf16 MXU
    # operands, so ~1e-2 relative deviation is expected and acceptable).
    ref = jax.block_until_ready(reference_forward(x, raw))
    err = float(jnp.max(jnp.abs(out - ref)))
    scale = float(jnp.max(jnp.abs(ref)))
    assert err <= 0.05 + 0.05 * scale, (err, scale)

    print("KERNEL_OK")
</pallas_src>

<mosaic_0001>
module attributes {stable_mosaic.version = 11 : i64} {
  func.func @_conv_kernel(%arg0: i32, %arg1: i32, %arg2: memref<1x18x18x2xbf16, #tpu.memory_space<vmem>>, %arg3: memref<18x8xbf16, #tpu.memory_space<vmem>>, %arg4: memref<1x8xf32, #tpu.memory_space<vmem>>, %arg5: memref<1x8x16x8xbf16, #tpu.memory_space<vmem>>) attributes {dimension_semantics = [#tpu.dimension_semantics<parallel>, #tpu.dimension_semantics<parallel>], iteration_bounds = array<i64: 2, 2>, scalar_prefetch = 0 : i64, scratch_operands = 0 : i64, tpu.core_type = #tpu.core_type<tc>, window_params = [{transform_indices = @transform_0, window_bounds = array<i64: 1, 18, 18, 2>}, {pipeline_mode = #tpu.pipeline_mode<synchronous>, transform_indices = @transform_1, window_bounds = array<i64: 18, 8>}, {pipeline_mode = #tpu.pipeline_mode<synchronous>, transform_indices = @transform_2, window_bounds = array<i64: 1, 8>}, {transform_indices = @transform_3, window_bounds = array<i64: 1, 8, 16, 8>}]} {
    %c8_i32 = arith.constant 8 : i32
    %0 = arith.muli %arg1, %c8_i32 : i32
    %c0 = arith.constant 0 : index
    %c0_0 = arith.constant 0 : index
    %1 = vector.load %arg4[%c0, %c0_0] : memref<1x8xf32, #tpu.memory_space<vmem>>, vector<1x8xf32>
    %c0_1 = arith.constant 0 : index
    %c0_2 = arith.constant 0 : index
    %2 = vector.load %arg3[%c0_1, %c0_2] : memref<18x8xbf16, #tpu.memory_space<vmem>>, vector<2x8xbf16>
    %c2 = arith.constant 2 : index
    %c0_3 = arith.constant 0 : index
    %3 = vector.load %arg3[%c2, %c0_3] : memref<18x8xbf16, #tpu.memory_space<vmem>>, vector<2x8xbf16>
    %c4 = arith.constant 4 : index
    %c0_4 = arith.constant 0 : index
    %4 = vector.load %arg3[%c4, %c0_4] : memref<18x8xbf16, #tpu.memory_space<vmem>>, vector<2x8xbf16>
    %c6 = arith.constant 6 : index
    %c0_5 = arith.constant 0 : index
    %5 = vector.load %arg3[%c6, %c0_5] : memref<18x8xbf16, #tpu.memory_space<vmem>>, vector<2x8xbf16>
    %c8 = arith.constant 8 : index
    %c0_6 = arith.constant 0 : index
    %6 = vector.load %arg3[%c8, %c0_6] : memref<18x8xbf16, #tpu.memory_space<vmem>>, vector<2x8xbf16>
    %c10 = arith.constant 10 : index
    %c0_7 = arith.constant 0 : index
    %7 = vector.load %arg3[%c10, %c0_7] : memref<18x8xbf16, #tpu.memory_space<vmem>>, vector<2x8xbf16>
    %c12 = arith.constant 12 : index
    %c0_8 = arith.constant 0 : index
    %8 = vector.load %arg3[%c12, %c0_8] : memref<18x8xbf16, #tpu.memory_space<vmem>>, vector<2x8xbf16>
    %c14 = arith.constant 14 : index
    %c0_9 = arith.constant 0 : index
    %9 = vector.load %arg3[%c14, %c0_9] : memref<18x8xbf16, #tpu.memory_space<vmem>>, vector<2x8xbf16>
    %c16 = arith.constant 16 : index
    %c0_10 = arith.constant 0 : index
    %10 = vector.load %arg3[%c16, %c0_10] : memref<18x8xbf16, #tpu.memory_space<vmem>>, vector<2x8xbf16>
    %c0_i32 = arith.constant 0 : i32
    %c8_i32_11 = arith.constant 8 : i32
    %11 = arith.addi %c0_i32, %c8_i32_11 : i32
    %c1_i32 = arith.constant 1 : i32
    scf.for %arg6 = %c0_i32 to %11 step %c1_i32  : i32 {
      %cst = arith.constant 0.000000e+00 : f32
      %12 = vector.broadcast %cst : f32 to vector<16x8xf32>
      %13 = arith.addi %0, %arg6 : i32
      %c0_i32_13 = arith.constant 0 : i32
      %14 = arith.addi %13, %c0_i32_13 : i32
      %c0_14 = arith.constant 0 : index
      %15 = arith.index_cast %14 : i32 to index
      %c0_15 = arith.constant 0 : index
      %c0_16 = arith.constant 0 : index
      %16 = vector.load %arg2[%c0_14, %15, %c0_15, %c0_16] : memref<1x18x18x2xbf16, #tpu.memory_space<vmem>>, vector<1x1x16x2xbf16>
      %17 = vector.shape_cast %16 : vector<1x1x16x2xbf16> to vector<16x2xbf16>
      %cst_17 = arith.constant dense<0.000000e+00> : vector<16x8xf32>
      %18 = tpu.matmul %17, %2, %cst_17 {dimension_numbers = #tpu.dot_dimension_numbers<[1], [0], [0], [1], [0, 0, 1, 1], [], []>} : vector<16x2xbf16>, vector<2x8xbf16>, vector<16x8xf32> -> vector<16x8xf32>
      %19 = arith.addf %12, %18 : vector<16x8xf32>
      %20 = arith.addi %0, %arg6 : i32
      %c0_i32_18 = arith.constant 0 : i32
      %21 = arith.addi %20, %c0_i32_18 : i32
      %c0_19 = arith.constant 0 : index
      %22 = arith.index_cast %21 : i32 to index
      %c1 = arith.constant 1 : index
      %c0_20 = arith.constant 0 : index
      %23 = vector.load %arg2[%c0_19, %22, %c1, %c0_20] : memref<1x18x18x2xbf16, #tpu.memory_space<vmem>>, vector<1x1x16x2xbf16>
      %24 = vector.shape_cast %23 : vector<1x1x16x2xbf16> to vector<16x2xbf16>
      %cst_21 = arith.constant dense<0.000000e+00> : vector<16x8xf32>
      %25 = tpu.matmul %24, %3, %cst_21 {dimension_numbers = #tpu.dot_dimension_numbers<[1], [0], [0], [1], [0, 0, 1, 1], [], []>} : vector<16x2xbf16>, vector<2x8xbf16>, vector<16x8xf32> -> vector<16x8xf32>
      %26 = arith.addf %19, %25 : vector<16x8xf32>
      %27 = arith.addi %0, %arg6 : i32
      %c0_i32_22 = arith.constant 0 : i32
      %28 = arith.addi %27, %c0_i32_22 : i32
      %c0_23 = arith.constant 0 : index
      %29 = arith.index_cast %28 : i32 to index
      %c2_24 = arith.constant 2 : index
      %c0_25 = arith.constant 0 : index
      %30 = vector.load %arg2[%c0_23, %29, %c2_24, %c0_25] : memref<1x18x18x2xbf16, #tpu.memory_space<vmem>>, vector<1x1x16x2xbf16>
      %31 = vector.shape_cast %30 : vector<1x1x16x2xbf16> to vector<16x2xbf16>
      %cst_26 = arith.constant dense<0.000000e+00> : vector<16x8xf32>
      %32 = tpu.matmul %31, %4, %cst_26 {dimension_numbers = #tpu.dot_dimension_numbers<[1], [0], [0], [1], [0, 0, 1, 1], [], []>} : vector<16x2xbf16>, vector<2x8xbf16>, vector<16x8xf32> -> vector<16x8xf32>
      %33 = arith.addf %26, %32 : vector<16x8xf32>
      %34 = arith.addi %0, %arg6 : i32
      %c1_i32_27 = arith.constant 1 : i32
      %35 = arith.addi %34, %c1_i32_27 : i32
      %c0_28 = arith.constant 0 : index
      %36 = arith.index_cast %35 : i32 to index
      %c0_29 = arith.constant 0 : index
      %c0_30 = arith.constant 0 : index
      %37 = vector.load %arg2[%c0_28, %36, %c0_29, %c0_30] : memref<1x18x18x2xbf16, #tpu.memory_space<vmem>>, vector<1x1x16x2xbf16>
      %38 = vector.shape_cast %37 : vector<1x1x16x2xbf16> to vector<16x2xbf16>
      %cst_31 = arith.constant dense<0.000000e+00> : vector<16x8xf32>
      %39 = tpu.matmul %38, %5, %cst_31 {dimension_numbers = #tpu.dot_dimension_numbers<[1], [0], [0], [1], [0, 0, 1, 1], [], []>} : vector<16x2xbf16>, vector<2x8xbf16>, vector<16x8xf32> -> vector<16x8xf32>
      %40 = arith.addf %33, %39 : vector<16x8xf32>
      %41 = arith.addi %0, %arg6 : i32
      %c1_i32_32 = arith.constant 1 : i32
      %42 = arith.addi %41, %c1_i32_32 : i32
      %c0_33 = arith.constant 0 : index
      %43 = arith.index_cast %42 : i32 to index
      %c1_34 = arith.constant 1 : index
      %c0_35 = arith.constant 0 : index
      %44 = vector.load %arg2[%c0_33, %43, %c1_34, %c0_35] : memref<1x18x18x2xbf16, #tpu.memory_space<vmem>>, vector<1x1x16x2xbf16>
      %45 = vector.shape_cast %44 : vector<1x1x16x2xbf16> to vector<16x2xbf16>
      %cst_36 = arith.constant dense<0.000000e+00> : vector<16x8xf32>
      %46 = tpu.matmul %45, %6, %cst_36 {dimension_numbers = #tpu.dot_dimension_numbers<[1], [0], [0], [1], [0, 0, 1, 1], [], []>} : vector<16x2xbf16>, vector<2x8xbf16>, vector<16x8xf32> -> vector<16x8xf32>
      %47 = arith.addf %40, %46 : vector<16x8xf32>
      %48 = arith.addi %0, %arg6 : i32
      %c1_i32_37 = arith.constant 1 : i32
      %49 = arith.addi %48, %c1_i32_37 : i32
      %c0_38 = arith.constant 0 : index
      %50 = arith.index_cast %49 : i32 to index
      %c2_39 = arith.constant 2 : index
      %c0_40 = arith.constant 0 : index
      %51 = vector.load %arg2[%c0_38, %50, %c2_39, %c0_40] : memref<1x18x18x2xbf16, #tpu.memory_space<vmem>>, vector<1x1x16x2xbf16>
      %52 = vector.shape_cast %51 : vector<1x1x16x2xbf16> to vector<16x2xbf16>
      %cst_41 = arith.constant dense<0.000000e+00> : vector<16x8xf32>
      %53 = tpu.matmul %52, %7, %cst_41 {dimension_numbers = #tpu.dot_dimension_numbers<[1], [0], [0], [1], [0, 0, 1, 1], [], []>} : vector<16x2xbf16>, vector<2x8xbf16>, vector<16x8xf32> -> vector<16x8xf32>
      %54 = arith.addf %47, %53 : vector<16x8xf32>
      %55 = arith.addi %0, %arg6 : i32
      %c2_i32 = arith.constant 2 : i32
      %56 = arith.addi %55, %c2_i32 : i32
      %c0_42 = arith.constant 0 : index
      %57 = arith.index_cast %56 : i32 to index
      %c0_43 = arith.constant 0 : index
      %c0_44 = arith.constant 0 : index
      %58 = vector.load %arg2[%c0_42, %57, %c0_43, %c0_44] : memref<1x18x18x2xbf16, #tpu.memory_space<vmem>>, vector<1x1x16x2xbf16>
      %59 = vector.shape_cast %58 : vector<1x1x16x2xbf16> to vector<16x2xbf16>
      %cst_45 = arith.constant dense<0.000000e+00> : vector<16x8xf32>
      %60 = tpu.matmul %59, %8, %cst_45 {dimension_numbers = #tpu.dot_dimension_numbers<[1], [0], [0], [1], [0, 0, 1, 1], [], []>} : vector<16x2xbf16>, vector<2x8xbf16>, vector<16x8xf32> -> vector<16x8xf32>
      %61 = arith.addf %54, %60 : vector<16x8xf32>
      %62 = arith.addi %0, %arg6 : i32
      %c2_i32_46 = arith.constant 2 : i32
      %63 = arith.addi %62, %c2_i32_46 : i32
      %c0_47 = arith.constant 0 : index
      %64 = arith.index_cast %63 : i32 to index
      %c1_48 = arith.constant 1 : index
      %c0_49 = arith.constant 0 : index
      %65 = vector.load %arg2[%c0_47, %64, %c1_48, %c0_49] : memref<1x18x18x2xbf16, #tpu.memory_space<vmem>>, vector<1x1x16x2xbf16>
      %66 = vector.shape_cast %65 : vector<1x1x16x2xbf16> to vector<16x2xbf16>
      %cst_50 = arith.constant dense<0.000000e+00> : vector<16x8xf32>
      %67 = tpu.matmul %66, %9, %cst_50 {dimension_numbers = #tpu.dot_dimension_numbers<[1], [0], [0], [1], [0, 0, 1, 1], [], []>} : vector<16x2xbf16>, vector<2x8xbf16>, vector<16x8xf32> -> vector<16x8xf32>
      %68 = arith.addf %61, %67 : vector<16x8xf32>
      %69 = arith.addi %0, %arg6 : i32
      %c2_i32_51 = arith.constant 2 : i32
      %70 = arith.addi %69, %c2_i32_51 : i32
      %c0_52 = arith.constant 0 : index
      %71 = arith.index_cast %70 : i32 to index
      %c2_53 = arith.constant 2 : index
      %c0_54 = arith.constant 0 : index
      %72 = vector.load %arg2[%c0_52, %71, %c2_53, %c0_54] : memref<1x18x18x2xbf16, #tpu.memory_space<vmem>>, vector<1x1x16x2xbf16>
      %73 = vector.shape_cast %72 : vector<1x1x16x2xbf16> to vector<16x2xbf16>
      %cst_55 = arith.constant dense<0.000000e+00> : vector<16x8xf32>
      %74 = tpu.matmul %73, %10, %cst_55 {dimension_numbers = #tpu.dot_dimension_numbers<[1], [0], [0], [1], [0, 0, 1, 1], [], []>} : vector<16x2xbf16>, vector<2x8xbf16>, vector<16x8xf32> -> vector<16x8xf32>
      %75 = arith.addf %68, %74 : vector<16x8xf32>
      %76 = vector.broadcast %1 : vector<1x8xf32> to vector<16x8xf32>
      %77 = arith.addf %75, %76 : vector<16x8xf32>
      %cst_56 = arith.constant 0.000000e+00 : f32
      %78 = vector.broadcast %cst_56 : f32 to vector<16x8xf32>
      %79 = arith.maximumf %77, %78 : vector<16x8xf32>
      %80 = arith.truncf %79 : vector<16x8xf32> to vector<16x8xbf16>
      %c0_57 = arith.constant 0 : index
      %81 = arith.index_cast %arg6 : i32 to index
      %c0_58 = arith.constant 0 : index
      %c0_59 = arith.constant 0 : index
      %82 = vector.load %arg5[%c0_57, %81, %c0_58, %c0_59] : memref<1x8x16x8xbf16, #tpu.memory_space<vmem>>, vector<1x1x16x8xbf16>
      %83 = vector.shape_cast %82 : vector<1x1x16x8xbf16> to vector<16x8xbf16>
      %84 = vector.shape_cast %80 : vector<16x8xbf16> to vector<1x1x16x8xbf16>
      tpu.vector_store %arg5[%c0_57, %81, %c0_58, %c0_59], %84 {strides = array<i32>} : memref<1x8x16x8xbf16, #tpu.memory_space<vmem>>, vector<1x1x16x8xbf16>,
    }
    %c8_i32_12 = arith.constant 8 : i32
    return
  }
  func.func @transform_0(%arg0: i32, %arg1: i32) -> (i32, i32, i32, i32) {
    %c0_i32 = arith.constant 0 : i32
    %c0_i32_0 = arith.constant 0 : i32
    %c0_i32_1 = arith.constant 0 : i32
    %c0_i32_2 = arith.constant 0 : i32
    return %arg0, %c0_i32, %c0_i32_0, %c0_i32_1 : i32, i32, i32, i32
  }
  func.func @transform_1(%arg0: i32, %arg1: i32) -> (i32, i32) {
    %c0_i32 = arith.constant 0 : i32
    %c0_i32_0 = arith.constant 0 : i32
    %c0_i32_1 = arith.constant 0 : i32
    return %c0_i32, %c0_i32_0 : i32, i32
  }
  func.func @transform_2(%arg0: i32, %arg1: i32) -> (i32, i32) {
    %c0_i32 = arith.constant 0 : i32
    %c0_i32_0 = arith.constant 0 : i32
    %c0_i32_1 = arith.constant 0 : i32
    return %c0_i32, %c0_i32_0 : i32, i32
  }
  func.func @transform_3(%arg0: i32, %arg1: i32) -> (i32, i32, i32, i32) {
    %c0_i32 = arith.constant 0 : i32
    %c0_i32_0 = arith.constant 0 : i32
    %c0_i32_1 = arith.constant 0 : i32
    return %arg0, %arg1, %c0_i32, %c0_i32_0 : i32, i32, i32, i32
  }
}

module attributes {stable_mosaic.version = 11 : i64} {
  func.func @_conv_kernel(%arg0: i32, %arg1: i32, %arg2: memref<1x10x10x8xbf16, #tpu.memory_space<vmem>>, %arg3: memref<72x16xbf16, #tpu.memory_space<vmem>>, %arg4: memref<1x16xf32, #tpu.memory_space<vmem>>, %arg5: memref<1x8x8x16xbf16, #tpu.memory_space<vmem>>) attributes {dimension_semantics = [#tpu.dimension_semantics<parallel>, #tpu.dimension_semantics<parallel>], iteration_bounds = array<i64: 2, 1>, scalar_prefetch = 0 : i64, scratch_operands = 0 : i64, tpu.core_type = #tpu.core_type<tc>, window_params = [{transform_indices = @transform_0, window_bounds = array<i64: 1, 10, 10, 8>}, {pipeline_mode = #tpu.pipeline_mode<synchronous>, transform_indices = @transform_1, window_bounds = array<i64: 72, 16>}, {pipeline_mode = #tpu.pipeline_mode<synchronous>, transform_indices = @transform_2, window_bounds = array<i64: 1, 16>}, {transform_indices = @transform_3, window_bounds = array<i64: 1, 8, 8, 16>}]} {
    %c8_i32 = arith.constant 8 : i32
    %0 = arith.muli %arg1, %c8_i32 : i32
    %c0 = arith.constant 0 : index
    %c0_0 = arith.constant 0 : index
    %1 = vector.load %arg4[%c0, %c0_0] : memref<1x16xf32, #tpu.memory_space<vmem>>, vector<1x16xf32>
    %c0_1 = arith.constant 0 : index
    %c0_2 = arith.constant 0 : index
    %2 = vector.load %arg3[%c0_1, %c0_2] : memref<72x16xbf16, #tpu.memory_space<vmem>>, vector<8x16xbf16>
    %c8 = arith.constant 8 : index
    %c0_3 = arith.constant 0 : index
    %3 = vector.load %arg3[%c8, %c0_3] : memref<72x16xbf16, #tpu.memory_space<vmem>>, vector<8x16xbf16>
    %c16 = arith.constant 16 : index
    %c0_4 = arith.constant 0 : index
    %4 = vector.load %arg3[%c16, %c0_4] : memref<72x16xbf16, #tpu.memory_space<vmem>>, vector<8x16xbf16>
    %c24 = arith.constant 24 : index
    %c0_5 = arith.constant 0 : index
    %5 = vector.load %arg3[%c24, %c0_5] : memref<72x16xbf16, #tpu.memory_space<vmem>>, vector<8x16xbf16>
    %c32 = arith.constant 32 : index
    %c0_6 = arith.constant 0 : index
    %6 = vector.load %arg3[%c32, %c0_6] : memref<72x16xbf16, #tpu.memory_space<vmem>>, vector<8x16xbf16>
    %c40 = arith.constant 40 : index
    %c0_7 = arith.constant 0 : index
    %7 = vector.load %arg3[%c40, %c0_7] : memref<72x16xbf16, #tpu.memory_space<vmem>>, vector<8x16xbf16>
    %c48 = arith.constant 48 : index
    %c0_8 = arith.constant 0 : index
    %8 = vector.load %arg3[%c48, %c0_8] : memref<72x16xbf16, #tpu.memory_space<vmem>>, vector<8x16xbf16>
    %c56 = arith.constant 56 : index
    %c0_9 = arith.constant 0 : index
    %9 = vector.load %arg3[%c56, %c0_9] : memref<72x16xbf16, #tpu.memory_space<vmem>>, vector<8x16xbf16>
    %c64 = arith.constant 64 : index
    %c0_10 = arith.constant 0 : index
    %10 = vector.load %arg3[%c64, %c0_10] : memref<72x16xbf16, #tpu.memory_space<vmem>>, vector<8x16xbf16>
    %c0_i32 = arith.constant 0 : i32
    %c8_i32_11 = arith.constant 8 : i32
    %11 = arith.addi %c0_i32, %c8_i32_11 : i32
    %c1_i32 = arith.constant 1 : i32
    scf.for %arg6 = %c0_i32 to %11 step %c1_i32  : i32 {
      %cst = arith.constant 0.000000e+00 : f32
      %12 = vector.broadcast %cst : f32 to vector<8x16xf32>
      %13 = arith.addi %0, %arg6 : i32
      %c0_i32_13 = arith.constant 0 : i32
      %14 = arith.addi %13, %c0_i32_13 : i32
      %c0_14 = arith.constant 0 : index
      %15 = arith.index_cast %14 : i32 to index
      %c0_15 = arith.constant 0 : index
      %c0_16 = arith.constant 0 : index
      %16 = vector.load %arg2[%c0_14, %15, %c0_15, %c0_16] : memref<1x10x10x8xbf16, #tpu.memory_space<vmem>>, vector<1x1x8x8xbf16>
      %17 = vector.shape_cast %16 : vector<1x1x8x8xbf16> to vector<8x8xbf16>
      %cst_17 = arith.constant dense<0.000000e+00> : vector<8x16xf32>
      %18 = tpu.matmul %17, %2, %cst_17 {dimension_numbers = #tpu.dot_dimension_numbers<[1], [0], [0], [1], [0, 0, 1, 1], [], []>} : vector<8x8xbf16>, vector<8x16xbf16>, vector<8x16xf32> -> vector<8x16xf32>
      %19 = arith.addf %12, %18 : vector<8x16xf32>
      %20 = arith.addi %0, %arg6 : i32
      %c0_i32_18 = arith.constant 0 : i32
      %21 = arith.addi %20, %c0_i32_18 : i32
      %c0_19 = arith.constant 0 : index
      %22 = arith.index_cast %21 : i32 to index
      %c1 = arith.constant 1 : index
      %c0_20 = arith.constant 0 : index
      %23 = vector.load %arg2[%c0_19, %22, %c1, %c0_20] : memref<1x10x10x8xbf16, #tpu.memory_space<vmem>>, vector<1x1x8x8xbf16>
      %24 = vector.shape_cast %23 : vector<1x1x8x8xbf16> to vector<8x8xbf16>
      %cst_21 = arith.constant dense<0.000000e+00> : vector<8x16xf32>
      %25 = tpu.matmul %24, %3, %cst_21 {dimension_numbers = #tpu.dot_dimension_numbers<[1], [0], [0], [1], [0, 0, 1, 1], [], []>} : vector<8x8xbf16>, vector<8x16xbf16>, vector<8x16xf32> -> vector<8x16xf32>
      %26 = arith.addf %19, %25 : vector<8x16xf32>
      %27 = arith.addi %0, %arg6 : i32
      %c0_i32_22 = arith.constant 0 : i32
      %28 = arith.addi %27, %c0_i32_22 : i32
      %c0_23 = arith.constant 0 : index
      %29 = arith.index_cast %28 : i32 to index
      %c2 = arith.constant 2 : index
      %c0_24 = arith.constant 0 : index
      %30 = vector.load %arg2[%c0_23, %29, %c2, %c0_24] : memref<1x10x10x8xbf16, #tpu.memory_space<vmem>>, vector<1x1x8x8xbf16>
      %31 = vector.shape_cast %30 : vector<1x1x8x8xbf16> to vector<8x8xbf16>
      %cst_25 = arith.constant dense<0.000000e+00> : vector<8x16xf32>
      %32 = tpu.matmul %31, %4, %cst_25 {dimension_numbers = #tpu.dot_dimension_numbers<[1], [0], [0], [1], [0, 0, 1, 1], [], []>} : vector<8x8xbf16>, vector<8x16xbf16>, vector<8x16xf32> -> vector<8x16xf32>
      %33 = arith.addf %26, %32 : vector<8x16xf32>
      %34 = arith.addi %0, %arg6 : i32
      %c1_i32_26 = arith.constant 1 : i32
      %35 = arith.addi %34, %c1_i32_26 : i32
      %c0_27 = arith.constant 0 : index
      %36 = arith.index_cast %35 : i32 to index
      %c0_28 = arith.constant 0 : index
      %c0_29 = arith.constant 0 : index
      %37 = vector.load %arg2[%c0_27, %36, %c0_28, %c0_29] : memref<1x10x10x8xbf16, #tpu.memory_space<vmem>>, vector<1x1x8x8xbf16>
      %38 = vector.shape_cast %37 : vector<1x1x8x8xbf16> to vector<8x8xbf16>
      %cst_30 = arith.constant dense<0.000000e+00> : vector<8x16xf32>
      %39 = tpu.matmul %38, %5, %cst_30 {dimension_numbers = #tpu.dot_dimension_numbers<[1], [0], [0], [1], [0, 0, 1, 1], [], []>} : vector<8x8xbf16>, vector<8x16xbf16>, vector<8x16xf32> -> vector<8x16xf32>
      %40 = arith.addf %33, %39 : vector<8x16xf32>
      %41 = arith.addi %0, %arg6 : i32
      %c1_i32_31 = arith.constant 1 : i32
      %42 = arith.addi %41, %c1_i32_31 : i32
      %c0_32 = arith.constant 0 : index
      %43 = arith.index_cast %42 : i32 to index
      %c1_33 = arith.constant 1 : index
      %c0_34 = arith.constant 0 : index
      %44 = vector.load %arg2[%c0_32, %43, %c1_33, %c0_34] : memref<1x10x10x8xbf16, #tpu.memory_space<vmem>>, vector<1x1x8x8xbf16>
      %45 = vector.shape_cast %44 : vector<1x1x8x8xbf16> to vector<8x8xbf16>
      %cst_35 = arith.constant dense<0.000000e+00> : vector<8x16xf32>
      %46 = tpu.matmul %45, %6, %cst_35 {dimension_numbers = #tpu.dot_dimension_numbers<[1], [0], [0], [1], [0, 0, 1, 1], [], []>} : vector<8x8xbf16>, vector<8x16xbf16>, vector<8x16xf32> -> vector<8x16xf32>
      %47 = arith.addf %40, %46 : vector<8x16xf32>
      %48 = arith.addi %0, %arg6 : i32
      %c1_i32_36 = arith.constant 1 : i32
      %49 = arith.addi %48, %c1_i32_36 : i32
      %c0_37 = arith.constant 0 : index
      %50 = arith.index_cast %49 : i32 to index
      %c2_38 = arith.constant 2 : index
      %c0_39 = arith.constant 0 : index
      %51 = vector.load %arg2[%c0_37, %50, %c2_38, %c0_39] : memref<1x10x10x8xbf16, #tpu.memory_space<vmem>>, vector<1x1x8x8xbf16>
      %52 = vector.shape_cast %51 : vector<1x1x8x8xbf16> to vector<8x8xbf16>
      %cst_40 = arith.constant dense<0.000000e+00> : vector<8x16xf32>
      %53 = tpu.matmul %52, %7, %cst_40 {dimension_numbers = #tpu.dot_dimension_numbers<[1], [0], [0], [1], [0, 0, 1, 1], [], []>} : vector<8x8xbf16>, vector<8x16xbf16>, vector<8x16xf32> -> vector<8x16xf32>
      %54 = arith.addf %47, %53 : vector<8x16xf32>
      %55 = arith.addi %0, %arg6 : i32
      %c2_i32 = arith.constant 2 : i32
      %56 = arith.addi %55, %c2_i32 : i32
      %c0_41 = arith.constant 0 : index
      %57 = arith.index_cast %56 : i32 to index
      %c0_42 = arith.constant 0 : index
      %c0_43 = arith.constant 0 : index
      %58 = vector.load %arg2[%c0_41, %57, %c0_42, %c0_43] : memref<1x10x10x8xbf16, #tpu.memory_space<vmem>>, vector<1x1x8x8xbf16>
      %59 = vector.shape_cast %58 : vector<1x1x8x8xbf16> to vector<8x8xbf16>
      %cst_44 = arith.constant dense<0.000000e+00> : vector<8x16xf32>
      %60 = tpu.matmul %59, %8, %cst_44 {dimension_numbers = #tpu.dot_dimension_numbers<[1], [0], [0], [1], [0, 0, 1, 1], [], []>} : vector<8x8xbf16>, vector<8x16xbf16>, vector<8x16xf32> -> vector<8x16xf32>
      %61 = arith.addf %54, %60 : vector<8x16xf32>
      %62 = arith.addi %0, %arg6 : i32
      %c2_i32_45 = arith.constant 2 : i32
      %63 = arith.addi %62, %c2_i32_45 : i32
      %c0_46 = arith.constant 0 : index
      %64 = arith.index_cast %63 : i32 to index
      %c1_47 = arith.constant 1 : index
      %c0_48 = arith.constant 0 : index
      %65 = vector.load %arg2[%c0_46, %64, %c1_47, %c0_48] : memref<1x10x10x8xbf16, #tpu.memory_space<vmem>>, vector<1x1x8x8xbf16>
      %66 = vector.shape_cast %65 : vector<1x1x8x8xbf16> to vector<8x8xbf16>
      %cst_49 = arith.constant dense<0.000000e+00> : vector<8x16xf32>
      %67 = tpu.matmul %66, %9, %cst_49 {dimension_numbers = #tpu.dot_dimension_numbers<[1], [0], [0], [1], [0, 0, 1, 1], [], []>} : vector<8x8xbf16>, vector<8x16xbf16>, vector<8x16xf32> -> vector<8x16xf32>
      %68 = arith.addf %61, %67 : vector<8x16xf32>
      %69 = arith.addi %0, %arg6 : i32
      %c2_i32_50 = arith.constant 2 : i32
      %70 = arith.addi %69, %c2_i32_50 : i32
      %c0_51 = arith.constant 0 : index
      %71 = arith.index_cast %70 : i32 to index
      %c2_52 = arith.constant 2 : index
      %c0_53 = arith.constant 0 : index
      %72 = vector.load %arg2[%c0_51, %71, %c2_52, %c0_53] : memref<1x10x10x8xbf16, #tpu.memory_space<vmem>>, vector<1x1x8x8xbf16>
      %73 = vector.shape_cast %72 : vector<1x1x8x8xbf16> to vector<8x8xbf16>
      %cst_54 = arith.constant dense<0.000000e+00> : vector<8x16xf32>
      %74 = tpu.matmul %73, %10, %cst_54 {dimension_numbers = #tpu.dot_dimension_numbers<[1], [0], [0], [1], [0, 0, 1, 1], [], []>} : vector<8x8xbf16>, vector<8x16xbf16>, vector<8x16xf32> -> vector<8x16xf32>
      %75 = arith.addf %68, %74 : vector<8x16xf32>
      %76 = vector.broadcast %1 : vector<1x16xf32> to vector<8x16xf32>
      %77 = arith.addf %75, %76 : vector<8x16xf32>
      %cst_55 = arith.constant 0.000000e+00 : f32
      %78 = vector.broadcast %cst_55 : f32 to vector<8x16xf32>
      %79 = arith.maximumf %77, %78 : vector<8x16xf32>
      %80 = arith.truncf %79 : vector<8x16xf32> to vector<8x16xbf16>
      %c0_56 = arith.constant 0 : index
      %81 = arith.index_cast %arg6 : i32 to index
      %c0_57 = arith.constant 0 : index
      %c0_58 = arith.constant 0 : index
      %82 = vector.load %arg5[%c0_56, %81, %c0_57, %c0_58] : memref<1x8x8x16xbf16, #tpu.memory_space<vmem>>, vector<1x1x8x16xbf16>
      %83 = vector.shape_cast %82 : vector<1x1x8x16xbf16> to vector<8x16xbf16>
      %84 = vector.shape_cast %80 : vector<8x16xbf16> to vector<1x1x8x16xbf16>
      tpu.vector_store %arg5[%c0_56, %81, %c0_57, %c0_58], %84 {strides = array<i32>} : memref<1x8x8x16xbf16, #tpu.memory_space<vmem>>, vector<1x1x8x16xbf16>,
    }
    %c8_i32_12 = arith.constant 8 : i32
    return
  }
  func.func @transform_0(%arg0: i32, %arg1: i32) -> (i32, i32, i32, i32) {
    %c0_i32 = arith.constant 0 : i32
    %c0_i32_0 = arith.constant 0 : i32
    %c0_i32_1 = arith.constant 0 : i32
    %c0_i32_2 = arith.constant 0 : i32
    return %arg0, %c0_i32, %c0_i32_0, %c0_i32_1 : i32, i32, i32, i32
  }
  func.func @transform_1(%arg0: i32, %arg1: i32) -> (i32, i32) {
    %c0_i32 = arith.constant 0 : i32
    %c0_i32_0 = arith.constant 0 : i32
    %c0_i32_1 = arith.constant 0 : i32
    return %c0_i32, %c0_i32_0 : i32, i32
  }
  func.func @transform_2(%arg0: i32, %arg1: i32) -> (i32, i32) {
    %c0_i32 = arith.constant 0 : i32
    %c0_i32_0 = arith.constant 0 : i32
    %c0_i32_1 = arith.constant 0 : i32
    return %c0_i32, %c0_i32_0 : i32, i32
  }
  func.func @transform_3(%arg0: i32, %arg1: i32) -> (i32, i32, i32, i32) {
    %c0_i32 = arith.constant 0 : i32
    %c0_i32_0 = arith.constant 0 : i32
    %c0_i32_1 = arith.constant 0 : i32
    return %arg0, %arg1, %c0_i32, %c0_i32_0 : i32, i32, i32, i32
  }
}

module attributes {stable_mosaic.version = 11 : i64} {
  func.func @_conv_kernel(%arg0: i32, %arg1: i32, %arg2: memref<1x6x6x16xbf16, #tpu.memory_space<vmem>>, %arg3: memref<144x32xbf16, #tpu.memory_space<vmem>>, %arg4: memref<1x32xf32, #tpu.memory_space<vmem>>, %arg5: memref<1x4x4x32xbf16, #tpu.memory_space<vmem>>) attributes {dimension_semantics = [#tpu.dimension_semantics<parallel>, #tpu.dimension_semantics<parallel>], iteration_bounds = array<i64: 2, 1>, scalar_prefetch = 0 : i64, scratch_operands = 0 : i64, tpu.core_type = #tpu.core_type<tc>, window_params = [{transform_indices = @transform_0, window_bounds = array<i64: 1, 6, 6, 16>}, {pipeline_mode = #tpu.pipeline_mode<synchronous>, transform_indices = @transform_1, window_bounds = array<i64: 144, 32>}, {pipeline_mode = #tpu.pipeline_mode<synchronous>, transform_indices = @transform_2, window_bounds = array<i64: 1, 32>}, {transform_indices = @transform_3, window_bounds = array<i64: 1, 4, 4, 32>}]} {
    %c4_i32 = arith.constant 4 : i32
    %0 = arith.muli %arg1, %c4_i32 : i32
    %c0 = arith.constant 0 : index
    %c0_0 = arith.constant 0 : index
    %1 = vector.load %arg4[%c0, %c0_0] : memref<1x32xf32, #tpu.memory_space<vmem>>, vector<1x32xf32>
    %c0_1 = arith.constant 0 : index
    %c0_2 = arith.constant 0 : index
    %2 = vector.load %arg3[%c0_1, %c0_2] : memref<144x32xbf16, #tpu.memory_space<vmem>>, vector<16x32xbf16>
    %c16 = arith.constant 16 : index
    %c0_3 = arith.constant 0 : index
    %3 = vector.load %arg3[%c16, %c0_3] : memref<144x32xbf16, #tpu.memory_space<vmem>>, vector<16x32xbf16>
    %c32 = arith.constant 32 : index
    %c0_4 = arith.constant 0 : index
    %4 = vector.load %arg3[%c32, %c0_4] : memref<144x32xbf16, #tpu.memory_space<vmem>>, vector<16x32xbf16>
    %c48 = arith.constant 48 : index
    %c0_5 = arith.constant 0 : index
    %5 = vector.load %arg3[%c48, %c0_5] : memref<144x32xbf16, #tpu.memory_space<vmem>>, vector<16x32xbf16>
    %c64 = arith.constant 64 : index
    %c0_6 = arith.constant 0 : index
    %6 = vector.load %arg3[%c64, %c0_6] : memref<144x32xbf16, #tpu.memory_space<vmem>>, vector<16x32xbf16>
    %c80 = arith.constant 80 : index
    %c0_7 = arith.constant 0 : index
    %7 = vector.load %arg3[%c80, %c0_7] : memref<144x32xbf16, #tpu.memory_space<vmem>>, vector<16x32xbf16>
    %c96 = arith.constant 96 : index
    %c0_8 = arith.constant 0 : index
    %8 = vector.load %arg3[%c96, %c0_8] : memref<144x32xbf16, #tpu.memory_space<vmem>>, vector<16x32xbf16>
    %c112 = arith.constant 112 : index
    %c0_9 = arith.constant 0 : index
    %9 = vector.load %arg3[%c112, %c0_9] : memref<144x32xbf16, #tpu.memory_space<vmem>>, vector<16x32xbf16>
    %c128 = arith.constant 128 : index
    %c0_10 = arith.constant 0 : index
    %10 = vector.load %arg3[%c128, %c0_10] : memref<144x32xbf16, #tpu.memory_space<vmem>>, vector<16x32xbf16>
    %c0_i32 = arith.constant 0 : i32
    %c4_i32_11 = arith.constant 4 : i32
    %11 = arith.addi %c0_i32, %c4_i32_11 : i32
    %c1_i32 = arith.constant 1 : i32
    scf.for %arg6 = %c0_i32 to %11 step %c1_i32  : i32 {
      %cst = arith.constant 0.000000e+00 : f32
      %12 = vector.broadcast %cst : f32 to vector<4x32xf32>
      %13 = arith.addi %0, %arg6 : i32
      %c0_i32_13 = arith.constant 0 : i32
      %14 = arith.addi %13, %c0_i32_13 : i32
      %c0_14 = arith.constant 0 : index
      %15 = arith.index_cast %14 : i32 to index
      %c0_15 = arith.constant 0 : index
      %c0_16 = arith.constant 0 : index
      %16 = vector.load %arg2[%c0_14, %15, %c0_15, %c0_16] : memref<1x6x6x16xbf16, #tpu.memory_space<vmem>>, vector<1x1x4x16xbf16>
      %17 = vector.shape_cast %16 : vector<1x1x4x16xbf16> to vector<4x16xbf16>
      %cst_17 = arith.constant dense<0.000000e+00> : vector<4x32xf32>
      %18 = tpu.matmul %17, %2, %cst_17 {dimension_numbers = #tpu.dot_dimension_numbers<[1], [0], [0], [1], [0, 0, 1, 1], [], []>} : vector<4x16xbf16>, vector<16x32xbf16>, vector<4x32xf32> -> vector<4x32xf32>
      %19 = arith.addf %12, %18 : vector<4x32xf32>
      %20 = arith.addi %0, %arg6 : i32
      %c0_i32_18 = arith.constant 0 : i32
      %21 = arith.addi %20, %c0_i32_18 : i32
      %c0_19 = arith.constant 0 : index
      %22 = arith.index_cast %21 : i32 to index
      %c1 = arith.constant 1 : index
      %c0_20 = arith.constant 0 : index
      %23 = vector.load %arg2[%c0_19, %22, %c1, %c0_20] : memref<1x6x6x16xbf16, #tpu.memory_space<vmem>>, vector<1x1x4x16xbf16>
      %24 = vector.shape_cast %23 : vector<1x1x4x16xbf16> to vector<4x16xbf16>
      %cst_21 = arith.constant dense<0.000000e+00> : vector<4x32xf32>
      %25 = tpu.matmul %24, %3, %cst_21 {dimension_numbers = #tpu.dot_dimension_numbers<[1], [0], [0], [1], [0, 0, 1, 1], [], []>} : vector<4x16xbf16>, vector<16x32xbf16>, vector<4x32xf32> -> vector<4x32xf32>
      %26 = arith.addf %19, %25 : vector<4x32xf32>
      %27 = arith.addi %0, %arg6 : i32
      %c0_i32_22 = arith.constant 0 : i32
      %28 = arith.addi %27, %c0_i32_22 : i32
      %c0_23 = arith.constant 0 : index
      %29 = arith.index_cast %28 : i32 to index
      %c2 = arith.constant 2 : index
      %c0_24 = arith.constant 0 : index
      %30 = vector.load %arg2[%c0_23, %29, %c2, %c0_24] : memref<1x6x6x16xbf16, #tpu.memory_space<vmem>>, vector<1x1x4x16xbf16>
      %31 = vector.shape_cast %30 : vector<1x1x4x16xbf16> to vector<4x16xbf16>
      %cst_25 = arith.constant dense<0.000000e+00> : vector<4x32xf32>
      %32 = tpu.matmul %31, %4, %cst_25 {dimension_numbers = #tpu.dot_dimension_numbers<[1], [0], [0], [1], [0, 0, 1, 1], [], []>} : vector<4x16xbf16>, vector<16x32xbf16>, vector<4x32xf32> -> vector<4x32xf32>
      %33 = arith.addf %26, %32 : vector<4x32xf32>
      %34 = arith.addi %0, %arg6 : i32
      %c1_i32_26 = arith.constant 1 : i32
      %35 = arith.addi %34, %c1_i32_26 : i32
      %c0_27 = arith.constant 0 : index
      %36 = arith.index_cast %35 : i32 to index
      %c0_28 = arith.constant 0 : index
      %c0_29 = arith.constant 0 : index
      %37 = vector.load %arg2[%c0_27, %36, %c0_28, %c0_29] : memref<1x6x6x16xbf16, #tpu.memory_space<vmem>>, vector<1x1x4x16xbf16>
      %38 = vector.shape_cast %37 : vector<1x1x4x16xbf16> to vector<4x16xbf16>
      %cst_30 = arith.constant dense<0.000000e+00> : vector<4x32xf32>
      %39 = tpu.matmul %38, %5, %cst_30 {dimension_numbers = #tpu.dot_dimension_numbers<[1], [0], [0], [1], [0, 0, 1, 1], [], []>} : vector<4x16xbf16>, vector<16x32xbf16>, vector<4x32xf32> -> vector<4x32xf32>
      %40 = arith.addf %33, %39 : vector<4x32xf32>
      %41 = arith.addi %0, %arg6 : i32
      %c1_i32_31 = arith.constant 1 : i32
      %42 = arith.addi %41, %c1_i32_31 : i32
      %c0_32 = arith.constant 0 : index
      %43 = arith.index_cast %42 : i32 to index
      %c1_33 = arith.constant 1 : index
      %c0_34 = arith.constant 0 : index
      %44 = vector.load %arg2[%c0_32, %43, %c1_33, %c0_34] : memref<1x6x6x16xbf16, #tpu.memory_space<vmem>>, vector<1x1x4x16xbf16>
      %45 = vector.shape_cast %44 : vector<1x1x4x16xbf16> to vector<4x16xbf16>
      %cst_35 = arith.constant dense<0.000000e+00> : vector<4x32xf32>
      %46 = tpu.matmul %45, %6, %cst_35 {dimension_numbers = #tpu.dot_dimension_numbers<[1], [0], [0], [1], [0, 0, 1, 1], [], []>} : vector<4x16xbf16>, vector<16x32xbf16>, vector<4x32xf32> -> vector<4x32xf32>
      %47 = arith.addf %40, %46 : vector<4x32xf32>
      %48 = arith.addi %0, %arg6 : i32
      %c1_i32_36 = arith.constant 1 : i32
      %49 = arith.addi %48, %c1_i32_36 : i32
      %c0_37 = arith.constant 0 : index
      %50 = arith.index_cast %49 : i32 to index
      %c2_38 = arith.constant 2 : index
      %c0_39 = arith.constant 0 : index
      %51 = vector.load %arg2[%c0_37, %50, %c2_38, %c0_39] : memref<1x6x6x16xbf16, #tpu.memory_space<vmem>>, vector<1x1x4x16xbf16>
      %52 = vector.shape_cast %51 : vector<1x1x4x16xbf16> to vector<4x16xbf16>
      %cst_40 = arith.constant dense<0.000000e+00> : vector<4x32xf32>
      %53 = tpu.matmul %52, %7, %cst_40 {dimension_numbers = #tpu.dot_dimension_numbers<[1], [0], [0], [1], [0, 0, 1, 1], [], []>} : vector<4x16xbf16>, vector<16x32xbf16>, vector<4x32xf32> -> vector<4x32xf32>
      %54 = arith.addf %47, %53 : vector<4x32xf32>
      %55 = arith.addi %0, %arg6 : i32
      %c2_i32 = arith.constant 2 : i32
      %56 = arith.addi %55, %c2_i32 : i32
      %c0_41 = arith.constant 0 : index
      %57 = arith.index_cast %56 : i32 to index
      %c0_42 = arith.constant 0 : index
      %c0_43 = arith.constant 0 : index
      %58 = vector.load %arg2[%c0_41, %57, %c0_42, %c0_43] : memref<1x6x6x16xbf16, #tpu.memory_space<vmem>>, vector<1x1x4x16xbf16>
      %59 = vector.shape_cast %58 : vector<1x1x4x16xbf16> to vector<4x16xbf16>
      %cst_44 = arith.constant dense<0.000000e+00> : vector<4x32xf32>
      %60 = tpu.matmul %59, %8, %cst_44 {dimension_numbers = #tpu.dot_dimension_numbers<[1], [0], [0], [1], [0, 0, 1, 1], [], []>} : vector<4x16xbf16>, vector<16x32xbf16>, vector<4x32xf32> -> vector<4x32xf32>
      %61 = arith.addf %54, %60 : vector<4x32xf32>
      %62 = arith.addi %0, %arg6 : i32
      %c2_i32_45 = arith.constant 2 : i32
      %63 = arith.addi %62, %c2_i32_45 : i32
      %c0_46 = arith.constant 0 : index
      %64 = arith.index_cast %63 : i32 to index
      %c1_47 = arith.constant 1 : index
      %c0_48 = arith.constant 0 : index
      %65 = vector.load %arg2[%c0_46, %64, %c1_47, %c0_48] : memref<1x6x6x16xbf16, #tpu.memory_space<vmem>>, vector<1x1x4x16xbf16>
      %66 = vector.shape_cast %65 : vector<1x1x4x16xbf16> to vector<4x16xbf16>
      %cst_49 = arith.constant dense<0.000000e+00> : vector<4x32xf32>
      %67 = tpu.matmul %66, %9, %cst_49 {dimension_numbers = #tpu.dot_dimension_numbers<[1], [0], [0], [1], [0, 0, 1, 1], [], []>} : vector<4x16xbf16>, vector<16x32xbf16>, vector<4x32xf32> -> vector<4x32xf32>
      %68 = arith.addf %61, %67 : vector<4x32xf32>
      %69 = arith.addi %0, %arg6 : i32
      %c2_i32_50 = arith.constant 2 : i32
      %70 = arith.addi %69, %c2_i32_50 : i32
      %c0_51 = arith.constant 0 : index
      %71 = arith.index_cast %70 : i32 to index
      %c2_52 = arith.constant 2 : index
      %c0_53 = arith.constant 0 : index
      %72 = vector.load %arg2[%c0_51, %71, %c2_52, %c0_53] : memref<1x6x6x16xbf16, #tpu.memory_space<vmem>>, vector<1x1x4x16xbf16>
      %73 = vector.shape_cast %72 : vector<1x1x4x16xbf16> to vector<4x16xbf16>
      %cst_54 = arith.constant dense<0.000000e+00> : vector<4x32xf32>
      %74 = tpu.matmul %73, %10, %cst_54 {dimension_numbers = #tpu.dot_dimension_numbers<[1], [0], [0], [1], [0, 0, 1, 1], [], []>} : vector<4x16xbf16>, vector<16x32xbf16>, vector<4x32xf32> -> vector<4x32xf32>
      %75 = arith.addf %68, %74 : vector<4x32xf32>
      %76 = vector.broadcast %1 : vector<1x32xf32> to vector<4x32xf32>
      %77 = arith.addf %75, %76 : vector<4x32xf32>
      %cst_55 = arith.constant 0.000000e+00 : f32
      %78 = vector.broadcast %cst_55 : f32 to vector<4x32xf32>
      %79 = arith.maximumf %77, %78 : vector<4x32xf32>
      %80 = arith.truncf %79 : vector<4x32xf32> to vector<4x32xbf16>
      %c0_56 = arith.constant 0 : index
      %81 = arith.index_cast %arg6 : i32 to index
      %c0_57 = arith.constant 0 : index
      %c0_58 = arith.constant 0 : index
      %82 = vector.load %arg5[%c0_56, %81, %c0_57, %c0_58] : memref<1x4x4x32xbf16, #tpu.memory_space<vmem>>, vector<1x1x4x32xbf16>
      %83 = vector.shape_cast %82 : vector<1x1x4x32xbf16> to vector<4x32xbf16>
      %84 = vector.shape_cast %80 : vector<4x32xbf16> to vector<1x1x4x32xbf16>
      tpu.vector_store %arg5[%c0_56, %81, %c0_57, %c0_58], %84 {strides = array<i32>} : memref<1x4x4x32xbf16, #tpu.memory_space<vmem>>, vector<1x1x4x32xbf16>,
    }
    %c4_i32_12 = arith.constant 4 : i32
    return
  }
  func.func @transform_0(%arg0: i32, %arg1: i32) -> (i32, i32, i32, i32) {
    %c0_i32 = arith.constant 0 : i32
    %c0_i32_0 = arith.constant 0 : i32
    %c0_i32_1 = arith.constant 0 : i32
    %c0_i32_2 = arith.constant 0 : i32
    return %arg0, %c0_i32, %c0_i32_0, %c0_i32_1 : i32, i32, i32, i32
  }
  func.func @transform_1(%arg0: i32, %arg1: i32) -> (i32, i32) {
    %c0_i32 = arith.constant 0 : i32
    %c0_i32_0 = arith.constant 0 : i32
    %c0_i32_1 = arith.constant 0 : i32
    return %c0_i32, %c0_i32_0 : i32, i32
  }
  func.func @transform_2(%arg0: i32, %arg1: i32) -> (i32, i32) {
    %c0_i32 = arith.constant 0 : i32
    %c0_i32_0 = arith.constant 0 : i32
    %c0_i32_1 = arith.constant 0 : i32
    return %c0_i32, %c0_i32_0 : i32, i32
  }
  func.func @transform_3(%arg0: i32, %arg1: i32) -> (i32, i32, i32, i32) {
    %c0_i32 = arith.constant 0 : i32
    %c0_i32_0 = arith.constant 0 : i32
    %c0_i32_1 = arith.constant 0 : i32
    return %arg0, %arg1, %c0_i32, %c0_i32_0 : i32, i32, i32, i32
  }
}

module attributes {stable_mosaic.version = 11 : i64} {
  func.func @_conv_kernel(%arg0: i32, %arg1: i32, %arg2: memref<1x6x6x32xbf16, #tpu.memory_space<vmem>>, %arg3: memref<288x32xbf16, #tpu.memory_space<vmem>>, %arg4: memref<1x32xf32, #tpu.memory_space<vmem>>, %arg5: memref<1x4x4x32xbf16, #tpu.memory_space<vmem>>) attributes {dimension_semantics = [#tpu.dimension_semantics<parallel>, #tpu.dimension_semantics<parallel>], iteration_bounds = array<i64: 2, 1>, scalar_prefetch = 0 : i64, scratch_operands = 0 : i64, tpu.core_type = #tpu.core_type<tc>, window_params = [{transform_indices = @transform_0, window_bounds = array<i64: 1, 6, 6, 32>}, {pipeline_mode = #tpu.pipeline_mode<synchronous>, transform_indices = @transform_1, window_bounds = array<i64: 288, 32>}, {pipeline_mode = #tpu.pipeline_mode<synchronous>, transform_indices = @transform_2, window_bounds = array<i64: 1, 32>}, {transform_indices = @transform_3, window_bounds = array<i64: 1, 4, 4, 32>}]} {
    %c4_i32 = arith.constant 4 : i32
    %0 = arith.muli %arg1, %c4_i32 : i32
    %c0 = arith.constant 0 : index
    %c0_0 = arith.constant 0 : index
    %1 = vector.load %arg4[%c0, %c0_0] : memref<1x32xf32, #tpu.memory_space<vmem>>, vector<1x32xf32>
    %c0_1 = arith.constant 0 : index
    %c0_2 = arith.constant 0 : index
    %2 = vector.load %arg3[%c0_1, %c0_2] : memref<288x32xbf16, #tpu.memory_space<vmem>>, vector<32x32xbf16>
    %c32 = arith.constant 32 : index
    %c0_3 = arith.constant 0 : index
    %3 = vector.load %arg3[%c32, %c0_3] : memref<288x32xbf16, #tpu.memory_space<vmem>>, vector<32x32xbf16>
    %c64 = arith.constant 64 : index
    %c0_4 = arith.constant 0 : index
    %4 = vector.load %arg3[%c64, %c0_4] : memref<288x32xbf16, #tpu.memory_space<vmem>>, vector<32x32xbf16>
    %c96 = arith.constant 96 : index
    %c0_5 = arith.constant 0 : index
    %5 = vector.load %arg3[%c96, %c0_5] : memref<288x32xbf16, #tpu.memory_space<vmem>>, vector<32x32xbf16>
    %c128 = arith.constant 128 : index
    %c0_6 = arith.constant 0 : index
    %6 = vector.load %arg3[%c128, %c0_6] : memref<288x32xbf16, #tpu.memory_space<vmem>>, vector<32x32xbf16>
    %c160 = arith.constant 160 : index
    %c0_7 = arith.constant 0 : index
    %7 = vector.load %arg3[%c160, %c0_7] : memref<288x32xbf16, #tpu.memory_space<vmem>>, vector<32x32xbf16>
    %c192 = arith.constant 192 : index
    %c0_8 = arith.constant 0 : index
    %8 = vector.load %arg3[%c192, %c0_8] : memref<288x32xbf16, #tpu.memory_space<vmem>>, vector<32x32xbf16>
    %c224 = arith.constant 224 : index
    %c0_9 = arith.constant 0 : index
    %9 = vector.load %arg3[%c224, %c0_9] : memref<288x32xbf16, #tpu.memory_space<vmem>>, vector<32x32xbf16>
    %c256 = arith.constant 256 : index
    %c0_10 = arith.constant 0 : index
    %10 = vector.load %arg3[%c256, %c0_10] : memref<288x32xbf16, #tpu.memory_space<vmem>>, vector<32x32xbf16>
    %c0_i32 = arith.constant 0 : i32
    %c4_i32_11 = arith.constant 4 : i32
    %11 = arith.addi %c0_i32, %c4_i32_11 : i32
    %c1_i32 = arith.constant 1 : i32
    scf.for %arg6 = %c0_i32 to %11 step %c1_i32  : i32 {
      %cst = arith.constant 0.000000e+00 : f32
      %12 = vector.broadcast %cst : f32 to vector<4x32xf32>
      %13 = arith.addi %0, %arg6 : i32
      %c0_i32_13 = arith.constant 0 : i32
      %14 = arith.addi %13, %c0_i32_13 : i32
      %c0_14 = arith.constant 0 : index
      %15 = arith.index_cast %14 : i32 to index
      %c0_15 = arith.constant 0 : index
      %c0_16 = arith.constant 0 : index
      %16 = vector.load %arg2[%c0_14, %15, %c0_15, %c0_16] : memref<1x6x6x32xbf16, #tpu.memory_space<vmem>>, vector<1x1x4x32xbf16>
      %17 = vector.shape_cast %16 : vector<1x1x4x32xbf16> to vector<4x32xbf16>
      %cst_17 = arith.constant dense<0.000000e+00> : vector<4x32xf32>
      %18 = tpu.matmul %17, %2, %cst_17 {dimension_numbers = #tpu.dot_dimension_numbers<[1], [0], [0], [1], [0, 0, 1, 1], [], []>} : vector<4x32xbf16>, vector<32x32xbf16>, vector<4x32xf32> -> vector<4x32xf32>
      %19 = arith.addf %12, %18 : vector<4x32xf32>
      %20 = arith.addi %0, %arg6 : i32
      %c0_i32_18 = arith.constant 0 : i32
      %21 = arith.addi %20, %c0_i32_18 : i32
      %c0_19 = arith.constant 0 : index
      %22 = arith.index_cast %21 : i32 to index
      %c1 = arith.constant 1 : index
      %c0_20 = arith.constant 0 : index
      %23 = vector.load %arg2[%c0_19, %22, %c1, %c0_20] : memref<1x6x6x32xbf16, #tpu.memory_space<vmem>>, vector<1x1x4x32xbf16>
      %24 = vector.shape_cast %23 : vector<1x1x4x32xbf16> to vector<4x32xbf16>
      %cst_21 = arith.constant dense<0.000000e+00> : vector<4x32xf32>
      %25 = tpu.matmul %24, %3, %cst_21 {dimension_numbers = #tpu.dot_dimension_numbers<[1], [0], [0], [1], [0, 0, 1, 1], [], []>} : vector<4x32xbf16>, vector<32x32xbf16>, vector<4x32xf32> -> vector<4x32xf32>
      %26 = arith.addf %19, %25 : vector<4x32xf32>
      %27 = arith.addi %0, %arg6 : i32
      %c0_i32_22 = arith.constant 0 : i32
      %28 = arith.addi %27, %c0_i32_22 : i32
      %c0_23 = arith.constant 0 : index
      %29 = arith.index_cast %28 : i32 to index
      %c2 = arith.constant 2 : index
      %c0_24 = arith.constant 0 : index
      %30 = vector.load %arg2[%c0_23, %29, %c2, %c0_24] : memref<1x6x6x32xbf16, #tpu.memory_space<vmem>>, vector<1x1x4x32xbf16>
      %31 = vector.shape_cast %30 : vector<1x1x4x32xbf16> to vector<4x32xbf16>
      %cst_25 = arith.constant dense<0.000000e+00> : vector<4x32xf32>
      %32 = tpu.matmul %31, %4, %cst_25 {dimension_numbers = #tpu.dot_dimension_numbers<[1], [0], [0], [1], [0, 0, 1, 1], [], []>} : vector<4x32xbf16>, vector<32x32xbf16>, vector<4x32xf32> -> vector<4x32xf32>
      %33 = arith.addf %26, %32 : vector<4x32xf32>
      %34 = arith.addi %0, %arg6 : i32
      %c1_i32_26 = arith.constant 1 : i32
      %35 = arith.addi %34, %c1_i32_26 : i32
      %c0_27 = arith.constant 0 : index
      %36 = arith.index_cast %35 : i32 to index
      %c0_28 = arith.constant 0 : index
      %c0_29 = arith.constant 0 : index
      %37 = vector.load %arg2[%c0_27, %36, %c0_28, %c0_29] : memref<1x6x6x32xbf16, #tpu.memory_space<vmem>>, vector<1x1x4x32xbf16>
      %38 = vector.shape_cast %37 : vector<1x1x4x32xbf16> to vector<4x32xbf16>
      %cst_30 = arith.constant dense<0.000000e+00> : vector<4x32xf32>
      %39 = tpu.matmul %38, %5, %cst_30 {dimension_numbers = #tpu.dot_dimension_numbers<[1], [0], [0], [1], [0, 0, 1, 1], [], []>} : vector<4x32xbf16>, vector<32x32xbf16>, vector<4x32xf32> -> vector<4x32xf32>
      %40 = arith.addf %33, %39 : vector<4x32xf32>
      %41 = arith.addi %0, %arg6 : i32
      %c1_i32_31 = arith.constant 1 : i32
      %42 = arith.addi %41, %c1_i32_31 : i32
      %c0_32 = arith.constant 0 : index
      %43 = arith.index_cast %42 : i32 to index
      %c1_33 = arith.constant 1 : index
      %c0_34 = arith.constant 0 : index
      %44 = vector.load %arg2[%c0_32, %43, %c1_33, %c0_34] : memref<1x6x6x32xbf16, #tpu.memory_space<vmem>>, vector<1x1x4x32xbf16>
      %45 = vector.shape_cast %44 : vector<1x1x4x32xbf16> to vector<4x32xbf16>
      %cst_35 = arith.constant dense<0.000000e+00> : vector<4x32xf32>
      %46 = tpu.matmul %45, %6, %cst_35 {dimension_numbers = #tpu.dot_dimension_numbers<[1], [0], [0], [1], [0, 0, 1, 1], [], []>} : vector<4x32xbf16>, vector<32x32xbf16>, vector<4x32xf32> -> vector<4x32xf32>
      %47 = arith.addf %40, %46 : vector<4x32xf32>
      %48 = arith.addi %0, %arg6 : i32
      %c1_i32_36 = arith.constant 1 : i32
      %49 = arith.addi %48, %c1_i32_36 : i32
      %c0_37 = arith.constant 0 : index
      %50 = arith.index_cast %49 : i32 to index
      %c2_38 = arith.constant 2 : index
      %c0_39 = arith.constant 0 : index
      %51 = vector.load %arg2[%c0_37, %50, %c2_38, %c0_39] : memref<1x6x6x32xbf16, #tpu.memory_space<vmem>>, vector<1x1x4x32xbf16>
      %52 = vector.shape_cast %51 : vector<1x1x4x32xbf16> to vector<4x32xbf16>
      %cst_40 = arith.constant dense<0.000000e+00> : vector<4x32xf32>
      %53 = tpu.matmul %52, %7, %cst_40 {dimension_numbers = #tpu.dot_dimension_numbers<[1], [0], [0], [1], [0, 0, 1, 1], [], []>} : vector<4x32xbf16>, vector<32x32xbf16>, vector<4x32xf32> -> vector<4x32xf32>
      %54 = arith.addf %47, %53 : vector<4x32xf32>
      %55 = arith.addi %0, %arg6 : i32
      %c2_i32 = arith.constant 2 : i32
      %56 = arith.addi %55, %c2_i32 : i32
      %c0_41 = arith.constant 0 : index
      %57 = arith.index_cast %56 : i32 to index
      %c0_42 = arith.constant 0 : index
      %c0_43 = arith.constant 0 : index
      %58 = vector.load %arg2[%c0_41, %57, %c0_42, %c0_43] : memref<1x6x6x32xbf16, #tpu.memory_space<vmem>>, vector<1x1x4x32xbf16>
      %59 = vector.shape_cast %58 : vector<1x1x4x32xbf16> to vector<4x32xbf16>
      %cst_44 = arith.constant dense<0.000000e+00> : vector<4x32xf32>
      %60 = tpu.matmul %59, %8, %cst_44 {dimension_numbers = #tpu.dot_dimension_numbers<[1], [0], [0], [1], [0, 0, 1, 1], [], []>} : vector<4x32xbf16>, vector<32x32xbf16>, vector<4x32xf32> -> vector<4x32xf32>
      %61 = arith.addf %54, %60 : vector<4x32xf32>
      %62 = arith.addi %0, %arg6 : i32
      %c2_i32_45 = arith.constant 2 : i32
      %63 = arith.addi %62, %c2_i32_45 : i32
      %c0_46 = arith.constant 0 : index
      %64 = arith.index_cast %63 : i32 to index
      %c1_47 = arith.constant 1 : index
      %c0_48 = arith.constant 0 : index
      %65 = vector.load %arg2[%c0_46, %64, %c1_47, %c0_48] : memref<1x6x6x32xbf16, #tpu.memory_space<vmem>>, vector<1x1x4x32xbf16>
      %66 = vector.shape_cast %65 : vector<1x1x4x32xbf16> to vector<4x32xbf16>
      %cst_49 = arith.constant dense<0.000000e+00> : vector<4x32xf32>
      %67 = tpu.matmul %66, %9, %cst_49 {dimension_numbers = #tpu.dot_dimension_numbers<[1], [0], [0], [1], [0, 0, 1, 1], [], []>} : vector<4x32xbf16>, vector<32x32xbf16>, vector<4x32xf32> -> vector<4x32xf32>
      %68 = arith.addf %61, %67 : vector<4x32xf32>
      %69 = arith.addi %0, %arg6 : i32
      %c2_i32_50 = arith.constant 2 : i32
      %70 = arith.addi %69, %c2_i32_50 : i32
      %c0_51 = arith.constant 0 : index
      %71 = arith.index_cast %70 : i32 to index
      %c2_52 = arith.constant 2 : index
      %c0_53 = arith.constant 0 : index
      %72 = vector.load %arg2[%c0_51, %71, %c2_52, %c0_53] : memref<1x6x6x32xbf16, #tpu.memory_space<vmem>>, vector<1x1x4x32xbf16>
      %73 = vector.shape_cast %72 : vector<1x1x4x32xbf16> to vector<4x32xbf16>
      %cst_54 = arith.constant dense<0.000000e+00> : vector<4x32xf32>
      %74 = tpu.matmul %73, %10, %cst_54 {dimension_numbers = #tpu.dot_dimension_numbers<[1], [0], [0], [1], [0, 0, 1, 1], [], []>} : vector<4x32xbf16>, vector<32x32xbf16>, vector<4x32xf32> -> vector<4x32xf32>
      %75 = arith.addf %68, %74 : vector<4x32xf32>
      %76 = vector.broadcast %1 : vector<1x32xf32> to vector<4x32xf32>
      %77 = arith.addf %75, %76 : vector<4x32xf32>
      %cst_55 = arith.constant 0.000000e+00 : f32
      %78 = vector.broadcast %cst_55 : f32 to vector<4x32xf32>
      %79 = arith.maximumf %77, %78 : vector<4x32xf32>
      %80 = arith.truncf %79 : vector<4x32xf32> to vector<4x32xbf16>
      %c0_56 = arith.constant 0 : index
      %81 = arith.index_cast %arg6 : i32 to index
      %c0_57 = arith.constant 0 : index
      %c0_58 = arith.constant 0 : index
      %82 = vector.load %arg5[%c0_56, %81, %c0_57, %c0_58] : memref<1x4x4x32xbf16, #tpu.memory_space<vmem>>, vector<1x1x4x32xbf16>
      %83 = vector.shape_cast %82 : vector<1x1x4x32xbf16> to vector<4x32xbf16>
      %84 = vector.shape_cast %80 : vector<4x32xbf16> to vector<1x1x4x32xbf16>
      tpu.vector_store %arg5[%c0_56, %81, %c0_57, %c0_58], %84 {strides = array<i32>} : memref<1x4x4x32xbf16, #tpu.memory_space<vmem>>, vector<1x1x4x32xbf16>,
    }
    %c4_i32_12 = arith.constant 4 : i32
    return
  }
  func.func @transform_0(%arg0: i32, %arg1: i32) -> (i32, i32, i32, i32) {
    %c0_i32 = arith.constant 0 : i32
    %c0_i32_0 = arith.constant 0 : i32
    %c0_i32_1 = arith.constant 0 : i32
    %c0_i32_2 = arith.constant 0 : i32
    return %arg0, %c0_i32, %c0_i32_0, %c0_i32_1 : i32, i32, i32, i32
  }
  func.func @transform_1(%arg0: i32, %arg1: i32) -> (i32, i32) {
    %c0_i32 = arith.constant 0 : i32
    %c0_i32_0 = arith.constant 0 : i32
    %c0_i32_1 = arith.constant 0 : i32
    return %c0_i32, %c0_i32_0 : i32, i32
  }
  func.func @transform_2(%arg0: i32, %arg1: i32) -> (i32, i32) {
    %c0_i32 = arith.constant 0 : i32
    %c0_i32_0 = arith.constant 0 : i32
    %c0_i32_1 = arith.constant 0 : i32
    return %c0_i32, %c0_i32_0 : i32, i32
  }
  func.func @transform_3(%arg0: i32, %arg1: i32) -> (i32, i32, i32, i32) {
    %c0_i32 = arith.constant 0 : i32
    %c0_i32_0 = arith.constant 0 : i32
    %c0_i32_1 = arith.constant 0 : i32
    return %arg0, %arg1, %c0_i32, %c0_i32_0 : i32, i32, i32, i32
  }
}

module attributes {stable_mosaic.version = 11 : i64} {
  func.func @_conv_kernel(%arg0: i32, %arg1: i32, %arg2: memref<1x5x5x32xbf16, #tpu.memory_space<vmem>>, %arg3: memref<128x64xbf16, #tpu.memory_space<vmem>>, %arg4: memref<1x64xf32, #tpu.memory_space<vmem>>, %arg5: memref<1x4x4x64xbf16, #tpu.memory_space<vmem>>) attributes {dimension_semantics = [#tpu.dimension_semantics<parallel>, #tpu.dimension_semantics<parallel>], iteration_bounds = array<i64: 2, 1>, scalar_prefetch = 0 : i64, scratch_operands = 0 : i64, tpu.core_type = #tpu.core_type<tc>, window_params = [{transform_indices = @transform_0, window_bounds = array<i64: 1, 5, 5, 32>}, {pipeline_mode = #tpu.pipeline_mode<synchronous>, transform_indices = @transform_1, window_bounds = array<i64: 128, 64>}, {pipeline_mode = #tpu.pipeline_mode<synchronous>, transform_indices = @transform_2, window_bounds = array<i64: 1, 64>}, {transform_indices = @transform_3, window_bounds = array<i64: 1, 4, 4, 64>}]} {
    %c4_i32 = arith.constant 4 : i32
    %0 = arith.muli %arg1, %c4_i32 : i32
    %c0 = arith.constant 0 : index
    %c0_0 = arith.constant 0 : index
    %1 = vector.load %arg4[%c0, %c0_0] : memref<1x64xf32, #tpu.memory_space<vmem>>, vector<1x64xf32>
    %c0_1 = arith.constant 0 : index
    %c0_2 = arith.constant 0 : index
    %2 = vector.load %arg3[%c0_1, %c0_2] : memref<128x64xbf16, #tpu.memory_space<vmem>>, vector<32x64xbf16>
    %c32 = arith.constant 32 : index
    %c0_3 = arith.constant 0 : index
    %3 = vector.load %arg3[%c32, %c0_3] : memref<128x64xbf16, #tpu.memory_space<vmem>>, vector<32x64xbf16>
    %c64 = arith.constant 64 : index
    %c0_4 = arith.constant 0 : index
    %4 = vector.load %arg3[%c64, %c0_4] : memref<128x64xbf16, #tpu.memory_space<vmem>>, vector<32x64xbf16>
    %c96 = arith.constant 96 : index
    %c0_5 = arith.constant 0 : index
    %5 = vector.load %arg3[%c96, %c0_5] : memref<128x64xbf16, #tpu.memory_space<vmem>>, vector<32x64xbf16>
    %c0_i32 = arith.constant 0 : i32
    %c4_i32_6 = arith.constant 4 : i32
    %6 = arith.addi %c0_i32, %c4_i32_6 : i32
    %c1_i32 = arith.constant 1 : i32
    scf.for %arg6 = %c0_i32 to %6 step %c1_i32  : i32 {
      %cst = arith.constant 0.000000e+00 : f32
      %7 = vector.broadcast %cst : f32 to vector<4x64xf32>
      %8 = arith.addi %0, %arg6 : i32
      %c0_i32_8 = arith.constant 0 : i32
      %9 = arith.addi %8, %c0_i32_8 : i32
      %c0_9 = arith.constant 0 : index
      %10 = arith.index_cast %9 : i32 to index
      %c0_10 = arith.constant 0 : index
      %c0_11 = arith.constant 0 : index
      %11 = vector.load %arg2[%c0_9, %10, %c0_10, %c0_11] : memref<1x5x5x32xbf16, #tpu.memory_space<vmem>>, vector<1x1x4x32xbf16>
      %12 = vector.shape_cast %11 : vector<1x1x4x32xbf16> to vector<4x32xbf16>
      %cst_12 = arith.constant dense<0.000000e+00> : vector<4x64xf32>
      %13 = tpu.matmul %12, %2, %cst_12 {dimension_numbers = #tpu.dot_dimension_numbers<[1], [0], [0], [1], [0, 0, 1, 1], [], []>} : vector<4x32xbf16>, vector<32x64xbf16>, vector<4x64xf32> -> vector<4x64xf32>
      %14 = arith.addf %7, %13 : vector<4x64xf32>
      %15 = arith.addi %0, %arg6 : i32
      %c0_i32_13 = arith.constant 0 : i32
      %16 = arith.addi %15, %c0_i32_13 : i32
      %c0_14 = arith.constant 0 : index
      %17 = arith.index_cast %16 : i32 to index
      %c1 = arith.constant 1 : index
      %c0_15 = arith.constant 0 : index
      %18 = vector.load %arg2[%c0_14, %17, %c1, %c0_15] : memref<1x5x5x32xbf16, #tpu.memory_space<vmem>>, vector<1x1x4x32xbf16>
      %19 = vector.shape_cast %18 : vector<1x1x4x32xbf16> to vector<4x32xbf16>
      %cst_16 = arith.constant dense<0.000000e+00> : vector<4x64xf32>
      %20 = tpu.matmul %19, %3, %cst_16 {dimension_numbers = #tpu.dot_dimension_numbers<[1], [0], [0], [1], [0, 0, 1, 1], [], []>} : vector<4x32xbf16>, vector<32x64xbf16>, vector<4x64xf32> -> vector<4x64xf32>
      %21 = arith.addf %14, %20 : vector<4x64xf32>
      %22 = arith.addi %0, %arg6 : i32
      %c1_i32_17 = arith.constant 1 : i32
      %23 = arith.addi %22, %c1_i32_17 : i32
      %c0_18 = arith.constant 0 : index
      %24 = arith.index_cast %23 : i32 to index
      %c0_19 = arith.constant 0 : index
      %c0_20 = arith.constant 0 : index
      %25 = vector.load %arg2[%c0_18, %24, %c0_19, %c0_20] : memref<1x5x5x32xbf16, #tpu.memory_space<vmem>>, vector<1x1x4x32xbf16>
      %26 = vector.shape_cast %25 : vector<1x1x4x32xbf16> to vector<4x32xbf16>
      %cst_21 = arith.constant dense<0.000000e+00> : vector<4x64xf32>
      %27 = tpu.matmul %26, %4, %cst_21 {dimension_numbers = #tpu.dot_dimension_numbers<[1], [0], [0], [1], [0, 0, 1, 1], [], []>} : vector<4x32xbf16>, vector<32x64xbf16>, vector<4x64xf32> -> vector<4x64xf32>
      %28 = arith.addf %21, %27 : vector<4x64xf32>
      %29 = arith.addi %0, %arg6 : i32
      %c1_i32_22 = arith.constant 1 : i32
      %30 = arith.addi %29, %c1_i32_22 : i32
      %c0_23 = arith.constant 0 : index
      %31 = arith.index_cast %30 : i32 to index
      %c1_24 = arith.constant 1 : index
      %c0_25 = arith.constant 0 : index
      %32 = vector.load %arg2[%c0_23, %31, %c1_24, %c0_25] : memref<1x5x5x32xbf16, #tpu.memory_space<vmem>>, vector<1x1x4x32xbf16>
      %33 = vector.shape_cast %32 : vector<1x1x4x32xbf16> to vector<4x32xbf16>
      %cst_26 = arith.constant dense<0.000000e+00> : vector<4x64xf32>
      %34 = tpu.matmul %33, %5, %cst_26 {dimension_numbers = #tpu.dot_dimension_numbers<[1], [0], [0], [1], [0, 0, 1, 1], [], []>} : vector<4x32xbf16>, vector<32x64xbf16>, vector<4x64xf32> -> vector<4x64xf32>
      %35 = arith.addf %28, %34 : vector<4x64xf32>
      %36 = vector.broadcast %1 : vector<1x64xf32> to vector<4x64xf32>
      %37 = arith.addf %35, %36 : vector<4x64xf32>
      %cst_27 = arith.constant 0.000000e+00 : f32
      %38 = vector.broadcast %cst_27 : f32 to vector<4x64xf32>
      %39 = arith.maximumf %37, %38 : vector<4x64xf32>
      %40 = arith.truncf %39 : vector<4x64xf32> to vector<4x64xbf16>
      %c0_28 = arith.constant 0 : index
      %41 = arith.index_cast %arg6 : i32 to index
      %c0_29 = arith.constant 0 : index
      %c0_30 = arith.constant 0 : index
      %42 = vector.load %arg5[%c0_28, %41, %c0_29, %c0_30] : memref<1x4x4x64xbf16, #tpu.memory_space<vmem>>, vector<1x1x4x64xbf16>
      %43 = vector.shape_cast %42 : vector<1x1x4x64xbf16> to vector<4x64xbf16>
      %44 = vector.shape_cast %40 : vector<4x64xbf16> to vector<1x1x4x64xbf16>
      tpu.vector_store %arg5[%c0_28, %41, %c0_29, %c0_30], %44 {strides = array<i32>} : memref<1x4x4x64xbf16, #tpu.memory_space<vmem>>, vector<1x1x4x64xbf16>,
    }
    %c4_i32_7 = arith.constant 4 : i32
    return
  }
  func.func @transform_0(%arg0: i32, %arg1: i32) -> (i32, i32, i32, i32) {
    %c0_i32 = arith.constant 0 : i32
    %c0_i32_0 = arith.constant 0 : i32
    %c0_i32_1 = arith.constant 0 : i32
    %c0_i32_2 = arith.constant 0 : i32
    return %arg0, %c0_i32, %c0_i32_0, %c0_i32_1 : i32, i32, i32, i32
  }
  func.func @transform_1(%arg0: i32, %arg1: i32) -> (i32, i32) {
    %c0_i32 = arith.constant 0 : i32
    %c0_i32_0 = arith.constant 0 : i32
    %c0_i32_1 = arith.constant 0 : i32
    return %c0_i32, %c0_i32_0 : i32, i32
  }
  func.func @transform_2(%arg0: i32, %arg1: i32) -> (i32, i32) {
    %c0_i32 = arith.constant 0 : i32
    %c0_i32_0 = arith.constant 0 : i32
    %c0_i32_1 = arith.constant 0 : i32
    return %c0_i32, %c0_i32_0 : i32, i32
  }
  func.func @transform_3(%arg0: i32, %arg1: i32) -> (i32, i32, i32, i32) {
    %c0_i32 = arith.constant 0 : i32
    %c0_i32_0 = arith.constant 0 : i32
    %c0_i32_1 = arith.constant 0 : i32
    return %arg0, %arg1, %c0_i32, %c0_i32_0 : i32, i32, i32, i32
  }
}

module attributes {stable_mosaic.version = 11 : i64} {
  func.func @_conv_kernel(%arg0: i32, %arg1: i32, %arg2: memref<1x10x10x16xbf16, #tpu.memory_space<vmem>>, %arg3: memref<144x16xbf16, #tpu.memory_space<vmem>>, %arg4: memref<1x16xf32, #tpu.memory_space<vmem>>, %arg5: memref<1x8x8x16xbf16, #tpu.memory_space<vmem>>) attributes {dimension_semantics = [#tpu.dimension_semantics<parallel>, #tpu.dimension_semantics<parallel>], iteration_bounds = array<i64: 2, 1>, scalar_prefetch = 0 : i64, scratch_operands = 0 : i64, tpu.core_type = #tpu.core_type<tc>, window_params = [{transform_indices = @transform_0, window_bounds = array<i64: 1, 10, 10, 16>}, {pipeline_mode = #tpu.pipeline_mode<synchronous>, transform_indices = @transform_1, window_bounds = array<i64: 144, 16>}, {pipeline_mode = #tpu.pipeline_mode<synchronous>, transform_indices = @transform_2, window_bounds = array<i64: 1, 16>}, {transform_indices = @transform_3, window_bounds = array<i64: 1, 8, 8, 16>}]} {
    %c8_i32 = arith.constant 8 : i32
    %0 = arith.muli %arg1, %c8_i32 : i32
    %c0 = arith.constant 0 : index
    %c0_0 = arith.constant 0 : index
    %1 = vector.load %arg4[%c0, %c0_0] : memref<1x16xf32, #tpu.memory_space<vmem>>, vector<1x16xf32>
    %c0_1 = arith.constant 0 : index
    %c0_2 = arith.constant 0 : index
    %2 = vector.load %arg3[%c0_1, %c0_2] : memref<144x16xbf16, #tpu.memory_space<vmem>>, vector<16x16xbf16>
    %c16 = arith.constant 16 : index
    %c0_3 = arith.constant 0 : index
    %3 = vector.load %arg3[%c16, %c0_3] : memref<144x16xbf16, #tpu.memory_space<vmem>>, vector<16x16xbf16>
    %c32 = arith.constant 32 : index
    %c0_4 = arith.constant 0 : index
    %4 = vector.load %arg3[%c32, %c0_4] : memref<144x16xbf16, #tpu.memory_space<vmem>>, vector<16x16xbf16>
    %c48 = arith.constant 48 : index
    %c0_5 = arith.constant 0 : index
    %5 = vector.load %arg3[%c48, %c0_5] : memref<144x16xbf16, #tpu.memory_space<vmem>>, vector<16x16xbf16>
    %c64 = arith.constant 64 : index
    %c0_6 = arith.constant 0 : index
    %6 = vector.load %arg3[%c64, %c0_6] : memref<144x16xbf16, #tpu.memory_space<vmem>>, vector<16x16xbf16>
    %c80 = arith.constant 80 : index
    %c0_7 = arith.constant 0 : index
    %7 = vector.load %arg3[%c80, %c0_7] : memref<144x16xbf16, #tpu.memory_space<vmem>>, vector<16x16xbf16>
    %c96 = arith.constant 96 : index
    %c0_8 = arith.constant 0 : index
    %8 = vector.load %arg3[%c96, %c0_8] : memref<144x16xbf16, #tpu.memory_space<vmem>>, vector<16x16xbf16>
    %c112 = arith.constant 112 : index
    %c0_9 = arith.constant 0 : index
    %9 = vector.load %arg3[%c112, %c0_9] : memref<144x16xbf16, #tpu.memory_space<vmem>>, vector<16x16xbf16>
    %c128 = arith.constant 128 : index
    %c0_10 = arith.constant 0 : index
    %10 = vector.load %arg3[%c128, %c0_10] : memref<144x16xbf16, #tpu.memory_space<vmem>>, vector<16x16xbf16>
    %c0_i32 = arith.constant 0 : i32
    %c8_i32_11 = arith.constant 8 : i32
    %11 = arith.addi %c0_i32, %c8_i32_11 : i32
    %c1_i32 = arith.constant 1 : i32
    scf.for %arg6 = %c0_i32 to %11 step %c1_i32  : i32 {
      %cst = arith.constant 0.000000e+00 : f32
      %12 = vector.broadcast %cst : f32 to vector<8x16xf32>
      %13 = arith.addi %0, %arg6 : i32
      %c0_i32_13 = arith.constant 0 : i32
      %14 = arith.addi %13, %c0_i32_13 : i32
      %c0_14 = arith.constant 0 : index
      %15 = arith.index_cast %14 : i32 to index
      %c0_15 = arith.constant 0 : index
      %c0_16 = arith.constant 0 : index
      %16 = vector.load %arg2[%c0_14, %15, %c0_15, %c0_16] : memref<1x10x10x16xbf16, #tpu.memory_space<vmem>>, vector<1x1x8x16xbf16>
      %17 = vector.shape_cast %16 : vector<1x1x8x16xbf16> to vector<8x16xbf16>
      %cst_17 = arith.constant dense<0.000000e+00> : vector<8x16xf32>
      %18 = tpu.matmul %17, %2, %cst_17 {dimension_numbers = #tpu.dot_dimension_numbers<[1], [0], [0], [1], [0, 0, 1, 1], [], []>} : vector<8x16xbf16>, vector<16x16xbf16>, vector<8x16xf32> -> vector<8x16xf32>
      %19 = arith.addf %12, %18 : vector<8x16xf32>
      %20 = arith.addi %0, %arg6 : i32
      %c0_i32_18 = arith.constant 0 : i32
      %21 = arith.addi %20, %c0_i32_18 : i32
      %c0_19 = arith.constant 0 : index
      %22 = arith.index_cast %21 : i32 to index
      %c1 = arith.constant 1 : index
      %c0_20 = arith.constant 0 : index
      %23 = vector.load %arg2[%c0_19, %22, %c1, %c0_20] : memref<1x10x10x16xbf16, #tpu.memory_space<vmem>>, vector<1x1x8x16xbf16>
      %24 = vector.shape_cast %23 : vector<1x1x8x16xbf16> to vector<8x16xbf16>
      %cst_21 = arith.constant dense<0.000000e+00> : vector<8x16xf32>
      %25 = tpu.matmul %24, %3, %cst_21 {dimension_numbers = #tpu.dot_dimension_numbers<[1], [0], [0], [1], [0, 0, 1, 1], [], []>} : vector<8x16xbf16>, vector<16x16xbf16>, vector<8x16xf32> -> vector<8x16xf32>
      %26 = arith.addf %19, %25 : vector<8x16xf32>
      %27 = arith.addi %0, %arg6 : i32
      %c0_i32_22 = arith.constant 0 : i32
      %28 = arith.addi %27, %c0_i32_22 : i32
      %c0_23 = arith.constant 0 : index
      %29 = arith.index_cast %28 : i32 to index
      %c2 = arith.constant 2 : index
      %c0_24 = arith.constant 0 : index
      %30 = vector.load %arg2[%c0_23, %29, %c2, %c0_24] : memref<1x10x10x16xbf16, #tpu.memory_space<vmem>>, vector<1x1x8x16xbf16>
      %31 = vector.shape_cast %30 : vector<1x1x8x16xbf16> to vector<8x16xbf16>
      %cst_25 = arith.constant dense<0.000000e+00> : vector<8x16xf32>
      %32 = tpu.matmul %31, %4, %cst_25 {dimension_numbers = #tpu.dot_dimension_numbers<[1], [0], [0], [1], [0, 0, 1, 1], [], []>} : vector<8x16xbf16>, vector<16x16xbf16>, vector<8x16xf32> -> vector<8x16xf32>
      %33 = arith.addf %26, %32 : vector<8x16xf32>
      %34 = arith.addi %0, %arg6 : i32
      %c1_i32_26 = arith.constant 1 : i32
      %35 = arith.addi %34, %c1_i32_26 : i32
      %c0_27 = arith.constant 0 : index
      %36 = arith.index_cast %35 : i32 to index
      %c0_28 = arith.constant 0 : index
      %c0_29 = arith.constant 0 : index
      %37 = vector.load %arg2[%c0_27, %36, %c0_28, %c0_29] : memref<1x10x10x16xbf16, #tpu.memory_space<vmem>>, vector<1x1x8x16xbf16>
      %38 = vector.shape_cast %37 : vector<1x1x8x16xbf16> to vector<8x16xbf16>
      %cst_30 = arith.constant dense<0.000000e+00> : vector<8x16xf32>
      %39 = tpu.matmul %38, %5, %cst_30 {dimension_numbers = #tpu.dot_dimension_numbers<[1], [0], [0], [1], [0, 0, 1, 1], [], []>} : vector<8x16xbf16>, vector<16x16xbf16>, vector<8x16xf32> -> vector<8x16xf32>
      %40 = arith.addf %33, %39 : vector<8x16xf32>
      %41 = arith.addi %0, %arg6 : i32
      %c1_i32_31 = arith.constant 1 : i32
      %42 = arith.addi %41, %c1_i32_31 : i32
      %c0_32 = arith.constant 0 : index
      %43 = arith.index_cast %42 : i32 to index
      %c1_33 = arith.constant 1 : index
      %c0_34 = arith.constant 0 : index
      %44 = vector.load %arg2[%c0_32, %43, %c1_33, %c0_34] : memref<1x10x10x16xbf16, #tpu.memory_space<vmem>>, vector<1x1x8x16xbf16>
      %45 = vector.shape_cast %44 : vector<1x1x8x16xbf16> to vector<8x16xbf16>
      %cst_35 = arith.constant dense<0.000000e+00> : vector<8x16xf32>
      %46 = tpu.matmul %45, %6, %cst_35 {dimension_numbers = #tpu.dot_dimension_numbers<[1], [0], [0], [1], [0, 0, 1, 1], [], []>} : vector<8x16xbf16>, vector<16x16xbf16>, vector<8x16xf32> -> vector<8x16xf32>
      %47 = arith.addf %40, %46 : vector<8x16xf32>
      %48 = arith.addi %0, %arg6 : i32
      %c1_i32_36 = arith.constant 1 : i32
      %49 = arith.addi %48, %c1_i32_36 : i32
      %c0_37 = arith.constant 0 : index
      %50 = arith.index_cast %49 : i32 to index
      %c2_38 = arith.constant 2 : index
      %c0_39 = arith.constant 0 : index
      %51 = vector.load %arg2[%c0_37, %50, %c2_38, %c0_39] : memref<1x10x10x16xbf16, #tpu.memory_space<vmem>>, vector<1x1x8x16xbf16>
      %52 = vector.shape_cast %51 : vector<1x1x8x16xbf16> to vector<8x16xbf16>
      %cst_40 = arith.constant dense<0.000000e+00> : vector<8x16xf32>
      %53 = tpu.matmul %52, %7, %cst_40 {dimension_numbers = #tpu.dot_dimension_numbers<[1], [0], [0], [1], [0, 0, 1, 1], [], []>} : vector<8x16xbf16>, vector<16x16xbf16>, vector<8x16xf32> -> vector<8x16xf32>
      %54 = arith.addf %47, %53 : vector<8x16xf32>
      %55 = arith.addi %0, %arg6 : i32
      %c2_i32 = arith.constant 2 : i32
      %56 = arith.addi %55, %c2_i32 : i32
      %c0_41 = arith.constant 0 : index
      %57 = arith.index_cast %56 : i32 to index
      %c0_42 = arith.constant 0 : index
      %c0_43 = arith.constant 0 : index
      %58 = vector.load %arg2[%c0_41, %57, %c0_42, %c0_43] : memref<1x10x10x16xbf16, #tpu.memory_space<vmem>>, vector<1x1x8x16xbf16>
      %59 = vector.shape_cast %58 : vector<1x1x8x16xbf16> to vector<8x16xbf16>
      %cst_44 = arith.constant dense<0.000000e+00> : vector<8x16xf32>
      %60 = tpu.matmul %59, %8, %cst_44 {dimension_numbers = #tpu.dot_dimension_numbers<[1], [0], [0], [1], [0, 0, 1, 1], [], []>} : vector<8x16xbf16>, vector<16x16xbf16>, vector<8x16xf32> -> vector<8x16xf32>
      %61 = arith.addf %54, %60 : vector<8x16xf32>
      %62 = arith.addi %0, %arg6 : i32
      %c2_i32_45 = arith.constant 2 : i32
      %63 = arith.addi %62, %c2_i32_45 : i32
      %c0_46 = arith.constant 0 : index
      %64 = arith.index_cast %63 : i32 to index
      %c1_47 = arith.constant 1 : index
      %c0_48 = arith.constant 0 : index
      %65 = vector.load %arg2[%c0_46, %64, %c1_47, %c0_48] : memref<1x10x10x16xbf16, #tpu.memory_space<vmem>>, vector<1x1x8x16xbf16>
      %66 = vector.shape_cast %65 : vector<1x1x8x16xbf16> to vector<8x16xbf16>
      %cst_49 = arith.constant dense<0.000000e+00> : vector<8x16xf32>
      %67 = tpu.matmul %66, %9, %cst_49 {dimension_numbers = #tpu.dot_dimension_numbers<[1], [0], [0], [1], [0, 0, 1, 1], [], []>} : vector<8x16xbf16>, vector<16x16xbf16>, vector<8x16xf32> -> vector<8x16xf32>
      %68 = arith.addf %61, %67 : vector<8x16xf32>
      %69 = arith.addi %0, %arg6 : i32
      %c2_i32_50 = arith.constant 2 : i32
      %70 = arith.addi %69, %c2_i32_50 : i32
      %c0_51 = arith.constant 0 : index
      %71 = arith.index_cast %70 : i32 to index
      %c2_52 = arith.constant 2 : index
      %c0_53 = arith.constant 0 : index
      %72 = vector.load %arg2[%c0_51, %71, %c2_52, %c0_53] : memref<1x10x10x16xbf16, #tpu.memory_space<vmem>>, vector<1x1x8x16xbf16>
      %73 = vector.shape_cast %72 : vector<1x1x8x16xbf16> to vector<8x16xbf16>
      %cst_54 = arith.constant dense<0.000000e+00> : vector<8x16xf32>
      %74 = tpu.matmul %73, %10, %cst_54 {dimension_numbers = #tpu.dot_dimension_numbers<[1], [0], [0], [1], [0, 0, 1, 1], [], []>} : vector<8x16xbf16>, vector<16x16xbf16>, vector<8x16xf32> -> vector<8x16xf32>
      %75 = arith.addf %68, %74 : vector<8x16xf32>
      %76 = vector.broadcast %1 : vector<1x16xf32> to vector<8x16xf32>
      %77 = arith.addf %75, %76 : vector<8x16xf32>
      %cst_55 = arith.constant 0.000000e+00 : f32
      %78 = vector.broadcast %cst_55 : f32 to vector<8x16xf32>
      %79 = arith.maximumf %77, %78 : vector<8x16xf32>
      %80 = arith.truncf %79 : vector<8x16xf32> to vector<8x16xbf16>
      %c0_56 = arith.constant 0 : index
      %81 = arith.index_cast %arg6 : i32 to index
      %c0_57 = arith.constant 0 : index
      %c0_58 = arith.constant 0 : index
      %82 = vector.load %arg5[%c0_56, %81, %c0_57, %c0_58] : memref<1x8x8x16xbf16, #tpu.memory_space<vmem>>, vector<1x1x8x16xbf16>
      %83 = vector.shape_cast %82 : vector<1x1x8x16xbf16> to vector<8x16xbf16>
      %84 = vector.shape_cast %80 : vector<8x16xbf16> to vector<1x1x8x16xbf16>
      tpu.vector_store %arg5[%c0_56, %81, %c0_57, %c0_58], %84 {strides = array<i32>} : memref<1x8x8x16xbf16, #tpu.memory_space<vmem>>, vector<1x1x8x16xbf16>,
    }
    %c8_i32_12 = arith.constant 8 : i32
    return
  }
  func.func @transform_0(%arg0: i32, %arg1: i32) -> (i32, i32, i32, i32) {
    %c0_i32 = arith.constant 0 : i32
    %c0_i32_0 = arith.constant 0 : i32
    %c0_i32_1 = arith.constant 0 : i32
    %c0_i32_2 = arith.constant 0 : i32
    return %arg0, %c0_i32, %c0_i32_0, %c0_i32_1 : i32, i32, i32, i32
  }
  func.func @transform_1(%arg0: i32, %arg1: i32) -> (i32, i32) {
    %c0_i32 = arith.constant 0 : i32
    %c0_i32_0 = arith.constant 0 : i32
    %c0_i32_1 = arith.constant 0 : i32
    return %c0_i32, %c0_i32_0 : i32, i32
  }
  func.func @transform_2(%arg0: i32, %arg1: i32) -> (i32, i32) {
    %c0_i32 = arith.constant 0 : i32
    %c0_i32_0 = arith.constant 0 : i32
    %c0_i32_1 = arith.constant 0 : i32
    return %c0_i32, %c0_i32_0 : i32, i32
  }
  func.func @transform_3(%arg0: i32, %arg1: i32) -> (i32, i32, i32, i32) {
    %c0_i32 = arith.constant 0 : i32
    %c0_i32_0 = arith.constant 0 : i32
    %c0_i32_1 = arith.constant 0 : i32
    return %arg0, %arg1, %c0_i32, %c0_i32_0 : i32, i32, i32, i32
  }
}

module attributes {stable_mosaic.version = 11 : i64} {
  func.func @_conv_kernel(%arg0: i32, %arg1: i32, %arg2: memref<1x9x9x32xbf16, #tpu.memory_space<vmem>>, %arg3: memref<128x32xbf16, #tpu.memory_space<vmem>>, %arg4: memref<1x32xf32, #tpu.memory_space<vmem>>, %arg5: memref<1x8x8x32xbf16, #tpu.memory_space<vmem>>) attributes {dimension_semantics = [#tpu.dimension_semantics<parallel>, #tpu.dimension_semantics<parallel>], iteration_bounds = array<i64: 2, 1>, scalar_prefetch = 0 : i64, scratch_operands = 0 : i64, tpu.core_type = #tpu.core_type<tc>, window_params = [{transform_indices = @transform_0, window_bounds = array<i64: 1, 9, 9, 32>}, {pipeline_mode = #tpu.pipeline_mode<synchronous>, transform_indices = @transform_1, window_bounds = array<i64: 128, 32>}, {pipeline_mode = #tpu.pipeline_mode<synchronous>, transform_indices = @transform_2, window_bounds = array<i64: 1, 32>}, {transform_indices = @transform_3, window_bounds = array<i64: 1, 8, 8, 32>}]} {
    %c8_i32 = arith.constant 8 : i32
    %0 = arith.muli %arg1, %c8_i32 : i32
    %c0 = arith.constant 0 : index
    %c0_0 = arith.constant 0 : index
    %1 = vector.load %arg4[%c0, %c0_0] : memref<1x32xf32, #tpu.memory_space<vmem>>, vector<1x32xf32>
    %c0_1 = arith.constant 0 : index
    %c0_2 = arith.constant 0 : index
    %2 = vector.load %arg3[%c0_1, %c0_2] : memref<128x32xbf16, #tpu.memory_space<vmem>>, vector<32x32xbf16>
    %c32 = arith.constant 32 : index
    %c0_3 = arith.constant 0 : index
    %3 = vector.load %arg3[%c32, %c0_3] : memref<128x32xbf16, #tpu.memory_space<vmem>>, vector<32x32xbf16>
    %c64 = arith.constant 64 : index
    %c0_4 = arith.constant 0 : index
    %4 = vector.load %arg3[%c64, %c0_4] : memref<128x32xbf16, #tpu.memory_space<vmem>>, vector<32x32xbf16>
    %c96 = arith.constant 96 : index
    %c0_5 = arith.constant 0 : index
    %5 = vector.load %arg3[%c96, %c0_5] : memref<128x32xbf16, #tpu.memory_space<vmem>>, vector<32x32xbf16>
    %c0_i32 = arith.constant 0 : i32
    %c8_i32_6 = arith.constant 8 : i32
    %6 = arith.addi %c0_i32, %c8_i32_6 : i32
    %c1_i32 = arith.constant 1 : i32
    scf.for %arg6 = %c0_i32 to %6 step %c1_i32  : i32 {
      %cst = arith.constant 0.000000e+00 : f32
      %7 = vector.broadcast %cst : f32 to vector<8x32xf32>
      %8 = arith.addi %0, %arg6 : i32
      %c0_i32_8 = arith.constant 0 : i32
      %9 = arith.addi %8, %c0_i32_8 : i32
      %c0_9 = arith.constant 0 : index
      %10 = arith.index_cast %9 : i32 to index
      %c0_10 = arith.constant 0 : index
      %c0_11 = arith.constant 0 : index
      %11 = vector.load %arg2[%c0_9, %10, %c0_10, %c0_11] : memref<1x9x9x32xbf16, #tpu.memory_space<vmem>>, vector<1x1x8x32xbf16>
      %12 = vector.shape_cast %11 : vector<1x1x8x32xbf16> to vector<8x32xbf16>
      %cst_12 = arith.constant dense<0.000000e+00> : vector<8x32xf32>
      %13 = tpu.matmul %12, %2, %cst_12 {dimension_numbers = #tpu.dot_dimension_numbers<[1], [0], [0], [1], [0, 0, 1, 1], [], []>} : vector<8x32xbf16>, vector<32x32xbf16>, vector<8x32xf32> -> vector<8x32xf32>
      %14 = arith.addf %7, %13 : vector<8x32xf32>
      %15 = arith.addi %0, %arg6 : i32
      %c0_i32_13 = arith.constant 0 : i32
      %16 = arith.addi %15, %c0_i32_13 : i32
      %c0_14 = arith.constant 0 : index
      %17 = arith.index_cast %16 : i32 to index
      %c1 = arith.constant 1 : index
      %c0_15 = arith.constant 0 : index
      %18 = vector.load %arg2[%c0_14, %17, %c1, %c0_15] : memref<1x9x9x32xbf16, #tpu.memory_space<vmem>>, vector<1x1x8x32xbf16>
      %19 = vector.shape_cast %18 : vector<1x1x8x32xbf16> to vector<8x32xbf16>
      %cst_16 = arith.constant dense<0.000000e+00> : vector<8x32xf32>
      %20 = tpu.matmul %19, %3, %cst_16 {dimension_numbers = #tpu.dot_dimension_numbers<[1], [0], [0], [1], [0, 0, 1, 1], [], []>} : vector<8x32xbf16>, vector<32x32xbf16>, vector<8x32xf32> -> vector<8x32xf32>
      %21 = arith.addf %14, %20 : vector<8x32xf32>
      %22 = arith.addi %0, %arg6 : i32
      %c1_i32_17 = arith.constant 1 : i32
      %23 = arith.addi %22, %c1_i32_17 : i32
      %c0_18 = arith.constant 0 : index
      %24 = arith.index_cast %23 : i32 to index
      %c0_19 = arith.constant 0 : index
      %c0_20 = arith.constant 0 : index
      %25 = vector.load %arg2[%c0_18, %24, %c0_19, %c0_20] : memref<1x9x9x32xbf16, #tpu.memory_space<vmem>>, vector<1x1x8x32xbf16>
      %26 = vector.shape_cast %25 : vector<1x1x8x32xbf16> to vector<8x32xbf16>
      %cst_21 = arith.constant dense<0.000000e+00> : vector<8x32xf32>
      %27 = tpu.matmul %26, %4, %cst_21 {dimension_numbers = #tpu.dot_dimension_numbers<[1], [0], [0], [1], [0, 0, 1, 1], [], []>} : vector<8x32xbf16>, vector<32x32xbf16>, vector<8x32xf32> -> vector<8x32xf32>
      %28 = arith.addf %21, %27 : vector<8x32xf32>
      %29 = arith.addi %0, %arg6 : i32
      %c1_i32_22 = arith.constant 1 : i32
      %30 = arith.addi %29, %c1_i32_22 : i32
      %c0_23 = arith.constant 0 : index
      %31 = arith.index_cast %30 : i32 to index
      %c1_24 = arith.constant 1 : index
      %c0_25 = arith.constant 0 : index
      %32 = vector.load %arg2[%c0_23, %31, %c1_24, %c0_25] : memref<1x9x9x32xbf16, #tpu.memory_space<vmem>>, vector<1x1x8x32xbf16>
      %33 = vector.shape_cast %32 : vector<1x1x8x32xbf16> to vector<8x32xbf16>
      %cst_26 = arith.constant dense<0.000000e+00> : vector<8x32xf32>
      %34 = tpu.matmul %33, %5, %cst_26 {dimension_numbers = #tpu.dot_dimension_numbers<[1], [0], [0], [1], [0, 0, 1, 1], [], []>} : vector<8x32xbf16>, vector<32x32xbf16>, vector<8x32xf32> -> vector<8x32xf32>
      %35 = arith.addf %28, %34 : vector<8x32xf32>
      %36 = vector.broadcast %1 : vector<1x32xf32> to vector<8x32xf32>
      %37 = arith.addf %35, %36 : vector<8x32xf32>
      %cst_27 = arith.constant 0.000000e+00 : f32
      %38 = vector.broadcast %cst_27 : f32 to vector<8x32xf32>
      %39 = arith.maximumf %37, %38 : vector<8x32xf32>
      %40 = arith.truncf %39 : vector<8x32xf32> to vector<8x32xbf16>
      %c0_28 = arith.constant 0 : index
      %41 = arith.index_cast %arg6 : i32 to index
      %c0_29 = arith.constant 0 : index
      %c0_30 = arith.constant 0 : index
      %42 = vector.load %arg5[%c0_28, %41, %c0_29, %c0_30] : memref<1x8x8x32xbf16, #tpu.memory_space<vmem>>, vector<1x1x8x32xbf16>
      %43 = vector.shape_cast %42 : vector<1x1x8x32xbf16> to vector<8x32xbf16>
      %44 = vector.shape_cast %40 : vector<8x32xbf16> to vector<1x1x8x32xbf16>
      tpu.vector_store %arg5[%c0_28, %41, %c0_29, %c0_30], %44 {strides = array<i32>} : memref<1x8x8x32xbf16, #tpu.memory_space<vmem>>, vector<1x1x8x32xbf16>,
    }
    %c8_i32_7 = arith.constant 8 : i32
    return
  }
  func.func @transform_0(%arg0: i32, %arg1: i32) -> (i32, i32, i32, i32) {
    %c0_i32 = arith.constant 0 : i32
    %c0_i32_0 = arith.constant 0 : i32
    %c0_i32_1 = arith.constant 0 : i32
    %c0_i32_2 = arith.constant 0 : i32
    return %arg0, %c0_i32, %c0_i32_0, %c0_i32_1 : i32, i32, i32, i32
  }
  func.func @transform_1(%arg0: i32, %arg1: i32) -> (i32, i32) {
    %c0_i32 = arith.constant 0 : i32
    %c0_i32_0 = arith.constant 0 : i32
    %c0_i32_1 = arith.constant 0 : i32
    return %c0_i32, %c0_i32_0 : i32, i32
  }
  func.func @transform_2(%arg0: i32, %arg1: i32) -> (i32, i32) {
    %c0_i32 = arith.constant 0 : i32
    %c0_i32_0 = arith.constant 0 : i32
    %c0_i32_1 = arith.constant 0 : i32
    return %c0_i32, %c0_i32_0 : i32, i32
  }
  func.func @transform_3(%arg0: i32, %arg1: i32) -> (i32, i32, i32, i32) {
    %c0_i32 = arith.constant 0 : i32
    %c0_i32_0 = arith.constant 0 : i32
    %c0_i32_1 = arith.constant 0 : i32
    return %arg0, %arg1, %c0_i32, %c0_i32_0 : i32, i32, i32, i32
  }
}

module attributes {stable_mosaic.version = 11 : i64} {
  func.func @_conv_kernel(%arg0: i32, %arg1: i32, %arg2: memref<1x18x18x8xbf16, #tpu.memory_space<vmem>>, %arg3: memref<72x8xbf16, #tpu.memory_space<vmem>>, %arg4: memref<1x8xf32, #tpu.memory_space<vmem>>, %arg5: memref<1x8x16x8xbf16, #tpu.memory_space<vmem>>) attributes {dimension_semantics = [#tpu.dimension_semantics<parallel>, #tpu.dimension_semantics<parallel>], iteration_bounds = array<i64: 2, 2>, scalar_prefetch = 0 : i64, scratch_operands = 0 : i64, tpu.core_type = #tpu.core_type<tc>, window_params = [{transform_indices = @transform_0, window_bounds = array<i64: 1, 18, 18, 8>}, {pipeline_mode = #tpu.pipeline_mode<synchronous>, transform_indices = @transform_1, window_bounds = array<i64: 72, 8>}, {pipeline_mode = #tpu.pipeline_mode<synchronous>, transform_indices = @transform_2, window_bounds = array<i64: 1, 8>}, {transform_indices = @transform_3, window_bounds = array<i64: 1, 8, 16, 8>}]} {
    %c8_i32 = arith.constant 8 : i32
    %0 = arith.muli %arg1, %c8_i32 : i32
    %c0 = arith.constant 0 : index
    %c0_0 = arith.constant 0 : index
    %1 = vector.load %arg4[%c0, %c0_0] : memref<1x8xf32, #tpu.memory_space<vmem>>, vector<1x8xf32>
    %c0_1 = arith.constant 0 : index
    %c0_2 = arith.constant 0 : index
    %2 = vector.load %arg3[%c0_1, %c0_2] : memref<72x8xbf16, #tpu.memory_space<vmem>>, vector<8x8xbf16>
    %c8 = arith.constant 8 : index
    %c0_3 = arith.constant 0 : index
    %3 = vector.load %arg3[%c8, %c0_3] : memref<72x8xbf16, #tpu.memory_space<vmem>>, vector<8x8xbf16>
    %c16 = arith.constant 16 : index
    %c0_4 = arith.constant 0 : index
    %4 = vector.load %arg3[%c16, %c0_4] : memref<72x8xbf16, #tpu.memory_space<vmem>>, vector<8x8xbf16>
    %c24 = arith.constant 24 : index
    %c0_5 = arith.constant 0 : index
    %5 = vector.load %arg3[%c24, %c0_5] : memref<72x8xbf16, #tpu.memory_space<vmem>>, vector<8x8xbf16>
    %c32 = arith.constant 32 : index
    %c0_6 = arith.constant 0 : index
    %6 = vector.load %arg3[%c32, %c0_6] : memref<72x8xbf16, #tpu.memory_space<vmem>>, vector<8x8xbf16>
    %c40 = arith.constant 40 : index
    %c0_7 = arith.constant 0 : index
    %7 = vector.load %arg3[%c40, %c0_7] : memref<72x8xbf16, #tpu.memory_space<vmem>>, vector<8x8xbf16>
    %c48 = arith.constant 48 : index
    %c0_8 = arith.constant 0 : index
    %8 = vector.load %arg3[%c48, %c0_8] : memref<72x8xbf16, #tpu.memory_space<vmem>>, vector<8x8xbf16>
    %c56 = arith.constant 56 : index
    %c0_9 = arith.constant 0 : index
    %9 = vector.load %arg3[%c56, %c0_9] : memref<72x8xbf16, #tpu.memory_space<vmem>>, vector<8x8xbf16>
    %c64 = arith.constant 64 : index
    %c0_10 = arith.constant 0 : index
    %10 = vector.load %arg3[%c64, %c0_10] : memref<72x8xbf16, #tpu.memory_space<vmem>>, vector<8x8xbf16>
    %c0_i32 = arith.constant 0 : i32
    %c8_i32_11 = arith.constant 8 : i32
    %11 = arith.addi %c0_i32, %c8_i32_11 : i32
    %c1_i32 = arith.constant 1 : i32
    scf.for %arg6 = %c0_i32 to %11 step %c1_i32  : i32 {
      %cst = arith.constant 0.000000e+00 : f32
      %12 = vector.broadcast %cst : f32 to vector<16x8xf32>
      %13 = arith.addi %0, %arg6 : i32
      %c0_i32_13 = arith.constant 0 : i32
      %14 = arith.addi %13, %c0_i32_13 : i32
      %c0_14 = arith.constant 0 : index
      %15 = arith.index_cast %14 : i32 to index
      %c0_15 = arith.constant 0 : index
      %c0_16 = arith.constant 0 : index
      %16 = vector.load %arg2[%c0_14, %15, %c0_15, %c0_16] : memref<1x18x18x8xbf16, #tpu.memory_space<vmem>>, vector<1x1x16x8xbf16>
      %17 = vector.shape_cast %16 : vector<1x1x16x8xbf16> to vector<16x8xbf16>
      %cst_17 = arith.constant dense<0.000000e+00> : vector<16x8xf32>
      %18 = tpu.matmul %17, %2, %cst_17 {dimension_numbers = #tpu.dot_dimension_numbers<[1], [0], [0], [1], [0, 0, 1, 1], [], []>} : vector<16x8xbf16>, vector<8x8xbf16>, vector<16x8xf32> -> vector<16x8xf32>
      %19 = arith.addf %12, %18 : vector<16x8xf32>
      %20 = arith.addi %0, %arg6 : i32
      %c0_i32_18 = arith.constant 0 : i32
      %21 = arith.addi %20, %c0_i32_18 : i32
      %c0_19 = arith.constant 0 : index
      %22 = arith.index_cast %21 : i32 to index
      %c1 = arith.constant 1 : index
      %c0_20 = arith.constant 0 : index
      %23 = vector.load %arg2[%c0_19, %22, %c1, %c0_20] : memref<1x18x18x8xbf16, #tpu.memory_space<vmem>>, vector<1x1x16x8xbf16>
      %24 = vector.shape_cast %23 : vector<1x1x16x8xbf16> to vector<16x8xbf16>
      %cst_21 = arith.constant dense<0.000000e+00> : vector<16x8xf32>
      %25 = tpu.matmul %24, %3, %cst_21 {dimension_numbers = #tpu.dot_dimension_numbers<[1], [0], [0], [1], [0, 0, 1, 1], [], []>} : vector<16x8xbf16>, vector<8x8xbf16>, vector<16x8xf32> -> vector<16x8xf32>
      %26 = arith.addf %19, %25 : vector<16x8xf32>
      %27 = arith.addi %0, %arg6 : i32
      %c0_i32_22 = arith.constant 0 : i32
      %28 = arith.addi %27, %c0_i32_22 : i32
      %c0_23 = arith.constant 0 : index
      %29 = arith.index_cast %28 : i32 to index
      %c2 = arith.constant 2 : index
      %c0_24 = arith.constant 0 : index
      %30 = vector.load %arg2[%c0_23, %29, %c2, %c0_24] : memref<1x18x18x8xbf16, #tpu.memory_space<vmem>>, vector<1x1x16x8xbf16>
      %31 = vector.shape_cast %30 : vector<1x1x16x8xbf16> to vector<16x8xbf16>
      %cst_25 = arith.constant dense<0.000000e+00> : vector<16x8xf32>
      %32 = tpu.matmul %31, %4, %cst_25 {dimension_numbers = #tpu.dot_dimension_numbers<[1], [0], [0], [1], [0, 0, 1, 1], [], []>} : vector<16x8xbf16>, vector<8x8xbf16>, vector<16x8xf32> -> vector<16x8xf32>
      %33 = arith.addf %26, %32 : vector<16x8xf32>
      %34 = arith.addi %0, %arg6 : i32
      %c1_i32_26 = arith.constant 1 : i32
      %35 = arith.addi %34, %c1_i32_26 : i32
      %c0_27 = arith.constant 0 : index
      %36 = arith.index_cast %35 : i32 to index
      %c0_28 = arith.constant 0 : index
      %c0_29 = arith.constant 0 : index
      %37 = vector.load %arg2[%c0_27, %36, %c0_28, %c0_29] : memref<1x18x18x8xbf16, #tpu.memory_space<vmem>>, vector<1x1x16x8xbf16>
      %38 = vector.shape_cast %37 : vector<1x1x16x8xbf16> to vector<16x8xbf16>
      %cst_30 = arith.constant dense<0.000000e+00> : vector<16x8xf32>
      %39 = tpu.matmul %38, %5, %cst_30 {dimension_numbers = #tpu.dot_dimension_numbers<[1], [0], [0], [1], [0, 0, 1, 1], [], []>} : vector<16x8xbf16>, vector<8x8xbf16>, vector<16x8xf32> -> vector<16x8xf32>
      %40 = arith.addf %33, %39 : vector<16x8xf32>
      %41 = arith.addi %0, %arg6 : i32
      %c1_i32_31 = arith.constant 1 : i32
      %42 = arith.addi %41, %c1_i32_31 : i32
      %c0_32 = arith.constant 0 : index
      %43 = arith.index_cast %42 : i32 to index
      %c1_33 = arith.constant 1 : index
      %c0_34 = arith.constant 0 : index
      %44 = vector.load %arg2[%c0_32, %43, %c1_33, %c0_34] : memref<1x18x18x8xbf16, #tpu.memory_space<vmem>>, vector<1x1x16x8xbf16>
      %45 = vector.shape_cast %44 : vector<1x1x16x8xbf16> to vector<16x8xbf16>
      %cst_35 = arith.constant dense<0.000000e+00> : vector<16x8xf32>
      %46 = tpu.matmul %45, %6, %cst_35 {dimension_numbers = #tpu.dot_dimension_numbers<[1], [0], [0], [1], [0, 0, 1, 1], [], []>} : vector<16x8xbf16>, vector<8x8xbf16>, vector<16x8xf32> -> vector<16x8xf32>
      %47 = arith.addf %40, %46 : vector<16x8xf32>
      %48 = arith.addi %0, %arg6 : i32
      %c1_i32_36 = arith.constant 1 : i32
      %49 = arith.addi %48, %c1_i32_36 : i32
      %c0_37 = arith.constant 0 : index
      %50 = arith.index_cast %49 : i32 to index
      %c2_38 = arith.constant 2 : index
      %c0_39 = arith.constant 0 : index
      %51 = vector.load %arg2[%c0_37, %50, %c2_38, %c0_39] : memref<1x18x18x8xbf16, #tpu.memory_space<vmem>>, vector<1x1x16x8xbf16>
      %52 = vector.shape_cast %51 : vector<1x1x16x8xbf16> to vector<16x8xbf16>
      %cst_40 = arith.constant dense<0.000000e+00> : vector<16x8xf32>
      %53 = tpu.matmul %52, %7, %cst_40 {dimension_numbers = #tpu.dot_dimension_numbers<[1], [0], [0], [1], [0, 0, 1, 1], [], []>} : vector<16x8xbf16>, vector<8x8xbf16>, vector<16x8xf32> -> vector<16x8xf32>
      %54 = arith.addf %47, %53 : vector<16x8xf32>
      %55 = arith.addi %0, %arg6 : i32
      %c2_i32 = arith.constant 2 : i32
      %56 = arith.addi %55, %c2_i32 : i32
      %c0_41 = arith.constant 0 : index
      %57 = arith.index_cast %56 : i32 to index
      %c0_42 = arith.constant 0 : index
      %c0_43 = arith.constant 0 : index
      %58 = vector.load %arg2[%c0_41, %57, %c0_42, %c0_43] : memref<1x18x18x8xbf16, #tpu.memory_space<vmem>>, vector<1x1x16x8xbf16>
      %59 = vector.shape_cast %58 : vector<1x1x16x8xbf16> to vector<16x8xbf16>
      %cst_44 = arith.constant dense<0.000000e+00> : vector<16x8xf32>
      %60 = tpu.matmul %59, %8, %cst_44 {dimension_numbers = #tpu.dot_dimension_numbers<[1], [0], [0], [1], [0, 0, 1, 1], [], []>} : vector<16x8xbf16>, vector<8x8xbf16>, vector<16x8xf32> -> vector<16x8xf32>
      %61 = arith.addf %54, %60 : vector<16x8xf32>
      %62 = arith.addi %0, %arg6 : i32
      %c2_i32_45 = arith.constant 2 : i32
      %63 = arith.addi %62, %c2_i32_45 : i32
      %c0_46 = arith.constant 0 : index
      %64 = arith.index_cast %63 : i32 to index
      %c1_47 = arith.constant 1 : index
      %c0_48 = arith.constant 0 : index
      %65 = vector.load %arg2[%c0_46, %64, %c1_47, %c0_48] : memref<1x18x18x8xbf16, #tpu.memory_space<vmem>>, vector<1x1x16x8xbf16>
      %66 = vector.shape_cast %65 : vector<1x1x16x8xbf16> to vector<16x8xbf16>
      %cst_49 = arith.constant dense<0.000000e+00> : vector<16x8xf32>
      %67 = tpu.matmul %66, %9, %cst_49 {dimension_numbers = #tpu.dot_dimension_numbers<[1], [0], [0], [1], [0, 0, 1, 1], [], []>} : vector<16x8xbf16>, vector<8x8xbf16>, vector<16x8xf32> -> vector<16x8xf32>
      %68 = arith.addf %61, %67 : vector<16x8xf32>
      %69 = arith.addi %0, %arg6 : i32
      %c2_i32_50 = arith.constant 2 : i32
      %70 = arith.addi %69, %c2_i32_50 : i32
      %c0_51 = arith.constant 0 : index
      %71 = arith.index_cast %70 : i32 to index
      %c2_52 = arith.constant 2 : index
      %c0_53 = arith.constant 0 : index
      %72 = vector.load %arg2[%c0_51, %71, %c2_52, %c0_53] : memref<1x18x18x8xbf16, #tpu.memory_space<vmem>>, vector<1x1x16x8xbf16>
      %73 = vector.shape_cast %72 : vector<1x1x16x8xbf16> to vector<16x8xbf16>
      %cst_54 = arith.constant dense<0.000000e+00> : vector<16x8xf32>
      %74 = tpu.matmul %73, %10, %cst_54 {dimension_numbers = #tpu.dot_dimension_numbers<[1], [0], [0], [1], [0, 0, 1, 1], [], []>} : vector<16x8xbf16>, vector<8x8xbf16>, vector<16x8xf32> -> vector<16x8xf32>
      %75 = arith.addf %68, %74 : vector<16x8xf32>
      %76 = vector.broadcast %1 : vector<1x8xf32> to vector<16x8xf32>
      %77 = arith.addf %75, %76 : vector<16x8xf32>
      %cst_55 = arith.constant 0.000000e+00 : f32
      %78 = vector.broadcast %cst_55 : f32 to vector<16x8xf32>
      %79 = arith.maximumf %77, %78 : vector<16x8xf32>
      %80 = arith.truncf %79 : vector<16x8xf32> to vector<16x8xbf16>
      %c0_56 = arith.constant 0 : index
      %81 = arith.index_cast %arg6 : i32 to index
      %c0_57 = arith.constant 0 : index
      %c0_58 = arith.constant 0 : index
      %82 = vector.load %arg5[%c0_56, %81, %c0_57, %c0_58] : memref<1x8x16x8xbf16, #tpu.memory_space<vmem>>, vector<1x1x16x8xbf16>
      %83 = vector.shape_cast %82 : vector<1x1x16x8xbf16> to vector<16x8xbf16>
      %84 = vector.shape_cast %80 : vector<16x8xbf16> to vector<1x1x16x8xbf16>
      tpu.vector_store %arg5[%c0_56, %81, %c0_57, %c0_58], %84 {strides = array<i32>} : memref<1x8x16x8xbf16, #tpu.memory_space<vmem>>, vector<1x1x16x8xbf16>,
    }
    %c8_i32_12 = arith.constant 8 : i32
    return
  }
  func.func @transform_0(%arg0: i32, %arg1: i32) -> (i32, i32, i32, i32) {
    %c0_i32 = arith.constant 0 : i32
    %c0_i32_0 = arith.constant 0 : i32
    %c0_i32_1 = arith.constant 0 : i32
    %c0_i32_2 = arith.constant 0 : i32
    return %arg0, %c0_i32, %c0_i32_0, %c0_i32_1 : i32, i32, i32, i32
  }
  func.func @transform_1(%arg0: i32, %arg1: i32) -> (i32, i32) {
    %c0_i32 = arith.constant 0 : i32
    %c0_i32_0 = arith.constant 0 : i32
    %c0_i32_1 = arith.constant 0 : i32
    return %c0_i32, %c0_i32_0 : i32, i32
  }
  func.func @transform_2(%arg0: i32, %arg1: i32) -> (i32, i32) {
    %c0_i32 = arith.constant 0 : i32
    %c0_i32_0 = arith.constant 0 : i32
    %c0_i32_1 = arith.constant 0 : i32
    return %c0_i32, %c0_i32_0 : i32, i32
  }
  func.func @transform_3(%arg0: i32, %arg1: i32) -> (i32, i32, i32, i32) {
    %c0_i32 = arith.constant 0 : i32
    %c0_i32_0 = arith.constant 0 : i32
    %c0_i32_1 = arith.constant 0 : i32
    return %arg0, %arg1, %c0_i32, %c0_i32_0 : i32, i32, i32, i32
  }
}

module attributes {stable_mosaic.version = 11 : i64} {
  func.func @_conv_kernel(%arg0: i32, %arg1: i32, %arg2: memref<1x18x18x16xbf16, #tpu.memory_space<vmem>>, %arg3: memref<144x2xbf16, #tpu.memory_space<vmem>>, %arg4: memref<1x2xf32, #tpu.memory_space<vmem>>, %arg5: memref<1x8x16x2xf32, #tpu.memory_space<vmem>>) attributes {dimension_semantics = [#tpu.dimension_semantics<parallel>, #tpu.dimension_semantics<parallel>], iteration_bounds = array<i64: 2, 2>, scalar_prefetch = 0 : i64, scratch_operands = 0 : i64, tpu.core_type = #tpu.core_type<tc>, window_params = [{transform_indices = @transform_0, window_bounds = array<i64: 1, 18, 18, 16>}, {pipeline_mode = #tpu.pipeline_mode<synchronous>, transform_indices = @transform_1, window_bounds = array<i64: 144, 2>}, {pipeline_mode = #tpu.pipeline_mode<synchronous>, transform_indices = @transform_2, window_bounds = array<i64: 1, 2>}, {transform_indices = @transform_3, window_bounds = array<i64: 1, 8, 16, 2>}]} {
    %c8_i32 = arith.constant 8 : i32
    %0 = arith.muli %arg1, %c8_i32 : i32
    %c0 = arith.constant 0 : index
    %c0_0 = arith.constant 0 : index
    %1 = vector.load %arg4[%c0, %c0_0] : memref<1x2xf32, #tpu.memory_space<vmem>>, vector<1x2xf32>
    %c0_1 = arith.constant 0 : index
    %c0_2 = arith.constant 0 : index
    %2 = vector.load %arg3[%c0_1, %c0_2] : memref<144x2xbf16, #tpu.memory_space<vmem>>, vector<16x2xbf16>
    %c16 = arith.constant 16 : index
    %c0_3 = arith.constant 0 : index
    %3 = vector.load %arg3[%c16, %c0_3] : memref<144x2xbf16, #tpu.memory_space<vmem>>, vector<16x2xbf16>
    %c32 = arith.constant 32 : index
    %c0_4 = arith.constant 0 : index
    %4 = vector.load %arg3[%c32, %c0_4] : memref<144x2xbf16, #tpu.memory_space<vmem>>, vector<16x2xbf16>
    %c48 = arith.constant 48 : index
    %c0_5 = arith.constant 0 : index
    %5 = vector.load %arg3[%c48, %c0_5] : memref<144x2xbf16, #tpu.memory_space<vmem>>, vector<16x2xbf16>
    %c64 = arith.constant 64 : index
    %c0_6 = arith.constant 0 : index
    %6 = vector.load %arg3[%c64, %c0_6] : memref<144x2xbf16, #tpu.memory_space<vmem>>, vector<16x2xbf16>
    %c80 = arith.constant 80 : index
    %c0_7 = arith.constant 0 : index
    %7 = vector.load %arg3[%c80, %c0_7] : memref<144x2xbf16, #tpu.memory_space<vmem>>, vector<16x2xbf16>
    %c96 = arith.constant 96 : index
    %c0_8 = arith.constant 0 : index
    %8 = vector.load %arg3[%c96, %c0_8] : memref<144x2xbf16, #tpu.memory_space<vmem>>, vector<16x2xbf16>
    %c112 = arith.constant 112 : index
    %c0_9 = arith.constant 0 : index
    %9 = vector.load %arg3[%c112, %c0_9] : memref<144x2xbf16, #tpu.memory_space<vmem>>, vector<16x2xbf16>
    %c128 = arith.constant 128 : index
    %c0_10 = arith.constant 0 : index
    %10 = vector.load %arg3[%c128, %c0_10] : memref<144x2xbf16, #tpu.memory_space<vmem>>, vector<16x2xbf16>
    %c0_i32 = arith.constant 0 : i32
    %c8_i32_11 = arith.constant 8 : i32
    %11 = arith.addi %c0_i32, %c8_i32_11 : i32
    %c1_i32 = arith.constant 1 : i32
    scf.for %arg6 = %c0_i32 to %11 step %c1_i32  : i32 {
      %cst = arith.constant 0.000000e+00 : f32
      %12 = vector.broadcast %cst : f32 to vector<16x2xf32>
      %13 = arith.addi %0, %arg6 : i32
      %c0_i32_13 = arith.constant 0 : i32
      %14 = arith.addi %13, %c0_i32_13 : i32
      %c0_14 = arith.constant 0 : index
      %15 = arith.index_cast %14 : i32 to index
      %c0_15 = arith.constant 0 : index
      %c0_16 = arith.constant 0 : index
      %16 = vector.load %arg2[%c0_14, %15, %c0_15, %c0_16] : memref<1x18x18x16xbf16, #tpu.memory_space<vmem>>, vector<1x1x16x16xbf16>
      %17 = vector.shape_cast %16 : vector<1x1x16x16xbf16> to vector<16x16xbf16>
      %cst_17 = arith.constant dense<0.000000e+00> : vector<16x2xf32>
      %18 = tpu.matmul %17, %2, %cst_17 {dimension_numbers = #tpu.dot_dimension_numbers<[1], [0], [0], [1], [0, 0, 1, 1], [], []>} : vector<16x16xbf16>, vector<16x2xbf16>, vector<16x2xf32> -> vector<16x2xf32>
      %19 = arith.addf %12, %18 : vector<16x2xf32>
      %20 = arith.addi %0, %arg6 : i32
      %c0_i32_18 = arith.constant 0 : i32
      %21 = arith.addi %20, %c0_i32_18 : i32
      %c0_19 = arith.constant 0 : index
      %22 = arith.index_cast %21 : i32 to index
      %c1 = arith.constant 1 : index
      %c0_20 = arith.constant 0 : index
      %23 = vector.load %arg2[%c0_19, %22, %c1, %c0_20] : memref<1x18x18x16xbf16, #tpu.memory_space<vmem>>, vector<1x1x16x16xbf16>
      %24 = vector.shape_cast %23 : vector<1x1x16x16xbf16> to vector<16x16xbf16>
      %cst_21 = arith.constant dense<0.000000e+00> : vector<16x2xf32>
      %25 = tpu.matmul %24, %3, %cst_21 {dimension_numbers = #tpu.dot_dimension_numbers<[1], [0], [0], [1], [0, 0, 1, 1], [], []>} : vector<16x16xbf16>, vector<16x2xbf16>, vector<16x2xf32> -> vector<16x2xf32>
      %26 = arith.addf %19, %25 : vector<16x2xf32>
      %27 = arith.addi %0, %arg6 : i32
      %c0_i32_22 = arith.constant 0 : i32
      %28 = arith.addi %27, %c0_i32_22 : i32
      %c0_23 = arith.constant 0 : index
      %29 = arith.index_cast %28 : i32 to index
      %c2 = arith.constant 2 : index
      %c0_24 = arith.constant 0 : index
      %30 = vector.load %arg2[%c0_23, %29, %c2, %c0_24] : memref<1x18x18x16xbf16, #tpu.memory_space<vmem>>, vector<1x1x16x16xbf16>
      %31 = vector.shape_cast %30 : vector<1x1x16x16xbf16> to vector<16x16xbf16>
      %cst_25 = arith.constant dense<0.000000e+00> : vector<16x2xf32>
      %32 = tpu.matmul %31, %4, %cst_25 {dimension_numbers = #tpu.dot_dimension_numbers<[1], [0], [0], [1], [0, 0, 1, 1], [], []>} : vector<16x16xbf16>, vector<16x2xbf16>, vector<16x2xf32> -> vector<16x2xf32>
      %33 = arith.addf %26, %32 : vector<16x2xf32>
      %34 = arith.addi %0, %arg6 : i32
      %c1_i32_26 = arith.constant 1 : i32
      %35 = arith.addi %34, %c1_i32_26 : i32
      %c0_27 = arith.constant 0 : index
      %36 = arith.index_cast %35 : i32 to index
      %c0_28 = arith.constant 0 : index
      %c0_29 = arith.constant 0 : index
      %37 = vector.load %arg2[%c0_27, %36, %c0_28, %c0_29] : memref<1x18x18x16xbf16, #tpu.memory_space<vmem>>, vector<1x1x16x16xbf16>
      %38 = vector.shape_cast %37 : vector<1x1x16x16xbf16> to vector<16x16xbf16>
      %cst_30 = arith.constant dense<0.000000e+00> : vector<16x2xf32>
      %39 = tpu.matmul %38, %5, %cst_30 {dimension_numbers = #tpu.dot_dimension_numbers<[1], [0], [0], [1], [0, 0, 1, 1], [], []>} : vector<16x16xbf16>, vector<16x2xbf16>, vector<16x2xf32> -> vector<16x2xf32>
      %40 = arith.addf %33, %39 : vector<16x2xf32>
      %41 = arith.addi %0, %arg6 : i32
      %c1_i32_31 = arith.constant 1 : i32
      %42 = arith.addi %41, %c1_i32_31 : i32
      %c0_32 = arith.constant 0 : index
      %43 = arith.index_cast %42 : i32 to index
      %c1_33 = arith.constant 1 : index
      %c0_34 = arith.constant 0 : index
      %44 = vector.load %arg2[%c0_32, %43, %c1_33, %c0_34] : memref<1x18x18x16xbf16, #tpu.memory_space<vmem>>, vector<1x1x16x16xbf16>
      %45 = vector.shape_cast %44 : vector<1x1x16x16xbf16> to vector<16x16xbf16>
      %cst_35 = arith.constant dense<0.000000e+00> : vector<16x2xf32>
      %46 = tpu.matmul %45, %6, %cst_35 {dimension_numbers = #tpu.dot_dimension_numbers<[1], [0], [0], [1], [0, 0, 1, 1], [], []>} : vector<16x16xbf16>, vector<16x2xbf16>, vector<16x2xf32> -> vector<16x2xf32>
      %47 = arith.addf %40, %46 : vector<16x2xf32>
      %48 = arith.addi %0, %arg6 : i32
      %c1_i32_36 = arith.constant 1 : i32
      %49 = arith.addi %48, %c1_i32_36 : i32
      %c0_37 = arith.constant 0 : index
      %50 = arith.index_cast %49 : i32 to index
      %c2_38 = arith.constant 2 : index
      %c0_39 = arith.constant 0 : index
      %51 = vector.load %arg2[%c0_37, %50, %c2_38, %c0_39] : memref<1x18x18x16xbf16, #tpu.memory_space<vmem>>, vector<1x1x16x16xbf16>
      %52 = vector.shape_cast %51 : vector<1x1x16x16xbf16> to vector<16x16xbf16>
      %cst_40 = arith.constant dense<0.000000e+00> : vector<16x2xf32>
      %53 = tpu.matmul %52, %7, %cst_40 {dimension_numbers = #tpu.dot_dimension_numbers<[1], [0], [0], [1], [0, 0, 1, 1], [], []>} : vector<16x16xbf16>, vector<16x2xbf16>, vector<16x2xf32> -> vector<16x2xf32>
      %54 = arith.addf %47, %53 : vector<16x2xf32>
      %55 = arith.addi %0, %arg6 : i32
      %c2_i32 = arith.constant 2 : i32
      %56 = arith.addi %55, %c2_i32 : i32
      %c0_41 = arith.constant 0 : index
      %57 = arith.index_cast %56 : i32 to index
      %c0_42 = arith.constant 0 : index
      %c0_43 = arith.constant 0 : index
      %58 = vector.load %arg2[%c0_41, %57, %c0_42, %c0_43] : memref<1x18x18x16xbf16, #tpu.memory_space<vmem>>, vector<1x1x16x16xbf16>
      %59 = vector.shape_cast %58 : vector<1x1x16x16xbf16> to vector<16x16xbf16>
      %cst_44 = arith.constant dense<0.000000e+00> : vector<16x2xf32>
      %60 = tpu.matmul %59, %8, %cst_44 {dimension_numbers = #tpu.dot_dimension_numbers<[1], [0], [0], [1], [0, 0, 1, 1], [], []>} : vector<16x16xbf16>, vector<16x2xbf16>, vector<16x2xf32> -> vector<16x2xf32>
      %61 = arith.addf %54, %60 : vector<16x2xf32>
      %62 = arith.addi %0, %arg6 : i32
      %c2_i32_45 = arith.constant 2 : i32
      %63 = arith.addi %62, %c2_i32_45 : i32
      %c0_46 = arith.constant 0 : index
      %64 = arith.index_cast %63 : i32 to index
      %c1_47 = arith.constant 1 : index
      %c0_48 = arith.constant 0 : index
      %65 = vector.load %arg2[%c0_46, %64, %c1_47, %c0_48] : memref<1x18x18x16xbf16, #tpu.memory_space<vmem>>, vector<1x1x16x16xbf16>
      %66 = vector.shape_cast %65 : vector<1x1x16x16xbf16> to vector<16x16xbf16>
      %cst_49 = arith.constant dense<0.000000e+00> : vector<16x2xf32>
      %67 = tpu.matmul %66, %9, %cst_49 {dimension_numbers = #tpu.dot_dimension_numbers<[1], [0], [0], [1], [0, 0, 1, 1], [], []>} : vector<16x16xbf16>, vector<16x2xbf16>, vector<16x2xf32> -> vector<16x2xf32>
      %68 = arith.addf %61, %67 : vector<16x2xf32>
      %69 = arith.addi %0, %arg6 : i32
      %c2_i32_50 = arith.constant 2 : i32
      %70 = arith.addi %69, %c2_i32_50 : i32
      %c0_51 = arith.constant 0 : index
      %71 = arith.index_cast %70 : i32 to index
      %c2_52 = arith.constant 2 : index
      %c0_53 = arith.constant 0 : index
      %72 = vector.load %arg2[%c0_51, %71, %c2_52, %c0_53] : memref<1x18x18x16xbf16, #tpu.memory_space<vmem>>, vector<1x1x16x16xbf16>
      %73 = vector.shape_cast %72 : vector<1x1x16x16xbf16> to vector<16x16xbf16>
      %cst_54 = arith.constant dense<0.000000e+00> : vector<16x2xf32>
      %74 = tpu.matmul %73, %10, %cst_54 {dimension_numbers = #tpu.dot_dimension_numbers<[1], [0], [0], [1], [0, 0, 1, 1], [], []>} : vector<16x16xbf16>, vector<16x2xbf16>, vector<16x2xf32> -> vector<16x2xf32>
      %75 = arith.addf %68, %74 : vector<16x2xf32>
      %76 = vector.broadcast %1 : vector<1x2xf32> to vector<16x2xf32>
      %77 = arith.addf %75, %76 : vector<16x2xf32>
      %c0_55 = arith.constant 0 : index
      %78 = arith.index_cast %arg6 : i32 to index
      %c0_56 = arith.constant 0 : index
      %c0_57 = arith.constant 0 : index
      %79 = vector.load %arg5[%c0_55, %78, %c0_56, %c0_57] : memref<1x8x16x2xf32, #tpu.memory_space<vmem>>, vector<1x1x16x2xf32>
      %80 = vector.shape_cast %79 : vector<1x1x16x2xf32> to vector<16x2xf32>
      %81 = vector.shape_cast %77 : vector<16x2xf32> to vector<1x1x16x2xf32>
      tpu.vector_store %arg5[%c0_55, %78, %c0_56, %c0_57], %81 {strides = array<i32>} : memref<1x8x16x2xf32, #tpu.memory_space<vmem>>, vector<1x1x16x2xf32>,
    }
    %c8_i32_12 = arith.constant 8 : i32
    return
  }
  func.func @transform_0(%arg0: i32, %arg1: i32) -> (i32, i32, i32, i32) {
    %c0_i32 = arith.constant 0 : i32
    %c0_i32_0 = arith.constant 0 : i32
    %c0_i32_1 = arith.constant 0 : i32
    %c0_i32_2 = arith.constant 0 : i32
    return %arg0, %c0_i32, %c0_i32_0, %c0_i32_1 : i32, i32, i32, i32
  }
  func.func @transform_1(%arg0: i32, %arg1: i32) -> (i32, i32) {
    %c0_i32 = arith.constant 0 : i32
    %c0_i32_0 = arith.constant 0 : i32
    %c0_i32_1 = arith.constant 0 : i32
    return %c0_i32, %c0_i32_0 : i32, i32
  }
  func.func @transform_2(%arg0: i32, %arg1: i32) -> (i32, i32) {
    %c0_i32 = arith.constant 0 : i32
    %c0_i32_0 = arith.constant 0 : i32
    %c0_i32_1 = arith.constant 0 : i32
    return %c0_i32, %c0_i32_0 : i32, i32
  }
  func.func @transform_3(%arg0: i32, %arg1: i32) -> (i32, i32, i32, i32) {
    %c0_i32 = arith.constant 0 : i32
    %c0_i32_0 = arith.constant 0 : i32
    %c0_i32_1 = arith.constant 0 : i32
    return %arg0, %arg1, %c0_i32, %c0_i32_0 : i32, i32, i32, i32
  }
}

</mosaic_0001>

<llo_original>
// kernel: custom-call.1
$region0: #{custom-call.1}
  %s0 = inlined_call_operand.hbm [shape: c64[2,16,16], index: 0, kind: input, shape index: {}]
  %s1 = inlined_call_operand.vmem [shape: f32[2,16,16], index: 1, kind: output, shape index: {}]
  %s2 = scalar_lea.hbm %s0, 512
  $region1: #{custom-call.1} parent=0
    #allocation0 [shape = 's32[1]{0}', space=sflag, size = 0x4, scoped, tag = 'scoped memory for custom-call.1']
    %3 = vsyncpa [#allocation0], 0
    %s4 = sshll.u32 %s1, 4
    %s5 = int_to_ptr.vmem [resolvable:$true] %s4
    %7 = dma.hbm_to_vmem [thread:$0]  %s2, 512, %s5, [#allocation0]
    %8 = dma.done [#allocation0], 512
    %9 = vsyncpa [#allocation0], 1

// kernel: custom-call
$region0: #{custom-call}
  %s0 = inlined_call_operand.hbm [shape: c64[2,16,16], index: 0, kind: input, shape index: {}]
  %s1 = inlined_call_operand.vmem [shape: f32[2,16,16], index: 1, kind: output, shape index: {}]
  $region1: #{custom-call} parent=0
    #allocation0 [shape = 's32[1]{0}', space=sflag, size = 0x4, scoped, tag = 'scoped memory for custom-call']
    %2 = vsyncpa [#allocation0], 0
    %s3 = sshll.u32 %s1, 4
    %s4 = int_to_ptr.vmem [resolvable:$true] %s3
    %6 = dma.hbm_to_vmem [thread:$0]  %s0, 512, %s4, [#allocation0]
    %7 = dma.done [#allocation0], 512
    %8 = vsyncpa [#allocation0], 1

// kernel: _lambda_.14
$region0: #{_lambda_.14}
  #allocation0 [shape = 'u32[]', space=smem, size = 0x4, offset = 0x4, fixed_abs, tag = 'smem constant byte address 0x4 - core index']
  #allocation1 [shape = 'u32[144,128]{1,0:T(1,128)}', space=vmem, size = 0x12000, scoped, tag = 'internal scratch']
  %s0 = inlined_call_operand.vmem [shape: bf16[2,18,18,2], index: 0, kind: input, shape index: {}]
  %s1 = inlined_call_operand.vmem [shape: bf16[18,8], index: 1, kind: input, shape index: {}]
  %s2 = inlined_call_operand.vmem [shape: f32[1,8], index: 2, kind: input, shape index: {}]
  %s3 = inlined_call_operand.vmem [shape: bf16[2,16,16,8], index: 3, kind: output, shape index: {}]
  %s4 = sld [smem:[#allocation0]]
  $region52: #{_lambda_.14} parent=0
    _
  %s6 = ssub.s32 1, %s4
  %s7 = scalar_select 0, %s6, %s4
  loop: start=0, step=1, limit=6
  $region2: #{_lambda_.14} parent=0 // loop_pre_header
    _
  $region3: #{_lambda_.14} parent=0 // loop_header
    %s9 = sphi 0, %s13
    %p10 = scmp.ge.s32.totalorder %s9, 6
    %s16 = sphi 0, %s28
    %s17 = sphi 0, %s24
    %s18 = sphi 0, %s16
    %s19 = sphi 0, %s17
    %s20 = sphi 0, %s18
    %s21 = sphi 0, %s19
    %s31 = sphi 0, %s33
    %s34 = sphi 0, %s31
    %s35 = sphi 0, %s34
    %s51 = sphi 0, %s35
    %s55 = sphi 0, %s55
    %s57 = sphi 0, %s55
    %s58 = sphi 0, %s57
    %s72 = sphi 0, %s58
    %s76 = sphi 0, %s76
    %s78 = sphi 0, %s76
    %s79 = sphi 0, %s78
    %s93 = sphi 0, %s79
    %s101 = sphi 0, %s103
    %s104 = sphi 0, %s101
    %s105 = sphi 0, %s104
    %s121 = sphi 0, %s105
  $region4: #{_lambda_.14} parent=0 // loop_header_branch
    %12 = sbr.rel (%p10) target = $region8
  $region5: #{_lambda_.14} parent=0 // loop_body
    %s14 = ssub.s32 %s9, 1
    %s15 = ssub.s32 %s9, 2
    %s22 = sadd.s32 1, %s17
    %p23 = scmp.ge.s32.totalorder %s22, 2
    %s24 = scalar_select %p23, 0, %s22
    %s25 = sadd.s32 1, %s16
    %s26 = scalar_select %p23, %s25, %s16
    %p27 = scmp.ge.s32.totalorder %s26, 2
    %s28 = scalar_select %p27, 0, %s26
    %s29 = ssub.s32 %s16, %s28
    %p30 = scmp.eq.s32.totalorder %s29, 0
    %s32 = sadd.s32 %s31, 1
    %s33 = scalar_select %p30, %s31, %s32
    %p36 = pneg %p30
    %p37 = scmp.eq.s32.totalorder %s9, 3
    %p38 = por %p36, %p37
    %p39 = scmp.ne.s32.totalorder %s31, %s34
    %p40 = scmp.eq.s32.totalorder %s9, 0
    %p41 = por %p39, %p40
    %p42 = scmp.ne.s32.totalorder %s31, %s34
    %p43 = scmp.eq.s32.totalorder %s14, 3
    %p44 = por %p42, %p43
    %p45 = scmp.ne.s32.totalorder %s34, %s35
    %p46 = scmp.eq.s32.totalorder %s14, 0
    %p47 = por %p45, %p46
    %p48 = scmp.ne.s32.totalorder %s34, %s35
    %p49 = scmp.eq.s32.totalorder %s15, 3
    %p50 = por %p48, %p49
    %p52 = scmp.ne.s32.totalorder %s35, %s51
    %p53 = scmp.eq.s32.totalorder %s15, 0
    %p54 = por %p52, %p53
    %s56 = sadd.s32 %s55, 1
    %p59 = scmp.eq.s32.totalorder %s9, 3
    %p60 = scmp.ne.s32.totalorder %s55, %s57
    %p61 = scmp.eq.s32.totalorder %s9, 0
    %p62 = por %p60, %p61
    %p63 = scmp.ne.s32.totalorder %s55, %s57
    %p64 = scmp.eq.s32.totalorder %s14, 3
    %p65 = por %p63, %p64
    %p66 = scmp.ne.s32.totalorder %s57, %s58
    %p67 = scmp.eq.s32.totalorder %s14, 0
    %p68 = por %p66, %p67
    %p69 = scmp.ne.s32.totalorder %s57, %s58
    %p70 = scmp.eq.s32.totalorder %s15, 3
    %p71 = por %p69, %p70
    %p73 = scmp.ne.s32.totalorder %s58, %s72
    %p74 = scmp.eq.s32.totalorder %s15, 0
    %p75 = por %p73, %p74
    %s77 = sadd.s32 %s76, 1
    %p80 = scmp.eq.s32.totalorder %s9, 3
    %p81 = scmp.ne.s32.totalorder %s76, %s78
    %p82 = scmp.eq.s32.totalorder %s9, 0
    %p83 = por %p81, %p82
    %p84 = scmp.ne.s32.totalorder %s76, %s78
    %p85 = scmp.eq.s32.totalorder %s14, 3
    %p86 = por %p84, %p85
    %p87 = scmp.ne.s32.totalorder %s78, %s79
    %p88 = scmp.eq.s32.totalorder %s14, 0
    %p89 = por %p87, %p88
    %p90 = scmp.ne.s32.totalorder %s78, %s79
    %p91 = scmp.eq.s32.totalorder %s15, 3
    %p92 = por %p90, %p91
    %p94 = scmp.ne.s32.totalorder %s79, %s93
    %p95 = scmp.eq.s32.totalorder %s15, 0
    %p96 = por %p94, %p95
    %s97 = ssub.s32 %s16, %s28
    %s98 = ssub.s32 %s17, %s24
    %s99 = sor.u32 %s97, %s98
    %p100 = scmp.eq.s32.totalorder %s99, 0
    %s102 = sadd.s32 %s101, 1
    %s103 = scalar_select %p100, %s101, %s102
    %p106 = pneg %p100
    %p107 = scmp.eq.s32.totalorder %s9, 3
    %p108 = por %p106, %p107
    %p109 = scmp.ne.s32.totalorder %s101, %s104
    %p110 = scmp.eq.s32.totalorder %s9, 0
    %p111 = por %p109, %p110
    %p112 = scmp.ne.s32.totalorder %s101, %s104
    %p113 = scmp.eq.s32.totalorder %s14, 3
    %p114 = por %p112, %p113
    %p115 = scmp.ne.s32.totalorder %s104, %s105
    %p116 = scmp.eq.s32.totalorder %s14, 0
    %p117 = por %p115, %p116
    %p118 = scmp.ne.s32.totalorder %s104, %s105
    %p119 = scmp.eq.s32.totalorder %s15, 3
    %p120 = por %p118, %p119
    %p122 = scmp.ne.s32.totalorder %s105, %s121
    %p123 = scmp.eq.s32.totalorder %s15, 0
    %p124 = por %p122, %p123
    %p125 = scmp.le.s32.totalorder 1, %s9
    %p126 = scmp.lt.s32.totalorder %s9, 5
    %p127 = pnand %p125, %p126
    %p128 = pneg %p127
    // Predicated region
    $region9: #{_lambda_.14} parent=5 // pred_check
      _
    $region10: #{_lambda_.14} parent=5 // pred_check_branch
      %130 = sbr.rel (%p127) target = $region12
    $region11: #{_lambda_.14} parent=5 // pred_region
      %s131 = ssub.s32 %s9, 1
      // Predicated region
      $region13: #{_lambda_.14} parent=11 // pred_check
        %p132 = pneg %p68
      $region14: #{_lambda_.14} parent=11 // pred_check_branch
        %134 = sbr.rel (%p132) target = $region16
      $region15: #{_lambda_.14} parent=11 // pred_region
        _
      $region16: #{_lambda_.14} parent=11 // pred_fallthru
        _
      // Predicated region
      $region17: #{_lambda_.14} parent=11 // pred_check
        %p135 = pneg %p89
      $region18: #{_lambda_.14} parent=11 // pred_check_branch
        %137 = sbr.rel (%p135) target = $region20
      $region19: #{_lambda_.14} parent=11 // pred_region
        _
      $region20: #{_lambda_.14} parent=11 // pred_fallthru
        _
    $region12: #{_lambda_.14} parent=5 // pred_fallthru
      _
    %p138 = scmp.lt.s32.totalorder %s9, 4
    // Predicated region
    $region21: #{_lambda_.14} parent=5 // pred_check
      %p139 = pneg %p138
    $region22: #{_lambda_.14} parent=5 // pred_check_branch
      %141 = sbr.rel (%p139) target = $region24
    $region23: #{_lambda_.14} parent=5 // pred_region
      // Predicated region
      $region25: #{_lambda_.14} parent=23 // pred_check
        %p142 = pneg %p41
      $region26: #{_lambda_.14} parent=23 // pred_check_branch
        %144 = sbr.rel (%p142) target = $region28
      $region27: #{_lambda_.14} parent=23 // pred_region
        %p145 = scmp.lt.s32.totalorder %s16, 1
        %s146 = scalar_select %p145, %s16, 1
        %s147 = smul.addr %s146, 54
        %s148 = smul.addr %s147, 4
        %s149 = scalar_lea.vmem %s0, %s148
      $region28: #{_lambda_.14} parent=23 // pred_fallthru
        _
    $region24: #{_lambda_.14} parent=5 // pred_fallthru
      _
    %p150 = scmp.le.s32.totalorder 1, %s9
    %p151 = scmp.lt.s32.totalorder %s9, 5
    %p152 = pnand %p150, %p151
    %p153 = pneg %p152
    // Predicated region
    $region29: #{_lambda_.14} parent=5 // pred_check
      _
    $region30: #{_lambda_.14} parent=5 // pred_check_branch
      %155 = sbr.rel (%p152) target = $region32
    $region31: #{_lambda_.14} parent=5 // pred_region
      %s156 = ssub.s32 %s9, 1
      %p157 = scmp.lt.s32.totalorder %s18, 1
      %s158 = scalar_select %p157, %s18, 1
      %s159 = smul.addr %s158, 54
      %s160 = smul.addr %s159, 4
      %s161 = scalar_lea.vmem %s0, %s160
      %p162 = pneg %p47
      %p163 = pneg %p44
      %p164 = pneg %p68
      %p165 = pneg %p65
      %p166 = pneg %p89
      %p167 = pneg %p86
      %p168 = pneg %p117
      %p169 = pneg %p114
      %s170 = smul.u32 8, %s19
      %p171 = scmp.lt.s32.totalorder %s18, 1
      %s172 = scalar_select %p171, %s18, 1
      %p173 = scmp.lt.s32.totalorder %s170, 15
      %s174 = scalar_select %p173, %s170, 15
      %s175 = smul.addr %s174, 2
      %s176 = smul.addr %s172, 32
      %s177 = sadd.s32 %s175, %s176
      %s178 = smul.addr %s177, 4
      %s179 = scalar_lea.vmem %s3, %s178
      %p180 = scmp.lt.s32.totalorder %s18, 1
      %s181 = scalar_select %p180, %s18, 1
      %s182 = smul.addr %s181, 54
      %s183 = smul.addr %s182, 4
      %s184 = scalar_lea.vmem %s0, %s183
      %s185 = smul.u32 8, %s19
      %p186 = scmp.lt.s32.totalorder %s18, 1
      %s187 = scalar_select %p186, %s18, 1
      %p188 = scmp.lt.s32.totalorder %s185, 15
      %s189 = scalar_select %p188, %s185, 15
      %s190 = smul.addr %s189, 2
      %s191 = smul.addr %s187, 32
      %s192 = sadd.s32 %s190, %s191
      %s193 = smul.addr %s192, 4
      %s194 = scalar_lea.vmem %s3, %s193
      %s195 = smul.u32 8, %s19
      %s197 = smul.u32 %s19, 8
      %v198 = vld [vmem:[%s2] sm:$0x1]
      %v199 = vld [vmem:[%s1] sm:$0x1]
      %v200 = vld [vmem:[%s1] sm:$0x2]
      %v201 = vld [vmem:[%s1] sm:$0x4]
      %v202 = vld [vmem:[%s1] sm:$0x8]
      %v203 = vld [vmem:[%s1 + $0x4] sm:$0x1]
      %v204 = vld [vmem:[%s1 + $0x4] sm:$0x2]
      %v205 = vld [vmem:[%s1 + $0x4] sm:$0x4]
      %v206 = vld [vmem:[%s1 + $0x4] sm:$0x8]
      %v207 = vld [vmem:[%s1 + $0x8] sm:$0x1]
      loop: start=0, step=1, limit=8
      $region33: #{_lambda_.14} parent=31 // loop_pre_header
        _
      $region34: #{_lambda_.14} parent=31 // loop_header
        %s209 = sphi 0, %s213
        %p210 = scmp.ge.s32.totalorder %s209, 8
      $region35: #{_lambda_.14} parent=31 // loop_header_branch
        %212 = sbr.rel (%p210) target = $region39
      $region36: #{_lambda_.14} parent=31 // loop_body
        %s214 = sadd.s32 %s197, %s209
        %s215 = smul.u32 %s214, 3
        %s216 = smul.addr %s215, 4
        %s217 = scalar_lea.vmem %s184, %s216
        %v218 = vld [vmem:[%s217] sm:$0xf]
        %v219 = vld [vmem:[%s217 + $0x4] sm:$0xf]
        %v220 = vld [vmem:[%s217 + $0x8] sm:$0x1]
        %v224 = vunpack.c.l.b16 %v218
        %v225 = vunpack.c.l.b16 %v219
        %v226 = vunpack.c.l.b16 %v220
        %v227 = vpack.c.b16 %v225, %v224
        %v228 = vpack.c.b16 %v226, %v226
        %vm229 = vsmask.f32 7424
        %v231 = vshrl.u32 %v227, 16
        %v233 = vshll.u32 %v227, 16
        %v235 = vrot.slane %v233, 1
        %v236 = vor.u32 %v231, %v235
        %v238 = vshll.u32 %v228, 16
        %v240 = vrot.slane %v238, 1
        %v241 = vsel %vm229, %v236, %v240
        %v243 = vunpack.c.l.b16 %v200
        %v244 = vpack.c.b16 %v243, %v243
        %v245 = vrot.slane %v244, 1
        %vm246 = vcmask 15360
        %v248 = vsel %vm246, %v241, 0
        %vm250 = vcmask 1040384
        %v252 = vsel %vm250, %v245, 0
        %254 = vmatprep.subr.bf16.mxu0 0
        %255 = vmatpush1.bf16.msra.mxu0 0
        %256 = vmatprep.subr.bf16.mxu0 0
        %257 = vmatpush1.bf16.msra.mxu0 0
        %258 = vmatprep.subr.bf16.mxu0 0
        %259 = vmatpush1.bf16.msra.mxu0 0
        %260 = vmatprep.subr.bf16.mxu0 0
        %261 = vmatpush1.bf16.msra.mxu0 0
        %262 = vmatprep.subr.bf16.mxu0 0
        %263 = vmatpush1.bf16.msra.mxu0 0
        %264 = vmatprep.subr.bf16.mxu0 0
        %265 = vmatpush1.bf16.msra.mxu0 0
        %266 = vmatprep.subr.bf16.mxu0 0
        %267 = vmatpush1.bf16.msra.mxu0 0
        %268 = vmatprep.subr.bf16.mxu0 0
        %269 = vmatpush1.bf16.msra.mxu0 %v252
        %270 = vmatprep.subr.bf16.mxu0 0
        %271 = vmatpush2.bf16.msra.mxu0 0
        %272 = vmatprep.subr.bf16.mxu0 0
        %273 = vmatpush2.bf16.msra.mxu0 0
        %274 = vmatprep.subr.bf16.mxu0 0
        %275 = vmatpush2.bf16.msra.mxu0 0
        %276 = vmatprep.subr.bf16.mxu0 0
        %277 = vmatpush2.bf16.msra.mxu0 0
        %278 = vmatprep.subr.bf16.mxu0 0
        %279 = vmatpush2.bf16.msra.mxu0 0
        %280 = vmatprep.subr.bf16.mxu0 0
        %281 = vmatpush2.bf16.msra.mxu0 0
        %282 = vmatprep.subr.bf16.mxu0 0
        %283 = vmatpush2.bf16.msra.mxu0 0
        %284 = vmatprep.subr.bf16.mxu0 0
        %285 = vmatpush2.bf16.msra.mxu0 0
        %286 = vmatprep.mubr.bf16.mxu0 0
        %287 = vmatmul.mubr.bf16.gmra.mxu0 %v248
        %v288 = vpop.f32.mrf.mxu0
        %v289 = vadd.f32 0.0, %v288
        %v290 = vpop.f32.mrf.mxu0
        %v291 = vpop.f32.mrf.mxu0
        %v292 = vadd.f32 0.0, %v291
        %v293 = vpop.f32.mrf.mxu0
        %294 = vdwg.mxu0
        %v295 = vsel %vm246, %v227, 0
        %v298 = vsel %vm250, %v199, 0
        %300 = vmatprep.subr.bf16.mxu0 0
        %301 = vmatpush1.bf16.msra.mxu0 0
        %302 = vmatprep.subr.bf16.mxu0 0
        %303 = vmatpush1.bf16.msra.mxu0 0
        %304 = vmatprep.subr.bf16.mxu0 0
        %305 = vmatpush1.bf16.msra.mxu0 0
        %306 = vmatprep.subr.bf16.mxu0 0
        %307 = vmatpush1.bf16.msra.mxu0 0
        %308 = vmatprep.subr.bf16.mxu0 0
        %309 = vmatpush1.bf16.msra.mxu0 0
        %310 = vmatprep.subr.bf16.mxu0 0
        %311 = vmatpush1.bf16.msra.mxu0 0
        %312 = vmatprep.subr.bf16.mxu0 0
        %313 = vmatpush1.bf16.msra.mxu0 0
        %314 = vmatprep.subr.bf16.mxu0 0
        %315 = vmatpush1.bf16.msra.mxu0 %v298
        %316 = vmatprep.subr.bf16.mxu0 0
        %317 = vmatpush2.bf16.msra.mxu0 0
        %318 = vmatprep.subr.bf16.mxu0 0
        %319 = vmatpush2.bf16.msra.mxu0 0
        %320 = vmatprep.subr.bf16.mxu0 0
        %321 = vmatpush2.bf16.msra.mxu0 0
        %322 = vmatprep.subr.bf16.mxu0 0
        %323 = vmatpush2.bf16.msra.mxu0 0
        %324 = vmatprep.subr.bf16.mxu0 0
        %325 = vmatpush2.bf16.msra.mxu0 0
        %326 = vmatprep.subr.bf16.mxu0 0
        %327 = vmatpush2.bf16.msra.mxu0 0
        %328 = vmatprep.subr.bf16.mxu0 0
        %329 = vmatpush2.bf16.msra.mxu0 0
        %330 = vmatprep.subr.bf16.mxu0 0
        %331 = vmatpush2.bf16.msra.mxu0 0
        %332 = vmatprep.mubr.bf16.mxu0 0
        %333 = vmatmul.mubr.bf16.gmra.mxu0 %v295
        %v334 = vpop.f32.mrf.mxu0
        %v335 = vadd.f32 %v289, %v334
        %v336 = vpop.f32.mrf.mxu0
        %v337 = vpop.f32.mrf.mxu0
        %v338 = vadd.f32 %v292, %v337
        %v339 = vpop.f32.mrf.mxu0
        %340 = vdwg.mxu0
        %v341 = vld [vmem:[%s217] sm:$0xe]
        %v343 = vunpack.c.l.b16 %v341
        %v344 = vpack.c.b16 %v225, %v343
        %vm345 = vcmask 1046528
        %v346 = vrot.slane %v344, 1
        %v347 = vrot.slane %v228, 1
        %v348 = vsel %vm345, %v346, %v347
        %v350 = vunpack.c.l.b16 %v201
        %v351 = vpack.c.b16 %v350, %v350
        %v352 = vrot.slane %v351, 2
        %v354 = vsel %vm246, %v348, 0
        %v357 = vsel %vm250, %v352, 0
        %359 = vmatprep.subr.bf16.mxu0 0
        %360 = vmatpush1.bf16.msra.mxu0 0
        %361 = vmatprep.subr.bf16.mxu0 0
        %362 = vmatpush1.bf16.msra.mxu0 0
        %363 = vmatprep.subr.bf16.mxu0 0
        %364 = vmatpush1.bf16.msra.mxu0 0
        %365 = vmatprep.subr.bf16.mxu0 0
        %366 = vmatpush1.bf16.msra.mxu0 0
        %367 = vmatprep.subr.bf16.mxu0 0
        %368 = vmatpush1.bf16.msra.mxu0 0
        %369 = vmatprep.subr.bf16.mxu0 0
        %370 = vmatpush1.bf16.msra.mxu0 0
        %371 = vmatprep.subr.bf16.mxu0 0
        %372 = vmatpush1.bf16.msra.mxu0 0
        %373 = vmatprep.subr.bf16.mxu0 0
        %374 = vmatpush1.bf16.msra.mxu0 %v357
        %375 = vmatprep.subr.bf16.mxu0 0
        %376 = vmatpush2.bf16.msra.mxu0 0
        %377 = vmatprep.subr.bf16.mxu0 0
        %378 = vmatpush2.bf16.msra.mxu0 0
        %379 = vmatprep.subr.bf16.mxu0 0
        %380 = vmatpush2.bf16.msra.mxu0 0
        %381 = vmatprep.subr.bf16.mxu0 0
        %382 = vmatpush2.bf16.msra.mxu0 0
        %383 = vmatprep.subr.bf16.mxu0 0
        %384 = vmatpush2.bf16.msra.mxu0 0
        %385 = vmatprep.subr.bf16.mxu0 0
        %386 = vmatpush2.bf16.msra.mxu0 0
        %387 = vmatprep.subr.bf16.mxu0 0
        %388 = vmatpush2.bf16.msra.mxu0 0
        %389 = vmatprep.subr.bf16.mxu0 0
        %390 = vmatpush2.bf16.msra.mxu0 0
        %391 = vmatprep.mubr.bf16.mxu0 0
        %392 = vmatmul.mubr.bf16.gmra.mxu0 %v354
        %v393 = vpop.f32.mrf.mxu0
        %v394 = vadd.f32 0.0, %v393
        %v395 = vpop.f32.mrf.mxu0
        %v396 = vpop.f32.mrf.mxu0
        %v397 = vadd.f32 0.0, %v396
        %v398 = vpop.f32.mrf.mxu0
        %399 = vdwg.mxu0
        %v400 = vadd.f32 %v335, %v394
        %v401 = vadd.f32 %v338, %v397
        %s402 = sadd.s32 %s214, 1
        %s403 = smul.u32 %s402, 3
        %s404 = smul.addr %s403, 4
        %s405 = scalar_lea.vmem %s184, %s404
        %v406 = vld [vmem:[%s405] sm:$0xf]
        %v407 = vld [vmem:[%s405 + $0x4] sm:$0xf]
        %v410 = vunpack.c.l.b16 %v406
        %v411 = vunpack.c.l.b16 %v407
        %v412 = vpack.c.b16 %v411, %v410
        %v414 = vunpack.c.l.b16 %v202
        %v415 = vpack.c.b16 %v414, %v414
        %v416 = vrot.slane %v415, 3
        %v418 = vsel %vm246, %v412, 0
        %v421 = vsel %vm250, %v416, 0
        %423 = vmatprep.subr.bf16.mxu0 0
        %424 = vmatpush1.bf16.msra.mxu0 0
        %425 = vmatprep.subr.bf16.mxu0 0
        %426 = vmatpush1.bf16.msra.mxu0 0
        %427 = vmatprep.subr.bf16.mxu0 0
        %428 = vmatpush1.bf16.msra.mxu0 0
        %429 = vmatprep.subr.bf16.mxu0 0
        %430 = vmatpush1.bf16.msra.mxu0 0
        %431 = vmatprep.subr.bf16.mxu0 0
        %432 = vmatpush1.bf16.msra.mxu0 0
        %433 = vmatprep.subr.bf16.mxu0 0
        %434 = vmatpush1.bf16.msra.mxu0 0
        %435 = vmatprep.subr.bf16.mxu0 0
        %436 = vmatpush1.bf16.msra.mxu0 0
        %437 = vmatprep.subr.bf16.mxu0 0
        %438 = vmatpush1.bf16.msra.mxu0 %v421
        %439 = vmatprep.subr.bf16.mxu0 0
        %440 = vmatpush2.bf16.msra.mxu0 0
        %441 = vmatprep.subr.bf16.mxu0 0
        %442 = vmatpush2.bf16.msra.mxu0 0
        %443 = vmatprep.subr.bf16.mxu0 0
        %444 = vmatpush2.bf16.msra.mxu0 0
        %445 = vmatprep.subr.bf16.mxu0 0
        %446 = vmatpush2.bf16.msra.mxu0 0
        %447 = vmatprep.subr.bf16.mxu0 0
        %448 = vmatpush2.bf16.msra.mxu0 0
        %449 = vmatprep.subr.bf16.mxu0 0
        %450 = vmatpush2.bf16.msra.mxu0 0
        %451 = vmatprep.subr.bf16.mxu0 0
        %452 = vmatpush2.bf16.msra.mxu0 0
        %453 = vmatprep.subr.bf16.mxu0 0
        %454 = vmatpush2.bf16.msra.mxu0 0
        %455 = vmatprep.mubr.bf16.mxu0 0
        %456 = vmatmul.mubr.bf16.gmra.mxu0 %v418
        %v457 = vpop.f32.mrf.mxu0
        %v458 = vadd.f32 0.0, %v457
        %v459 = vpop.f32.mrf.mxu0
        %v460 = vpop.f32.mrf.mxu0
        %v461 = vadd.f32 0.0, %v460
        %v462 = vpop.f32.mrf.mxu0
        %463 = vdwg.mxu0
        %v464 = vadd.f32 %v400, %v458
        %v465 = vadd.f32 %v401, %v461
        %v466 = vld [vmem:[%s405] sm:$0xf]
        %v467 = vld [vmem:[%s405 + $0x4] sm:$0xf]
        %v468 = vld [vmem:[%s405 + $0x8] sm:$0x1]
        %v472 = vunpack.c.l.b16 %v466
        %v473 = vunpack.c.l.b16 %v467
        %v474 = vunpack.c.l.b16 %v468
        %v475 = vpack.c.b16 %v473, %v472
        %v476 = vpack.c.b16 %v474, %v474
        %v478 = vshrl.u32 %v475, 16
        %v480 = vshll.u32 %v475, 16
        %v482 = vrot.slane %v480, 1
        %v483 = vor.u32 %v478, %v482
        %v485 = vshll.u32 %v476, 16
        %v487 = vrot.slane %v485, 1
        %v488 = vsel %vm229, %v483, %v487
        %v490 = vsel %vm246, %v488, 0
        %v493 = vsel %vm250, %v203, 0
        %495 = vmatprep.subr.bf16.mxu0 0
        %496 = vmatpush1.bf16.msra.mxu0 0
        %497 = vmatprep.subr.bf16.mxu0 0
        %498 = vmatpush1.bf16.msra.mxu0 0
        %499 = vmatprep.subr.bf16.mxu0 0
        %500 = vmatpush1.bf16.msra.mxu0 0
        %501 = vmatprep.subr.bf16.mxu0 0
        %502 = vmatpush1.bf16.msra.mxu0 0
        %503 = vmatprep.subr.bf16.mxu0 0
        %504 = vmatpush1.bf16.msra.mxu0 0
        %505 = vmatprep.subr.bf16.mxu0 0
        %506 = vmatpush1.bf16.msra.mxu0 0
        %507 = vmatprep.subr.bf16.mxu0 0
        %508 = vmatpush1.bf16.msra.mxu0 0
        %509 = vmatprep.subr.bf16.mxu0 0
        %510 = vmatpush1.bf16.msra.mxu0 %v493
        %511 = vmatprep.subr.bf16.mxu0 0
        %512 = vmatpush2.bf16.msra.mxu0 0
        %513 = vmatprep.subr.bf16.mxu0 0
        %514 = vmatpush2.bf16.msra.mxu0 0
        %515 = vmatprep.subr.bf16.mxu0 0
        %516 = vmatpush2.bf16.msra.mxu0 0
        %517 = vmatprep.subr.bf16.mxu0 0
        %518 = vmatpush2.bf16.msra.mxu0 0
        %519 = vmatprep.subr.bf16.mxu0 0
        %520 = vmatpush2.bf16.msra.mxu0 0
        %521 = vmatprep.subr.bf16.mxu0 0
        %522 = vmatpush2.bf16.msra.mxu0 0
        %523 = vmatprep.subr.bf16.mxu0 0
        %524 = vmatpush2.bf16.msra.mxu0 0
        %525 = vmatprep.subr.bf16.mxu0 0
        %526 = vmatpush2.bf16.msra.mxu0 0
        %527 = vmatprep.mubr.bf16.mxu0 0
        %528 = vmatmul.mubr.bf16.gmra.mxu0 %v490
        %v529 = vpop.f32.mrf.mxu0
        %v530 = vadd.f32 0.0, %v529
        %v531 = vpop.f32.mrf.mxu0
        %v532 = vpop.f32.mrf.mxu0
        %v533 = vadd.f32 0.0, %v532
        %v534 = vpop.f32.mrf.mxu0
        %535 = vdwg.mxu0
        %v536 = vadd.f32 %v464, %v530
        %v537 = vadd.f32 %v465, %v533
        %v538 = vld [vmem:[%s405] sm:$0xe]
        %v540 = vunpack.c.l.b16 %v538
        %v541 = vpack.c.b16 %v473, %v540
        %v542 = vrot.slane %v541, 1
        %v543 = vrot.slane %v476, 1
        %v544 = vsel %vm345, %v542, %v543
        %v546 = vunpack.c.l.b16 %v204
        %v547 = vpack.c.b16 %v546, %v546
        %v548 = vrot.slane %v547, 1
        %v550 = vsel %vm246, %v544, 0
        %v553 = vsel %vm250, %v548, 0
        %555 = vmatprep.subr.bf16.mxu0 0
        %556 = vmatpush1.bf16.msra.mxu0 0
        %557 = vmatprep.subr.bf16.mxu0 0
        %558 = vmatpush1.bf16.msra.mxu0 0
        %559 = vmatprep.subr.bf16.mxu0 0
        %560 = vmatpush1.bf16.msra.mxu0 0
        %561 = vmatprep.subr.bf16.mxu0 0
        %562 = vmatpush1.bf16.msra.mxu0 0
        %563 = vmatprep.subr.bf16.mxu0 0
        %564 = vmatpush1.bf16.msra.mxu0 0
        %565 = vmatprep.subr.bf16.mxu0 0
        %566 = vmatpush1.bf16.msra.mxu0 0
        %567 = vmatprep.subr.bf16.mxu0 0
        %568 = vmatpush1.bf16.msra.mxu0 0
        %569 = vmatprep.subr.bf16.mxu0 0
        %570 = vmatpush1.bf16.msra.mxu0 %v553
        %571 = vmatprep.subr.bf16.mxu0 0
        %572 = vmatpush2.bf16.msra.mxu0 0
        %573 = vmatprep.subr.bf16.mxu0 0
        %574 = vmatpush2.bf16.msra.mxu0 0
        %575 = vmatprep.subr.bf16.mxu0 0
        %576 = vmatpush2.bf16.msra.mxu0 0
        %577 = vmatprep.subr.bf16.mxu0 0
        %578 = vmatpush2.bf16.msra.mxu0 0
        %579 = vmatprep.subr.bf16.mxu0 0
        %580 = vmatpush2.bf16.msra.mxu0 0
        %581 = vmatprep.subr.bf16.mxu0 0
        %582 = vmatpush2.bf16.msra.mxu0 0
        %583 = vmatprep.subr.bf16.mxu0 0
        %584 = vmatpush2.bf16.msra.mxu0 0
        %585 = vmatprep.subr.bf16.mxu0 0
        %586 = vmatpush2.bf16.msra.mxu0 0
        %587 = vmatprep.mubr.bf16.mxu0 0
        %588 = vmatmul.mubr.bf16.gmra.mxu0 %v550
        %v589 = vpop.f32.mrf.mxu0
        %v590 = vadd.f32 0.0, %v589
        %v591 = vpop.f32.mrf.mxu0
        %v592 = vpop.f32.mrf.mxu0
        %v593 = vadd.f32 0.0, %v592
        %v594 = vpop.f32.mrf.mxu0
        %595 = vdwg.mxu0
        %v596 = vadd.f32 %v536, %v590
        %v597 = vadd.f32 %v537, %v593
        %s598 = sadd.s32 %s214, 2
        %s599 = smul.u32 %s598, 3
        %s600 = smul.addr %s599, 4
        %s601 = scalar_lea.vmem %s184, %s600
        %v602 = vld [vmem:[%s601] sm:$0xf]
        %v603 = vld [vmem:[%s601 + $0x4] sm:$0xf]
        %v606 = vunpack.c.l.b16 %v602
        %v607 = vunpack.c.l.b16 %v603
        %v608 = vpack.c.b16 %v607, %v606
        %v610 = vunpack.c.l.b16 %v205
        %v611 = vpack.c.b16 %v610, %v610
        %v612 = vrot.slane %v611, 2
        %v614 = vsel %vm246, %v608, 0
        %v617 = vsel %vm250, %v612, 0
        %619 = vmatprep.subr.bf16.mxu0 0
        %620 = vmatpush1.bf16.msra.mxu0 0
        %621 = vmatprep.subr.bf16.mxu0 0
        %622 = vmatpush1.bf16.msra.mxu0 0
        %623 = vmatprep.subr.bf16.mxu0 0
        %624 = vmatpush1.bf16.msra.mxu0 0
        %625 = vmatprep.subr.bf16.mxu0 0
        %626 = vmatpush1.bf16.msra.mxu0 0
        %627 = vmatprep.subr.bf16.mxu0 0
        %628 = vmatpush1.bf16.msra.mxu0 0
        %629 = vmatprep.subr.bf16.mxu0 0
        %630 = vmatpush1.bf16.msra.mxu0 0
        %631 = vmatprep.subr.bf16.mxu0 0
        %632 = vmatpush1.bf16.msra.mxu0 0
        %633 = vmatprep.subr.bf16.mxu0 0
        %634 = vmatpush1.bf16.msra.mxu0 %v617
        %635 = vmatprep.subr.bf16.mxu0 0
        %636 = vmatpush2.bf16.msra.mxu0 0
        %637 = vmatprep.subr.bf16.mxu0 0
        %638 = vmatpush2.bf16.msra.mxu0 0
        %639 = vmatprep.subr.bf16.mxu0 0
        %640 = vmatpush2.bf16.msra.mxu0 0
        %641 = vmatprep.subr.bf16.mxu0 0
        %642 = vmatpush2.bf16.msra.mxu0 0
        %643 = vmatprep.subr.bf16.mxu0 0
        %644 = vmatpush2.bf16.msra.mxu0 0
        %645 = vmatprep.subr.bf16.mxu0 0
        %646 = vmatpush2.bf16.msra.mxu0 0
        %647 = vmatprep.subr.bf16.mxu0 0
        %648 = vmatpush2.bf16.msra.mxu0 0
        %649 = vmatprep.subr.bf16.mxu0 0
        %650 = vmatpush2.bf16.msra.mxu0 0
        %651 = vmatprep.mubr.bf16.mxu0 0
        %652 = vmatmul.mubr.bf16.gmra.mxu0 %v614
        %v653 = vpop.f32.mrf.mxu0
        %v654 = vadd.f32 0.0, %v653
        %v655 = vpop.f32.mrf.mxu0
        %v656 = vpop.f32.mrf.mxu0
        %v657 = vadd.f32 0.0, %v656
        %v658 = vpop.f32.mrf.mxu0
        %659 = vdwg.mxu0
        %v660 = vadd.f32 %v596, %v654
        %v661 = vadd.f32 %v597, %v657
        %v662 = vld [vmem:[%s601] sm:$0xf]
        %v663 = vld [vmem:[%s601 + $0x4] sm:$0xf]
        %v664 = vld [vmem:[%s601 + $0x8] sm:$0x1]
        %v668 = vunpack.c.l.b16 %v662
        %v669 = vunpack.c.l.b16 %v663
        %v670 = vunpack.c.l.b16 %v664
        %v671 = vpack.c.b16 %v669, %v668
        %v672 = vpack.c.b16 %v670, %v670
        %v674 = vshrl.u32 %v671, 16
        %v676 = vshll.u32 %v671, 16
        %v678 = vrot.slane %v676, 1
        %v679 = vor.u32 %v674, %v678
        %v681 = vshll.u32 %v672, 16
        %v683 = vrot.slane %v681, 1
        %v684 = vsel %vm229, %v679, %v683
        %v686 = vunpack.c.l.b16 %v206
        %v687 = vpack.c.b16 %v686, %v686
        %v688 = vrot.slane %v687, 3
        %v690 = vsel %vm246, %v684, 0
        %v693 = vsel %vm250, %v688, 0
        %695 = vmatprep.subr.bf16.mxu0 0
        %696 = vmatpush1.bf16.msra.mxu0 0
        %697 = vmatprep.subr.bf16.mxu0 0
        %698 = vmatpush1.bf16.msra.mxu0 0
        %699 = vmatprep.subr.bf16.mxu0 0
        %700 = vmatpush1.bf16.msra.mxu0 0
        %701 = vmatprep.subr.bf16.mxu0 0
        %702 = vmatpush1.bf16.msra.mxu0 0
        %703 = vmatprep.subr.bf16.mxu0 0
        %704 = vmatpush1.bf16.msra.mxu0 0
        %705 = vmatprep.subr.bf16.mxu0 0
        %706 = vmatpush1.bf16.msra.mxu0 0
        %707 = vmatprep.subr.bf16.mxu0 0
        %708 = vmatpush1.bf16.msra.mxu0 0
        %709 = vmatprep.subr.bf16.mxu0 0
        %710 = vmatpush1.bf16.msra.mxu0 %v693
        %711 = vmatprep.subr.bf16.mxu0 0
        %712 = vmatpush2.bf16.msra.mxu0 0
        %713 = vmatprep.subr.bf16.mxu0 0
        %714 = vmatpush2.bf16.msra.mxu0 0
        %715 = vmatprep.subr.bf16.mxu0 0
        %716 = vmatpush2.bf16.msra.mxu0 0
        %717 = vmatprep.subr.bf16.mxu0 0
        %718 = vmatpush2.bf16.msra.mxu0 0
        %719 = vmatprep.subr.bf16.mxu0 0
        %720 = vmatpush2.bf16.msra.mxu0 0
        %721 = vmatprep.subr.bf16.mxu0 0
        %722 = vmatpush2.bf16.msra.mxu0 0
        %723 = vmatprep.subr.bf16.mxu0 0
        %724 = vmatpush2.bf16.msra.mxu0 0
        %725 = vmatprep.subr.bf16.mxu0 0
        %726 = vmatpush2.bf16.msra.mxu0 0
        %727 = vmatprep.mubr.bf16.mxu0 0
        %728 = vmatmul.mubr.bf16.gmra.mxu0 %v690
        %v729 = vpop.f32.mrf.mxu0
        %v730 = vadd.f32 0.0, %v729
        %v731 = vpop.f32.mrf.mxu0
        %v732 = vpop.f32.mrf.mxu0
        %v733 = vadd.f32 0.0, %v732
        %v734 = vpop.f32.mrf.mxu0
        %735 = vdwg.mxu0
        %v736 = vadd.f32 %v660, %v730
        %v737 = vadd.f32 %v661, %v733
        %v738 = vld [vmem:[%s601] sm:$0xe]
        %v740 = vunpack.c.l.b16 %v738
        %v741 = vpack.c.b16 %v669, %v740
        %v742 = vrot.slane %v741, 1
        %v743 = vrot.slane %v672, 1
        %v744 = vsel %vm345, %v742, %v743
        %v746 = vsel %vm246, %v744, 0
        %v749 = vsel %vm250, %v207, 0
        %751 = vmatprep.subr.bf16.mxu0 0
        %752 = vmatpush1.bf16.msra.mxu0 0
        %753 = vmatprep.subr.bf16.mxu0 0
        %754 = vmatpush1.bf16.msra.mxu0 0
        %755 = vmatprep.subr.bf16.mxu0 0
        %756 = vmatpush1.bf16.msra.mxu0 0
        %757 = vmatprep.subr.bf16.mxu0 0
        %758 = vmatpush1.bf16.msra.mxu0 0
        %759 = vmatprep.subr.bf16.mxu0 0
        %760 = vmatpush1.bf16.msra.mxu0 0
        %761 = vmatprep.subr.bf16.mxu0 0
        %762 = vmatpush1.bf16.msra.mxu0 0
        %763 = vmatprep.subr.bf16.mxu0 0
        %764 = vmatpush1.bf16.msra.mxu0 0
        %765 = vmatprep.subr.bf16.mxu0 0
        %766 = vmatpush1.bf16.msra.mxu0 %v749
        %767 = vmatprep.subr.bf16.mxu0 0
        %768 = vmatpush2.bf16.msra.mxu0 0
        %769 = vmatprep.subr.bf16.mxu0 0
        %770 = vmatpush2.bf16.msra.mxu0 0
        %771 = vmatprep.subr.bf16.mxu0 0
        %772 = vmatpush2.bf16.msra.mxu0 0
        %773 = vmatprep.subr.bf16.mxu0 0
        %774 = vmatpush2.bf16.msra.mxu0 0
        %775 = vmatprep.subr.bf16.mxu0 0
        %776 = vmatpush2.bf16.msra.mxu0 0
        %777 = vmatprep.subr.bf16.mxu0 0
        %778 = vmatpush2.bf16.msra.mxu0 0
        %779 = vmatprep.subr.bf16.mxu0 0
        %780 = vmatpush2.bf16.msra.mxu0 0
        %781 = vmatprep.subr.bf16.mxu0 0
        %782 = vmatpush2.bf16.msra.mxu0 0
        %783 = vmatprep.mubr.bf16.mxu0 0
        %784 = vmatmul.mubr.bf16.gmra.mxu0 %v746
        %v785 = vpop.f32.mrf.mxu0
        %v786 = vadd.f32 0.0, %v785
        %v787 = vpop.f32.mrf.mxu0
        %v788 = vpop.f32.mrf.mxu0
        %v789 = vadd.f32 0.0, %v788
        %v790 = vpop.f32.mrf.mxu0
        %791 = vdwg.mxu0
        %v792 = vadd.f32 %v736, %v786
        %v793 = vadd.f32 %v737, %v789
        %v795 = vlaneseq
        %v796 = vshrl.u32 %v795, 7
        %v797 = vsub.s32 0, %v796
        %v798 = vrot.slane %v198, %v797
        %v800 = vadd.f32 %v792, %v798
        %v801 = vadd.f32 %v793, %v798
        %v802 = vmax.f32 %v800, 0.0
        %v803 = vmax.f32 %v801, 0.0
        %v804 = vpack.c.bf16 %v803, %v802
        %v806 = vunpack.c.l.b16 %v804
        %v807 = vunpack.c.h.b16 %v804
        %v808 = vpack.c.b16 %v806, %v806
        %v809 = vpack.c.b16 %v807, %v807
        %s812 = smul.u32 %s209, 2
        %s813 = smul.addr %s812, 4
        %s814 = scalar_lea.vmem %s194, %s813
        %vm815 = vcmask 60416
        %816 = vst.msk [vmem:[%s814] sm:$0xf] %vm815, %v808
        %817 = vst.msk [vmem:[%s814 + $0x4] sm:$0xf] %vm815, %v809
      $region37: #{_lambda_.14} parent=31 // loop_footer
        %s213 = sadd.s32 1, %s209
      $region38: #{_lambda_.14} parent=31 // loop_footer_branch
        %208 = sbr.rel target = $region34
      $region39: #{_lambda_.14} parent=31 // loop_exit
        _
      %s818 = smul.u32 8, %s19
      %p819 = scmp.lt.s32.totalorder %s18, 1
      %s820 = scalar_select %p819, %s18, 1
      %p821 = scmp.lt.s32.totalorder %s818, 15
      %s822 = scalar_select %p821, %s818, 15
      %s823 = smul.addr %s822, 2
      %s824 = smul.addr %s820, 32
      %s825 = sadd.s32 %s823, %s824
      %s826 = smul.addr %s825, 4
      %s827 = scalar_lea.vmem %s3, %s826
      // Predicated region
      $region40: #{_lambda_.14} parent=31 // pred_check
        %p828 = pneg %p114
      $region41: #{_lambda_.14} parent=31 // pred_check_branch
        %830 = sbr.rel (%p828) target = $region43
      $region42: #{_lambda_.14} parent=31 // pred_region
        %s831 = smul.u32 8, %s19
      $region43: #{_lambda_.14} parent=31 // pred_fallthru
        _
    $region32: #{_lambda_.14} parent=5 // pred_fallthru
      _
    %p832 = scmp.le.s32.totalorder 2, %s9
    // Predicated region
    $region44: #{_lambda_.14} parent=5 // pred_check
      %p833 = pneg %p832
    $region45: #{_lambda_.14} parent=5 // pred_check_branch
      %835 = sbr.rel (%p833) target = $region47
    $region46: #{_lambda_.14} parent=5 // pred_region
      %s836 = ssub.s32 %s9, 2
      // Predicated region
      $region48: #{_lambda_.14} parent=46 // pred_check
        %p837 = pneg %p120
      $region49: #{_lambda_.14} parent=46 // pred_check_branch
        %839 = sbr.rel (%p837) target = $region51
      $region50: #{_lambda_.14} parent=46 // pred_region
        %s840 = smul.u32 8, %s21
        %p841 = scmp.lt.s32.totalorder %s20, 1
        %s842 = scalar_select %p841, %s20, 1
        %p843 = scmp.lt.s32.totalorder %s840, 15
        %s844 = scalar_select %p843, %s840, 15
        %s845 = smul.addr %s844, 2
        %s846 = smul.addr %s842, 32
        %s847 = sadd.s32 %s845, %s846
        %s848 = smul.addr %s847, 4
        %s849 = scalar_lea.vmem %s3, %s848
      $region51: #{_lambda_.14} parent=46 // pred_fallthru
        _
    $region47: #{_lambda_.14} parent=5 // pred_fallthru
      _
  $region6: #{_lambda_.14} parent=0 // loop_footer
    %s13 = sadd.s32 1, %s9
  $region7: #{_lambda_.14} parent=0 // loop_footer_branch
    %8 = sbr.rel target = $region3
  $region8: #{_lambda_.14} parent=0 // loop_exit
    _

// kernel: _lambda_.21
$region0: #{_lambda_.21}
  #allocation0 [shape = 'u32[]', space=smem, size = 0x4, offset = 0x4, fixed_abs, tag = 'smem constant byte address 0x4 - core index']
  #allocation1 [shape = 'u32[144,128]{1,0:T(1,128)}', space=vmem, size = 0x12000, scoped, tag = 'internal scratch']
  %s0 = inlined_call_operand.vmem [shape: bf16[2,10,10,8], index: 0, kind: input, shape index: {}]
  %s1 = inlined_call_operand.vmem [shape: bf16[72,16], index: 1, kind: input, shape index: {}]
  %s2 = inlined_call_operand.vmem [shape: f32[1,16], index: 2, kind: input, shape index: {}]
  %s3 = inlined_call_operand.vmem [shape: bf16[2,8,8,16], index: 3, kind: output, shape index: {}]
  %s4 = sld [smem:[#allocation0]]
  $region52: #{_lambda_.21} parent=0
    _
  %s6 = ssub.s32 1, %s4
  %s7 = scalar_select 0, %s6, %s4
  loop: start=0, step=1, limit=4
  $region2: #{_lambda_.21} parent=0 // loop_pre_header
    _
  $region3: #{_lambda_.21} parent=0 // loop_header
    %s9 = sphi 0, %s13
    %p10 = scmp.ge.s32.totalorder %s9, 4
    %s16 = sphi 0, %s28
    %s17 = sphi 0, %s24
    %s18 = sphi 0, %s16
    %s19 = sphi 0, %s17
    %s20 = sphi 0, %s18
    %s21 = sphi 0, %s19
    %s31 = sphi 0, %s33
    %s34 = sphi 0, %s31
    %s35 = sphi 0, %s34
    %s51 = sphi 0, %s35
    %s55 = sphi 0, %s55
    %s57 = sphi 0, %s55
    %s58 = sphi 0, %s57
    %s72 = sphi 0, %s58
    %s76 = sphi 0, %s76
    %s78 = sphi 0, %s76
    %s79 = sphi 0, %s78
    %s93 = sphi 0, %s79
    %s101 = sphi 0, %s103
    %s104 = sphi 0, %s101
    %s105 = sphi 0, %s104
    %s121 = sphi 0, %s105
  $region4: #{_lambda_.21} parent=0 // loop_header_branch
    %12 = sbr.rel (%p10) target = $region8
  $region5: #{_lambda_.21} parent=0 // loop_body
    %s14 = ssub.s32 %s9, 1
    %s15 = ssub.s32 %s9, 2
    %s22 = sadd.s32 1, %s17
    %p23 = scmp.ge.s32.totalorder %s22, 1
    %s24 = scalar_select %p23, 0, %s22
    %s25 = sadd.s32 1, %s16
    %s26 = scalar_select %p23, %s25, %s16
    %p27 = scmp.ge.s32.totalorder %s26, 2
    %s28 = scalar_select %p27, 0, %s26
    %s29 = ssub.s32 %s16, %s28
    %p30 = scmp.eq.s32.totalorder %s29, 0
    %s32 = sadd.s32 %s31, 1
    %s33 = scalar_select %p30, %s31, %s32
    %p36 = pneg %p30
    %p37 = scmp.eq.s32.totalorder %s9, 1
    %p38 = por %p36, %p37
    %p39 = scmp.ne.s32.totalorder %s31, %s34
    %p40 = scmp.eq.s32.totalorder %s9, 0
    %p41 = por %p39, %p40
    %p42 = scmp.ne.s32.totalorder %s31, %s34
    %p43 = scmp.eq.s32.totalorder %s14, 1
    %p44 = por %p42, %p43
    %p45 = scmp.ne.s32.totalorder %s34, %s35
    %p46 = scmp.eq.s32.totalorder %s14, 0
    %p47 = por %p45, %p46
    %p48 = scmp.ne.s32.totalorder %s34, %s35
    %p49 = scmp.eq.s32.totalorder %s15, 1
    %p50 = por %p48, %p49
    %p52 = scmp.ne.s32.totalorder %s35, %s51
    %p53 = scmp.eq.s32.totalorder %s15, 0
    %p54 = por %p52, %p53
    %s56 = sadd.s32 %s55, 1
    %p59 = scmp.eq.s32.totalorder %s9, 1
    %p60 = scmp.ne.s32.totalorder %s55, %s57
    %p61 = scmp.eq.s32.totalorder %s9, 0
    %p62 = por %p60, %p61
    %p63 = scmp.ne.s32.totalorder %s55, %s57
    %p64 = scmp.eq.s32.totalorder %s14, 1
    %p65 = por %p63, %p64
    %p66 = scmp.ne.s32.totalorder %s57, %s58
    %p67 = scmp.eq.s32.totalorder %s14, 0
    %p68 = por %p66, %p67
    %p69 = scmp.ne.s32.totalorder %s57, %s58
    %p70 = scmp.eq.s32.totalorder %s15, 1
    %p71 = por %p69, %p70
    %p73 = scmp.ne.s32.totalorder %s58, %s72
    %p74 = scmp.eq.s32.totalorder %s15, 0
    %p75 = por %p73, %p74
    %s77 = sadd.s32 %s76, 1
    %p80 = scmp.eq.s32.totalorder %s9, 1
    %p81 = scmp.ne.s32.totalorder %s76, %s78
    %p82 = scmp.eq.s32.totalorder %s9, 0
    %p83 = por %p81, %p82
    %p84 = scmp.ne.s32.totalorder %s76, %s78
    %p85 = scmp.eq.s32.totalorder %s14, 1
    %p86 = por %p84, %p85
    %p87 = scmp.ne.s32.totalorder %s78, %s79
    %p88 = scmp.eq.s32.totalorder %s14, 0
    %p89 = por %p87, %p88
    %p90 = scmp.ne.s32.totalorder %s78, %s79
    %p91 = scmp.eq.s32.totalorder %s15, 1
    %p92 = por %p90, %p91
    %p94 = scmp.ne.s32.totalorder %s79, %s93
    %p95 = scmp.eq.s32.totalorder %s15, 0
    %p96 = por %p94, %p95
    %s97 = ssub.s32 %s16, %s28
    %s98 = ssub.s32 %s17, %s24
    %s99 = sor.u32 %s97, %s98
    %p100 = scmp.eq.s32.totalorder %s99, 0
    %s102 = sadd.s32 %s101, 1
    %s103 = scalar_select %p100, %s101, %s102
    %p106 = pneg %p100
    %p107 = scmp.eq.s32.totalorder %s9, 1
    %p108 = por %p106, %p107
    %p109 = scmp.ne.s32.totalorder %s101, %s104
    %p110 = scmp.eq.s32.totalorder %s9, 0
    %p111 = por %p109, %p110
    %p112 = scmp.ne.s32.totalorder %s101, %s104
    %p113 = scmp.eq.s32.totalorder %s14, 1
    %p114 = por %p112, %p113
    %p115 = scmp.ne.s32.totalorder %s104, %s105
    %p116 = scmp.eq.s32.totalorder %s14, 0
    %p117 = por %p115, %p116
    %p118 = scmp.ne.s32.totalorder %s104, %s105
    %p119 = scmp.eq.s32.totalorder %s15, 1
    %p120 = por %p118, %p119
    %p122 = scmp.ne.s32.totalorder %s105, %s121
    %p123 = scmp.eq.s32.totalorder %s15, 0
    %p124 = por %p122, %p123
    %p125 = scmp.le.s32.totalorder 1, %s9
    %p126 = scmp.lt.s32.totalorder %s9, 3
    %p127 = pnand %p125, %p126
    %p128 = pneg %p127
    // Predicated region
    $region9: #{_lambda_.21} parent=5 // pred_check
      _
    $region10: #{_lambda_.21} parent=5 // pred_check_branch
      %130 = sbr.rel (%p127) target = $region12
    $region11: #{_lambda_.21} parent=5 // pred_region
      %s131 = ssub.s32 %s9, 1
      // Predicated region
      $region13: #{_lambda_.21} parent=11 // pred_check
        %p132 = pneg %p68
      $region14: #{_lambda_.21} parent=11 // pred_check_branch
        %134 = sbr.rel (%p132) target = $region16
      $region15: #{_lambda_.21} parent=11 // pred_region
        _
      $region16: #{_lambda_.21} parent=11 // pred_fallthru
        _
      // Predicated region
      $region17: #{_lambda_.21} parent=11 // pred_check
        %p135 = pneg %p89
      $region18: #{_lambda_.21} parent=11 // pred_check_branch
        %137 = sbr.rel (%p135) target = $region20
      $region19: #{_lambda_.21} parent=11 // pred_region
        _
      $region20: #{_lambda_.21} parent=11 // pred_fallthru
        _
    $region12: #{_lambda_.21} parent=5 // pred_fallthru
      _
    %p138 = scmp.lt.s32.totalorder %s9, 2
    // Predicated region
    $region21: #{_lambda_.21} parent=5 // pred_check
      %p139 = pneg %p138
    $region22: #{_lambda_.21} parent=5 // pred_check_branch
      %141 = sbr.rel (%p139) target = $region24
    $region23: #{_lambda_.21} parent=5 // pred_region
      // Predicated region
      $region25: #{_lambda_.21} parent=23 // pred_check
        %p142 = pneg %p41
      $region26: #{_lambda_.21} parent=23 // pred_check_branch
        %144 = sbr.rel (%p142) target = $region28
      $region27: #{_lambda_.21} parent=23 // pred_region
        %p145 = scmp.lt.s32.totalorder %s16, 1
        %s146 = scalar_select %p145, %s16, 1
        %s147 = smul.addr %s146, 20
        %s148 = smul.addr %s147, 4
        %s149 = scalar_lea.vmem %s0, %s148
      $region28: #{_lambda_.21} parent=23 // pred_fallthru
        _
    $region24: #{_lambda_.21} parent=5 // pred_fallthru
      _
    %p150 = scmp.le.s32.totalorder 1, %s9
    %p151 = scmp.lt.s32.totalorder %s9, 3
    %p152 = pnand %p150, %p151
    %p153 = pneg %p152
    // Predicated region
    $region29: #{_lambda_.21} parent=5 // pred_check
      _
    $region30: #{_lambda_.21} parent=5 // pred_check_branch
      %155 = sbr.rel (%p152) target = $region32
    $region31: #{_lambda_.21} parent=5 // pred_region
      %s156 = ssub.s32 %s9, 1
      %p157 = scmp.lt.s32.totalorder %s18, 1
      %s158 = scalar_select %p157, %s18, 1
      %s159 = smul.addr %s158, 20
      %s160 = smul.addr %s159, 4
      %s161 = scalar_lea.vmem %s0, %s160
      %p162 = pneg %p47
      %p163 = pneg %p44
      %p164 = pneg %p68
      %p165 = pneg %p65
      %p166 = pneg %p89
      %p167 = pneg %p86
      %p168 = pneg %p117
      %p169 = pneg %p114
      %s170 = smul.u32 8, %s19
      %p171 = scmp.lt.s32.totalorder %s18, 1
      %s172 = scalar_select %p171, %s18, 1
      %p173 = scmp.lt.s32.totalorder %s170, 7
      %s174 = scalar_select %p173, %s170, 7
      %s175 = smul.addr %s172, 8
      %s176 = sadd.s32 %s174, %s175
      %s177 = smul.addr %s176, 4
      %s178 = scalar_lea.vmem %s3, %s177
      %p179 = scmp.lt.s32.totalorder %s18, 1
      %s180 = scalar_select %p179, %s18, 1
      %s181 = smul.addr %s180, 20
      %s182 = smul.addr %s181, 4
      %s183 = scalar_lea.vmem %s0, %s182
      %s184 = smul.u32 8, %s19
      %p185 = scmp.lt.s32.totalorder %s18, 1
      %s186 = scalar_select %p185, %s18, 1
      %p187 = scmp.lt.s32.totalorder %s184, 7
      %s188 = scalar_select %p187, %s184, 7
      %s189 = smul.addr %s186, 8
      %s190 = sadd.s32 %s188, %s189
      %s191 = smul.addr %s190, 4
      %s192 = scalar_lea.vmem %s3, %s191
      %s193 = smul.u32 8, %s19
      %s195 = smul.u32 %s19, 8
      %v196 = vld [vmem:[%s2] sm:$0x1]
      %v197 = vld [vmem:[%s1] sm:$0xf]
      %v198 = vld [vmem:[%s1 + $0x4] sm:$0xf]
      %v199 = vld [vmem:[%s1 + $0x8] sm:$0xf]
      %v200 = vld [vmem:[%s1 + $0xc] sm:$0xf]
      %v201 = vld [vmem:[%s1 + $0x10] sm:$0xf]
      %v202 = vld [vmem:[%s1 + $0x14] sm:$0xf]
      %v203 = vld [vmem:[%s1 + $0x18] sm:$0xf]
      %v204 = vld [vmem:[%s1 + $0x1c] sm:$0xf]
      %v205 = vld [vmem:[%s1 + $0x20] sm:$0xf]
      loop: start=0, step=1, limit=8
      $region33: #{_lambda_.21} parent=31 // loop_pre_header
        _
      $region34: #{_lambda_.21} parent=31 // loop_header
        %s207 = sphi 0, %s211
        %p208 = scmp.ge.s32.totalorder %s207, 8
      $region35: #{_lambda_.21} parent=31 // loop_header_branch
        %210 = sbr.rel (%p208) target = $region39
      $region36: #{_lambda_.21} parent=31 // loop_body
        %s212 = sadd.s32 %s195, %s207
        %s213 = smul.u32 %s212, 2
        %s214 = smul.addr %s213, 4
        %s215 = scalar_lea.vmem %s183, %s214
        %v216 = vld [vmem:[%s215] sm:$0xf]
        %v217 = vld [vmem:[%s215 + $0x4] sm:$0x1]
        %v220 = vunpack.c.l.b16 %v216
        %v221 = vunpack.c.l.b16 %v217
        %v222 = vpack.c.b16 %v221, %v220
        %v224 = vshrl.u32 %v222, 16
        %v226 = vshll.u32 %v222, 16
        %v228 = vrot.slane %v226, 1
        %v229 = vor.u32 %v224, %v228
        %vm230 = vcmask 64512
        %v232 = vsel %vm230, %v229, 0
        %vm234 = vcmask 1043456
        %v236 = vsel %vm234, %v198, 0
        %238 = vmatprep.subr.bf16.mxu0 0
        %239 = vmatpush1.bf16.msra.mxu0 0
        %240 = vmatprep.subr.bf16.mxu0 0
        %241 = vmatpush1.bf16.msra.mxu0 0
        %242 = vmatprep.subr.bf16.mxu0 0
        %243 = vmatpush1.bf16.msra.mxu0 0
        %244 = vmatprep.subr.bf16.mxu0 0
        %245 = vmatpush1.bf16.msra.mxu0 0
        %246 = vmatprep.subr.bf16.mxu0 0
        %247 = vmatpush1.bf16.msra.mxu0 0
        %248 = vmatprep.subr.bf16.mxu0 0
        %249 = vmatpush1.bf16.msra.mxu0 0
        %250 = vmatprep.subr.bf16.mxu0 0
        %251 = vmatpush1.bf16.msra.mxu0 0
        %252 = vmatprep.subr.bf16.mxu0 0
        %253 = vmatpush1.bf16.msra.mxu0 %v236
        %254 = vmatprep.subr.bf16.mxu0 0
        %255 = vmatpush2.bf16.msra.mxu0 0
        %256 = vmatprep.subr.bf16.mxu0 0
        %257 = vmatpush2.bf16.msra.mxu0 0
        %258 = vmatprep.subr.bf16.mxu0 0
        %259 = vmatpush2.bf16.msra.mxu0 0
        %260 = vmatprep.subr.bf16.mxu0 0
        %261 = vmatpush2.bf16.msra.mxu0 0
        %262 = vmatprep.subr.bf16.mxu0 0
        %263 = vmatpush2.bf16.msra.mxu0 0
        %264 = vmatprep.subr.bf16.mxu0 0
        %265 = vmatpush2.bf16.msra.mxu0 0
        %266 = vmatprep.subr.bf16.mxu0 0
        %267 = vmatpush2.bf16.msra.mxu0 0
        %268 = vmatprep.subr.bf16.mxu0 0
        %269 = vmatpush2.bf16.msra.mxu0 0
        %270 = vmatprep.mubr.bf16.mxu0 0
        %271 = vmatmul.mubr.bf16.gmra.mxu0 %v232
        %v272 = vpop.f32.mrf.mxu0
        %v273 = vadd.f32 0.0, %v272
        %v274 = vpop.f32.mrf.mxu0
        %v275 = vpop.f32.mrf.mxu0
        %v276 = vpop.f32.mrf.mxu0
        %277 = vdwg.mxu0
        %v279 = vsel %vm230, %v216, 0
        %v282 = vsel %vm234, %v197, 0
        %284 = vmatprep.subr.bf16.mxu0 0
        %285 = vmatpush1.bf16.msra.mxu0 0
        %286 = vmatprep.subr.bf16.mxu0 0
        %287 = vmatpush1.bf16.msra.mxu0 0
        %288 = vmatprep.subr.bf16.mxu0 0
        %289 = vmatpush1.bf16.msra.mxu0 0
        %290 = vmatprep.subr.bf16.mxu0 0
        %291 = vmatpush1.bf16.msra.mxu0 0
        %292 = vmatprep.subr.bf16.mxu0 0
        %293 = vmatpush1.bf16.msra.mxu0 0
        %294 = vmatprep.subr.bf16.mxu0 0
        %295 = vmatpush1.bf16.msra.mxu0 0
        %296 = vmatprep.subr.bf16.mxu0 0
        %297 = vmatpush1.bf16.msra.mxu0 0
        %298 = vmatprep.subr.bf16.mxu0 0
        %299 = vmatpush1.bf16.msra.mxu0 %v282
        %300 = vmatprep.subr.bf16.mxu0 0
        %301 = vmatpush2.bf16.msra.mxu0 0
        %302 = vmatprep.subr.bf16.mxu0 0
        %303 = vmatpush2.bf16.msra.mxu0 0
        %304 = vmatprep.subr.bf16.mxu0 0
        %305 = vmatpush2.bf16.msra.mxu0 0
        %306 = vmatprep.subr.bf16.mxu0 0
        %307 = vmatpush2.bf16.msra.mxu0 0
        %308 = vmatprep.subr.bf16.mxu0 0
        %309 = vmatpush2.bf16.msra.mxu0 0
        %310 = vmatprep.subr.bf16.mxu0 0
        %311 = vmatpush2.bf16.msra.mxu0 0
        %312 = vmatprep.subr.bf16.mxu0 0
        %313 = vmatpush2.bf16.msra.mxu0 0
        %314 = vmatprep.subr.bf16.mxu0 0
        %315 = vmatpush2.bf16.msra.mxu0 0
        %316 = vmatprep.mubr.bf16.mxu0 0
        %317 = vmatmul.mubr.bf16.gmra.mxu0 %v279
        %v318 = vpop.f32.mrf.mxu0
        %v319 = vadd.f32 %v273, %v318
        %v320 = vpop.f32.mrf.mxu0
        %v321 = vpop.f32.mrf.mxu0
        %v322 = vpop.f32.mrf.mxu0
        %323 = vdwg.mxu0
        %v324 = vld [vmem:[%s215] sm:$0xe]
        %v326 = vunpack.c.l.b16 %v324
        %v327 = vpack.c.b16 %v221, %v326
        %v328 = vrot.slane %v327, 1
        %v330 = vsel %vm230, %v328, 0
        %v333 = vsel %vm234, %v199, 0
        %335 = vmatprep.subr.bf16.mxu0 0
        %336 = vmatpush1.bf16.msra.mxu0 0
        %337 = vmatprep.subr.bf16.mxu0 0
        %338 = vmatpush1.bf16.msra.mxu0 0
        %339 = vmatprep.subr.bf16.mxu0 0
        %340 = vmatpush1.bf16.msra.mxu0 0
        %341 = vmatprep.subr.bf16.mxu0 0
        %342 = vmatpush1.bf16.msra.mxu0 0
        %343 = vmatprep.subr.bf16.mxu0 0
        %344 = vmatpush1.bf16.msra.mxu0 0
        %345 = vmatprep.subr.bf16.mxu0 0
        %346 = vmatpush1.bf16.msra.mxu0 0
        %347 = vmatprep.subr.bf16.mxu0 0
        %348 = vmatpush1.bf16.msra.mxu0 0
        %349 = vmatprep.subr.bf16.mxu0 0
        %350 = vmatpush1.bf16.msra.mxu0 %v333
        %351 = vmatprep.subr.bf16.mxu0 0
        %352 = vmatpush2.bf16.msra.mxu0 0
        %353 = vmatprep.subr.bf16.mxu0 0
        %354 = vmatpush2.bf16.msra.mxu0 0
        %355 = vmatprep.subr.bf16.mxu0 0
        %356 = vmatpush2.bf16.msra.mxu0 0
        %357 = vmatprep.subr.bf16.mxu0 0
        %358 = vmatpush2.bf16.msra.mxu0 0
        %359 = vmatprep.subr.bf16.mxu0 0
        %360 = vmatpush2.bf16.msra.mxu0 0
        %361 = vmatprep.subr.bf16.mxu0 0
        %362 = vmatpush2.bf16.msra.mxu0 0
        %363 = vmatprep.subr.bf16.mxu0 0
        %364 = vmatpush2.bf16.msra.mxu0 0
        %365 = vmatprep.subr.bf16.mxu0 0
        %366 = vmatpush2.bf16.msra.mxu0 0
        %367 = vmatprep.mubr.bf16.mxu0 0
        %368 = vmatmul.mubr.bf16.gmra.mxu0 %v330
        %v369 = vpop.f32.mrf.mxu0
        %v370 = vadd.f32 0.0, %v369
        %v371 = vpop.f32.mrf.mxu0
        %v372 = vpop.f32.mrf.mxu0
        %v373 = vpop.f32.mrf.mxu0
        %374 = vdwg.mxu0
        %v375 = vadd.f32 %v319, %v370
        %s376 = sadd.s32 %s212, 1
        %s377 = smul.u32 %s376, 2
        %s378 = smul.addr %s377, 4
        %s379 = scalar_lea.vmem %s183, %s378
        %v380 = vld [vmem:[%s379] sm:$0xf]
        %v382 = vsel %vm230, %v380, 0
        %v385 = vsel %vm234, %v200, 0
        %387 = vmatprep.subr.bf16.mxu0 0
        %388 = vmatpush1.bf16.msra.mxu0 0
        %389 = vmatprep.subr.bf16.mxu0 0
        %390 = vmatpush1.bf16.msra.mxu0 0
        %391 = vmatprep.subr.bf16.mxu0 0
        %392 = vmatpush1.bf16.msra.mxu0 0
        %393 = vmatprep.subr.bf16.mxu0 0
        %394 = vmatpush1.bf16.msra.mxu0 0
        %395 = vmatprep.subr.bf16.mxu0 0
        %396 = vmatpush1.bf16.msra.mxu0 0
        %397 = vmatprep.subr.bf16.mxu0 0
        %398 = vmatpush1.bf16.msra.mxu0 0
        %399 = vmatprep.subr.bf16.mxu0 0
        %400 = vmatpush1.bf16.msra.mxu0 0
        %401 = vmatprep.subr.bf16.mxu0 0
        %402 = vmatpush1.bf16.msra.mxu0 %v385
        %403 = vmatprep.subr.bf16.mxu0 0
        %404 = vmatpush2.bf16.msra.mxu0 0
        %405 = vmatprep.subr.bf16.mxu0 0
        %406 = vmatpush2.bf16.msra.mxu0 0
        %407 = vmatprep.subr.bf16.mxu0 0
        %408 = vmatpush2.bf16.msra.mxu0 0
        %409 = vmatprep.subr.bf16.mxu0 0
        %410 = vmatpush2.bf16.msra.mxu0 0
        %411 = vmatprep.subr.bf16.mxu0 0
        %412 = vmatpush2.bf16.msra.mxu0 0
        %413 = vmatprep.subr.bf16.mxu0 0
        %414 = vmatpush2.bf16.msra.mxu0 0
        %415 = vmatprep.subr.bf16.mxu0 0
        %416 = vmatpush2.bf16.msra.mxu0 0
        %417 = vmatprep.subr.bf16.mxu0 0
        %418 = vmatpush2.bf16.msra.mxu0 0
        %419 = vmatprep.mubr.bf16.mxu0 0
        %420 = vmatmul.mubr.bf16.gmra.mxu0 %v382
        %v421 = vpop.f32.mrf.mxu0
        %v422 = vadd.f32 0.0, %v421
        %v423 = vpop.f32.mrf.mxu0
        %v424 = vpop.f32.mrf.mxu0
        %v425 = vpop.f32.mrf.mxu0
        %426 = vdwg.mxu0
        %v427 = vadd.f32 %v375, %v422
        %v428 = vld [vmem:[%s379] sm:$0xf]
        %v429 = vld [vmem:[%s379 + $0x4] sm:$0x1]
        %v432 = vunpack.c.l.b16 %v428
        %v433 = vunpack.c.l.b16 %v429
        %v434 = vpack.c.b16 %v433, %v432
        %v436 = vshrl.u32 %v434, 16
        %v438 = vshll.u32 %v434, 16
        %v440 = vrot.slane %v438, 1
        %v441 = vor.u32 %v436, %v440
        %v443 = vsel %vm230, %v441, 0
        %v446 = vsel %vm234, %v201, 0
        %448 = vmatprep.subr.bf16.mxu0 0
        %449 = vmatpush1.bf16.msra.mxu0 0
        %450 = vmatprep.subr.bf16.mxu0 0
        %451 = vmatpush1.bf16.msra.mxu0 0
        %452 = vmatprep.subr.bf16.mxu0 0
        %453 = vmatpush1.bf16.msra.mxu0 0
        %454 = vmatprep.subr.bf16.mxu0 0
        %455 = vmatpush1.bf16.msra.mxu0 0
        %456 = vmatprep.subr.bf16.mxu0 0
        %457 = vmatpush1.bf16.msra.mxu0 0
        %458 = vmatprep.subr.bf16.mxu0 0
        %459 = vmatpush1.bf16.msra.mxu0 0
        %460 = vmatprep.subr.bf16.mxu0 0
        %461 = vmatpush1.bf16.msra.mxu0 0
        %462 = vmatprep.subr.bf16.mxu0 0
        %463 = vmatpush1.bf16.msra.mxu0 %v446
        %464 = vmatprep.subr.bf16.mxu0 0
        %465 = vmatpush2.bf16.msra.mxu0 0
        %466 = vmatprep.subr.bf16.mxu0 0
        %467 = vmatpush2.bf16.msra.mxu0 0
        %468 = vmatprep.subr.bf16.mxu0 0
        %469 = vmatpush2.bf16.msra.mxu0 0
        %470 = vmatprep.subr.bf16.mxu0 0
        %471 = vmatpush2.bf16.msra.mxu0 0
        %472 = vmatprep.subr.bf16.mxu0 0
        %473 = vmatpush2.bf16.msra.mxu0 0
        %474 = vmatprep.subr.bf16.mxu0 0
        %475 = vmatpush2.bf16.msra.mxu0 0
        %476 = vmatprep.subr.bf16.mxu0 0
        %477 = vmatpush2.bf16.msra.mxu0 0
        %478 = vmatprep.subr.bf16.mxu0 0
        %479 = vmatpush2.bf16.msra.mxu0 0
        %480 = vmatprep.mubr.bf16.mxu0 0
        %481 = vmatmul.mubr.bf16.gmra.mxu0 %v443
        %v482 = vpop.f32.mrf.mxu0
        %v483 = vadd.f32 0.0, %v482
        %v484 = vpop.f32.mrf.mxu0
        %v485 = vpop.f32.mrf.mxu0
        %v486 = vpop.f32.mrf.mxu0
        %487 = vdwg.mxu0
        %v488 = vadd.f32 %v427, %v483
        %v489 = vld [vmem:[%s379] sm:$0xe]
        %v491 = vunpack.c.l.b16 %v489
        %v492 = vpack.c.b16 %v433, %v491
        %v493 = vrot.slane %v492, 1
        %v495 = vsel %vm230, %v493, 0
        %v498 = vsel %vm234, %v202, 0
        %500 = vmatprep.subr.bf16.mxu0 0
        %501 = vmatpush1.bf16.msra.mxu0 0
        %502 = vmatprep.subr.bf16.mxu0 0
        %503 = vmatpush1.bf16.msra.mxu0 0
        %504 = vmatprep.subr.bf16.mxu0 0
        %505 = vmatpush1.bf16.msra.mxu0 0
        %506 = vmatprep.subr.bf16.mxu0 0
        %507 = vmatpush1.bf16.msra.mxu0 0
        %508 = vmatprep.subr.bf16.mxu0 0
        %509 = vmatpush1.bf16.msra.mxu0 0
        %510 = vmatprep.subr.bf16.mxu0 0
        %511 = vmatpush1.bf16.msra.mxu0 0
        %512 = vmatprep.subr.bf16.mxu0 0
        %513 = vmatpush1.bf16.msra.mxu0 0
        %514 = vmatprep.subr.bf16.mxu0 0
        %515 = vmatpush1.bf16.msra.mxu0 %v498
        %516 = vmatprep.subr.bf16.mxu0 0
        %517 = vmatpush2.bf16.msra.mxu0 0
        %518 = vmatprep.subr.bf16.mxu0 0
        %519 = vmatpush2.bf16.msra.mxu0 0
        %520 = vmatprep.subr.bf16.mxu0 0
        %521 = vmatpush2.bf16.msra.mxu0 0
        %522 = vmatprep.subr.bf16.mxu0 0
        %523 = vmatpush2.bf16.msra.mxu0 0
        %524 = vmatprep.subr.bf16.mxu0 0
        %525 = vmatpush2.bf16.msra.mxu0 0
        %526 = vmatprep.subr.bf16.mxu0 0
        %527 = vmatpush2.bf16.msra.mxu0 0
        %528 = vmatprep.subr.bf16.mxu0 0
        %529 = vmatpush2.bf16.msra.mxu0 0
        %530 = vmatprep.subr.bf16.mxu0 0
        %531 = vmatpush2.bf16.msra.mxu0 0
        %532 = vmatprep.mubr.bf16.mxu0 0
        %533 = vmatmul.mubr.bf16.gmra.mxu0 %v495
        %v534 = vpop.f32.mrf.mxu0
        %v535 = vadd.f32 0.0, %v534
        %v536 = vpop.f32.mrf.mxu0
        %v537 = vpop.f32.mrf.mxu0
        %v538 = vpop.f32.mrf.mxu0
        %539 = vdwg.mxu0
        %v540 = vadd.f32 %v488, %v535
        %s541 = sadd.s32 %s212, 2
        %s542 = smul.u32 %s541, 2
        %s543 = smul.addr %s542, 4
        %s544 = scalar_lea.vmem %s183, %s543
        %v545 = vld [vmem:[%s544] sm:$0xf]
        %v547 = vsel %vm230, %v545, 0
        %v550 = vsel %vm234, %v203, 0
        %552 = vmatprep.subr.bf16.mxu0 0
        %553 = vmatpush1.bf16.msra.mxu0 0
        %554 = vmatprep.subr.bf16.mxu0 0
        %555 = vmatpush1.bf16.msra.mxu0 0
        %556 = vmatprep.subr.bf16.mxu0 0
        %557 = vmatpush1.bf16.msra.mxu0 0
        %558 = vmatprep.subr.bf16.mxu0 0
        %559 = vmatpush1.bf16.msra.mxu0 0
        %560 = vmatprep.subr.bf16.mxu0 0
        %561 = vmatpush1.bf16.msra.mxu0 0
        %562 = vmatprep.subr.bf16.mxu0 0
        %563 = vmatpush1.bf16.msra.mxu0 0
        %564 = vmatprep.subr.bf16.mxu0 0
        %565 = vmatpush1.bf16.msra.mxu0 0
        %566 = vmatprep.subr.bf16.mxu0 0
        %567 = vmatpush1.bf16.msra.mxu0 %v550
        %568 = vmatprep.subr.bf16.mxu0 0
        %569 = vmatpush2.bf16.msra.mxu0 0
        %570 = vmatprep.subr.bf16.mxu0 0
        %571 = vmatpush2.bf16.msra.mxu0 0
        %572 = vmatprep.subr.bf16.mxu0 0
        %573 = vmatpush2.bf16.msra.mxu0 0
        %574 = vmatprep.subr.bf16.mxu0 0
        %575 = vmatpush2.bf16.msra.mxu0 0
        %576 = vmatprep.subr.bf16.mxu0 0
        %577 = vmatpush2.bf16.msra.mxu0 0
        %578 = vmatprep.subr.bf16.mxu0 0
        %579 = vmatpush2.bf16.msra.mxu0 0
        %580 = vmatprep.subr.bf16.mxu0 0
        %581 = vmatpush2.bf16.msra.mxu0 0
        %582 = vmatprep.subr.bf16.mxu0 0
        %583 = vmatpush2.bf16.msra.mxu0 0
        %584 = vmatprep.mubr.bf16.mxu0 0
        %585 = vmatmul.mubr.bf16.gmra.mxu0 %v547
        %v586 = vpop.f32.mrf.mxu0
        %v587 = vadd.f32 0.0, %v586
        %v588 = vpop.f32.mrf.mxu0
        %v589 = vpop.f32.mrf.mxu0
        %v590 = vpop.f32.mrf.mxu0
        %591 = vdwg.mxu0
        %v592 = vadd.f32 %v540, %v587
        %v593 = vld [vmem:[%s544] sm:$0xf]
        %v594 = vld [vmem:[%s544 + $0x4] sm:$0x1]
        %v597 = vunpack.c.l.b16 %v593
        %v598 = vunpack.c.l.b16 %v594
        %v599 = vpack.c.b16 %v598, %v597
        %v601 = vshrl.u32 %v599, 16
        %v603 = vshll.u32 %v599, 16
        %v605 = vrot.slane %v603, 1
        %v606 = vor.u32 %v601, %v605
        %v608 = vsel %vm230, %v606, 0
        %v611 = vsel %vm234, %v204, 0
        %613 = vmatprep.subr.bf16.mxu0 0
        %614 = vmatpush1.bf16.msra.mxu0 0
        %615 = vmatprep.subr.bf16.mxu0 0
        %616 = vmatpush1.bf16.msra.mxu0 0
        %617 = vmatprep.subr.bf16.mxu0 0
        %618 = vmatpush1.bf16.msra.mxu0 0
        %619 = vmatprep.subr.bf16.mxu0 0
        %620 = vmatpush1.bf16.msra.mxu0 0
        %621 = vmatprep.subr.bf16.mxu0 0
        %622 = vmatpush1.bf16.msra.mxu0 0
        %623 = vmatprep.subr.bf16.mxu0 0
        %624 = vmatpush1.bf16.msra.mxu0 0
        %625 = vmatprep.subr.bf16.mxu0 0
        %626 = vmatpush1.bf16.msra.mxu0 0
        %627 = vmatprep.subr.bf16.mxu0 0
        %628 = vmatpush1.bf16.msra.mxu0 %v611
        %629 = vmatprep.subr.bf16.mxu0 0
        %630 = vmatpush2.bf16.msra.mxu0 0
        %631 = vmatprep.subr.bf16.mxu0 0
        %632 = vmatpush2.bf16.msra.mxu0 0
        %633 = vmatprep.subr.bf16.mxu0 0
        %634 = vmatpush2.bf16.msra.mxu0 0
        %635 = vmatprep.subr.bf16.mxu0 0
        %636 = vmatpush2.bf16.msra.mxu0 0
        %637 = vmatprep.subr.bf16.mxu0 0
        %638 = vmatpush2.bf16.msra.mxu0 0
        %639 = vmatprep.subr.bf16.mxu0 0
        %640 = vmatpush2.bf16.msra.mxu0 0
        %641 = vmatprep.subr.bf16.mxu0 0
        %642 = vmatpush2.bf16.msra.mxu0 0
        %643 = vmatprep.subr.bf16.mxu0 0
        %644 = vmatpush2.bf16.msra.mxu0 0
        %645 = vmatprep.mubr.bf16.mxu0 0
        %646 = vmatmul.mubr.bf16.gmra.mxu0 %v608
        %v647 = vpop.f32.mrf.mxu0
        %v648 = vadd.f32 0.0, %v647
        %v649 = vpop.f32.mrf.mxu0
        %v650 = vpop.f32.mrf.mxu0
        %v651 = vpop.f32.mrf.mxu0
        %652 = vdwg.mxu0
        %v653 = vadd.f32 %v592, %v648
        %v654 = vld [vmem:[%s544] sm:$0xe]
        %v656 = vunpack.c.l.b16 %v654
        %v657 = vpack.c.b16 %v598, %v656
        %v658 = vrot.slane %v657, 1
        %v660 = vsel %vm230, %v658, 0
        %v663 = vsel %vm234, %v205, 0
        %665 = vmatprep.subr.bf16.mxu0 0
        %666 = vmatpush1.bf16.msra.mxu0 0
        %667 = vmatprep.subr.bf16.mxu0 0
        %668 = vmatpush1.bf16.msra.mxu0 0
        %669 = vmatprep.subr.bf16.mxu0 0
        %670 = vmatpush1.bf16.msra.mxu0 0
        %671 = vmatprep.subr.bf16.mxu0 0
        %672 = vmatpush1.bf16.msra.mxu0 0
        %673 = vmatprep.subr.bf16.mxu0 0
        %674 = vmatpush1.bf16.msra.mxu0 0
        %675 = vmatprep.subr.bf16.mxu0 0
        %676 = vmatpush1.bf16.msra.mxu0 0
        %677 = vmatprep.subr.bf16.mxu0 0
        %678 = vmatpush1.bf16.msra.mxu0 0
        %679 = vmatprep.subr.bf16.mxu0 0
        %680 = vmatpush1.bf16.msra.mxu0 %v663
        %681 = vmatprep.subr.bf16.mxu0 0
        %682 = vmatpush2.bf16.msra.mxu0 0
        %683 = vmatprep.subr.bf16.mxu0 0
        %684 = vmatpush2.bf16.msra.mxu0 0
        %685 = vmatprep.subr.bf16.mxu0 0
        %686 = vmatpush2.bf16.msra.mxu0 0
        %687 = vmatprep.subr.bf16.mxu0 0
        %688 = vmatpush2.bf16.msra.mxu0 0
        %689 = vmatprep.subr.bf16.mxu0 0
        %690 = vmatpush2.bf16.msra.mxu0 0
        %691 = vmatprep.subr.bf16.mxu0 0
        %692 = vmatpush2.bf16.msra.mxu0 0
        %693 = vmatprep.subr.bf16.mxu0 0
        %694 = vmatpush2.bf16.msra.mxu0 0
        %695 = vmatprep.subr.bf16.mxu0 0
        %696 = vmatpush2.bf16.msra.mxu0 0
        %697 = vmatprep.mubr.bf16.mxu0 0
        %698 = vmatmul.mubr.bf16.gmra.mxu0 %v660
        %v699 = vpop.f32.mrf.mxu0
        %v700 = vadd.f32 0.0, %v699
        %v701 = vpop.f32.mrf.mxu0
        %v702 = vpop.f32.mrf.mxu0
        %v703 = vpop.f32.mrf.mxu0
        %704 = vdwg.mxu0
        %v705 = vadd.f32 %v653, %v700
        %v707 = vlaneseq
        %v708 = vshrl.u32 %v707, 7
        %v709 = vsub.s32 0, %v708
        %v710 = vrot.slane %v196, %v709
        %v712 = vadd.f32 %v705, %v710
        %v713 = vmax.f32 %v712, 0.0
        %v714 = vpack.c.bf16 %v713, %v713
        %s715 = smul.addr %s207, 4
        %s716 = scalar_lea.vmem %s192, %s715
        %vm717 = vcmask 125952
        %718 = vst.msk [vmem:[%s716] sm:$0xf] %vm717, %v714
      $region37: #{_lambda_.21} parent=31 // loop_footer
        %s211 = sadd.s32 1, %s207
      $region38: #{_lambda_.21} parent=31 // loop_footer_branch
        %206 = sbr.rel target = $region34
      $region39: #{_lambda_.21} parent=31 // loop_exit
        _
      %s719 = smul.u32 8, %s19
      %p720 = scmp.lt.s32.totalorder %s18, 1
      %s721 = scalar_select %p720, %s18, 1
      %p722 = scmp.lt.s32.totalorder %s719, 7
      %s723 = scalar_select %p722, %s719, 7
      %s724 = smul.addr %s721, 8
      %s725 = sadd.s32 %s723, %s724
      %s726 = smul.addr %s725, 4
      %s727 = scalar_lea.vmem %s3, %s726
      // Predicated region
      $region40: #{_lambda_.21} parent=31 // pred_check
        %p728 = pneg %p114
      $region41: #{_lambda_.21} parent=31 // pred_check_branch
        %730 = sbr.rel (%p728) target = $region43
      $region42: #{_lambda_.21} parent=31 // pred_region
        %s731 = smul.u32 8, %s19
      $region43: #{_lambda_.21} parent=31 // pred_fallthru
        _
    $region32: #{_lambda_.21} parent=5 // pred_fallthru
      _
    %p732 = scmp.le.s32.totalorder 2, %s9
    // Predicated region
    $region44: #{_lambda_.21} parent=5 // pred_check
      %p733 = pneg %p732
    $region45: #{_lambda_.21} parent=5 // pred_check_branch
      %735 = sbr.rel (%p733) target = $region47
    $region46: #{_lambda_.21} parent=5 // pred_region
      %s736 = ssub.s32 %s9, 2
      // Predicated region
      $region48: #{_lambda_.21} parent=46 // pred_check
        %p737 = pneg %p120
      $region49: #{_lambda_.21} parent=46 // pred_check_branch
        %739 = sbr.rel (%p737) target = $region51
      $region50: #{_lambda_.21} parent=46 // pred_region
        %s740 = smul.u32 8, %s21
        %p741 = scmp.lt.s32.totalorder %s20, 1
        %s742 = scalar_select %p741, %s20, 1
        %p743 = scmp.lt.s32.totalorder %s740, 7
        %s744 = scalar_select %p743, %s740, 7
        %s745 = smul.addr %s742, 8
        %s746 = sadd.s32 %s744, %s745
        %s747 = smul.addr %s746, 4
        %s748 = scalar_lea.vmem %s3, %s747
      $region51: #{_lambda_.21} parent=46 // pred_fallthru
        _
    $region47: #{_lambda_.21} parent=5 // pred_fallthru
      _
  $region6: #{_lambda_.21} parent=0 // loop_footer
    %s13 = sadd.s32 1, %s9
  $region7: #{_lambda_.21} parent=0 // loop_footer_branch
    %8 = sbr.rel target = $region3
  $region8: #{_lambda_.21} parent=0 // loop_exit
    _

// kernel: _lambda_.22
$region0: #{_lambda_.22}
  #allocation0 [shape = 'u32[]', space=smem, size = 0x4, offset = 0x4, fixed_abs, tag = 'smem constant byte address 0x4 - core index']
  #allocation1 [shape = 'u32[144,128]{1,0:T(1,128)}', space=vmem, size = 0x12000, scoped, tag = 'internal scratch']
  %s0 = inlined_call_operand.vmem [shape: bf16[2,6,6,16], index: 0, kind: input, shape index: {}]
  %s1 = inlined_call_operand.vmem [shape: bf16[144,32], index: 1, kind: input, shape index: {}]
  %s2 = inlined_call_operand.vmem [shape: f32[1,32], index: 2, kind: input, shape index: {}]
  %s3 = inlined_call_operand.vmem [shape: bf16[2,4,4,32], index: 3, kind: output, shape index: {}]
  %s4 = sld [smem:[#allocation0]]
  $region52: #{_lambda_.22} parent=0
    _
  %s6 = ssub.s32 1, %s4
  %s7 = scalar_select 0, %s6, %s4
  loop: start=0, step=1, limit=4
  $region2: #{_lambda_.22} parent=0 // loop_pre_header
    _
  $region3: #{_lambda_.22} parent=0 // loop_header
    %s9 = sphi 0, %s13
    %p10 = scmp.ge.s32.totalorder %s9, 4
    %s16 = sphi 0, %s28
    %s17 = sphi 0, %s24
    %s18 = sphi 0, %s16
    %s19 = sphi 0, %s17
    %s20 = sphi 0, %s18
    %s21 = sphi 0, %s19
    %s31 = sphi 0, %s33
    %s34 = sphi 0, %s31
    %s35 = sphi 0, %s34
    %s51 = sphi 0, %s35
    %s55 = sphi 0, %s55
    %s57 = sphi 0, %s55
    %s58 = sphi 0, %s57
    %s72 = sphi 0, %s58
    %s76 = sphi 0, %s76
    %s78 = sphi 0, %s76
    %s79 = sphi 0, %s78
    %s93 = sphi 0, %s79
    %s101 = sphi 0, %s103
    %s104 = sphi 0, %s101
    %s105 = sphi 0, %s104
    %s121 = sphi 0, %s105
  $region4: #{_lambda_.22} parent=0 // loop_header_branch
    %12 = sbr.rel (%p10) target = $region8
  $region5: #{_lambda_.22} parent=0 // loop_body
    %s14 = ssub.s32 %s9, 1
    %s15 = ssub.s32 %s9, 2
    %s22 = sadd.s32 1, %s17
    %p23 = scmp.ge.s32.totalorder %s22, 1
    %s24 = scalar_select %p23, 0, %s22
    %s25 = sadd.s32 1, %s16
    %s26 = scalar_select %p23, %s25, %s16
    %p27 = scmp.ge.s32.totalorder %s26, 2
    %s28 = scalar_select %p27, 0, %s26
    %s29 = ssub.s32 %s16, %s28
    %p30 = scmp.eq.s32.totalorder %s29, 0
    %s32 = sadd.s32 %s31, 1
    %s33 = scalar_select %p30, %s31, %s32
    %p36 = pneg %p30
    %p37 = scmp.eq.s32.totalorder %s9, 1
    %p38 = por %p36, %p37
    %p39 = scmp.ne.s32.totalorder %s31, %s34
    %p40 = scmp.eq.s32.totalorder %s9, 0
    %p41 = por %p39, %p40
    %p42 = scmp.ne.s32.totalorder %s31, %s34
    %p43 = scmp.eq.s32.totalorder %s14, 1
    %p44 = por %p42, %p43
    %p45 = scmp.ne.s32.totalorder %s34, %s35
    %p46 = scmp.eq.s32.totalorder %s14, 0
    %p47 = por %p45, %p46
    %p48 = scmp.ne.s32.totalorder %s34, %s35
    %p49 = scmp.eq.s32.totalorder %s15, 1
    %p50 = por %p48, %p49
    %p52 = scmp.ne.s32.totalorder %s35, %s51
    %p53 = scmp.eq.s32.totalorder %s15, 0
    %p54 = por %p52, %p53
    %s56 = sadd.s32 %s55, 1
    %p59 = scmp.eq.s32.totalorder %s9, 1
    %p60 = scmp.ne.s32.totalorder %s55, %s57
    %p61 = scmp.eq.s32.totalorder %s9, 0
    %p62 = por %p60, %p61
    %p63 = scmp.ne.s32.totalorder %s55, %s57
    %p64 = scmp.eq.s32.totalorder %s14, 1
    %p65 = por %p63, %p64
    %p66 = scmp.ne.s32.totalorder %s57, %s58
    %p67 = scmp.eq.s32.totalorder %s14, 0
    %p68 = por %p66, %p67
    %p69 = scmp.ne.s32.totalorder %s57, %s58
    %p70 = scmp.eq.s32.totalorder %s15, 1
    %p71 = por %p69, %p70
    %p73 = scmp.ne.s32.totalorder %s58, %s72
    %p74 = scmp.eq.s32.totalorder %s15, 0
    %p75 = por %p73, %p74
    %s77 = sadd.s32 %s76, 1
    %p80 = scmp.eq.s32.totalorder %s9, 1
    %p81 = scmp.ne.s32.totalorder %s76, %s78
    %p82 = scmp.eq.s32.totalorder %s9, 0
    %p83 = por %p81, %p82
    %p84 = scmp.ne.s32.totalorder %s76, %s78
    %p85 = scmp.eq.s32.totalorder %s14, 1
    %p86 = por %p84, %p85
    %p87 = scmp.ne.s32.totalorder %s78, %s79
    %p88 = scmp.eq.s32.totalorder %s14, 0
    %p89 = por %p87, %p88
    %p90 = scmp.ne.s32.totalorder %s78, %s79
    %p91 = scmp.eq.s32.totalorder %s15, 1
    %p92 = por %p90, %p91
    %p94 = scmp.ne.s32.totalorder %s79, %s93
    %p95 = scmp.eq.s32.totalorder %s15, 0
    %p96 = por %p94, %p95
    %s97 = ssub.s32 %s16, %s28
    %s98 = ssub.s32 %s17, %s24
    %s99 = sor.u32 %s97, %s98
    %p100 = scmp.eq.s32.totalorder %s99, 0
    %s102 = sadd.s32 %s101, 1
    %s103 = scalar_select %p100, %s101, %s102
    %p106 = pneg %p100
    %p107 = scmp.eq.s32.totalorder %s9, 1
    %p108 = por %p106, %p107
    %p109 = scmp.ne.s32.totalorder %s101, %s104
    %p110 = scmp.eq.s32.totalorder %s9, 0
    %p111 = por %p109, %p110
    %p112 = scmp.ne.s32.totalorder %s101, %s104
    %p113 = scmp.eq.s32.totalorder %s14, 1
    %p114 = por %p112, %p113
    %p115 = scmp.ne.s32.totalorder %s104, %s105
    %p116 = scmp.eq.s32.totalorder %s14, 0
    %p117 = por %p115, %p116
    %p118 = scmp.ne.s32.totalorder %s104, %s105
    %p119 = scmp.eq.s32.totalorder %s15, 1
    %p120 = por %p118, %p119
    %p122 = scmp.ne.s32.totalorder %s105, %s121
    %p123 = scmp.eq.s32.totalorder %s15, 0
    %p124 = por %p122, %p123
    %p125 = scmp.le.s32.totalorder 1, %s9
    %p126 = scmp.lt.s32.totalorder %s9, 3
    %p127 = pnand %p125, %p126
    %p128 = pneg %p127
    // Predicated region
    $region9: #{_lambda_.22} parent=5 // pred_check
      _
    $region10: #{_lambda_.22} parent=5 // pred_check_branch
      %130 = sbr.rel (%p127) target = $region12
    $region11: #{_lambda_.22} parent=5 // pred_region
      %s131 = ssub.s32 %s9, 1
      // Predicated region
      $region13: #{_lambda_.22} parent=11 // pred_check
        %p132 = pneg %p68
      $region14: #{_lambda_.22} parent=11 // pred_check_branch
        %134 = sbr.rel (%p132) target = $region16
      $region15: #{_lambda_.22} parent=11 // pred_region
        _
      $region16: #{_lambda_.22} parent=11 // pred_fallthru
        _
      // Predicated region
      $region17: #{_lambda_.22} parent=11 // pred_check
        %p135 = pneg %p89
      $region18: #{_lambda_.22} parent=11 // pred_check_branch
        %137 = sbr.rel (%p135) target = $region20
      $region19: #{_lambda_.22} parent=11 // pred_region
        _
      $region20: #{_lambda_.22} parent=11 // pred_fallthru
        _
    $region12: #{_lambda_.22} parent=5 // pred_fallthru
      _
    %p138 = scmp.lt.s32.totalorder %s9, 2
    // Predicated region
    $region21: #{_lambda_.22} parent=5 // pred_check
      %p139 = pneg %p138
    $region22: #{_lambda_.22} parent=5 // pred_check_branch
      %141 = sbr.rel (%p139) target = $region24
    $region23: #{_lambda_.22} parent=5 // pred_region
      // Predicated region
      $region25: #{_lambda_.22} parent=23 // pred_check
        %p142 = pneg %p41
      $region26: #{_lambda_.22} parent=23 // pred_check_branch
        %144 = sbr.rel (%p142) target = $region28
      $region27: #{_lambda_.22} parent=23 // pred_region
        %p145 = scmp.lt.s32.totalorder %s16, 1
        %s146 = scalar_select %p145, %s16, 1
        %s147 = smul.addr %s146, 6
        %s148 = smul.addr %s147, 4
        %s149 = scalar_lea.vmem %s0, %s148
      $region28: #{_lambda_.22} parent=23 // pred_fallthru
        _
    $region24: #{_lambda_.22} parent=5 // pred_fallthru
      _
    %p150 = scmp.le.s32.totalorder 1, %s9
    %p151 = scmp.lt.s32.totalorder %s9, 3
    %p152 = pnand %p150, %p151
    %p153 = pneg %p152
    // Predicated region
    $region29: #{_lambda_.22} parent=5 // pred_check
      _
    $region30: #{_lambda_.22} parent=5 // pred_check_branch
      %155 = sbr.rel (%p152) target = $region32
    $region31: #{_lambda_.22} parent=5 // pred_region
      %s156 = ssub.s32 %s9, 1
      %p157 = scmp.lt.s32.totalorder %s18, 1
      %s158 = scalar_select %p157, %s18, 1
      %s159 = smul.addr %s158, 6
      %s160 = smul.addr %s159, 4
      %s161 = scalar_lea.vmem %s0, %s160
      %p162 = pneg %p47
      %p163 = pneg %p44
      %p164 = pneg %p68
      %p165 = pneg %p65
      %p166 = pneg %p89
      %p167 = pneg %p86
      %p168 = pneg %p117
      %p169 = pneg %p114
      %s170 = smul.u32 4, %s19
      %p171 = scmp.lt.s32.totalorder %s18, 1
      %s172 = scalar_select %p171, %s18, 1
      %p173 = scmp.lt.s32.totalorder %s170, 3
      %s174 = scalar_select %p173, %s170, 3
      %s175 = smul.addr %s172, 4
      %s176 = sadd.s32 %s174, %s175
      %s177 = smul.addr %s176, 2
      %s178 = scalar_lea.vmem %s3, %s177
      %p179 = scmp.lt.s32.totalorder %s18, 1
      %s180 = scalar_select %p179, %s18, 1
      %s181 = smul.addr %s180, 6
      %s182 = smul.addr %s181, 4
      %s183 = scalar_lea.vmem %s0, %s182
      %s184 = smul.u32 4, %s19
      %p185 = scmp.lt.s32.totalorder %s18, 1
      %s186 = scalar_select %p185, %s18, 1
      %p187 = scmp.lt.s32.totalorder %s184, 3
      %s188 = scalar_select %p187, %s184, 3
      %s189 = smul.addr %s186, 4
      %s190 = sadd.s32 %s188, %s189
      %s191 = smul.addr %s190, 2
      %s192 = scalar_lea.vmem %s3, %s191
      %s193 = smul.u32 4, %s19
      %s195 = smul.u32 %s19, 4
      %v196 = vld [vmem:[%s2] sm:$0x1]
      %v197 = vld [vmem:[%s1] sm:$0xf]
      %v198 = vld [vmem:[%s1 + $0x4] sm:$0xf]
      %v199 = vld [vmem:[%s1 + $0x8] sm:$0xf]
      %v200 = vld [vmem:[%s1 + $0xc] sm:$0xf]
      %v201 = vld [vmem:[%s1 + $0x10] sm:$0xf]
      %v202 = vld [vmem:[%s1 + $0x14] sm:$0xf]
      %v203 = vld [vmem:[%s1 + $0x18] sm:$0xf]
      %v204 = vld [vmem:[%s1 + $0x1c] sm:$0xf]
      %v205 = vld [vmem:[%s1 + $0x20] sm:$0xf]
      %v206 = vld [vmem:[%s1 + $0x24] sm:$0xf]
      %v207 = vld [vmem:[%s1 + $0x28] sm:$0xf]
      %v208 = vld [vmem:[%s1 + $0x2c] sm:$0xf]
      %v209 = vld [vmem:[%s1 + $0x30] sm:$0xf]
      %v210 = vld [vmem:[%s1 + $0x34] sm:$0xf]
      %v211 = vld [vmem:[%s1 + $0x38] sm:$0xf]
      %v212 = vld [vmem:[%s1 + $0x3c] sm:$0xf]
      %v213 = vld [vmem:[%s1 + $0x40] sm:$0xf]
      %v214 = vld [vmem:[%s1 + $0x44] sm:$0xf]
      loop: start=0, step=1, limit=4
      $region33: #{_lambda_.22} parent=31 // loop_pre_header
        _
      $region34: #{_lambda_.22} parent=31 // loop_header
        %s216 = sphi 0, %s220
        %p217 = scmp.ge.s32.totalorder %s216, 4
      $region35: #{_lambda_.22} parent=31 // loop_header_branch
        %219 = sbr.rel (%p217) target = $region39
      $region36: #{_lambda_.22} parent=31 // loop_body
        %s221 = sadd.s32 %s195, %s216
        %s222 = smul.addr %s221, 4
        %s223 = scalar_lea.vmem %s183, %s222
        %v224 = vld [vmem:[%s223] sm:$0x3]
        %v225 = vld [vmem:[%s223] sm:$0x7]
        %v227 = vunpack.c.l.b16 %v225
        %v228 = vpack.c.b16 %v227, %v227
        %v230 = vshrl.u32 %v228, 16
        %v232 = vshll.u32 %v228, 16
        %v234 = vrot.slane %v232, 1
        %v235 = vor.u32 %v230, %v234
        %v238 = vunpack.c.l.b16 %v199
        %v239 = vunpack.c.l.b16 %v200
        %v240 = vpack.c.b16 %v239, %v238
        %vm242 = vcmask 130048
        %v244 = vsel %vm242, %v235, 0
        %246 = vmatprep.subr.bf16.mxu0 0
        %247 = vmatpush1.bf16.msra.mxu0 0
        %248 = vmatprep.subr.bf16.mxu0 0
        %249 = vmatpush1.bf16.msra.mxu0 0
        %250 = vmatprep.subr.bf16.mxu0 0
        %251 = vmatpush1.bf16.msra.mxu0 0
        %252 = vmatprep.subr.bf16.mxu0 0
        %253 = vmatpush1.bf16.msra.mxu0 0
        %254 = vmatprep.subr.bf16.mxu0 0
        %255 = vmatpush1.bf16.msra.mxu0 0
        %256 = vmatprep.subr.bf16.mxu0 0
        %257 = vmatpush1.bf16.msra.mxu0 0
        %258 = vmatprep.subr.bf16.mxu0 0
        %259 = vmatpush1.bf16.msra.mxu0 0
        %260 = vmatprep.subr.bf16.mxu0 0
        %261 = vmatpush1.bf16.msra.mxu0 %v240
        %262 = vmatprep.subr.bf16.mxu0 0
        %263 = vmatpush2.bf16.msra.mxu0 0
        %264 = vmatprep.subr.bf16.mxu0 0
        %265 = vmatpush2.bf16.msra.mxu0 0
        %266 = vmatprep.subr.bf16.mxu0 0
        %267 = vmatpush2.bf16.msra.mxu0 0
        %268 = vmatprep.subr.bf16.mxu0 0
        %269 = vmatpush2.bf16.msra.mxu0 0
        %270 = vmatprep.subr.bf16.mxu0 0
        %271 = vmatpush2.bf16.msra.mxu0 0
        %272 = vmatprep.subr.bf16.mxu0 0
        %273 = vmatpush2.bf16.msra.mxu0 0
        %274 = vmatprep.subr.bf16.mxu0 0
        %275 = vmatpush2.bf16.msra.mxu0 0
        %276 = vmatprep.subr.bf16.mxu0 0
        %277 = vmatpush2.bf16.msra.mxu0 0
        %278 = vmatprep.mubr.bf16.mxu0 0
        %279 = vmatmul.mubr.bf16.gmra.mxu0 %v244
        %v280 = vpop.f32.mrf.mxu0
        %v281 = vadd.f32 0.0, %v280
        %v282 = vpop.f32.mrf.mxu0
        %v283 = vpop.f32.mrf.mxu0
        %v284 = vpop.f32.mrf.mxu0
        %285 = vdwg.mxu0
        %v288 = vunpack.c.l.b16 %v197
        %v289 = vunpack.c.l.b16 %v198
        %v290 = vpack.c.b16 %v289, %v288
        %v293 = vsel %vm242, %v224, 0
        %295 = vmatprep.subr.bf16.mxu0 0
        %296 = vmatpush1.bf16.msra.mxu0 0
        %297 = vmatprep.subr.bf16.mxu0 0
        %298 = vmatpush1.bf16.msra.mxu0 0
        %299 = vmatprep.subr.bf16.mxu0 0
        %300 = vmatpush1.bf16.msra.mxu0 0
        %301 = vmatprep.subr.bf16.mxu0 0
        %302 = vmatpush1.bf16.msra.mxu0 0
        %303 = vmatprep.subr.bf16.mxu0 0
        %304 = vmatpush1.bf16.msra.mxu0 0
        %305 = vmatprep.subr.bf16.mxu0 0
        %306 = vmatpush1.bf16.msra.mxu0 0
        %307 = vmatprep.subr.bf16.mxu0 0
        %308 = vmatpush1.bf16.msra.mxu0 0
        %309 = vmatprep.subr.bf16.mxu0 0
        %310 = vmatpush1.bf16.msra.mxu0 %v290
        %311 = vmatprep.subr.bf16.mxu0 0
        %312 = vmatpush2.bf16.msra.mxu0 0
        %313 = vmatprep.subr.bf16.mxu0 0
        %314 = vmatpush2.bf16.msra.mxu0 0
        %315 = vmatprep.subr.bf16.mxu0 0
        %316 = vmatpush2.bf16.msra.mxu0 0
        %317 = vmatprep.subr.bf16.mxu0 0
        %318 = vmatpush2.bf16.msra.mxu0 0
        %319 = vmatprep.subr.bf16.mxu0 0
        %320 = vmatpush2.bf16.msra.mxu0 0
        %321 = vmatprep.subr.bf16.mxu0 0
        %322 = vmatpush2.bf16.msra.mxu0 0
        %323 = vmatprep.subr.bf16.mxu0 0
        %324 = vmatpush2.bf16.msra.mxu0 0
        %325 = vmatprep.subr.bf16.mxu0 0
        %326 = vmatpush2.bf16.msra.mxu0 0
        %327 = vmatprep.mubr.bf16.mxu0 0
        %328 = vmatmul.mubr.bf16.gmra.mxu0 %v293
        %v329 = vpop.f32.mrf.mxu0
        %v330 = vadd.f32 %v281, %v329
        %v331 = vpop.f32.mrf.mxu0
        %v332 = vpop.f32.mrf.mxu0
        %v333 = vpop.f32.mrf.mxu0
        %334 = vdwg.mxu0
        %v335 = vld [vmem:[%s223] sm:$0x6]
        %v337 = vunpack.c.l.b16 %v335
        %v338 = vpack.c.b16 %v337, %v337
        %v339 = vrot.slane %v338, 1
        %v342 = vunpack.c.l.b16 %v201
        %v343 = vunpack.c.l.b16 %v202
        %v344 = vpack.c.b16 %v343, %v342
        %v347 = vsel %vm242, %v339, 0
        %349 = vmatprep.subr.bf16.mxu0 0
        %350 = vmatpush1.bf16.msra.mxu0 0
        %351 = vmatprep.subr.bf16.mxu0 0
        %352 = vmatpush1.bf16.msra.mxu0 0
        %353 = vmatprep.subr.bf16.mxu0 0
        %354 = vmatpush1.bf16.msra.mxu0 0
        %355 = vmatprep.subr.bf16.mxu0 0
        %356 = vmatpush1.bf16.msra.mxu0 0
        %357 = vmatprep.subr.bf16.mxu0 0
        %358 = vmatpush1.bf16.msra.mxu0 0
        %359 = vmatprep.subr.bf16.mxu0 0
        %360 = vmatpush1.bf16.msra.mxu0 0
        %361 = vmatprep.subr.bf16.mxu0 0
        %362 = vmatpush1.bf16.msra.mxu0 0
        %363 = vmatprep.subr.bf16.mxu0 0
        %364 = vmatpush1.bf16.msra.mxu0 %v344
        %365 = vmatprep.subr.bf16.mxu0 0
        %366 = vmatpush2.bf16.msra.mxu0 0
        %367 = vmatprep.subr.bf16.mxu0 0
        %368 = vmatpush2.bf16.msra.mxu0 0
        %369 = vmatprep.subr.bf16.mxu0 0
        %370 = vmatpush2.bf16.msra.mxu0 0
        %371 = vmatprep.subr.bf16.mxu0 0
        %372 = vmatpush2.bf16.msra.mxu0 0
        %373 = vmatprep.subr.bf16.mxu0 0
        %374 = vmatpush2.bf16.msra.mxu0 0
        %375 = vmatprep.subr.bf16.mxu0 0
        %376 = vmatpush2.bf16.msra.mxu0 0
        %377 = vmatprep.subr.bf16.mxu0 0
        %378 = vmatpush2.bf16.msra.mxu0 0
        %379 = vmatprep.subr.bf16.mxu0 0
        %380 = vmatpush2.bf16.msra.mxu0 0
        %381 = vmatprep.mubr.bf16.mxu0 0
        %382 = vmatmul.mubr.bf16.gmra.mxu0 %v347
        %v383 = vpop.f32.mrf.mxu0
        %v384 = vadd.f32 0.0, %v383
        %v385 = vpop.f32.mrf.mxu0
        %v386 = vpop.f32.mrf.mxu0
        %v387 = vpop.f32.mrf.mxu0
        %388 = vdwg.mxu0
        %v389 = vadd.f32 %v330, %v384
        %s390 = sadd.s32 %s221, 1
        %s391 = smul.addr %s390, 4
        %s392 = scalar_lea.vmem %s183, %s391
        %v393 = vld [vmem:[%s392] sm:$0x3]
        %v396 = vunpack.c.l.b16 %v203
        %v397 = vunpack.c.l.b16 %v204
        %v398 = vpack.c.b16 %v397, %v396
        %v401 = vsel %vm242, %v393, 0
        %403 = vmatprep.subr.bf16.mxu0 0
        %404 = vmatpush1.bf16.msra.mxu0 0
        %405 = vmatprep.subr.bf16.mxu0 0
        %406 = vmatpush1.bf16.msra.mxu0 0
        %407 = vmatprep.subr.bf16.mxu0 0
        %408 = vmatpush1.bf16.msra.mxu0 0
        %409 = vmatprep.subr.bf16.mxu0 0
        %410 = vmatpush1.bf16.msra.mxu0 0
        %411 = vmatprep.subr.bf16.mxu0 0
        %412 = vmatpush1.bf16.msra.mxu0 0
        %413 = vmatprep.subr.bf16.mxu0 0
        %414 = vmatpush1.bf16.msra.mxu0 0
        %415 = vmatprep.subr.bf16.mxu0 0
        %416 = vmatpush1.bf16.msra.mxu0 0
        %417 = vmatprep.subr.bf16.mxu0 0
        %418 = vmatpush1.bf16.msra.mxu0 %v398
        %419 = vmatprep.subr.bf16.mxu0 0
        %420 = vmatpush2.bf16.msra.mxu0 0
        %421 = vmatprep.subr.bf16.mxu0 0
        %422 = vmatpush2.bf16.msra.mxu0 0
        %423 = vmatprep.subr.bf16.mxu0 0
        %424 = vmatpush2.bf16.msra.mxu0 0
        %425 = vmatprep.subr.bf16.mxu0 0
        %426 = vmatpush2.bf16.msra.mxu0 0
        %427 = vmatprep.subr.bf16.mxu0 0
        %428 = vmatpush2.bf16.msra.mxu0 0
        %429 = vmatprep.subr.bf16.mxu0 0
        %430 = vmatpush2.bf16.msra.mxu0 0
        %431 = vmatprep.subr.bf16.mxu0 0
        %432 = vmatpush2.bf16.msra.mxu0 0
        %433 = vmatprep.subr.bf16.mxu0 0
        %434 = vmatpush2.bf16.msra.mxu0 0
        %435 = vmatprep.mubr.bf16.mxu0 0
        %436 = vmatmul.mubr.bf16.gmra.mxu0 %v401
        %v437 = vpop.f32.mrf.mxu0
        %v438 = vadd.f32 0.0, %v437
        %v439 = vpop.f32.mrf.mxu0
        %v440 = vpop.f32.mrf.mxu0
        %v441 = vpop.f32.mrf.mxu0
        %442 = vdwg.mxu0
        %v443 = vadd.f32 %v389, %v438
        %v444 = vld [vmem:[%s392] sm:$0x7]
        %v446 = vunpack.c.l.b16 %v444
        %v447 = vpack.c.b16 %v446, %v446
        %v449 = vshrl.u32 %v447, 16
        %v451 = vshll.u32 %v447, 16
        %v453 = vrot.slane %v451, 1
        %v454 = vor.u32 %v449, %v453
        %v457 = vunpack.c.l.b16 %v205
        %v458 = vunpack.c.l.b16 %v206
        %v459 = vpack.c.b16 %v458, %v457
        %v462 = vsel %vm242, %v454, 0
        %464 = vmatprep.subr.bf16.mxu0 0
        %465 = vmatpush1.bf16.msra.mxu0 0
        %466 = vmatprep.subr.bf16.mxu0 0
        %467 = vmatpush1.bf16.msra.mxu0 0
        %468 = vmatprep.subr.bf16.mxu0 0
        %469 = vmatpush1.bf16.msra.mxu0 0
        %470 = vmatprep.subr.bf16.mxu0 0
        %471 = vmatpush1.bf16.msra.mxu0 0
        %472 = vmatprep.subr.bf16.mxu0 0
        %473 = vmatpush1.bf16.msra.mxu0 0
        %474 = vmatprep.subr.bf16.mxu0 0
        %475 = vmatpush1.bf16.msra.mxu0 0
        %476 = vmatprep.subr.bf16.mxu0 0
        %477 = vmatpush1.bf16.msra.mxu0 0
        %478 = vmatprep.subr.bf16.mxu0 0
        %479 = vmatpush1.bf16.msra.mxu0 %v459
        %480 = vmatprep.subr.bf16.mxu0 0
        %481 = vmatpush2.bf16.msra.mxu0 0
        %482 = vmatprep.subr.bf16.mxu0 0
        %483 = vmatpush2.bf16.msra.mxu0 0
        %484 = vmatprep.subr.bf16.mxu0 0
        %485 = vmatpush2.bf16.msra.mxu0 0
        %486 = vmatprep.subr.bf16.mxu0 0
        %487 = vmatpush2.bf16.msra.mxu0 0
        %488 = vmatprep.subr.bf16.mxu0 0
        %489 = vmatpush2.bf16.msra.mxu0 0
        %490 = vmatprep.subr.bf16.mxu0 0
        %491 = vmatpush2.bf16.msra.mxu0 0
        %492 = vmatprep.subr.bf16.mxu0 0
        %493 = vmatpush2.bf16.msra.mxu0 0
        %494 = vmatprep.subr.bf16.mxu0 0
        %495 = vmatpush2.bf16.msra.mxu0 0
        %496 = vmatprep.mubr.bf16.mxu0 0
        %497 = vmatmul.mubr.bf16.gmra.mxu0 %v462
        %v498 = vpop.f32.mrf.mxu0
        %v499 = vadd.f32 0.0, %v498
        %v500 = vpop.f32.mrf.mxu0
        %v501 = vpop.f32.mrf.mxu0
        %v502 = vpop.f32.mrf.mxu0
        %503 = vdwg.mxu0
        %v504 = vadd.f32 %v443, %v499
        %v505 = vld [vmem:[%s392] sm:$0x6]
        %v507 = vunpack.c.l.b16 %v505
        %v508 = vpack.c.b16 %v507, %v507
        %v509 = vrot.slane %v508, 1
        %v512 = vunpack.c.l.b16 %v207
        %v513 = vunpack.c.l.b16 %v208
        %v514 = vpack.c.b16 %v513, %v512
        %v517 = vsel %vm242, %v509, 0
        %519 = vmatprep.subr.bf16.mxu0 0
        %520 = vmatpush1.bf16.msra.mxu0 0
        %521 = vmatprep.subr.bf16.mxu0 0
        %522 = vmatpush1.bf16.msra.mxu0 0
        %523 = vmatprep.subr.bf16.mxu0 0
        %524 = vmatpush1.bf16.msra.mxu0 0
        %525 = vmatprep.subr.bf16.mxu0 0
        %526 = vmatpush1.bf16.msra.mxu0 0
        %527 = vmatprep.subr.bf16.mxu0 0
        %528 = vmatpush1.bf16.msra.mxu0 0
        %529 = vmatprep.subr.bf16.mxu0 0
        %530 = vmatpush1.bf16.msra.mxu0 0
        %531 = vmatprep.subr.bf16.mxu0 0
        %532 = vmatpush1.bf16.msra.mxu0 0
        %533 = vmatprep.subr.bf16.mxu0 0
        %534 = vmatpush1.bf16.msra.mxu0 %v514
        %535 = vmatprep.subr.bf16.mxu0 0
        %536 = vmatpush2.bf16.msra.mxu0 0
        %537 = vmatprep.subr.bf16.mxu0 0
        %538 = vmatpush2.bf16.msra.mxu0 0
        %539 = vmatprep.subr.bf16.mxu0 0
        %540 = vmatpush2.bf16.msra.mxu0 0
        %541 = vmatprep.subr.bf16.mxu0 0
        %542 = vmatpush2.bf16.msra.mxu0 0
        %543 = vmatprep.subr.bf16.mxu0 0
        %544 = vmatpush2.bf16.msra.mxu0 0
        %545 = vmatprep.subr.bf16.mxu0 0
        %546 = vmatpush2.bf16.msra.mxu0 0
        %547 = vmatprep.subr.bf16.mxu0 0
        %548 = vmatpush2.bf16.msra.mxu0 0
        %549 = vmatprep.subr.bf16.mxu0 0
        %550 = vmatpush2.bf16.msra.mxu0 0
        %551 = vmatprep.mubr.bf16.mxu0 0
        %552 = vmatmul.mubr.bf16.gmra.mxu0 %v517
        %v553 = vpop.f32.mrf.mxu0
        %v554 = vadd.f32 0.0, %v553
        %v555 = vpop.f32.mrf.mxu0
        %v556 = vpop.f32.mrf.mxu0
        %v557 = vpop.f32.mrf.mxu0
        %558 = vdwg.mxu0
        %v559 = vadd.f32 %v504, %v554
        %s560 = sadd.s32 %s221, 2
        %s561 = smul.addr %s560, 4
        %s562 = scalar_lea.vmem %s183, %s561
        %v563 = vld [vmem:[%s562] sm:$0x3]
        %v566 = vunpack.c.l.b16 %v209
        %v567 = vunpack.c.l.b16 %v210
        %v568 = vpack.c.b16 %v567, %v566
        %v571 = vsel %vm242, %v563, 0
        %573 = vmatprep.subr.bf16.mxu0 0
        %574 = vmatpush1.bf16.msra.mxu0 0
        %575 = vmatprep.subr.bf16.mxu0 0
        %576 = vmatpush1.bf16.msra.mxu0 0
        %577 = vmatprep.subr.bf16.mxu0 0
        %578 = vmatpush1.bf16.msra.mxu0 0
        %579 = vmatprep.subr.bf16.mxu0 0
        %580 = vmatpush1.bf16.msra.mxu0 0
        %581 = vmatprep.subr.bf16.mxu0 0
        %582 = vmatpush1.bf16.msra.mxu0 0
        %583 = vmatprep.subr.bf16.mxu0 0
        %584 = vmatpush1.bf16.msra.mxu0 0
        %585 = vmatprep.subr.bf16.mxu0 0
        %586 = vmatpush1.bf16.msra.mxu0 0
        %587 = vmatprep.subr.bf16.mxu0 0
        %588 = vmatpush1.bf16.msra.mxu0 %v568
        %589 = vmatprep.subr.bf16.mxu0 0
        %590 = vmatpush2.bf16.msra.mxu0 0
        %591 = vmatprep.subr.bf16.mxu0 0
        %592 = vmatpush2.bf16.msra.mxu0 0
        %593 = vmatprep.subr.bf16.mxu0 0
        %594 = vmatpush2.bf16.msra.mxu0 0
        %595 = vmatprep.subr.bf16.mxu0 0
        %596 = vmatpush2.bf16.msra.mxu0 0
        %597 = vmatprep.subr.bf16.mxu0 0
        %598 = vmatpush2.bf16.msra.mxu0 0
        %599 = vmatprep.subr.bf16.mxu0 0
        %600 = vmatpush2.bf16.msra.mxu0 0
        %601 = vmatprep.subr.bf16.mxu0 0
        %602 = vmatpush2.bf16.msra.mxu0 0
        %603 = vmatprep.subr.bf16.mxu0 0
        %604 = vmatpush2.bf16.msra.mxu0 0
        %605 = vmatprep.mubr.bf16.mxu0 0
        %606 = vmatmul.mubr.bf16.gmra.mxu0 %v571
        %v607 = vpop.f32.mrf.mxu0
        %v608 = vadd.f32 0.0, %v607
        %v609 = vpop.f32.mrf.mxu0
        %v610 = vpop.f32.mrf.mxu0
        %v611 = vpop.f32.mrf.mxu0
        %612 = vdwg.mxu0
        %v613 = vadd.f32 %v559, %v608
        %v614 = vld [vmem:[%s562] sm:$0x7]
        %v616 = vunpack.c.l.b16 %v614
        %v617 = vpack.c.b16 %v616, %v616
        %v619 = vshrl.u32 %v617, 16
        %v621 = vshll.u32 %v617, 16
        %v623 = vrot.slane %v621, 1
        %v624 = vor.u32 %v619, %v623
        %v627 = vunpack.c.l.b16 %v211
        %v628 = vunpack.c.l.b16 %v212
        %v629 = vpack.c.b16 %v628, %v627
        %v632 = vsel %vm242, %v624, 0
        %634 = vmatprep.subr.bf16.mxu0 0
        %635 = vmatpush1.bf16.msra.mxu0 0
        %636 = vmatprep.subr.bf16.mxu0 0
        %637 = vmatpush1.bf16.msra.mxu0 0
        %638 = vmatprep.subr.bf16.mxu0 0
        %639 = vmatpush1.bf16.msra.mxu0 0
        %640 = vmatprep.subr.bf16.mxu0 0
        %641 = vmatpush1.bf16.msra.mxu0 0
        %642 = vmatprep.subr.bf16.mxu0 0
        %643 = vmatpush1.bf16.msra.mxu0 0
        %644 = vmatprep.subr.bf16.mxu0 0
        %645 = vmatpush1.bf16.msra.mxu0 0
        %646 = vmatprep.subr.bf16.mxu0 0
        %647 = vmatpush1.bf16.msra.mxu0 0
        %648 = vmatprep.subr.bf16.mxu0 0
        %649 = vmatpush1.bf16.msra.mxu0 %v629
        %650 = vmatprep.subr.bf16.mxu0 0
        %651 = vmatpush2.bf16.msra.mxu0 0
        %652 = vmatprep.subr.bf16.mxu0 0
        %653 = vmatpush2.bf16.msra.mxu0 0
        %654 = vmatprep.subr.bf16.mxu0 0
        %655 = vmatpush2.bf16.msra.mxu0 0
        %656 = vmatprep.subr.bf16.mxu0 0
        %657 = vmatpush2.bf16.msra.mxu0 0
        %658 = vmatprep.subr.bf16.mxu0 0
        %659 = vmatpush2.bf16.msra.mxu0 0
        %660 = vmatprep.subr.bf16.mxu0 0
        %661 = vmatpush2.bf16.msra.mxu0 0
        %662 = vmatprep.subr.bf16.mxu0 0
        %663 = vmatpush2.bf16.msra.mxu0 0
        %664 = vmatprep.subr.bf16.mxu0 0
        %665 = vmatpush2.bf16.msra.mxu0 0
        %666 = vmatprep.mubr.bf16.mxu0 0
        %667 = vmatmul.mubr.bf16.gmra.mxu0 %v632
        %v668 = vpop.f32.mrf.mxu0
        %v669 = vadd.f32 0.0, %v668
        %v670 = vpop.f32.mrf.mxu0
        %v671 = vpop.f32.mrf.mxu0
        %v672 = vpop.f32.mrf.mxu0
        %673 = vdwg.mxu0
        %v674 = vadd.f32 %v613, %v669
        %v675 = vld [vmem:[%s562] sm:$0x6]
        %v677 = vunpack.c.l.b16 %v675
        %v678 = vpack.c.b16 %v677, %v677
        %v679 = vrot.slane %v678, 1
        %v682 = vunpack.c.l.b16 %v213
        %v683 = vunpack.c.l.b16 %v214
        %v684 = vpack.c.b16 %v683, %v682
        %v687 = vsel %vm242, %v679, 0
        %689 = vmatprep.subr.bf16.mxu0 0
        %690 = vmatpush1.bf16.msra.mxu0 0
        %691 = vmatprep.subr.bf16.mxu0 0
        %692 = vmatpush1.bf16.msra.mxu0 0
        %693 = vmatprep.subr.bf16.mxu0 0
        %694 = vmatpush1.bf16.msra.mxu0 0
        %695 = vmatprep.subr.bf16.mxu0 0
        %696 = vmatpush1.bf16.msra.mxu0 0
        %697 = vmatprep.subr.bf16.mxu0 0
        %698 = vmatpush1.bf16.msra.mxu0 0
        %699 = vmatprep.subr.bf16.mxu0 0
        %700 = vmatpush1.bf16.msra.mxu0 0
        %701 = vmatprep.subr.bf16.mxu0 0
        %702 = vmatpush1.bf16.msra.mxu0 0
        %703 = vmatprep.subr.bf16.mxu0 0
        %704 = vmatpush1.bf16.msra.mxu0 %v684
        %705 = vmatprep.subr.bf16.mxu0 0
        %706 = vmatpush2.bf16.msra.mxu0 0
        %707 = vmatprep.subr.bf16.mxu0 0
        %708 = vmatpush2.bf16.msra.mxu0 0
        %709 = vmatprep.subr.bf16.mxu0 0
        %710 = vmatpush2.bf16.msra.mxu0 0
        %711 = vmatprep.subr.bf16.mxu0 0
        %712 = vmatpush2.bf16.msra.mxu0 0
        %713 = vmatprep.subr.bf16.mxu0 0
        %714 = vmatpush2.bf16.msra.mxu0 0
        %715 = vmatprep.subr.bf16.mxu0 0
        %716 = vmatpush2.bf16.msra.mxu0 0
        %717 = vmatprep.subr.bf16.mxu0 0
        %718 = vmatpush2.bf16.msra.mxu0 0
        %719 = vmatprep.subr.bf16.mxu0 0
        %720 = vmatpush2.bf16.msra.mxu0 0
        %721 = vmatprep.mubr.bf16.mxu0 0
        %722 = vmatmul.mubr.bf16.gmra.mxu0 %v687
        %v723 = vpop.f32.mrf.mxu0
        %v724 = vadd.f32 0.0, %v723
        %v725 = vpop.f32.mrf.mxu0
        %v726 = vpop.f32.mrf.mxu0
        %v727 = vpop.f32.mrf.mxu0
        %728 = vdwg.mxu0
        %v729 = vadd.f32 %v674, %v724
        %v731 = vlaneseq
        %v732 = vshrl.u32 %v731, 7
        %v733 = vsub.s32 0, %v732
        %v734 = vrot.slane %v196, %v733
        %v736 = vadd.f32 %v729, %v734
        %v737 = vmax.f32 %v736, 0.0
        %v738 = vpack.c.bf16 %v737, %v737
        %s739 = smul.addr %s216, 2
        %s740 = scalar_lea.vmem %s192, %s739
        %vm741 = vcmask 254976
        %742 = vst.msk [vmem:[%s740] sm:$0x3] %vm741, %v738
      $region37: #{_lambda_.22} parent=31 // loop_footer
        %s220 = sadd.s32 1, %s216
      $region38: #{_lambda_.22} parent=31 // loop_footer_branch
        %215 = sbr.rel target = $region34
      $region39: #{_lambda_.22} parent=31 // loop_exit
        _
      %s743 = smul.u32 4, %s19
      %p744 = scmp.lt.s32.totalorder %s18, 1
      %s745 = scalar_select %p744, %s18, 1
      %p746 = scmp.lt.s32.totalorder %s743, 3
      %s747 = scalar_select %p746, %s743, 3
      %s748 = smul.addr %s745, 4
      %s749 = sadd.s32 %s747, %s748
      %s750 = smul.addr %s749, 2
      %s751 = scalar_lea.vmem %s3, %s750
      // Predicated region
      $region40: #{_lambda_.22} parent=31 // pred_check
        %p752 = pneg %p114
      $region41: #{_lambda_.22} parent=31 // pred_check_branch
        %754 = sbr.rel (%p752) target = $region43
      $region42: #{_lambda_.22} parent=31 // pred_region
        %s755 = smul.u32 4, %s19
      $region43: #{_lambda_.22} parent=31 // pred_fallthru
        _
    $region32: #{_lambda_.22} parent=5 // pred_fallthru
      _
    %p756 = scmp.le.s32.totalorder 2, %s9
    // Predicated region
    $region44: #{_lambda_.22} parent=5 // pred_check
      %p757 = pneg %p756
    $region45: #{_lambda_.22} parent=5 // pred_check_branch
      %759 = sbr.rel (%p757) target = $region47
    $region46: #{_lambda_.22} parent=5 // pred_region
      %s760 = ssub.s32 %s9, 2
      // Predicated region
      $region48: #{_lambda_.22} parent=46 // pred_check
        %p761 = pneg %p120
      $region49: #{_lambda_.22} parent=46 // pred_check_branch
        %763 = sbr.rel (%p761) target = $region51
      $region50: #{_lambda_.22} parent=46 // pred_region
        %s764 = smul.u32 4, %s21
        %p765 = scmp.lt.s32.totalorder %s20, 1
        %s766 = scalar_select %p765, %s20, 1
        %p767 = scmp.lt.s32.totalorder %s764, 3
        %s768 = scalar_select %p767, %s764, 3
        %s769 = smul.addr %s766, 4
        %s770 = sadd.s32 %s768, %s769
        %s771 = smul.addr %s770, 2
        %s772 = scalar_lea.vmem %s3, %s771
      $region51: #{_lambda_.22} parent=46 // pred_fallthru
        _
    $region47: #{_lambda_.22} parent=5 // pred_fallthru
      _
  $region6: #{_lambda_.22} parent=0 // loop_footer
    %s13 = sadd.s32 1, %s9
  $region7: #{_lambda_.22} parent=0 // loop_footer_branch
    %8 = sbr.rel target = $region3
  $region8: #{_lambda_.22} parent=0 // loop_exit
    _

// kernel: _lambda_.25
$region0: #{_lambda_.25}
  #allocation0 [shape = 'u32[]', space=smem, size = 0x4, offset = 0x4, fixed_abs, tag = 'smem constant byte address 0x4 - core index']
  #allocation1 [shape = 'u32[144,128]{1,0:T(1,128)}', space=vmem, size = 0x12000, scoped, tag = 'internal scratch']
  %s0 = inlined_call_operand.vmem [shape: bf16[2,5,5,32], index: 0, kind: input, shape index: {}]
  %s1 = inlined_call_operand.vmem [shape: bf16[128,64], index: 1, kind: input, shape index: {}]
  %s2 = inlined_call_operand.vmem [shape: f32[1,64], index: 2, kind: input, shape index: {}]
  %s3 = inlined_call_operand.vmem [shape: bf16[2,4,4,64], index: 3, kind: output, shape index: {}]
  %s4 = sld [smem:[#allocation0]]
  $region52: #{_lambda_.25} parent=0
    _
  %s6 = ssub.s32 1, %s4
  %s7 = scalar_select 0, %s6, %s4
  loop: start=0, step=1, limit=4
  $region2: #{_lambda_.25} parent=0 // loop_pre_header
    _
  $region3: #{_lambda_.25} parent=0 // loop_header
    %s9 = sphi 0, %s13
    %p10 = scmp.ge.s32.totalorder %s9, 4
    %s16 = sphi 0, %s28
    %s17 = sphi 0, %s24
    %s18 = sphi 0, %s16
    %s19 = sphi 0, %s17
    %s20 = sphi 0, %s18
    %s21 = sphi 0, %s19
    %s31 = sphi 0, %s33
    %s34 = sphi 0, %s31
    %s35 = sphi 0, %s34
    %s51 = sphi 0, %s35
    %s55 = sphi 0, %s55
    %s57 = sphi 0, %s55
    %s58 = sphi 0, %s57
    %s72 = sphi 0, %s58
    %s76 = sphi 0, %s76
    %s78 = sphi 0, %s76
    %s79 = sphi 0, %s78
    %s93 = sphi 0, %s79
    %s101 = sphi 0, %s103
    %s104 = sphi 0, %s101
    %s105 = sphi 0, %s104
    %s121 = sphi 0, %s105
  $region4: #{_lambda_.25} parent=0 // loop_header_branch
    %12 = sbr.rel (%p10) target = $region8
  $region5: #{_lambda_.25} parent=0 // loop_body
    %s14 = ssub.s32 %s9, 1
    %s15 = ssub.s32 %s9, 2
    %s22 = sadd.s32 1, %s17
    %p23 = scmp.ge.s32.totalorder %s22, 1
    %s24 = scalar_select %p23, 0, %s22
    %s25 = sadd.s32 1, %s16
    %s26 = scalar_select %p23, %s25, %s16
    %p27 = scmp.ge.s32.totalorder %s26, 2
    %s28 = scalar_select %p27, 0, %s26
    %s29 = ssub.s32 %s16, %s28
    %p30 = scmp.eq.s32.totalorder %s29, 0
    %s32 = sadd.s32 %s31, 1
    %s33 = scalar_select %p30, %s31, %s32
    %p36 = pneg %p30
    %p37 = scmp.eq.s32.totalorder %s9, 1
    %p38 = por %p36, %p37
    %p39 = scmp.ne.s32.totalorder %s31, %s34
    %p40 = scmp.eq.s32.totalorder %s9, 0
    %p41 = por %p39, %p40
    %p42 = scmp.ne.s32.totalorder %s31, %s34
    %p43 = scmp.eq.s32.totalorder %s14, 1
    %p44 = por %p42, %p43
    %p45 = scmp.ne.s32.totalorder %s34, %s35
    %p46 = scmp.eq.s32.totalorder %s14, 0
    %p47 = por %p45, %p46
    %p48 = scmp.ne.s32.totalorder %s34, %s35
    %p49 = scmp.eq.s32.totalorder %s15, 1
    %p50 = por %p48, %p49
    %p52 = scmp.ne.s32.totalorder %s35, %s51
    %p53 = scmp.eq.s32.totalorder %s15, 0
    %p54 = por %p52, %p53
    %s56 = sadd.s32 %s55, 1
    %p59 = scmp.eq.s32.totalorder %s9, 1
    %p60 = scmp.ne.s32.totalorder %s55, %s57
    %p61 = scmp.eq.s32.totalorder %s9, 0
    %p62 = por %p60, %p61
    %p63 = scmp.ne.s32.totalorder %s55, %s57
    %p64 = scmp.eq.s32.totalorder %s14, 1
    %p65 = por %p63, %p64
    %p66 = scmp.ne.s32.totalorder %s57, %s58
    %p67 = scmp.eq.s32.totalorder %s14, 0
    %p68 = por %p66, %p67
    %p69 = scmp.ne.s32.totalorder %s57, %s58
    %p70 = scmp.eq.s32.totalorder %s15, 1
    %p71 = por %p69, %p70
    %p73 = scmp.ne.s32.totalorder %s58, %s72
    %p74 = scmp.eq.s32.totalorder %s15, 0
    %p75 = por %p73, %p74
    %s77 = sadd.s32 %s76, 1
    %p80 = scmp.eq.s32.totalorder %s9, 1
    %p81 = scmp.ne.s32.totalorder %s76, %s78
    %p82 = scmp.eq.s32.totalorder %s9, 0
    %p83 = por %p81, %p82
    %p84 = scmp.ne.s32.totalorder %s76, %s78
    %p85 = scmp.eq.s32.totalorder %s14, 1
    %p86 = por %p84, %p85
    %p87 = scmp.ne.s32.totalorder %s78, %s79
    %p88 = scmp.eq.s32.totalorder %s14, 0
    %p89 = por %p87, %p88
    %p90 = scmp.ne.s32.totalorder %s78, %s79
    %p91 = scmp.eq.s32.totalorder %s15, 1
    %p92 = por %p90, %p91
    %p94 = scmp.ne.s32.totalorder %s79, %s93
    %p95 = scmp.eq.s32.totalorder %s15, 0
    %p96 = por %p94, %p95
    %s97 = ssub.s32 %s16, %s28
    %s98 = ssub.s32 %s17, %s24
    %s99 = sor.u32 %s97, %s98
    %p100 = scmp.eq.s32.totalorder %s99, 0
    %s102 = sadd.s32 %s101, 1
    %s103 = scalar_select %p100, %s101, %s102
    %p106 = pneg %p100
    %p107 = scmp.eq.s32.totalorder %s9, 1
    %p108 = por %p106, %p107
    %p109 = scmp.ne.s32.totalorder %s101, %s104
    %p110 = scmp.eq.s32.totalorder %s9, 0
    %p111 = por %p109, %p110
    %p112 = scmp.ne.s32.totalorder %s101, %s104
    %p113 = scmp.eq.s32.totalorder %s14, 1
    %p114 = por %p112, %p113
    %p115 = scmp.ne.s32.totalorder %s104, %s105
    %p116 = scmp.eq.s32.totalorder %s14, 0
    %p117 = por %p115, %p116
    %p118 = scmp.ne.s32.totalorder %s104, %s105
    %p119 = scmp.eq.s32.totalorder %s15, 1
    %p120 = por %p118, %p119
    %p122 = scmp.ne.s32.totalorder %s105, %s121
    %p123 = scmp.eq.s32.totalorder %s15, 0
    %p124 = por %p122, %p123
    %p125 = scmp.le.s32.totalorder 1, %s9
    %p126 = scmp.lt.s32.totalorder %s9, 3
    %p127 = pnand %p125, %p126
    %p128 = pneg %p127
    // Predicated region
    $region9: #{_lambda_.25} parent=5 // pred_check
      _
    $region10: #{_lambda_.25} parent=5 // pred_check_branch
      %130 = sbr.rel (%p127) target = $region12
    $region11: #{_lambda_.25} parent=5 // pred_region
      %s131 = ssub.s32 %s9, 1
      // Predicated region
      $region13: #{_lambda_.25} parent=11 // pred_check
        %p132 = pneg %p68
      $region14: #{_lambda_.25} parent=11 // pred_check_branch
        %134 = sbr.rel (%p132) target = $region16
      $region15: #{_lambda_.25} parent=11 // pred_region
        _
      $region16: #{_lambda_.25} parent=11 // pred_fallthru
        _
      // Predicated region
      $region17: #{_lambda_.25} parent=11 // pred_check
        %p135 = pneg %p89
      $region18: #{_lambda_.25} parent=11 // pred_check_branch
        %137 = sbr.rel (%p135) target = $region20
      $region19: #{_lambda_.25} parent=11 // pred_region
        _
      $region20: #{_lambda_.25} parent=11 // pred_fallthru
        _
    $region12: #{_lambda_.25} parent=5 // pred_fallthru
      _
    %p138 = scmp.lt.s32.totalorder %s9, 2
    // Predicated region
    $region21: #{_lambda_.25} parent=5 // pred_check
      %p139 = pneg %p138
    $region22: #{_lambda_.25} parent=5 // pred_check_branch
      %141 = sbr.rel (%p139) target = $region24
    $region23: #{_lambda_.25} parent=5 // pred_region
      // Predicated region
      $region25: #{_lambda_.25} parent=23 // pred_check
        %p142 = pneg %p41
      $region26: #{_lambda_.25} parent=23 // pred_check_branch
        %144 = sbr.rel (%p142) target = $region28
      $region27: #{_lambda_.25} parent=23 // pred_region
        %p145 = scmp.lt.s32.totalorder %s16, 1
        %s146 = scalar_select %p145, %s16, 1
        %s147 = smul.addr %s146, 5
        %s148 = smul.addr %s147, 4
        %s149 = scalar_lea.vmem %s0, %s148
      $region28: #{_lambda_.25} parent=23 // pred_fallthru
        _
    $region24: #{_lambda_.25} parent=5 // pred_fallthru
      _
    %p150 = scmp.le.s32.totalorder 1, %s9
    %p151 = scmp.lt.s32.totalorder %s9, 3
    %p152 = pnand %p150, %p151
    %p153 = pneg %p152
    // Predicated region
    $region29: #{_lambda_.25} parent=5 // pred_check
      _
    $region30: #{_lambda_.25} parent=5 // pred_check_branch
      %155 = sbr.rel (%p152) target = $region32
    $region31: #{_lambda_.25} parent=5 // pred_region
      %s156 = ssub.s32 %s9, 1
      %p157 = scmp.lt.s32.totalorder %s18, 1
      %s158 = scalar_select %p157, %s18, 1
      %s159 = smul.addr %s158, 5
      %s160 = smul.addr %s159, 4
      %s161 = scalar_lea.vmem %s0, %s160
      %p162 = pneg %p47
      %p163 = pneg %p44
      %p164 = pneg %p68
      %p165 = pneg %p65
      %p166 = pneg %p89
      %p167 = pneg %p86
      %p168 = pneg %p117
      %p169 = pneg %p114
      %s170 = smul.u32 4, %s19
      %p171 = scmp.lt.s32.totalorder %s18, 1
      %s172 = scalar_select %p171, %s18, 1
      %p173 = scmp.lt.s32.totalorder %s170, 3
      %s174 = scalar_select %p173, %s170, 3
      %s175 = smul.addr %s172, 4
      %s176 = sadd.s32 %s174, %s175
      %s177 = smul.addr %s176, 2
      %s178 = scalar_lea.vmem %s3, %s177
      %p179 = scmp.lt.s32.totalorder %s18, 1
      %s180 = scalar_select %p179, %s18, 1
      %s181 = smul.addr %s180, 5
      %s182 = smul.addr %s181, 4
      %s183 = scalar_lea.vmem %s0, %s182
      %s184 = smul.u32 4, %s19
      %p185 = scmp.lt.s32.totalorder %s18, 1
      %s186 = scalar_select %p185, %s18, 1
      %p187 = scmp.lt.s32.totalorder %s184, 3
      %s188 = scalar_select %p187, %s184, 3
      %s189 = smul.addr %s186, 4
      %s190 = sadd.s32 %s188, %s189
      %s191 = smul.addr %s190, 2
      %s192 = scalar_lea.vmem %s3, %s191
      %s193 = smul.u32 4, %s19
      %s195 = smul.u32 %s19, 4
      %v196 = vld [vmem:[%s2] sm:$0x1]
      %v197 = vld [vmem:[%s1] sm:$0xf]
      %v198 = vld [vmem:[%s1 + $0x4] sm:$0xf]
      %v199 = vld [vmem:[%s1 + $0x8] sm:$0xf]
      %v200 = vld [vmem:[%s1 + $0xc] sm:$0xf]
      %v201 = vld [vmem:[%s1 + $0x10] sm:$0xf]
      %v202 = vld [vmem:[%s1 + $0x14] sm:$0xf]
      %v203 = vld [vmem:[%s1 + $0x18] sm:$0xf]
      %v204 = vld [vmem:[%s1 + $0x1c] sm:$0xf]
      %v205 = vld [vmem:[%s1 + $0x20] sm:$0xf]
      %v206 = vld [vmem:[%s1 + $0x24] sm:$0xf]
      %v207 = vld [vmem:[%s1 + $0x28] sm:$0xf]
      %v208 = vld [vmem:[%s1 + $0x2c] sm:$0xf]
      %v209 = vld [vmem:[%s1 + $0x30] sm:$0xf]
      %v210 = vld [vmem:[%s1 + $0x34] sm:$0xf]
      %v211 = vld [vmem:[%s1 + $0x38] sm:$0xf]
      %v212 = vld [vmem:[%s1 + $0x3c] sm:$0xf]
      loop: start=0, step=1, limit=4
      $region33: #{_lambda_.25} parent=31 // loop_pre_header
        _
      $region34: #{_lambda_.25} parent=31 // loop_header
        %s214 = sphi 0, %s218
        %p215 = scmp.ge.s32.totalorder %s214, 4
      $region35: #{_lambda_.25} parent=31 // loop_header_branch
        %217 = sbr.rel (%p215) target = $region39
      $region36: #{_lambda_.25} parent=31 // loop_body
        %s219 = sadd.s32 %s195, %s214
        %s220 = smul.addr %s219, 4
        %s221 = scalar_lea.vmem %s183, %s220
        %v222 = vld [vmem:[%s221] sm:$0x3]
        %v223 = vld [vmem:[%s221] sm:$0x7]
        %v225 = vunpack.c.l.b16 %v223
        %v226 = vpack.c.b16 %v225, %v225
        %v228 = vshrl.u32 %v226, 16
        %v230 = vshll.u32 %v226, 16
        %v232 = vrot.slane %v230, 1
        %v233 = vor.u32 %v228, %v232
        %v238 = vunpack.c.l.b16 %v201
        %v239 = vunpack.c.l.b16 %v202
        %v240 = vunpack.c.l.b16 %v203
        %v241 = vunpack.c.l.b16 %v204
        %v242 = vpack.c.b16 %v239, %v238
        %v243 = vpack.c.b16 %v241, %v240
        %vm246 = vcmask 261120
        %v248 = vsel %vm246, %v233, 0
        %250 = vmatprep.subr.bf16.mxu0 0
        %251 = vmatpush1.bf16.msra.mxu0 0
        %252 = vmatprep.subr.bf16.mxu0 0
        %253 = vmatpush1.bf16.msra.mxu0 0
        %254 = vmatprep.subr.bf16.mxu0 0
        %255 = vmatpush1.bf16.msra.mxu0 0
        %256 = vmatprep.subr.bf16.mxu0 0
        %257 = vmatpush1.bf16.msra.mxu0 0
        %258 = vmatprep.subr.bf16.mxu0 0
        %259 = vmatpush1.bf16.msra.mxu0 0
        %260 = vmatprep.subr.bf16.mxu0 0
        %261 = vmatpush1.bf16.msra.mxu0 0
        %262 = vmatprep.subr.bf16.mxu0 0
        %263 = vmatpush1.bf16.msra.mxu0 %v243
        %264 = vmatprep.subr.bf16.mxu0 0
        %265 = vmatpush1.bf16.msra.mxu0 %v242
        %266 = vmatprep.subr.bf16.mxu0 0
        %267 = vmatpush2.bf16.msra.mxu0 0
        %268 = vmatprep.subr.bf16.mxu0 0
        %269 = vmatpush2.bf16.msra.mxu0 0
        %270 = vmatprep.subr.bf16.mxu0 0
        %271 = vmatpush2.bf16.msra.mxu0 0
        %272 = vmatprep.subr.bf16.mxu0 0
        %273 = vmatpush2.bf16.msra.mxu0 0
        %274 = vmatprep.subr.bf16.mxu0 0
        %275 = vmatpush2.bf16.msra.mxu0 0
        %276 = vmatprep.subr.bf16.mxu0 0
        %277 = vmatpush2.bf16.msra.mxu0 0
        %278 = vmatprep.subr.bf16.mxu0 0
        %279 = vmatpush2.bf16.msra.mxu0 0
        %280 = vmatprep.subr.bf16.mxu0 0
        %281 = vmatpush2.bf16.msra.mxu0 0
        %282 = vmatprep.mubr.bf16.mxu0 0
        %283 = vmatmul.mubr.bf16.gmra.mxu0 %v248
        %v284 = vpop.f32.mrf.mxu0
        %v285 = vadd.f32 0.0, %v284
        %v286 = vpop.f32.mrf.mxu0
        %v287 = vpop.f32.mrf.mxu0
        %v288 = vpop.f32.mrf.mxu0
        %289 = vdwg.mxu0
        %v294 = vunpack.c.l.b16 %v197
        %v295 = vunpack.c.l.b16 %v198
        %v296 = vunpack.c.l.b16 %v199
        %v297 = vunpack.c.l.b16 %v200
        %v298 = vpack.c.b16 %v295, %v294
        %v299 = vpack.c.b16 %v297, %v296
        %v303 = vsel %vm246, %v222, 0
        %305 = vmatprep.subr.bf16.mxu0 0
        %306 = vmatpush1.bf16.msra.mxu0 0
        %307 = vmatprep.subr.bf16.mxu0 0
        %308 = vmatpush1.bf16.msra.mxu0 0
        %309 = vmatprep.subr.bf16.mxu0 0
        %310 = vmatpush1.bf16.msra.mxu0 0
        %311 = vmatprep.subr.bf16.mxu0 0
        %312 = vmatpush1.bf16.msra.mxu0 0
        %313 = vmatprep.subr.bf16.mxu0 0
        %314 = vmatpush1.bf16.msra.mxu0 0
        %315 = vmatprep.subr.bf16.mxu0 0
        %316 = vmatpush1.bf16.msra.mxu0 0
        %317 = vmatprep.subr.bf16.mxu0 0
        %318 = vmatpush1.bf16.msra.mxu0 %v299
        %319 = vmatprep.subr.bf16.mxu0 0
        %320 = vmatpush1.bf16.msra.mxu0 %v298
        %321 = vmatprep.subr.bf16.mxu0 0
        %322 = vmatpush2.bf16.msra.mxu0 0
        %323 = vmatprep.subr.bf16.mxu0 0
        %324 = vmatpush2.bf16.msra.mxu0 0
        %325 = vmatprep.subr.bf16.mxu0 0
        %326 = vmatpush2.bf16.msra.mxu0 0
        %327 = vmatprep.subr.bf16.mxu0 0
        %328 = vmatpush2.bf16.msra.mxu0 0
        %329 = vmatprep.subr.bf16.mxu0 0
        %330 = vmatpush2.bf16.msra.mxu0 0
        %331 = vmatprep.subr.bf16.mxu0 0
        %332 = vmatpush2.bf16.msra.mxu0 0
        %333 = vmatprep.subr.bf16.mxu0 0
        %334 = vmatpush2.bf16.msra.mxu0 0
        %335 = vmatprep.subr.bf16.mxu0 0
        %336 = vmatpush2.bf16.msra.mxu0 0
        %337 = vmatprep.mubr.bf16.mxu0 0
        %338 = vmatmul.mubr.bf16.gmra.mxu0 %v303
        %v339 = vpop.f32.mrf.mxu0
        %v340 = vadd.f32 %v285, %v339
        %v341 = vpop.f32.mrf.mxu0
        %v342 = vpop.f32.mrf.mxu0
        %v343 = vpop.f32.mrf.mxu0
        %344 = vdwg.mxu0
        %s345 = sadd.s32 %s219, 1
        %s346 = smul.addr %s345, 4
        %s347 = scalar_lea.vmem %s183, %s346
        %v348 = vld [vmem:[%s347] sm:$0x3]
        %v353 = vunpack.c.l.b16 %v205
        %v354 = vunpack.c.l.b16 %v206
        %v355 = vunpack.c.l.b16 %v207
        %v356 = vunpack.c.l.b16 %v208
        %v357 = vpack.c.b16 %v354, %v353
        %v358 = vpack.c.b16 %v356, %v355
        %v362 = vsel %vm246, %v348, 0
        %364 = vmatprep.subr.bf16.mxu0 0
        %365 = vmatpush1.bf16.msra.mxu0 0
        %366 = vmatprep.subr.bf16.mxu0 0
        %367 = vmatpush1.bf16.msra.mxu0 0
        %368 = vmatprep.subr.bf16.mxu0 0
        %369 = vmatpush1.bf16.msra.mxu0 0
        %370 = vmatprep.subr.bf16.mxu0 0
        %371 = vmatpush1.bf16.msra.mxu0 0
        %372 = vmatprep.subr.bf16.mxu0 0
        %373 = vmatpush1.bf16.msra.mxu0 0
        %374 = vmatprep.subr.bf16.mxu0 0
        %375 = vmatpush1.bf16.msra.mxu0 0
        %376 = vmatprep.subr.bf16.mxu0 0
        %377 = vmatpush1.bf16.msra.mxu0 %v358
        %378 = vmatprep.subr.bf16.mxu0 0
        %379 = vmatpush1.bf16.msra.mxu0 %v357
        %380 = vmatprep.subr.bf16.mxu0 0
        %381 = vmatpush2.bf16.msra.mxu0 0
        %382 = vmatprep.subr.bf16.mxu0 0
        %383 = vmatpush2.bf16.msra.mxu0 0
        %384 = vmatprep.subr.bf16.mxu0 0
        %385 = vmatpush2.bf16.msra.mxu0 0
        %386 = vmatprep.subr.bf16.mxu0 0
        %387 = vmatpush2.bf16.msra.mxu0 0
        %388 = vmatprep.subr.bf16.mxu0 0
        %389 = vmatpush2.bf16.msra.mxu0 0
        %390 = vmatprep.subr.bf16.mxu0 0
        %391 = vmatpush2.bf16.msra.mxu0 0
        %392 = vmatprep.subr.bf16.mxu0 0
        %393 = vmatpush2.bf16.msra.mxu0 0
        %394 = vmatprep.subr.bf16.mxu0 0
        %395 = vmatpush2.bf16.msra.mxu0 0
        %396 = vmatprep.mubr.bf16.mxu0 0
        %397 = vmatmul.mubr.bf16.gmra.mxu0 %v362
        %v398 = vpop.f32.mrf.mxu0
        %v399 = vadd.f32 0.0, %v398
        %v400 = vpop.f32.mrf.mxu0
        %v401 = vpop.f32.mrf.mxu0
        %v402 = vpop.f32.mrf.mxu0
        %403 = vdwg.mxu0
        %v404 = vadd.f32 %v340, %v399
        %v405 = vld [vmem:[%s347] sm:$0x7]
        %v407 = vunpack.c.l.b16 %v405
        %v408 = vpack.c.b16 %v407, %v407
        %v410 = vshrl.u32 %v408, 16
        %v412 = vshll.u32 %v408, 16
        %v414 = vrot.slane %v412, 1
        %v415 = vor.u32 %v410, %v414
        %v420 = vunpack.c.l.b16 %v209
        %v421 = vunpack.c.l.b16 %v210
        %v422 = vunpack.c.l.b16 %v211
        %v423 = vunpack.c.l.b16 %v212
        %v424 = vpack.c.b16 %v421, %v420
        %v425 = vpack.c.b16 %v423, %v422
        %v429 = vsel %vm246, %v415, 0
        %431 = vmatprep.subr.bf16.mxu0 0
        %432 = vmatpush1.bf16.msra.mxu0 0
        %433 = vmatprep.subr.bf16.mxu0 0
        %434 = vmatpush1.bf16.msra.mxu0 0
        %435 = vmatprep.subr.bf16.mxu0 0
        %436 = vmatpush1.bf16.msra.mxu0 0
        %437 = vmatprep.subr.bf16.mxu0 0
        %438 = vmatpush1.bf16.msra.mxu0 0
        %439 = vmatprep.subr.bf16.mxu0 0
        %440 = vmatpush1.bf16.msra.mxu0 0
        %441 = vmatprep.subr.bf16.mxu0 0
        %442 = vmatpush1.bf16.msra.mxu0 0
        %443 = vmatprep.subr.bf16.mxu0 0
        %444 = vmatpush1.bf16.msra.mxu0 %v425
        %445 = vmatprep.subr.bf16.mxu0 0
        %446 = vmatpush1.bf16.msra.mxu0 %v424
        %447 = vmatprep.subr.bf16.mxu0 0
        %448 = vmatpush2.bf16.msra.mxu0 0
        %449 = vmatprep.subr.bf16.mxu0 0
        %450 = vmatpush2.bf16.msra.mxu0 0
        %451 = vmatprep.subr.bf16.mxu0 0
        %452 = vmatpush2.bf16.msra.mxu0 0
        %453 = vmatprep.subr.bf16.mxu0 0
        %454 = vmatpush2.bf16.msra.mxu0 0
        %455 = vmatprep.subr.bf16.mxu0 0
        %456 = vmatpush2.bf16.msra.mxu0 0
        %457 = vmatprep.subr.bf16.mxu0 0
        %458 = vmatpush2.bf16.msra.mxu0 0
        %459 = vmatprep.subr.bf16.mxu0 0
        %460 = vmatpush2.bf16.msra.mxu0 0
        %461 = vmatprep.subr.bf16.mxu0 0
        %462 = vmatpush2.bf16.msra.mxu0 0
        %463 = vmatprep.mubr.bf16.mxu0 0
        %464 = vmatmul.mubr.bf16.gmra.mxu0 %v429
        %v465 = vpop.f32.mrf.mxu0
        %v466 = vadd.f32 0.0, %v465
        %v467 = vpop.f32.mrf.mxu0
        %v468 = vpop.f32.mrf.mxu0
        %v469 = vpop.f32.mrf.mxu0
        %470 = vdwg.mxu0
        %v471 = vadd.f32 %v404, %v466
        %v473 = vlaneseq
        %v474 = vshrl.u32 %v473, 7
        %v475 = vsub.s32 0, %v474
        %v476 = vrot.slane %v196, %v475
        %v478 = vadd.f32 %v471, %v476
        %v479 = vmax.f32 %v478, 0.0
        %v480 = vpack.c.bf16 %v479, %v479
        %s481 = smul.addr %s214, 2
        %s482 = scalar_lea.vmem %s192, %s481
        %vm483 = vcmask 517120
        %484 = vst.msk [vmem:[%s482] sm:$0x3] %vm483, %v480
      $region37: #{_lambda_.25} parent=31 // loop_footer
        %s218 = sadd.s32 1, %s214
      $region38: #{_lambda_.25} parent=31 // loop_footer_branch
        %213 = sbr.rel target = $region34
      $region39: #{_lambda_.25} parent=31 // loop_exit
        _
      %s485 = smul.u32 4, %s19
      %p486 = scmp.lt.s32.totalorder %s18, 1
      %s487 = scalar_select %p486, %s18, 1
      %p488 = scmp.lt.s32.totalorder %s485, 3
      %s489 = scalar_select %p488, %s485, 3
      %s490 = smul.addr %s487, 4
      %s491 = sadd.s32 %s489, %s490
      %s492 = smul.addr %s491, 2
      %s493 = scalar_lea.vmem %s3, %s492
      // Predicated region
      $region40: #{_lambda_.25} parent=31 // pred_check
        %p494 = pneg %p114
      $region41: #{_lambda_.25} parent=31 // pred_check_branch
        %496 = sbr.rel (%p494) target = $region43
      $region42: #{_lambda_.25} parent=31 // pred_region
        %s497 = smul.u32 4, %s19
      $region43: #{_lambda_.25} parent=31 // pred_fallthru
        _
    $region32: #{_lambda_.25} parent=5 // pred_fallthru
      _
    %p498 = scmp.le.s32.totalorder 2, %s9
    // Predicated region
    $region44: #{_lambda_.25} parent=5 // pred_check
      %p499 = pneg %p498
    $region45: #{_lambda_.25} parent=5 // pred_check_branch
      %501 = sbr.rel (%p499) target = $region47
    $region46: #{_lambda_.25} parent=5 // pred_region
      %s502 = ssub.s32 %s9, 2
      // Predicated region
      $region48: #{_lambda_.25} parent=46 // pred_check
        %p503 = pneg %p120
      $region49: #{_lambda_.25} parent=46 // pred_check_branch
        %505 = sbr.rel (%p503) target = $region51
      $region50: #{_lambda_.25} parent=46 // pred_region
        %s506 = smul.u32 4, %s21
        %p507 = scmp.lt.s32.totalorder %s20, 1
        %s508 = scalar_select %p507, %s20, 1
        %p509 = scmp.lt.s32.totalorder %s506, 3
        %s510 = scalar_select %p509, %s506, 3
        %s511 = smul.addr %s508, 4
        %s512 = sadd.s32 %s510, %s511
        %s513 = smul.addr %s512, 2
        %s514 = scalar_lea.vmem %s3, %s513
      $region51: #{_lambda_.25} parent=46 // pred_fallthru
        _
    $region47: #{_lambda_.25} parent=5 // pred_fallthru
      _
  $region6: #{_lambda_.25} parent=0 // loop_footer
    %s13 = sadd.s32 1, %s9
  $region7: #{_lambda_.25} parent=0 // loop_footer_branch
    %8 = sbr.rel target = $region3
  $region8: #{_lambda_.25} parent=0 // loop_exit
    _

// kernel: _lambda_.23
$region0: #{_lambda_.23}
  #allocation0 [shape = 'u32[]', space=smem, size = 0x4, offset = 0x4, fixed_abs, tag = 'smem constant byte address 0x4 - core index']
  #allocation1 [shape = 'u32[144,128]{1,0:T(1,128)}', space=vmem, size = 0x12000, scoped, tag = 'internal scratch']
  %s0 = inlined_call_operand.vmem [shape: bf16[2,6,6,32], index: 0, kind: input, shape index: {}]
  %s1 = inlined_call_operand.vmem [shape: bf16[288,32], index: 1, kind: input, shape index: {}]
  %s2 = inlined_call_operand.vmem [shape: f32[1,32], index: 2, kind: input, shape index: {}]
  %s3 = inlined_call_operand.vmem [shape: bf16[2,4,4,32], index: 3, kind: output, shape index: {}]
  %s4 = sld [smem:[#allocation0]]
  $region52: #{_lambda_.23} parent=0
    _
  %s6 = ssub.s32 1, %s4
  %s7 = scalar_select 0, %s6, %s4
  loop: start=0, step=1, limit=4
  $region2: #{_lambda_.23} parent=0 // loop_pre_header
    _
  $region3: #{_lambda_.23} parent=0 // loop_header
    %s9 = sphi 0, %s13
    %p10 = scmp.ge.s32.totalorder %s9, 4
    %s16 = sphi 0, %s28
    %s17 = sphi 0, %s24
    %s18 = sphi 0, %s16
    %s19 = sphi 0, %s17
    %s20 = sphi 0, %s18
    %s21 = sphi 0, %s19
    %s31 = sphi 0, %s33
    %s34 = sphi 0, %s31
    %s35 = sphi 0, %s34
    %s51 = sphi 0, %s35
    %s55 = sphi 0, %s55
    %s57 = sphi 0, %s55
    %s58 = sphi 0, %s57
    %s72 = sphi 0, %s58
    %s76 = sphi 0, %s76
    %s78 = sphi 0, %s76
    %s79 = sphi 0, %s78
    %s93 = sphi 0, %s79
    %s101 = sphi 0, %s103
    %s104 = sphi 0, %s101
    %s105 = sphi 0, %s104
    %s121 = sphi 0, %s105
  $region4: #{_lambda_.23} parent=0 // loop_header_branch
    %12 = sbr.rel (%p10) target = $region8
  $region5: #{_lambda_.23} parent=0 // loop_body
    %s14 = ssub.s32 %s9, 1
    %s15 = ssub.s32 %s9, 2
    %s22 = sadd.s32 1, %s17
    %p23 = scmp.ge.s32.totalorder %s22, 1
    %s24 = scalar_select %p23, 0, %s22
    %s25 = sadd.s32 1, %s16
    %s26 = scalar_select %p23, %s25, %s16
    %p27 = scmp.ge.s32.totalorder %s26, 2
    %s28 = scalar_select %p27, 0, %s26
    %s29 = ssub.s32 %s16, %s28
    %p30 = scmp.eq.s32.totalorder %s29, 0
    %s32 = sadd.s32 %s31, 1
    %s33 = scalar_select %p30, %s31, %s32
    %p36 = pneg %p30
    %p37 = scmp.eq.s32.totalorder %s9, 1
    %p38 = por %p36, %p37
    %p39 = scmp.ne.s32.totalorder %s31, %s34
    %p40 = scmp.eq.s32.totalorder %s9, 0
    %p41 = por %p39, %p40
    %p42 = scmp.ne.s32.totalorder %s31, %s34
    %p43 = scmp.eq.s32.totalorder %s14, 1
    %p44 = por %p42, %p43
    %p45 = scmp.ne.s32.totalorder %s34, %s35
    %p46 = scmp.eq.s32.totalorder %s14, 0
    %p47 = por %p45, %p46
    %p48 = scmp.ne.s32.totalorder %s34, %s35
    %p49 = scmp.eq.s32.totalorder %s15, 1
    %p50 = por %p48, %p49
    %p52 = scmp.ne.s32.totalorder %s35, %s51
    %p53 = scmp.eq.s32.totalorder %s15, 0
    %p54 = por %p52, %p53
    %s56 = sadd.s32 %s55, 1
    %p59 = scmp.eq.s32.totalorder %s9, 1
    %p60 = scmp.ne.s32.totalorder %s55, %s57
    %p61 = scmp.eq.s32.totalorder %s9, 0
    %p62 = por %p60, %p61
    %p63 = scmp.ne.s32.totalorder %s55, %s57
    %p64 = scmp.eq.s32.totalorder %s14, 1
    %p65 = por %p63, %p64
    %p66 = scmp.ne.s32.totalorder %s57, %s58
    %p67 = scmp.eq.s32.totalorder %s14, 0
    %p68 = por %p66, %p67
    %p69 = scmp.ne.s32.totalorder %s57, %s58
    %p70 = scmp.eq.s32.totalorder %s15, 1
    %p71 = por %p69, %p70
    %p73 = scmp.ne.s32.totalorder %s58, %s72
    %p74 = scmp.eq.s32.totalorder %s15, 0
    %p75 = por %p73, %p74
    %s77 = sadd.s32 %s76, 1
    %p80 = scmp.eq.s32.totalorder %s9, 1
    %p81 = scmp.ne.s32.totalorder %s76, %s78
    %p82 = scmp.eq.s32.totalorder %s9, 0
    %p83 = por %p81, %p82
    %p84 = scmp.ne.s32.totalorder %s76, %s78
    %p85 = scmp.eq.s32.totalorder %s14, 1
    %p86 = por %p84, %p85
    %p87 = scmp.ne.s32.totalorder %s78, %s79
    %p88 = scmp.eq.s32.totalorder %s14, 0
    %p89 = por %p87, %p88
    %p90 = scmp.ne.s32.totalorder %s78, %s79
    %p91 = scmp.eq.s32.totalorder %s15, 1
    %p92 = por %p90, %p91
    %p94 = scmp.ne.s32.totalorder %s79, %s93
    %p95 = scmp.eq.s32.totalorder %s15, 0
    %p96 = por %p94, %p95
    %s97 = ssub.s32 %s16, %s28
    %s98 = ssub.s32 %s17, %s24
    %s99 = sor.u32 %s97, %s98
    %p100 = scmp.eq.s32.totalorder %s99, 0
    %s102 = sadd.s32 %s101, 1
    %s103 = scalar_select %p100, %s101, %s102
    %p106 = pneg %p100
    %p107 = scmp.eq.s32.totalorder %s9, 1
    %p108 = por %p106, %p107
    %p109 = scmp.ne.s32.totalorder %s101, %s104
    %p110 = scmp.eq.s32.totalorder %s9, 0
    %p111 = por %p109, %p110
    %p112 = scmp.ne.s32.totalorder %s101, %s104
    %p113 = scmp.eq.s32.totalorder %s14, 1
    %p114 = por %p112, %p113
    %p115 = scmp.ne.s32.totalorder %s104, %s105
    %p116 = scmp.eq.s32.totalorder %s14, 0
    %p117 = por %p115, %p116
    %p118 = scmp.ne.s32.totalorder %s104, %s105
    %p119 = scmp.eq.s32.totalorder %s15, 1
    %p120 = por %p118, %p119
    %p122 = scmp.ne.s32.totalorder %s105, %s121
    %p123 = scmp.eq.s32.totalorder %s15, 0
    %p124 = por %p122, %p123
    %p125 = scmp.le.s32.totalorder 1, %s9
    %p126 = scmp.lt.s32.totalorder %s9, 3
    %p127 = pnand %p125, %p126
    %p128 = pneg %p127
    // Predicated region
    $region9: #{_lambda_.23} parent=5 // pred_check
      _
    $region10: #{_lambda_.23} parent=5 // pred_check_branch
      %130 = sbr.rel (%p127) target = $region12
    $region11: #{_lambda_.23} parent=5 // pred_region
      %s131 = ssub.s32 %s9, 1
      // Predicated region
      $region13: #{_lambda_.23} parent=11 // pred_check
        %p132 = pneg %p68
      $region14: #{_lambda_.23} parent=11 // pred_check_branch
        %134 = sbr.rel (%p132) target = $region16
      $region15: #{_lambda_.23} parent=11 // pred_region
        _
      $region16: #{_lambda_.23} parent=11 // pred_fallthru
        _
      // Predicated region
      $region17: #{_lambda_.23} parent=11 // pred_check
        %p135 = pneg %p89
      $region18: #{_lambda_.23} parent=11 // pred_check_branch
        %137 = sbr.rel (%p135) target = $region20
      $region19: #{_lambda_.23} parent=11 // pred_region
        _
      $region20: #{_lambda_.23} parent=11 // pred_fallthru
        _
    $region12: #{_lambda_.23} parent=5 // pred_fallthru
      _
    %p138 = scmp.lt.s32.totalorder %s9, 2
    // Predicated region
    $region21: #{_lambda_.23} parent=5 // pred_check
      %p139 = pneg %p138
    $region22: #{_lambda_.23} parent=5 // pred_check_branch
      %141 = sbr.rel (%p139) target = $region24
    $region23: #{_lambda_.23} parent=5 // pred_region
      // Predicated region
      $region25: #{_lambda_.23} parent=23 // pred_check
        %p142 = pneg %p41
      $region26: #{_lambda_.23} parent=23 // pred_check_branch
        %144 = sbr.rel (%p142) target = $region28
      $region27: #{_lambda_.23} parent=23 // pred_region
        %p145 = scmp.lt.s32.totalorder %s16, 1
        %s146 = scalar_select %p145, %s16, 1
        %s147 = smul.addr %s146, 6
        %s148 = smul.addr %s147, 4
        %s149 = scalar_lea.vmem %s0, %s148
      $region28: #{_lambda_.23} parent=23 // pred_fallthru
        _
    $region24: #{_lambda_.23} parent=5 // pred_fallthru
      _
    %p150 = scmp.le.s32.totalorder 1, %s9
    %p151 = scmp.lt.s32.totalorder %s9, 3
    %p152 = pnand %p150, %p151
    %p153 = pneg %p152
    // Predicated region
    $region29: #{_lambda_.23} parent=5 // pred_check
      _
    $region30: #{_lambda_.23} parent=5 // pred_check_branch
      %155 = sbr.rel (%p152) target = $region32
    $region31: #{_lambda_.23} parent=5 // pred_region
      %s156 = ssub.s32 %s9, 1
      %p157 = scmp.lt.s32.totalorder %s18, 1
      %s158 = scalar_select %p157, %s18, 1
      %s159 = smul.addr %s158, 6
      %s160 = smul.addr %s159, 4
      %s161 = scalar_lea.vmem %s0, %s160
      %p162 = pneg %p47
      %p163 = pneg %p44
      %p164 = pneg %p68
      %p165 = pneg %p65
      %p166 = pneg %p89
      %p167 = pneg %p86
      %p168 = pneg %p117
      %p169 = pneg %p114
      %s170 = smul.u32 4, %s19
      %p171 = scmp.lt.s32.totalorder %s18, 1
      %s172 = scalar_select %p171, %s18, 1
      %p173 = scmp.lt.s32.totalorder %s170, 3
      %s174 = scalar_select %p173, %s170, 3
      %s175 = smul.addr %s172, 4
      %s176 = sadd.s32 %s174, %s175
      %s177 = smul.addr %s176, 2
      %s178 = scalar_lea.vmem %s3, %s177
      %p179 = scmp.lt.s32.totalorder %s18, 1
      %s180 = scalar_select %p179, %s18, 1
      %s181 = smul.addr %s180, 6
      %s182 = smul.addr %s181, 4
      %s183 = scalar_lea.vmem %s0, %s182
      %s184 = smul.u32 4, %s19
      %p185 = scmp.lt.s32.totalorder %s18, 1
      %s186 = scalar_select %p185, %s18, 1
      %p187 = scmp.lt.s32.totalorder %s184, 3
      %s188 = scalar_select %p187, %s184, 3
      %s189 = smul.addr %s186, 4
      %s190 = sadd.s32 %s188, %s189
      %s191 = smul.addr %s190, 2
      %s192 = scalar_lea.vmem %s3, %s191
      %s193 = smul.u32 4, %s19
      %s195 = smul.u32 %s19, 4
      %v196 = vld [vmem:[%s2] sm:$0x1]
      %v197 = vld [vmem:[%s1] sm:$0xf]
      %v198 = vld [vmem:[%s1 + $0x4] sm:$0xf]
      %v199 = vld [vmem:[%s1 + $0x8] sm:$0xf]
      %v200 = vld [vmem:[%s1 + $0xc] sm:$0xf]
      %v201 = vld [vmem:[%s1 + $0x10] sm:$0xf]
      %v202 = vld [vmem:[%s1 + $0x14] sm:$0xf]
      %v203 = vld [vmem:[%s1 + $0x18] sm:$0xf]
      %v204 = vld [vmem:[%s1 + $0x1c] sm:$0xf]
      %v205 = vld [vmem:[%s1 + $0x20] sm:$0xf]
      %v206 = vld [vmem:[%s1 + $0x24] sm:$0xf]
      %v207 = vld [vmem:[%s1 + $0x28] sm:$0xf]
      %v208 = vld [vmem:[%s1 + $0x2c] sm:$0xf]
      %v209 = vld [vmem:[%s1 + $0x30] sm:$0xf]
      %v210 = vld [vmem:[%s1 + $0x34] sm:$0xf]
      %v211 = vld [vmem:[%s1 + $0x38] sm:$0xf]
      %v212 = vld [vmem:[%s1 + $0x3c] sm:$0xf]
      %v213 = vld [vmem:[%s1 + $0x40] sm:$0xf]
      %v214 = vld [vmem:[%s1 + $0x44] sm:$0xf]
      %v215 = vld [vmem:[%s1 + $0x48] sm:$0xf]
      %v216 = vld [vmem:[%s1 + $0x4c] sm:$0xf]
      %v217 = vld [vmem:[%s1 + $0x50] sm:$0xf]
      %v218 = vld [vmem:[%s1 + $0x54] sm:$0xf]
      %v219 = vld [vmem:[%s1 + $0x58] sm:$0xf]
      %v220 = vld [vmem:[%s1 + $0x5c] sm:$0xf]
      %v221 = vld [vmem:[%s1 + $0x60] sm:$0xf]
      %v222 = vld [vmem:[%s1 + $0x64] sm:$0xf]
      %v223 = vld [vmem:[%s1 + $0x68] sm:$0xf]
      %v224 = vld [vmem:[%s1 + $0x6c] sm:$0xf]
      %v225 = vld [vmem:[%s1 + $0x70] sm:$0xf]
      %v226 = vld [vmem:[%s1 + $0x74] sm:$0xf]
      %v227 = vld [vmem:[%s1 + $0x78] sm:$0xf]
      %v228 = vld [vmem:[%s1 + $0x7c] sm:$0xf]
      %v229 = vld [vmem:[%s1 + $0x80] sm:$0xf]
      %v230 = vld [vmem:[%s1 + $0x84] sm:$0xf]
      %v231 = vld [vmem:[%s1 + $0x88] sm:$0xf]
      %v232 = vld [vmem:[%s1 + $0x8c] sm:$0xf]
      loop: start=0, step=1, limit=4
      $region33: #{_lambda_.23} parent=31 // loop_pre_header
        _
      $region34: #{_lambda_.23} parent=31 // loop_header
        %s234 = sphi 0, %s238
        %p235 = scmp.ge.s32.totalorder %s234, 4
      $region35: #{_lambda_.23} parent=31 // loop_header_branch
        %237 = sbr.rel (%p235) target = $region39
      $region36: #{_lambda_.23} parent=31 // loop_body
        %s239 = sadd.s32 %s195, %s234
        %s240 = smul.addr %s239, 4
        %s241 = scalar_lea.vmem %s183, %s240
        %v242 = vld [vmem:[%s241] sm:$0x3]
        %v243 = vld [vmem:[%s241] sm:$0x7]
        %v245 = vunpack.c.l.b16 %v243
        %v246 = vpack.c.b16 %v245, %v245
        %v248 = vshrl.u32 %v246, 16
        %v250 = vshll.u32 %v246, 16
        %v252 = vrot.slane %v250, 1
        %v253 = vor.u32 %v248, %v252
        %v258 = vunpack.c.l.b16 %v201
        %v259 = vunpack.c.l.b16 %v202
        %v260 = vunpack.c.l.b16 %v203
        %v261 = vunpack.c.l.b16 %v204
        %v262 = vpack.c.b16 %v259, %v258
        %v263 = vpack.c.b16 %v261, %v260
        %vm266 = vcmask 261120
        %v268 = vsel %vm266, %v253, 0
        %270 = vmatprep.subr.bf16.mxu0 0
        %271 = vmatpush1.bf16.msra.mxu0 0
        %272 = vmatprep.subr.bf16.mxu0 0
        %273 = vmatpush1.bf16.msra.mxu0 0
        %274 = vmatprep.subr.bf16.mxu0 0
        %275 = vmatpush1.bf16.msra.mxu0 0
        %276 = vmatprep.subr.bf16.mxu0 0
        %277 = vmatpush1.bf16.msra.mxu0 0
        %278 = vmatprep.subr.bf16.mxu0 0
        %279 = vmatpush1.bf16.msra.mxu0 0
        %280 = vmatprep.subr.bf16.mxu0 0
        %281 = vmatpush1.bf16.msra.mxu0 0
        %282 = vmatprep.subr.bf16.mxu0 0
        %283 = vmatpush1.bf16.msra.mxu0 %v263
        %284 = vmatprep.subr.bf16.mxu0 0
        %285 = vmatpush1.bf16.msra.mxu0 %v262
        %286 = vmatprep.subr.bf16.mxu0 0
        %287 = vmatpush2.bf16.msra.mxu0 0
        %288 = vmatprep.subr.bf16.mxu0 0
        %289 = vmatpush2.bf16.msra.mxu0 0
        %290 = vmatprep.subr.bf16.mxu0 0
        %291 = vmatpush2.bf16.msra.mxu0 0
        %292 = vmatprep.subr.bf16.mxu0 0
        %293 = vmatpush2.bf16.msra.mxu0 0
        %294 = vmatprep.subr.bf16.mxu0 0
        %295 = vmatpush2.bf16.msra.mxu0 0
        %296 = vmatprep.subr.bf16.mxu0 0
        %297 = vmatpush2.bf16.msra.mxu0 0
        %298 = vmatprep.subr.bf16.mxu0 0
        %299 = vmatpush2.bf16.msra.mxu0 0
        %300 = vmatprep.subr.bf16.mxu0 0
        %301 = vmatpush2.bf16.msra.mxu0 0
        %302 = vmatprep.mubr.bf16.mxu0 0
        %303 = vmatmul.mubr.bf16.gmra.mxu0 %v268
        %v304 = vpop.f32.mrf.mxu0
        %v305 = vadd.f32 0.0, %v304
        %v306 = vpop.f32.mrf.mxu0
        %v307 = vpop.f32.mrf.mxu0
        %v308 = vpop.f32.mrf.mxu0
        %309 = vdwg.mxu0
        %v314 = vunpack.c.l.b16 %v197
        %v315 = vunpack.c.l.b16 %v198
        %v316 = vunpack.c.l.b16 %v199
        %v317 = vunpack.c.l.b16 %v200
        %v318 = vpack.c.b16 %v315, %v314
        %v319 = vpack.c.b16 %v317, %v316
        %v323 = vsel %vm266, %v242, 0
        %325 = vmatprep.subr.bf16.mxu0 0
        %326 = vmatpush1.bf16.msra.mxu0 0
        %327 = vmatprep.subr.bf16.mxu0 0
        %328 = vmatpush1.bf16.msra.mxu0 0
        %329 = vmatprep.subr.bf16.mxu0 0
        %330 = vmatpush1.bf16.msra.mxu0 0
        %331 = vmatprep.subr.bf16.mxu0 0
        %332 = vmatpush1.bf16.msra.mxu0 0
        %333 = vmatprep.subr.bf16.mxu0 0
        %334 = vmatpush1.bf16.msra.mxu0 0
        %335 = vmatprep.subr.bf16.mxu0 0
        %336 = vmatpush1.bf16.msra.mxu0 0
        %337 = vmatprep.subr.bf16.mxu0 0
        %338 = vmatpush1.bf16.msra.mxu0 %v319
        %339 = vmatprep.subr.bf16.mxu0 0
        %340 = vmatpush1.bf16.msra.mxu0 %v318
        %341 = vmatprep.subr.bf16.mxu0 0
        %342 = vmatpush2.bf16.msra.mxu0 0
        %343 = vmatprep.subr.bf16.mxu0 0
        %344 = vmatpush2.bf16.msra.mxu0 0
        %345 = vmatprep.subr.bf16.mxu0 0
        %346 = vmatpush2.bf16.msra.mxu0 0
        %347 = vmatprep.subr.bf16.mxu0 0
        %348 = vmatpush2.bf16.msra.mxu0 0
        %349 = vmatprep.subr.bf16.mxu0 0
        %350 = vmatpush2.bf16.msra.mxu0 0
        %351 = vmatprep.subr.bf16.mxu0 0
        %352 = vmatpush2.bf16.msra.mxu0 0
        %353 = vmatprep.subr.bf16.mxu0 0
        %354 = vmatpush2.bf16.msra.mxu0 0
        %355 = vmatprep.subr.bf16.mxu0 0
        %356 = vmatpush2.bf16.msra.mxu0 0
        %357 = vmatprep.mubr.bf16.mxu0 0
        %358 = vmatmul.mubr.bf16.gmra.mxu0 %v323
        %v359 = vpop.f32.mrf.mxu0
        %v360 = vadd.f32 %v305, %v359
        %v361 = vpop.f32.mrf.mxu0
        %v362 = vpop.f32.mrf.mxu0
        %v363 = vpop.f32.mrf.mxu0
        %364 = vdwg.mxu0
        %v365 = vld [vmem:[%s241] sm:$0x6]
        %v367 = vunpack.c.l.b16 %v365
        %v368 = vpack.c.b16 %v367, %v367
        %v369 = vrot.slane %v368, 1
        %v374 = vunpack.c.l.b16 %v205
        %v375 = vunpack.c.l.b16 %v206
        %v376 = vunpack.c.l.b16 %v207
        %v377 = vunpack.c.l.b16 %v208
        %v378 = vpack.c.b16 %v375, %v374
        %v379 = vpack.c.b16 %v377, %v376
        %v383 = vsel %vm266, %v369, 0
        %385 = vmatprep.subr.bf16.mxu0 0
        %386 = vmatpush1.bf16.msra.mxu0 0
        %387 = vmatprep.subr.bf16.mxu0 0
        %388 = vmatpush1.bf16.msra.mxu0 0
        %389 = vmatprep.subr.bf16.mxu0 0
        %390 = vmatpush1.bf16.msra.mxu0 0
        %391 = vmatprep.subr.bf16.mxu0 0
        %392 = vmatpush1.bf16.msra.mxu0 0
        %393 = vmatprep.subr.bf16.mxu0 0
        %394 = vmatpush1.bf16.msra.mxu0 0
        %395 = vmatprep.subr.bf16.mxu0 0
        %396 = vmatpush1.bf16.msra.mxu0 0
        %397 = vmatprep.subr.bf16.mxu0 0
        %398 = vmatpush1.bf16.msra.mxu0 %v379
        %399 = vmatprep.subr.bf16.mxu0 0
        %400 = vmatpush1.bf16.msra.mxu0 %v378
        %401 = vmatprep.subr.bf16.mxu0 0
        %402 = vmatpush2.bf16.msra.mxu0 0
        %403 = vmatprep.subr.bf16.mxu0 0
        %404 = vmatpush2.bf16.msra.mxu0 0
        %405 = vmatprep.subr.bf16.mxu0 0
        %406 = vmatpush2.bf16.msra.mxu0 0
        %407 = vmatprep.subr.bf16.mxu0 0
        %408 = vmatpush2.bf16.msra.mxu0 0
        %409 = vmatprep.subr.bf16.mxu0 0
        %410 = vmatpush2.bf16.msra.mxu0 0
        %411 = vmatprep.subr.bf16.mxu0 0
        %412 = vmatpush2.bf16.msra.mxu0 0
        %413 = vmatprep.subr.bf16.mxu0 0
        %414 = vmatpush2.bf16.msra.mxu0 0
        %415 = vmatprep.subr.bf16.mxu0 0
        %416 = vmatpush2.bf16.msra.mxu0 0
        %417 = vmatprep.mubr.bf16.mxu0 0
        %418 = vmatmul.mubr.bf16.gmra.mxu0 %v383
        %v419 = vpop.f32.mrf.mxu0
        %v420 = vadd.f32 0.0, %v419
        %v421 = vpop.f32.mrf.mxu0
        %v422 = vpop.f32.mrf.mxu0
        %v423 = vpop.f32.mrf.mxu0
        %424 = vdwg.mxu0
        %v425 = vadd.f32 %v360, %v420
        %s426 = sadd.s32 %s239, 1
        %s427 = smul.addr %s426, 4
        %s428 = scalar_lea.vmem %s183, %s427
        %v429 = vld [vmem:[%s428] sm:$0x3]
        %v434 = vunpack.c.l.b16 %v209
        %v435 = vunpack.c.l.b16 %v210
        %v436 = vunpack.c.l.b16 %v211
        %v437 = vunpack.c.l.b16 %v212
        %v438 = vpack.c.b16 %v435, %v434
        %v439 = vpack.c.b16 %v437, %v436
        %v443 = vsel %vm266, %v429, 0
        %445 = vmatprep.subr.bf16.mxu0 0
        %446 = vmatpush1.bf16.msra.mxu0 0
        %447 = vmatprep.subr.bf16.mxu0 0
        %448 = vmatpush1.bf16.msra.mxu0 0
        %449 = vmatprep.subr.bf16.mxu0 0
        %450 = vmatpush1.bf16.msra.mxu0 0
        %451 = vmatprep.subr.bf16.mxu0 0
        %452 = vmatpush1.bf16.msra.mxu0 0
        %453 = vmatprep.subr.bf16.mxu0 0
        %454 = vmatpush1.bf16.msra.mxu0 0
        %455 = vmatprep.subr.bf16.mxu0 0
        %456 = vmatpush1.bf16.msra.mxu0 0
        %457 = vmatprep.subr.bf16.mxu0 0
        %458 = vmatpush1.bf16.msra.mxu0 %v439
        %459 = vmatprep.subr.bf16.mxu0 0
        %460 = vmatpush1.bf16.msra.mxu0 %v438
        %461 = vmatprep.subr.bf16.mxu0 0
        %462 = vmatpush2.bf16.msra.mxu0 0
        %463 = vmatprep.subr.bf16.mxu0 0
        %464 = vmatpush2.bf16.msra.mxu0 0
        %465 = vmatprep.subr.bf16.mxu0 0
        %466 = vmatpush2.bf16.msra.mxu0 0
        %467 = vmatprep.subr.bf16.mxu0 0
        %468 = vmatpush2.bf16.msra.mxu0 0
        %469 = vmatprep.subr.bf16.mxu0 0
        %470 = vmatpush2.bf16.msra.mxu0 0
        %471 = vmatprep.subr.bf16.mxu0 0
        %472 = vmatpush2.bf16.msra.mxu0 0
        %473 = vmatprep.subr.bf16.mxu0 0
        %474 = vmatpush2.bf16.msra.mxu0 0
        %475 = vmatprep.subr.bf16.mxu0 0
        %476 = vmatpush2.bf16.msra.mxu0 0
        %477 = vmatprep.mubr.bf16.mxu0 0
        %478 = vmatmul.mubr.bf16.gmra.mxu0 %v443
        %v479 = vpop.f32.mrf.mxu0
        %v480 = vadd.f32 0.0, %v479
        %v481 = vpop.f32.mrf.mxu0
        %v482 = vpop.f32.mrf.mxu0
        %v483 = vpop.f32.mrf.mxu0
        %484 = vdwg.mxu0
        %v485 = vadd.f32 %v425, %v480
        %v486 = vld [vmem:[%s428] sm:$0x7]
        %v488 = vunpack.c.l.b16 %v486
        %v489 = vpack.c.b16 %v488, %v488
        %v491 = vshrl.u32 %v489, 16
        %v493 = vshll.u32 %v489, 16
        %v495 = vrot.slane %v493, 1
        %v496 = vor.u32 %v491, %v495
        %v501 = vunpack.c.l.b16 %v213
        %v502 = vunpack.c.l.b16 %v214
        %v503 = vunpack.c.l.b16 %v215
        %v504 = vunpack.c.l.b16 %v216
        %v505 = vpack.c.b16 %v502, %v501
        %v506 = vpack.c.b16 %v504, %v503
        %v510 = vsel %vm266, %v496, 0
        %512 = vmatprep.subr.bf16.mxu0 0
        %513 = vmatpush1.bf16.msra.mxu0 0
        %514 = vmatprep.subr.bf16.mxu0 0
        %515 = vmatpush1.bf16.msra.mxu0 0
        %516 = vmatprep.subr.bf16.mxu0 0
        %517 = vmatpush1.bf16.msra.mxu0 0
        %518 = vmatprep.subr.bf16.mxu0 0
        %519 = vmatpush1.bf16.msra.mxu0 0
        %520 = vmatprep.subr.bf16.mxu0 0
        %521 = vmatpush1.bf16.msra.mxu0 0
        %522 = vmatprep.subr.bf16.mxu0 0
        %523 = vmatpush1.bf16.msra.mxu0 0
        %524 = vmatprep.subr.bf16.mxu0 0
        %525 = vmatpush1.bf16.msra.mxu0 %v506
        %526 = vmatprep.subr.bf16.mxu0 0
        %527 = vmatpush1.bf16.msra.mxu0 %v505
        %528 = vmatprep.subr.bf16.mxu0 0
        %529 = vmatpush2.bf16.msra.mxu0 0
        %530 = vmatprep.subr.bf16.mxu0 0
        %531 = vmatpush2.bf16.msra.mxu0 0
        %532 = vmatprep.subr.bf16.mxu0 0
        %533 = vmatpush2.bf16.msra.mxu0 0
        %534 = vmatprep.subr.bf16.mxu0 0
        %535 = vmatpush2.bf16.msra.mxu0 0
        %536 = vmatprep.subr.bf16.mxu0 0
        %537 = vmatpush2.bf16.msra.mxu0 0
        %538 = vmatprep.subr.bf16.mxu0 0
        %539 = vmatpush2.bf16.msra.mxu0 0
        %540 = vmatprep.subr.bf16.mxu0 0
        %541 = vmatpush2.bf16.msra.mxu0 0
        %542 = vmatprep.subr.bf16.mxu0 0
        %543 = vmatpush2.bf16.msra.mxu0 0
        %544 = vmatprep.mubr.bf16.mxu0 0
        %545 = vmatmul.mubr.bf16.gmra.mxu0 %v510
        %v546 = vpop.f32.mrf.mxu0
        %v547 = vadd.f32 0.0, %v546
        %v548 = vpop.f32.mrf.mxu0
        %v549 = vpop.f32.mrf.mxu0
        %v550 = vpop.f32.mrf.mxu0
        %551 = vdwg.mxu0
        %v552 = vadd.f32 %v485, %v547
        %v553 = vld [vmem:[%s428] sm:$0x6]
        %v555 = vunpack.c.l.b16 %v553
        %v556 = vpack.c.b16 %v555, %v555
        %v557 = vrot.slane %v556, 1
        %v562 = vunpack.c.l.b16 %v217
        %v563 = vunpack.c.l.b16 %v218
        %v564 = vunpack.c.l.b16 %v219
        %v565 = vunpack.c.l.b16 %v220
        %v566 = vpack.c.b16 %v563, %v562
        %v567 = vpack.c.b16 %v565, %v564
        %v571 = vsel %vm266, %v557, 0
        %573 = vmatprep.subr.bf16.mxu0 0
        %574 = vmatpush1.bf16.msra.mxu0 0
        %575 = vmatprep.subr.bf16.mxu0 0
        %576 = vmatpush1.bf16.msra.mxu0 0
        %577 = vmatprep.subr.bf16.mxu0 0
        %578 = vmatpush1.bf16.msra.mxu0 0
        %579 = vmatprep.subr.bf16.mxu0 0
        %580 = vmatpush1.bf16.msra.mxu0 0
        %581 = vmatprep.subr.bf16.mxu0 0
        %582 = vmatpush1.bf16.msra.mxu0 0
        %583 = vmatprep.subr.bf16.mxu0 0
        %584 = vmatpush1.bf16.msra.mxu0 0
        %585 = vmatprep.subr.bf16.mxu0 0
        %586 = vmatpush1.bf16.msra.mxu0 %v567
        %587 = vmatprep.subr.bf16.mxu0 0
        %588 = vmatpush1.bf16.msra.mxu0 %v566
        %589 = vmatprep.subr.bf16.mxu0 0
        %590 = vmatpush2.bf16.msra.mxu0 0
        %591 = vmatprep.subr.bf16.mxu0 0
        %592 = vmatpush2.bf16.msra.mxu0 0
        %593 = vmatprep.subr.bf16.mxu0 0
        %594 = vmatpush2.bf16.msra.mxu0 0
        %595 = vmatprep.subr.bf16.mxu0 0
        %596 = vmatpush2.bf16.msra.mxu0 0
        %597 = vmatprep.subr.bf16.mxu0 0
        %598 = vmatpush2.bf16.msra.mxu0 0
        %599 = vmatprep.subr.bf16.mxu0 0
        %600 = vmatpush2.bf16.msra.mxu0 0
        %601 = vmatprep.subr.bf16.mxu0 0
        %602 = vmatpush2.bf16.msra.mxu0 0
        %603 = vmatprep.subr.bf16.mxu0 0
        %604 = vmatpush2.bf16.msra.mxu0 0
        %605 = vmatprep.mubr.bf16.mxu0 0
        %606 = vmatmul.mubr.bf16.gmra.mxu0 %v571
        %v607 = vpop.f32.mrf.mxu0
        %v608 = vadd.f32 0.0, %v607
        %v609 = vpop.f32.mrf.mxu0
        %v610 = vpop.f32.mrf.mxu0
        %v611 = vpop.f32.mrf.mxu0
        %612 = vdwg.mxu0
        %v613 = vadd.f32 %v552, %v608
        %s614 = sadd.s32 %s239, 2
        %s615 = smul.addr %s614, 4
        %s616 = scalar_lea.vmem %s183, %s615
        %v617 = vld [vmem:[%s616] sm:$0x3]
        %v622 = vunpack.c.l.b16 %v221
        %v623 = vunpack.c.l.b16 %v222
        %v624 = vunpack.c.l.b16 %v223
        %v625 = vunpack.c.l.b16 %v224
        %v626 = vpack.c.b16 %v623, %v622
        %v627 = vpack.c.b16 %v625, %v624
        %v631 = vsel %vm266, %v617, 0
        %633 = vmatprep.subr.bf16.mxu0 0
        %634 = vmatpush1.bf16.msra.mxu0 0
        %635 = vmatprep.subr.bf16.mxu0 0
        %636 = vmatpush1.bf16.msra.mxu0 0
        %637 = vmatprep.subr.bf16.mxu0 0
        %638 = vmatpush1.bf16.msra.mxu0 0
        %639 = vmatprep.subr.bf16.mxu0 0
        %640 = vmatpush1.bf16.msra.mxu0 0
        %641 = vmatprep.subr.bf16.mxu0 0
        %642 = vmatpush1.bf16.msra.mxu0 0
        %643 = vmatprep.subr.bf16.mxu0 0
        %644 = vmatpush1.bf16.msra.mxu0 0
        %645 = vmatprep.subr.bf16.mxu0 0
        %646 = vmatpush1.bf16.msra.mxu0 %v627
        %647 = vmatprep.subr.bf16.mxu0 0
        %648 = vmatpush1.bf16.msra.mxu0 %v626
        %649 = vmatprep.subr.bf16.mxu0 0
        %650 = vmatpush2.bf16.msra.mxu0 0
        %651 = vmatprep.subr.bf16.mxu0 0
        %652 = vmatpush2.bf16.msra.mxu0 0
        %653 = vmatprep.subr.bf16.mxu0 0
        %654 = vmatpush2.bf16.msra.mxu0 0
        %655 = vmatprep.subr.bf16.mxu0 0
        %656 = vmatpush2.bf16.msra.mxu0 0
        %657 = vmatprep.subr.bf16.mxu0 0
        %658 = vmatpush2.bf16.msra.mxu0 0
        %659 = vmatprep.subr.bf16.mxu0 0
        %660 = vmatpush2.bf16.msra.mxu0 0
        %661 = vmatprep.subr.bf16.mxu0 0
        %662 = vmatpush2.bf16.msra.mxu0 0
        %663 = vmatprep.subr.bf16.mxu0 0
        %664 = vmatpush2.bf16.msra.mxu0 0
        %665 = vmatprep.mubr.bf16.mxu0 0
        %666 = vmatmul.mubr.bf16.gmra.mxu0 %v631
        %v667 = vpop.f32.mrf.mxu0
        %v668 = vadd.f32 0.0, %v667
        %v669 = vpop.f32.mrf.mxu0
        %v670 = vpop.f32.mrf.mxu0
        %v671 = vpop.f32.mrf.mxu0
        %672 = vdwg.mxu0
        %v673 = vadd.f32 %v613, %v668
        %v674 = vld [vmem:[%s616] sm:$0x7]
        %v676 = vunpack.c.l.b16 %v674
        %v677 = vpack.c.b16 %v676, %v676
        %v679 = vshrl.u32 %v677, 16
        %v681 = vshll.u32 %v677, 16
        %v683 = vrot.slane %v681, 1
        %v684 = vor.u32 %v679, %v683
        %v689 = vunpack.c.l.b16 %v225
        %v690 = vunpack.c.l.b16 %v226
        %v691 = vunpack.c.l.b16 %v227
        %v692 = vunpack.c.l.b16 %v228
        %v693 = vpack.c.b16 %v690, %v689
        %v694 = vpack.c.b16 %v692, %v691
        %v698 = vsel %vm266, %v684, 0
        %700 = vmatprep.subr.bf16.mxu0 0
        %701 = vmatpush1.bf16.msra.mxu0 0
        %702 = vmatprep.subr.bf16.mxu0 0
        %703 = vmatpush1.bf16.msra.mxu0 0
        %704 = vmatprep.subr.bf16.mxu0 0
        %705 = vmatpush1.bf16.msra.mxu0 0
        %706 = vmatprep.subr.bf16.mxu0 0
        %707 = vmatpush1.bf16.msra.mxu0 0
        %708 = vmatprep.subr.bf16.mxu0 0
        %709 = vmatpush1.bf16.msra.mxu0 0
        %710 = vmatprep.subr.bf16.mxu0 0
        %711 = vmatpush1.bf16.msra.mxu0 0
        %712 = vmatprep.subr.bf16.mxu0 0
        %713 = vmatpush1.bf16.msra.mxu0 %v694
        %714 = vmatprep.subr.bf16.mxu0 0
        %715 = vmatpush1.bf16.msra.mxu0 %v693
        %716 = vmatprep.subr.bf16.mxu0 0
        %717 = vmatpush2.bf16.msra.mxu0 0
        %718 = vmatprep.subr.bf16.mxu0 0
        %719 = vmatpush2.bf16.msra.mxu0 0
        %720 = vmatprep.subr.bf16.mxu0 0
        %721 = vmatpush2.bf16.msra.mxu0 0
        %722 = vmatprep.subr.bf16.mxu0 0
        %723 = vmatpush2.bf16.msra.mxu0 0
        %724 = vmatprep.subr.bf16.mxu0 0
        %725 = vmatpush2.bf16.msra.mxu0 0
        %726 = vmatprep.subr.bf16.mxu0 0
        %727 = vmatpush2.bf16.msra.mxu0 0
        %728 = vmatprep.subr.bf16.mxu0 0
        %729 = vmatpush2.bf16.msra.mxu0 0
        %730 = vmatprep.subr.bf16.mxu0 0
        %731 = vmatpush2.bf16.msra.mxu0 0
        %732 = vmatprep.mubr.bf16.mxu0 0
        %733 = vmatmul.mubr.bf16.gmra.mxu0 %v698
        %v734 = vpop.f32.mrf.mxu0
        %v735 = vadd.f32 0.0, %v734
        %v736 = vpop.f32.mrf.mxu0
        %v737 = vpop.f32.mrf.mxu0
        %v738 = vpop.f32.mrf.mxu0
        %739 = vdwg.mxu0
        %v740 = vadd.f32 %v673, %v735
        %v741 = vld [vmem:[%s616] sm:$0x6]
        %v743 = vunpack.c.l.b16 %v741
        %v744 = vpack.c.b16 %v743, %v743
        %v745 = vrot.slane %v744, 1
        %v750 = vunpack.c.l.b16 %v229
        %v751 = vunpack.c.l.b16 %v230
        %v752 = vunpack.c.l.b16 %v231
        %v753 = vunpack.c.l.b16 %v232
        %v754 = vpack.c.b16 %v751, %v750
        %v755 = vpack.c.b16 %v753, %v752
        %v759 = vsel %vm266, %v745, 0
        %761 = vmatprep.subr.bf16.mxu0 0
        %762 = vmatpush1.bf16.msra.mxu0 0
        %763 = vmatprep.subr.bf16.mxu0 0
        %764 = vmatpush1.bf16.msra.mxu0 0
        %765 = vmatprep.subr.bf16.mxu0 0
        %766 = vmatpush1.bf16.msra.mxu0 0
        %767 = vmatprep.subr.bf16.mxu0 0
        %768 = vmatpush1.bf16.msra.mxu0 0
        %769 = vmatprep.subr.bf16.mxu0 0
        %770 = vmatpush1.bf16.msra.mxu0 0
        %771 = vmatprep.subr.bf16.mxu0 0
        %772 = vmatpush1.bf16.msra.mxu0 0
        %773 = vmatprep.subr.bf16.mxu0 0
        %774 = vmatpush1.bf16.msra.mxu0 %v755
        %775 = vmatprep.subr.bf16.mxu0 0
        %776 = vmatpush1.bf16.msra.mxu0 %v754
        %777 = vmatprep.subr.bf16.mxu0 0
        %778 = vmatpush2.bf16.msra.mxu0 0
        %779 = vmatprep.subr.bf16.mxu0 0
        %780 = vmatpush2.bf16.msra.mxu0 0
        %781 = vmatprep.subr.bf16.mxu0 0
        %782 = vmatpush2.bf16.msra.mxu0 0
        %783 = vmatprep.subr.bf16.mxu0 0
        %784 = vmatpush2.bf16.msra.mxu0 0
        %785 = vmatprep.subr.bf16.mxu0 0
        %786 = vmatpush2.bf16.msra.mxu0 0
        %787 = vmatprep.subr.bf16.mxu0 0
        %788 = vmatpush2.bf16.msra.mxu0 0
        %789 = vmatprep.subr.bf16.mxu0 0
        %790 = vmatpush2.bf16.msra.mxu0 0
        %791 = vmatprep.subr.bf16.mxu0 0
        %792 = vmatpush2.bf16.msra.mxu0 0
        %793 = vmatprep.mubr.bf16.mxu0 0
        %794 = vmatmul.mubr.bf16.gmra.mxu0 %v759
        %v795 = vpop.f32.mrf.mxu0
        %v796 = vadd.f32 0.0, %v795
        %v797 = vpop.f32.mrf.mxu0
        %v798 = vpop.f32.mrf.mxu0
        %v799 = vpop.f32.mrf.mxu0
        %800 = vdwg.mxu0
        %v801 = vadd.f32 %v740, %v796
        %v803 = vlaneseq
        %v804 = vshrl.u32 %v803, 7
        %v805 = vsub.s32 0, %v804
        %v806 = vrot.slane %v196, %v805
        %v808 = vadd.f32 %v801, %v806
        %v809 = vmax.f32 %v808, 0.0
        %v810 = vpack.c.bf16 %v809, %v809
        %s811 = smul.addr %s234, 2
        %s812 = scalar_lea.vmem %s192, %s811
        %vm813 = vcmask 254976
        %814 = vst.msk [vmem:[%s812] sm:$0x3] %vm813, %v810
      $region37: #{_lambda_.23} parent=31 // loop_footer
        %s238 = sadd.s32 1, %s234
      $region38: #{_lambda_.23} parent=31 // loop_footer_branch
        %233 = sbr.rel target = $region34
      $region39: #{_lambda_.23} parent=31 // loop_exit
        _
      %s815 = smul.u32 4, %s19
      %p816 = scmp.lt.s32.totalorder %s18, 1
      %s817 = scalar_select %p816, %s18, 1
      %p818 = scmp.lt.s32.totalorder %s815, 3
      %s819 = scalar_select %p818, %s815, 3
      %s820 = smul.addr %s817, 4
      %s821 = sadd.s32 %s819, %s820
      %s822 = smul.addr %s821, 2
      %s823 = scalar_lea.vmem %s3, %s822
      // Predicated region
      $region40: #{_lambda_.23} parent=31 // pred_check
        %p824 = pneg %p114
      $region41: #{_lambda_.23} parent=31 // pred_check_branch
        %826 = sbr.rel (%p824) target = $region43
      $region42: #{_lambda_.23} parent=31 // pred_region
        %s827 = smul.u32 4, %s19
      $region43: #{_lambda_.23} parent=31 // pred_fallthru
        _
    $region32: #{_lambda_.23} parent=5 // pred_fallthru
      _
    %p828 = scmp.le.s32.totalorder 2, %s9
    // Predicated region
    $region44: #{_lambda_.23} parent=5 // pred_check
      %p829 = pneg %p828
    $region45: #{_lambda_.23} parent=5 // pred_check_branch
      %831 = sbr.rel (%p829) target = $region47
    $region46: #{_lambda_.23} parent=5 // pred_region
      %s832 = ssub.s32 %s9, 2
      // Predicated region
      $region48: #{_lambda_.23} parent=46 // pred_check
        %p833 = pneg %p120
      $region49: #{_lambda_.23} parent=46 // pred_check_branch
        %835 = sbr.rel (%p833) target = $region51
      $region50: #{_lambda_.23} parent=46 // pred_region
        %s836 = smul.u32 4, %s21
        %p837 = scmp.lt.s32.totalorder %s20, 1
        %s838 = scalar_select %p837, %s20, 1
        %p839 = scmp.lt.s32.totalorder %s836, 3
        %s840 = scalar_select %p839, %s836, 3
        %s841 = smul.addr %s838, 4
        %s842 = sadd.s32 %s840, %s841
        %s843 = smul.addr %s842, 2
        %s844 = scalar_lea.vmem %s3, %s843
      $region51: #{_lambda_.23} parent=46 // pred_fallthru
        _
    $region47: #{_lambda_.23} parent=5 // pred_fallthru
      _
  $region6: #{_lambda_.23} parent=0 // loop_footer
    %s13 = sadd.s32 1, %s9
  $region7: #{_lambda_.23} parent=0 // loop_footer_branch
    %8 = sbr.rel target = $region3
  $region8: #{_lambda_.23} parent=0 // loop_exit
    _

// kernel: _lambda_.19
$region0: #{_lambda_.19}
  #allocation0 [shape = 'u32[]', space=smem, size = 0x4, offset = 0x4, fixed_abs, tag = 'smem constant byte address 0x4 - core index']
  #allocation1 [shape = 'u32[144,128]{1,0:T(1,128)}', space=vmem, size = 0x12000, scoped, tag = 'internal scratch']
  %s0 = inlined_call_operand.vmem [shape: bf16[2,10,10,16], index: 0, kind: input, shape index: {}]
  %s1 = inlined_call_operand.vmem [shape: bf16[144,16], index: 1, kind: input, shape index: {}]
  %s2 = inlined_call_operand.vmem [shape: f32[1,16], index: 2, kind: input, shape index: {}]
  %s3 = inlined_call_operand.vmem [shape: bf16[2,8,8,16], index: 3, kind: output, shape index: {}]
  %s4 = sld [smem:[#allocation0]]
  $region52: #{_lambda_.19} parent=0
    _
  %s6 = ssub.s32 1, %s4
  %s7 = scalar_select 0, %s6, %s4
  loop: start=0, step=1, limit=4
  $region2: #{_lambda_.19} parent=0 // loop_pre_header
    _
  $region3: #{_lambda_.19} parent=0 // loop_header
    %s9 = sphi 0, %s13
    %p10 = scmp.ge.s32.totalorder %s9, 4
    %s16 = sphi 0, %s28
    %s17 = sphi 0, %s24
    %s18 = sphi 0, %s16
    %s19 = sphi 0, %s17
    %s20 = sphi 0, %s18
    %s21 = sphi 0, %s19
    %s31 = sphi 0, %s33
    %s34 = sphi 0, %s31
    %s35 = sphi 0, %s34
    %s51 = sphi 0, %s35
    %s55 = sphi 0, %s55
    %s57 = sphi 0, %s55
    %s58 = sphi 0, %s57
    %s72 = sphi 0, %s58
    %s76 = sphi 0, %s76
    %s78 = sphi 0, %s76
    %s79 = sphi 0, %s78
    %s93 = sphi 0, %s79
    %s101 = sphi 0, %s103
    %s104 = sphi 0, %s101
    %s105 = sphi 0, %s104
    %s121 = sphi 0, %s105
  $region4: #{_lambda_.19} parent=0 // loop_header_branch
    %12 = sbr.rel (%p10) target = $region8
  $region5: #{_lambda_.19} parent=0 // loop_body
    %s14 = ssub.s32 %s9, 1
    %s15 = ssub.s32 %s9, 2
    %s22 = sadd.s32 1, %s17
    %p23 = scmp.ge.s32.totalorder %s22, 1
    %s24 = scalar_select %p23, 0, %s22
    %s25 = sadd.s32 1, %s16
    %s26 = scalar_select %p23, %s25, %s16
    %p27 = scmp.ge.s32.totalorder %s26, 2
    %s28 = scalar_select %p27, 0, %s26
    %s29 = ssub.s32 %s16, %s28
    %p30 = scmp.eq.s32.totalorder %s29, 0
    %s32 = sadd.s32 %s31, 1
    %s33 = scalar_select %p30, %s31, %s32
    %p36 = pneg %p30
    %p37 = scmp.eq.s32.totalorder %s9, 1
    %p38 = por %p36, %p37
    %p39 = scmp.ne.s32.totalorder %s31, %s34
    %p40 = scmp.eq.s32.totalorder %s9, 0
    %p41 = por %p39, %p40
    %p42 = scmp.ne.s32.totalorder %s31, %s34
    %p43 = scmp.eq.s32.totalorder %s14, 1
    %p44 = por %p42, %p43
    %p45 = scmp.ne.s32.totalorder %s34, %s35
    %p46 = scmp.eq.s32.totalorder %s14, 0
    %p47 = por %p45, %p46
    %p48 = scmp.ne.s32.totalorder %s34, %s35
    %p49 = scmp.eq.s32.totalorder %s15, 1
    %p50 = por %p48, %p49
    %p52 = scmp.ne.s32.totalorder %s35, %s51
    %p53 = scmp.eq.s32.totalorder %s15, 0
    %p54 = por %p52, %p53
    %s56 = sadd.s32 %s55, 1
    %p59 = scmp.eq.s32.totalorder %s9, 1
    %p60 = scmp.ne.s32.totalorder %s55, %s57
    %p61 = scmp.eq.s32.totalorder %s9, 0
    %p62 = por %p60, %p61
    %p63 = scmp.ne.s32.totalorder %s55, %s57
    %p64 = scmp.eq.s32.totalorder %s14, 1
    %p65 = por %p63, %p64
    %p66 = scmp.ne.s32.totalorder %s57, %s58
    %p67 = scmp.eq.s32.totalorder %s14, 0
    %p68 = por %p66, %p67
    %p69 = scmp.ne.s32.totalorder %s57, %s58
    %p70 = scmp.eq.s32.totalorder %s15, 1
    %p71 = por %p69, %p70
    %p73 = scmp.ne.s32.totalorder %s58, %s72
    %p74 = scmp.eq.s32.totalorder %s15, 0
    %p75 = por %p73, %p74
    %s77 = sadd.s32 %s76, 1
    %p80 = scmp.eq.s32.totalorder %s9, 1
    %p81 = scmp.ne.s32.totalorder %s76, %s78
    %p82 = scmp.eq.s32.totalorder %s9, 0
    %p83 = por %p81, %p82
    %p84 = scmp.ne.s32.totalorder %s76, %s78
    %p85 = scmp.eq.s32.totalorder %s14, 1
    %p86 = por %p84, %p85
    %p87 = scmp.ne.s32.totalorder %s78, %s79
    %p88 = scmp.eq.s32.totalorder %s14, 0
    %p89 = por %p87, %p88
    %p90 = scmp.ne.s32.totalorder %s78, %s79
    %p91 = scmp.eq.s32.totalorder %s15, 1
    %p92 = por %p90, %p91
    %p94 = scmp.ne.s32.totalorder %s79, %s93
    %p95 = scmp.eq.s32.totalorder %s15, 0
    %p96 = por %p94, %p95
    %s97 = ssub.s32 %s16, %s28
    %s98 = ssub.s32 %s17, %s24
    %s99 = sor.u32 %s97, %s98
    %p100 = scmp.eq.s32.totalorder %s99, 0
    %s102 = sadd.s32 %s101, 1
    %s103 = scalar_select %p100, %s101, %s102
    %p106 = pneg %p100
    %p107 = scmp.eq.s32.totalorder %s9, 1
    %p108 = por %p106, %p107
    %p109 = scmp.ne.s32.totalorder %s101, %s104
    %p110 = scmp.eq.s32.totalorder %s9, 0
    %p111 = por %p109, %p110
    %p112 = scmp.ne.s32.totalorder %s101, %s104
    %p113 = scmp.eq.s32.totalorder %s14, 1
    %p114 = por %p112, %p113
    %p115 = scmp.ne.s32.totalorder %s104, %s105
    %p116 = scmp.eq.s32.totalorder %s14, 0
    %p117 = por %p115, %p116
    %p118 = scmp.ne.s32.totalorder %s104, %s105
    %p119 = scmp.eq.s32.totalorder %s15, 1
    %p120 = por %p118, %p119
    %p122 = scmp.ne.s32.totalorder %s105, %s121
    %p123 = scmp.eq.s32.totalorder %s15, 0
    %p124 = por %p122, %p123
    %p125 = scmp.le.s32.totalorder 1, %s9
    %p126 = scmp.lt.s32.totalorder %s9, 3
    %p127 = pnand %p125, %p126
    %p128 = pneg %p127
    // Predicated region
    $region9: #{_lambda_.19} parent=5 // pred_check
      _
    $region10: #{_lambda_.19} parent=5 // pred_check_branch
      %130 = sbr.rel (%p127) target = $region12
    $region11: #{_lambda_.19} parent=5 // pred_region
      %s131 = ssub.s32 %s9, 1
      // Predicated region
      $region13: #{_lambda_.19} parent=11 // pred_check
        %p132 = pneg %p68
      $region14: #{_lambda_.19} parent=11 // pred_check_branch
        %134 = sbr.rel (%p132) target = $region16
      $region15: #{_lambda_.19} parent=11 // pred_region
        _
      $region16: #{_lambda_.19} parent=11 // pred_fallthru
        _
      // Predicated region
      $region17: #{_lambda_.19} parent=11 // pred_check
        %p135 = pneg %p89
      $region18: #{_lambda_.19} parent=11 // pred_check_branch
        %137 = sbr.rel (%p135) target = $region20
      $region19: #{_lambda_.19} parent=11 // pred_region
        _
      $region20: #{_lambda_.19} parent=11 // pred_fallthru
        _
    $region12: #{_lambda_.19} parent=5 // pred_fallthru
      _
    %p138 = scmp.lt.s32.totalorder %s9, 2
    // Predicated region
    $region21: #{_lambda_.19} parent=5 // pred_check
      %p139 = pneg %p138
    $region22: #{_lambda_.19} parent=5 // pred_check_branch
      %141 = sbr.rel (%p139) target = $region24
    $region23: #{_lambda_.19} parent=5 // pred_region
      // Predicated region
      $region25: #{_lambda_.19} parent=23 // pred_check
        %p142 = pneg %p41
      $region26: #{_lambda_.19} parent=23 // pred_check_branch
        %144 = sbr.rel (%p142) target = $region28
      $region27: #{_lambda_.19} parent=23 // pred_region
        %p145 = scmp.lt.s32.totalorder %s16, 1
        %s146 = scalar_select %p145, %s16, 1
        %s147 = smul.addr %s146, 20
        %s148 = smul.addr %s147, 4
        %s149 = scalar_lea.vmem %s0, %s148
      $region28: #{_lambda_.19} parent=23 // pred_fallthru
        _
    $region24: #{_lambda_.19} parent=5 // pred_fallthru
      _
    %p150 = scmp.le.s32.totalorder 1, %s9
    %p151 = scmp.lt.s32.totalorder %s9, 3
    %p152 = pnand %p150, %p151
    %p153 = pneg %p152
    // Predicated region
    $region29: #{_lambda_.19} parent=5 // pred_check
      _
    $region30: #{_lambda_.19} parent=5 // pred_check_branch
      %155 = sbr.rel (%p152) target = $region32
    $region31: #{_lambda_.19} parent=5 // pred_region
      %s156 = ssub.s32 %s9, 1
      %p157 = scmp.lt.s32.totalorder %s18, 1
      %s158 = scalar_select %p157, %s18, 1
      %s159 = smul.addr %s158, 20
      %s160 = smul.addr %s159, 4
      %s161 = scalar_lea.vmem %s0, %s160
      %p162 = pneg %p47
      %p163 = pneg %p44
      %p164 = pneg %p68
      %p165 = pneg %p65
      %p166 = pneg %p89
      %p167 = pneg %p86
      %p168 = pneg %p117
      %p169 = pneg %p114
      %s170 = smul.u32 8, %s19
      %p171 = scmp.lt.s32.totalorder %s18, 1
      %s172 = scalar_select %p171, %s18, 1
      %p173 = scmp.lt.s32.totalorder %s170, 7
      %s174 = scalar_select %p173, %s170, 7
      %s175 = smul.addr %s172, 8
      %s176 = sadd.s32 %s174, %s175
      %s177 = smul.addr %s176, 4
      %s178 = scalar_lea.vmem %s3, %s177
      %p179 = scmp.lt.s32.totalorder %s18, 1
      %s180 = scalar_select %p179, %s18, 1
      %s181 = smul.addr %s180, 20
      %s182 = smul.addr %s181, 4
      %s183 = scalar_lea.vmem %s0, %s182
      %s184 = smul.u32 8, %s19
      %p185 = scmp.lt.s32.totalorder %s18, 1
      %s186 = scalar_select %p185, %s18, 1
      %p187 = scmp.lt.s32.totalorder %s184, 7
      %s188 = scalar_select %p187, %s184, 7
      %s189 = smul.addr %s186, 8
      %s190 = sadd.s32 %s188, %s189
      %s191 = smul.addr %s190, 4
      %s192 = scalar_lea.vmem %s3, %s191
      %s193 = smul.u32 8, %s19
      %s195 = smul.u32 %s19, 8
      %v196 = vld [vmem:[%s2] sm:$0x1]
      %v197 = vld [vmem:[%s1] sm:$0xf]
      %v198 = vld [vmem:[%s1 + $0x4] sm:$0xf]
      %v199 = vld [vmem:[%s1 + $0x8] sm:$0xf]
      %v200 = vld [vmem:[%s1 + $0xc] sm:$0xf]
      %v201 = vld [vmem:[%s1 + $0x10] sm:$0xf]
      %v202 = vld [vmem:[%s1 + $0x14] sm:$0xf]
      %v203 = vld [vmem:[%s1 + $0x18] sm:$0xf]
      %v204 = vld [vmem:[%s1 + $0x1c] sm:$0xf]
      %v205 = vld [vmem:[%s1 + $0x20] sm:$0xf]
      %v206 = vld [vmem:[%s1 + $0x24] sm:$0xf]
      %v207 = vld [vmem:[%s1 + $0x28] sm:$0xf]
      %v208 = vld [vmem:[%s1 + $0x2c] sm:$0xf]
      %v209 = vld [vmem:[%s1 + $0x30] sm:$0xf]
      %v210 = vld [vmem:[%s1 + $0x34] sm:$0xf]
      %v211 = vld [vmem:[%s1 + $0x38] sm:$0xf]
      %v212 = vld [vmem:[%s1 + $0x3c] sm:$0xf]
      %v213 = vld [vmem:[%s1 + $0x40] sm:$0xf]
      %v214 = vld [vmem:[%s1 + $0x44] sm:$0xf]
      loop: start=0, step=1, limit=8
      $region33: #{_lambda_.19} parent=31 // loop_pre_header
        _
      $region34: #{_lambda_.19} parent=31 // loop_header
        %s216 = sphi 0, %s220
        %p217 = scmp.ge.s32.totalorder %s216, 8
      $region35: #{_lambda_.19} parent=31 // loop_header_branch
        %219 = sbr.rel (%p217) target = $region39
      $region36: #{_lambda_.19} parent=31 // loop_body
        %s221 = sadd.s32 %s195, %s216
        %s222 = smul.u32 %s221, 2
        %s223 = smul.addr %s222, 4
        %s224 = scalar_lea.vmem %s183, %s223
        %v225 = vld [vmem:[%s224] sm:$0xf]
        %v226 = vld [vmem:[%s224 + $0x4] sm:$0x1]
        %v229 = vunpack.c.l.b16 %v225
        %v230 = vunpack.c.l.b16 %v226
        %v231 = vpack.c.b16 %v230, %v229
        %v233 = vshrl.u32 %v231, 16
        %v235 = vshll.u32 %v231, 16
        %v237 = vrot.slane %v235, 1
        %v238 = vor.u32 %v233, %v237
        %v241 = vunpack.c.l.b16 %v199
        %v242 = vunpack.c.l.b16 %v200
        %v243 = vpack.c.b16 %v242, %v241
        %vm245 = vcmask 130048
        %v247 = vsel %vm245, %v238, 0
        %249 = vmatprep.subr.bf16.mxu0 0
        %250 = vmatpush1.bf16.msra.mxu0 0
        %251 = vmatprep.subr.bf16.mxu0 0
        %252 = vmatpush1.bf16.msra.mxu0 0
        %253 = vmatprep.subr.bf16.mxu0 0
        %254 = vmatpush1.bf16.msra.mxu0 0
        %255 = vmatprep.subr.bf16.mxu0 0
        %256 = vmatpush1.bf16.msra.mxu0 0
        %257 = vmatprep.subr.bf16.mxu0 0
        %258 = vmatpush1.bf16.msra.mxu0 0
        %259 = vmatprep.subr.bf16.mxu0 0
        %260 = vmatpush1.bf16.msra.mxu0 0
        %261 = vmatprep.subr.bf16.mxu0 0
        %262 = vmatpush1.bf16.msra.mxu0 0
        %263 = vmatprep.subr.bf16.mxu0 0
        %264 = vmatpush1.bf16.msra.mxu0 %v243
        %265 = vmatprep.subr.bf16.mxu0 0
        %266 = vmatpush2.bf16.msra.mxu0 0
        %267 = vmatprep.subr.bf16.mxu0 0
        %268 = vmatpush2.bf16.msra.mxu0 0
        %269 = vmatprep.subr.bf16.mxu0 0
        %270 = vmatpush2.bf16.msra.mxu0 0
        %271 = vmatprep.subr.bf16.mxu0 0
        %272 = vmatpush2.bf16.msra.mxu0 0
        %273 = vmatprep.subr.bf16.mxu0 0
        %274 = vmatpush2.bf16.msra.mxu0 0
        %275 = vmatprep.subr.bf16.mxu0 0
        %276 = vmatpush2.bf16.msra.mxu0 0
        %277 = vmatprep.subr.bf16.mxu0 0
        %278 = vmatpush2.bf16.msra.mxu0 0
        %279 = vmatprep.subr.bf16.mxu0 0
        %280 = vmatpush2.bf16.msra.mxu0 0
        %281 = vmatprep.mubr.bf16.mxu0 0
        %282 = vmatmul.mubr.bf16.gmra.mxu0 %v247
        %v283 = vpop.f32.mrf.mxu0
        %v284 = vadd.f32 0.0, %v283
        %v285 = vpop.f32.mrf.mxu0
        %v286 = vpop.f32.mrf.mxu0
        %v287 = vpop.f32.mrf.mxu0
        %288 = vdwg.mxu0
        %v291 = vunpack.c.l.b16 %v197
        %v292 = vunpack.c.l.b16 %v198
        %v293 = vpack.c.b16 %v292, %v291
        %v296 = vsel %vm245, %v225, 0
        %298 = vmatprep.subr.bf16.mxu0 0
        %299 = vmatpush1.bf16.msra.mxu0 0
        %300 = vmatprep.subr.bf16.mxu0 0
        %301 = vmatpush1.bf16.msra.mxu0 0
        %302 = vmatprep.subr.bf16.mxu0 0
        %303 = vmatpush1.bf16.msra.mxu0 0
        %304 = vmatprep.subr.bf16.mxu0 0
        %305 = vmatpush1.bf16.msra.mxu0 0
        %306 = vmatprep.subr.bf16.mxu0 0
        %307 = vmatpush1.bf16.msra.mxu0 0
        %308 = vmatprep.subr.bf16.mxu0 0
        %309 = vmatpush1.bf16.msra.mxu0 0
        %310 = vmatprep.subr.bf16.mxu0 0
        %311 = vmatpush1.bf16.msra.mxu0 0
        %312 = vmatprep.subr.bf16.mxu0 0
        %313 = vmatpush1.bf16.msra.mxu0 %v293
        %314 = vmatprep.subr.bf16.mxu0 0
        %315 = vmatpush2.bf16.msra.mxu0 0
        %316 = vmatprep.subr.bf16.mxu0 0
        %317 = vmatpush2.bf16.msra.mxu0 0
        %318 = vmatprep.subr.bf16.mxu0 0
        %319 = vmatpush2.bf16.msra.mxu0 0
        %320 = vmatprep.subr.bf16.mxu0 0
        %321 = vmatpush2.bf16.msra.mxu0 0
        %322 = vmatprep.subr.bf16.mxu0 0
        %323 = vmatpush2.bf16.msra.mxu0 0
        %324 = vmatprep.subr.bf16.mxu0 0
        %325 = vmatpush2.bf16.msra.mxu0 0
        %326 = vmatprep.subr.bf16.mxu0 0
        %327 = vmatpush2.bf16.msra.mxu0 0
        %328 = vmatprep.subr.bf16.mxu0 0
        %329 = vmatpush2.bf16.msra.mxu0 0
        %330 = vmatprep.mubr.bf16.mxu0 0
        %331 = vmatmul.mubr.bf16.gmra.mxu0 %v296
        %v332 = vpop.f32.mrf.mxu0
        %v333 = vadd.f32 %v284, %v332
        %v334 = vpop.f32.mrf.mxu0
        %v335 = vpop.f32.mrf.mxu0
        %v336 = vpop.f32.mrf.mxu0
        %337 = vdwg.mxu0
        %v338 = vld [vmem:[%s224] sm:$0xe]
        %v340 = vunpack.c.l.b16 %v338
        %v341 = vpack.c.b16 %v230, %v340
        %v342 = vrot.slane %v341, 1
        %v345 = vunpack.c.l.b16 %v201
        %v346 = vunpack.c.l.b16 %v202
        %v347 = vpack.c.b16 %v346, %v345
        %v350 = vsel %vm245, %v342, 0
        %352 = vmatprep.subr.bf16.mxu0 0
        %353 = vmatpush1.bf16.msra.mxu0 0
        %354 = vmatprep.subr.bf16.mxu0 0
        %355 = vmatpush1.bf16.msra.mxu0 0
        %356 = vmatprep.subr.bf16.mxu0 0
        %357 = vmatpush1.bf16.msra.mxu0 0
        %358 = vmatprep.subr.bf16.mxu0 0
        %359 = vmatpush1.bf16.msra.mxu0 0
        %360 = vmatprep.subr.bf16.mxu0 0
        %361 = vmatpush1.bf16.msra.mxu0 0
        %362 = vmatprep.subr.bf16.mxu0 0
        %363 = vmatpush1.bf16.msra.mxu0 0
        %364 = vmatprep.subr.bf16.mxu0 0
        %365 = vmatpush1.bf16.msra.mxu0 0
        %366 = vmatprep.subr.bf16.mxu0 0
        %367 = vmatpush1.bf16.msra.mxu0 %v347
        %368 = vmatprep.subr.bf16.mxu0 0
        %369 = vmatpush2.bf16.msra.mxu0 0
        %370 = vmatprep.subr.bf16.mxu0 0
        %371 = vmatpush2.bf16.msra.mxu0 0
        %372 = vmatprep.subr.bf16.mxu0 0
        %373 = vmatpush2.bf16.msra.mxu0 0
        %374 = vmatprep.subr.bf16.mxu0 0
        %375 = vmatpush2.bf16.msra.mxu0 0
        %376 = vmatprep.subr.bf16.mxu0 0
        %377 = vmatpush2.bf16.msra.mxu0 0
        %378 = vmatprep.subr.bf16.mxu0 0
        %379 = vmatpush2.bf16.msra.mxu0 0
        %380 = vmatprep.subr.bf16.mxu0 0
        %381 = vmatpush2.bf16.msra.mxu0 0
        %382 = vmatprep.subr.bf16.mxu0 0
        %383 = vmatpush2.bf16.msra.mxu0 0
        %384 = vmatprep.mubr.bf16.mxu0 0
        %385 = vmatmul.mubr.bf16.gmra.mxu0 %v350
        %v386 = vpop.f32.mrf.mxu0
        %v387 = vadd.f32 0.0, %v386
        %v388 = vpop.f32.mrf.mxu0
        %v389 = vpop.f32.mrf.mxu0
        %v390 = vpop.f32.mrf.mxu0
        %391 = vdwg.mxu0
        %v392 = vadd.f32 %v333, %v387
        %s393 = sadd.s32 %s221, 1
        %s394 = smul.u32 %s393, 2
        %s395 = smul.addr %s394, 4
        %s396 = scalar_lea.vmem %s183, %s395
        %v397 = vld [vmem:[%s396] sm:$0xf]
        %v400 = vunpack.c.l.b16 %v203
        %v401 = vunpack.c.l.b16 %v204
        %v402 = vpack.c.b16 %v401, %v400
        %v405 = vsel %vm245, %v397, 0
        %407 = vmatprep.subr.bf16.mxu0 0
        %408 = vmatpush1.bf16.msra.mxu0 0
        %409 = vmatprep.subr.bf16.mxu0 0
        %410 = vmatpush1.bf16.msra.mxu0 0
        %411 = vmatprep.subr.bf16.mxu0 0
        %412 = vmatpush1.bf16.msra.mxu0 0
        %413 = vmatprep.subr.bf16.mxu0 0
        %414 = vmatpush1.bf16.msra.mxu0 0
        %415 = vmatprep.subr.bf16.mxu0 0
        %416 = vmatpush1.bf16.msra.mxu0 0
        %417 = vmatprep.subr.bf16.mxu0 0
        %418 = vmatpush1.bf16.msra.mxu0 0
        %419 = vmatprep.subr.bf16.mxu0 0
        %420 = vmatpush1.bf16.msra.mxu0 0
        %421 = vmatprep.subr.bf16.mxu0 0
        %422 = vmatpush1.bf16.msra.mxu0 %v402
        %423 = vmatprep.subr.bf16.mxu0 0
        %424 = vmatpush2.bf16.msra.mxu0 0
        %425 = vmatprep.subr.bf16.mxu0 0
        %426 = vmatpush2.bf16.msra.mxu0 0
        %427 = vmatprep.subr.bf16.mxu0 0
        %428 = vmatpush2.bf16.msra.mxu0 0
        %429 = vmatprep.subr.bf16.mxu0 0
        %430 = vmatpush2.bf16.msra.mxu0 0
        %431 = vmatprep.subr.bf16.mxu0 0
        %432 = vmatpush2.bf16.msra.mxu0 0
        %433 = vmatprep.subr.bf16.mxu0 0
        %434 = vmatpush2.bf16.msra.mxu0 0
        %435 = vmatprep.subr.bf16.mxu0 0
        %436 = vmatpush2.bf16.msra.mxu0 0
        %437 = vmatprep.subr.bf16.mxu0 0
        %438 = vmatpush2.bf16.msra.mxu0 0
        %439 = vmatprep.mubr.bf16.mxu0 0
        %440 = vmatmul.mubr.bf16.gmra.mxu0 %v405
        %v441 = vpop.f32.mrf.mxu0
        %v442 = vadd.f32 0.0, %v441
        %v443 = vpop.f32.mrf.mxu0
        %v444 = vpop.f32.mrf.mxu0
        %v445 = vpop.f32.mrf.mxu0
        %446 = vdwg.mxu0
        %v447 = vadd.f32 %v392, %v442
        %v448 = vld [vmem:[%s396] sm:$0xf]
        %v449 = vld [vmem:[%s396 + $0x4] sm:$0x1]
        %v452 = vunpack.c.l.b16 %v448
        %v453 = vunpack.c.l.b16 %v449
        %v454 = vpack.c.b16 %v453, %v452
        %v456 = vshrl.u32 %v454, 16
        %v458 = vshll.u32 %v454, 16
        %v460 = vrot.slane %v458, 1
        %v461 = vor.u32 %v456, %v460
        %v464 = vunpack.c.l.b16 %v205
        %v465 = vunpack.c.l.b16 %v206
        %v466 = vpack.c.b16 %v465, %v464
        %v469 = vsel %vm245, %v461, 0
        %471 = vmatprep.subr.bf16.mxu0 0
        %472 = vmatpush1.bf16.msra.mxu0 0
        %473 = vmatprep.subr.bf16.mxu0 0
        %474 = vmatpush1.bf16.msra.mxu0 0
        %475 = vmatprep.subr.bf16.mxu0 0
        %476 = vmatpush1.bf16.msra.mxu0 0
        %477 = vmatprep.subr.bf16.mxu0 0
        %478 = vmatpush1.bf16.msra.mxu0 0
        %479 = vmatprep.subr.bf16.mxu0 0
        %480 = vmatpush1.bf16.msra.mxu0 0
        %481 = vmatprep.subr.bf16.mxu0 0
        %482 = vmatpush1.bf16.msra.mxu0 0
        %483 = vmatprep.subr.bf16.mxu0 0
        %484 = vmatpush1.bf16.msra.mxu0 0
        %485 = vmatprep.subr.bf16.mxu0 0
        %486 = vmatpush1.bf16.msra.mxu0 %v466
        %487 = vmatprep.subr.bf16.mxu0 0
        %488 = vmatpush2.bf16.msra.mxu0 0
        %489 = vmatprep.subr.bf16.mxu0 0
        %490 = vmatpush2.bf16.msra.mxu0 0
        %491 = vmatprep.subr.bf16.mxu0 0
        %492 = vmatpush2.bf16.msra.mxu0 0
        %493 = vmatprep.subr.bf16.mxu0 0
        %494 = vmatpush2.bf16.msra.mxu0 0
        %495 = vmatprep.subr.bf16.mxu0 0
        %496 = vmatpush2.bf16.msra.mxu0 0
        %497 = vmatprep.subr.bf16.mxu0 0
        %498 = vmatpush2.bf16.msra.mxu0 0
        %499 = vmatprep.subr.bf16.mxu0 0
        %500 = vmatpush2.bf16.msra.mxu0 0
        %501 = vmatprep.subr.bf16.mxu0 0
        %502 = vmatpush2.bf16.msra.mxu0 0
        %503 = vmatprep.mubr.bf16.mxu0 0
        %504 = vmatmul.mubr.bf16.gmra.mxu0 %v469
        %v505 = vpop.f32.mrf.mxu0
        %v506 = vadd.f32 0.0, %v505
        %v507 = vpop.f32.mrf.mxu0
        %v508 = vpop.f32.mrf.mxu0
        %v509 = vpop.f32.mrf.mxu0
        %510 = vdwg.mxu0
        %v511 = vadd.f32 %v447, %v506
        %v512 = vld [vmem:[%s396] sm:$0xe]
        %v514 = vunpack.c.l.b16 %v512
        %v515 = vpack.c.b16 %v453, %v514
        %v516 = vrot.slane %v515, 1
        %v519 = vunpack.c.l.b16 %v207
        %v520 = vunpack.c.l.b16 %v208
        %v521 = vpack.c.b16 %v520, %v519
        %v524 = vsel %vm245, %v516, 0
        %526 = vmatprep.subr.bf16.mxu0 0
        %527 = vmatpush1.bf16.msra.mxu0 0
        %528 = vmatprep.subr.bf16.mxu0 0
        %529 = vmatpush1.bf16.msra.mxu0 0
        %530 = vmatprep.subr.bf16.mxu0 0
        %531 = vmatpush1.bf16.msra.mxu0 0
        %532 = vmatprep.subr.bf16.mxu0 0
        %533 = vmatpush1.bf16.msra.mxu0 0
        %534 = vmatprep.subr.bf16.mxu0 0
        %535 = vmatpush1.bf16.msra.mxu0 0
        %536 = vmatprep.subr.bf16.mxu0 0
        %537 = vmatpush1.bf16.msra.mxu0 0
        %538 = vmatprep.subr.bf16.mxu0 0
        %539 = vmatpush1.bf16.msra.mxu0 0
        %540 = vmatprep.subr.bf16.mxu0 0
        %541 = vmatpush1.bf16.msra.mxu0 %v521
        %542 = vmatprep.subr.bf16.mxu0 0
        %543 = vmatpush2.bf16.msra.mxu0 0
        %544 = vmatprep.subr.bf16.mxu0 0
        %545 = vmatpush2.bf16.msra.mxu0 0
        %546 = vmatprep.subr.bf16.mxu0 0
        %547 = vmatpush2.bf16.msra.mxu0 0
        %548 = vmatprep.subr.bf16.mxu0 0
        %549 = vmatpush2.bf16.msra.mxu0 0
        %550 = vmatprep.subr.bf16.mxu0 0
        %551 = vmatpush2.bf16.msra.mxu0 0
        %552 = vmatprep.subr.bf16.mxu0 0
        %553 = vmatpush2.bf16.msra.mxu0 0
        %554 = vmatprep.subr.bf16.mxu0 0
        %555 = vmatpush2.bf16.msra.mxu0 0
        %556 = vmatprep.subr.bf16.mxu0 0
        %557 = vmatpush2.bf16.msra.mxu0 0
        %558 = vmatprep.mubr.bf16.mxu0 0
        %559 = vmatmul.mubr.bf16.gmra.mxu0 %v524
        %v560 = vpop.f32.mrf.mxu0
        %v561 = vadd.f32 0.0, %v560
        %v562 = vpop.f32.mrf.mxu0
        %v563 = vpop.f32.mrf.mxu0
        %v564 = vpop.f32.mrf.mxu0
        %565 = vdwg.mxu0
        %v566 = vadd.f32 %v511, %v561
        %s567 = sadd.s32 %s221, 2
        %s568 = smul.u32 %s567, 2
        %s569 = smul.addr %s568, 4
        %s570 = scalar_lea.vmem %s183, %s569
        %v571 = vld [vmem:[%s570] sm:$0xf]
        %v574 = vunpack.c.l.b16 %v209
        %v575 = vunpack.c.l.b16 %v210
        %v576 = vpack.c.b16 %v575, %v574
        %v579 = vsel %vm245, %v571, 0
        %581 = vmatprep.subr.bf16.mxu0 0
        %582 = vmatpush1.bf16.msra.mxu0 0
        %583 = vmatprep.subr.bf16.mxu0 0
        %584 = vmatpush1.bf16.msra.mxu0 0
        %585 = vmatprep.subr.bf16.mxu0 0
        %586 = vmatpush1.bf16.msra.mxu0 0
        %587 = vmatprep.subr.bf16.mxu0 0
        %588 = vmatpush1.bf16.msra.mxu0 0
        %589 = vmatprep.subr.bf16.mxu0 0
        %590 = vmatpush1.bf16.msra.mxu0 0
        %591 = vmatprep.subr.bf16.mxu0 0
        %592 = vmatpush1.bf16.msra.mxu0 0
        %593 = vmatprep.subr.bf16.mxu0 0
        %594 = vmatpush1.bf16.msra.mxu0 0
        %595 = vmatprep.subr.bf16.mxu0 0
        %596 = vmatpush1.bf16.msra.mxu0 %v576
        %597 = vmatprep.subr.bf16.mxu0 0
        %598 = vmatpush2.bf16.msra.mxu0 0
        %599 = vmatprep.subr.bf16.mxu0 0
        %600 = vmatpush2.bf16.msra.mxu0 0
        %601 = vmatprep.subr.bf16.mxu0 0
        %602 = vmatpush2.bf16.msra.mxu0 0
        %603 = vmatprep.subr.bf16.mxu0 0
        %604 = vmatpush2.bf16.msra.mxu0 0
        %605 = vmatprep.subr.bf16.mxu0 0
        %606 = vmatpush2.bf16.msra.mxu0 0
        %607 = vmatprep.subr.bf16.mxu0 0
        %608 = vmatpush2.bf16.msra.mxu0 0
        %609 = vmatprep.subr.bf16.mxu0 0
        %610 = vmatpush2.bf16.msra.mxu0 0
        %611 = vmatprep.subr.bf16.mxu0 0
        %612 = vmatpush2.bf16.msra.mxu0 0
        %613 = vmatprep.mubr.bf16.mxu0 0
        %614 = vmatmul.mubr.bf16.gmra.mxu0 %v579
        %v615 = vpop.f32.mrf.mxu0
        %v616 = vadd.f32 0.0, %v615
        %v617 = vpop.f32.mrf.mxu0
        %v618 = vpop.f32.mrf.mxu0
        %v619 = vpop.f32.mrf.mxu0
        %620 = vdwg.mxu0
        %v621 = vadd.f32 %v566, %v616
        %v622 = vld [vmem:[%s570] sm:$0xf]
        %v623 = vld [vmem:[%s570 + $0x4] sm:$0x1]
        %v626 = vunpack.c.l.b16 %v622
        %v627 = vunpack.c.l.b16 %v623
        %v628 = vpack.c.b16 %v627, %v626
        %v630 = vshrl.u32 %v628, 16
        %v632 = vshll.u32 %v628, 16
        %v634 = vrot.slane %v632, 1
        %v635 = vor.u32 %v630, %v634
        %v638 = vunpack.c.l.b16 %v211
        %v639 = vunpack.c.l.b16 %v212
        %v640 = vpack.c.b16 %v639, %v638
        %v643 = vsel %vm245, %v635, 0
        %645 = vmatprep.subr.bf16.mxu0 0
        %646 = vmatpush1.bf16.msra.mxu0 0
        %647 = vmatprep.subr.bf16.mxu0 0
        %648 = vmatpush1.bf16.msra.mxu0 0
        %649 = vmatprep.subr.bf16.mxu0 0
        %650 = vmatpush1.bf16.msra.mxu0 0
        %651 = vmatprep.subr.bf16.mxu0 0
        %652 = vmatpush1.bf16.msra.mxu0 0
        %653 = vmatprep.subr.bf16.mxu0 0
        %654 = vmatpush1.bf16.msra.mxu0 0
        %655 = vmatprep.subr.bf16.mxu0 0
        %656 = vmatpush1.bf16.msra.mxu0 0
        %657 = vmatprep.subr.bf16.mxu0 0
        %658 = vmatpush1.bf16.msra.mxu0 0
        %659 = vmatprep.subr.bf16.mxu0 0
        %660 = vmatpush1.bf16.msra.mxu0 %v640
        %661 = vmatprep.subr.bf16.mxu0 0
        %662 = vmatpush2.bf16.msra.mxu0 0
        %663 = vmatprep.subr.bf16.mxu0 0
        %664 = vmatpush2.bf16.msra.mxu0 0
        %665 = vmatprep.subr.bf16.mxu0 0
        %666 = vmatpush2.bf16.msra.mxu0 0
        %667 = vmatprep.subr.bf16.mxu0 0
        %668 = vmatpush2.bf16.msra.mxu0 0
        %669 = vmatprep.subr.bf16.mxu0 0
        %670 = vmatpush2.bf16.msra.mxu0 0
        %671 = vmatprep.subr.bf16.mxu0 0
        %672 = vmatpush2.bf16.msra.mxu0 0
        %673 = vmatprep.subr.bf16.mxu0 0
        %674 = vmatpush2.bf16.msra.mxu0 0
        %675 = vmatprep.subr.bf16.mxu0 0
        %676 = vmatpush2.bf16.msra.mxu0 0
        %677 = vmatprep.mubr.bf16.mxu0 0
        %678 = vmatmul.mubr.bf16.gmra.mxu0 %v643
        %v679 = vpop.f32.mrf.mxu0
        %v680 = vadd.f32 0.0, %v679
        %v681 = vpop.f32.mrf.mxu0
        %v682 = vpop.f32.mrf.mxu0
        %v683 = vpop.f32.mrf.mxu0
        %684 = vdwg.mxu0
        %v685 = vadd.f32 %v621, %v680
        %v686 = vld [vmem:[%s570] sm:$0xe]
        %v688 = vunpack.c.l.b16 %v686
        %v689 = vpack.c.b16 %v627, %v688
        %v690 = vrot.slane %v689, 1
        %v693 = vunpack.c.l.b16 %v213
        %v694 = vunpack.c.l.b16 %v214
        %v695 = vpack.c.b16 %v694, %v693
        %v698 = vsel %vm245, %v690, 0
        %700 = vmatprep.subr.bf16.mxu0 0
        %701 = vmatpush1.bf16.msra.mxu0 0
        %702 = vmatprep.subr.bf16.mxu0 0
        %703 = vmatpush1.bf16.msra.mxu0 0
        %704 = vmatprep.subr.bf16.mxu0 0
        %705 = vmatpush1.bf16.msra.mxu0 0
        %706 = vmatprep.subr.bf16.mxu0 0
        %707 = vmatpush1.bf16.msra.mxu0 0
        %708 = vmatprep.subr.bf16.mxu0 0
        %709 = vmatpush1.bf16.msra.mxu0 0
        %710 = vmatprep.subr.bf16.mxu0 0
        %711 = vmatpush1.bf16.msra.mxu0 0
        %712 = vmatprep.subr.bf16.mxu0 0
        %713 = vmatpush1.bf16.msra.mxu0 0
        %714 = vmatprep.subr.bf16.mxu0 0
        %715 = vmatpush1.bf16.msra.mxu0 %v695
        %716 = vmatprep.subr.bf16.mxu0 0
        %717 = vmatpush2.bf16.msra.mxu0 0
        %718 = vmatprep.subr.bf16.mxu0 0
        %719 = vmatpush2.bf16.msra.mxu0 0
        %720 = vmatprep.subr.bf16.mxu0 0
        %721 = vmatpush2.bf16.msra.mxu0 0
        %722 = vmatprep.subr.bf16.mxu0 0
        %723 = vmatpush2.bf16.msra.mxu0 0
        %724 = vmatprep.subr.bf16.mxu0 0
        %725 = vmatpush2.bf16.msra.mxu0 0
        %726 = vmatprep.subr.bf16.mxu0 0
        %727 = vmatpush2.bf16.msra.mxu0 0
        %728 = vmatprep.subr.bf16.mxu0 0
        %729 = vmatpush2.bf16.msra.mxu0 0
        %730 = vmatprep.subr.bf16.mxu0 0
        %731 = vmatpush2.bf16.msra.mxu0 0
        %732 = vmatprep.mubr.bf16.mxu0 0
        %733 = vmatmul.mubr.bf16.gmra.mxu0 %v698
        %v734 = vpop.f32.mrf.mxu0
        %v735 = vadd.f32 0.0, %v734
        %v736 = vpop.f32.mrf.mxu0
        %v737 = vpop.f32.mrf.mxu0
        %v738 = vpop.f32.mrf.mxu0
        %739 = vdwg.mxu0
        %v740 = vadd.f32 %v685, %v735
        %v742 = vlaneseq
        %v743 = vshrl.u32 %v742, 7
        %v744 = vsub.s32 0, %v743
        %v745 = vrot.slane %v196, %v744
        %v747 = vadd.f32 %v740, %v745
        %v748 = vmax.f32 %v747, 0.0
        %v749 = vpack.c.bf16 %v748, %v748
        %s750 = smul.addr %s216, 4
        %s751 = scalar_lea.vmem %s192, %s750
        %vm752 = vcmask 125952
        %753 = vst.msk [vmem:[%s751] sm:$0xf] %vm752, %v749
      $region37: #{_lambda_.19} parent=31 // loop_footer
        %s220 = sadd.s32 1, %s216
      $region38: #{_lambda_.19} parent=31 // loop_footer_branch
        %215 = sbr.rel target = $region34
      $region39: #{_lambda_.19} parent=31 // loop_exit
        _
      %s754 = smul.u32 8, %s19
      %p755 = scmp.lt.s32.totalorder %s18, 1
      %s756 = scalar_select %p755, %s18, 1
      %p757 = scmp.lt.s32.totalorder %s754, 7
      %s758 = scalar_select %p757, %s754, 7
      %s759 = smul.addr %s756, 8
      %s760 = sadd.s32 %s758, %s759
      %s761 = smul.addr %s760, 4
      %s762 = scalar_lea.vmem %s3, %s761
      // Predicated region
      $region40: #{_lambda_.19} parent=31 // pred_check
        %p763 = pneg %p114
      $region41: #{_lambda_.19} parent=31 // pred_check_branch
        %765 = sbr.rel (%p763) target = $region43
      $region42: #{_lambda_.19} parent=31 // pred_region
        %s766 = smul.u32 8, %s19
      $region43: #{_lambda_.19} parent=31 // pred_fallthru
        _
    $region32: #{_lambda_.19} parent=5 // pred_fallthru
      _
    %p767 = scmp.le.s32.totalorder 2, %s9
    // Predicated region
    $region44: #{_lambda_.19} parent=5 // pred_check
      %p768 = pneg %p767
    $region45: #{_lambda_.19} parent=5 // pred_check_branch
      %770 = sbr.rel (%p768) target = $region47
    $region46: #{_lambda_.19} parent=5 // pred_region
      %s771 = ssub.s32 %s9, 2
      // Predicated region
      $region48: #{_lambda_.19} parent=46 // pred_check
        %p772 = pneg %p120
      $region49: #{_lambda_.19} parent=46 // pred_check_branch
        %774 = sbr.rel (%p772) target = $region51
      $region50: #{_lambda_.19} parent=46 // pred_region
        %s775 = smul.u32 8, %s21
        %p776 = scmp.lt.s32.totalorder %s20, 1
        %s777 = scalar_select %p776, %s20, 1
        %p778 = scmp.lt.s32.totalorder %s775, 7
        %s779 = scalar_select %p778, %s775, 7
        %s780 = smul.addr %s777, 8
        %s781 = sadd.s32 %s779, %s780
        %s782 = smul.addr %s781, 4
        %s783 = scalar_lea.vmem %s3, %s782
      $region51: #{_lambda_.19} parent=46 // pred_fallthru
        _
    $region47: #{_lambda_.19} parent=5 // pred_fallthru
      _
  $region6: #{_lambda_.19} parent=0 // loop_footer
    %s13 = sadd.s32 1, %s9
  $region7: #{_lambda_.19} parent=0 // loop_footer_branch
    %8 = sbr.rel target = $region3
  $region8: #{_lambda_.19} parent=0 // loop_exit
    _

// kernel: _lambda_.26
$region0: #{_lambda_.26}
  #allocation0 [shape = 'u32[]', space=smem, size = 0x4, offset = 0x4, fixed_abs, tag = 'smem constant byte address 0x4 - core index']
  #allocation1 [shape = 'u32[144,128]{1,0:T(1,128)}', space=vmem, size = 0x12000, scoped, tag = 'internal scratch']
  %s0 = inlined_call_operand.vmem [shape: bf16[2,9,9,32], index: 0, kind: input, shape index: {}]
  %s1 = inlined_call_operand.vmem [shape: bf16[128,32], index: 1, kind: input, shape index: {}]
  %s2 = inlined_call_operand.vmem [shape: f32[1,32], index: 2, kind: input, shape index: {}]
  %s3 = inlined_call_operand.vmem [shape: bf16[2,8,8,32], index: 3, kind: output, shape index: {}]
  %s4 = sld [smem:[#allocation0]]
  $region52: #{_lambda_.26} parent=0
    _
  %s6 = ssub.s32 1, %s4
  %s7 = scalar_select 0, %s6, %s4
  loop: start=0, step=1, limit=4
  $region2: #{_lambda_.26} parent=0 // loop_pre_header
    _
  $region3: #{_lambda_.26} parent=0 // loop_header
    %s9 = sphi 0, %s13
    %p10 = scmp.ge.s32.totalorder %s9, 4
    %s16 = sphi 0, %s28
    %s17 = sphi 0, %s24
    %s18 = sphi 0, %s16
    %s19 = sphi 0, %s17
    %s20 = sphi 0, %s18
    %s21 = sphi 0, %s19
    %s31 = sphi 0, %s33
    %s34 = sphi 0, %s31
    %s35 = sphi 0, %s34
    %s51 = sphi 0, %s35
    %s55 = sphi 0, %s55
    %s57 = sphi 0, %s55
    %s58 = sphi 0, %s57
    %s72 = sphi 0, %s58
    %s76 = sphi 0, %s76
    %s78 = sphi 0, %s76
    %s79 = sphi 0, %s78
    %s93 = sphi 0, %s79
    %s101 = sphi 0, %s103
    %s104 = sphi 0, %s101
    %s105 = sphi 0, %s104
    %s121 = sphi 0, %s105
  $region4: #{_lambda_.26} parent=0 // loop_header_branch
    %12 = sbr.rel (%p10) target = $region8
  $region5: #{_lambda_.26} parent=0 // loop_body
    %s14 = ssub.s32 %s9, 1
    %s15 = ssub.s32 %s9, 2
    %s22 = sadd.s32 1, %s17
    %p23 = scmp.ge.s32.totalorder %s22, 1
    %s24 = scalar_select %p23, 0, %s22
    %s25 = sadd.s32 1, %s16
    %s26 = scalar_select %p23, %s25, %s16
    %p27 = scmp.ge.s32.totalorder %s26, 2
    %s28 = scalar_select %p27, 0, %s26
    %s29 = ssub.s32 %s16, %s28
    %p30 = scmp.eq.s32.totalorder %s29, 0
    %s32 = sadd.s32 %s31, 1
    %s33 = scalar_select %p30, %s31, %s32
    %p36 = pneg %p30
    %p37 = scmp.eq.s32.totalorder %s9, 1
    %p38 = por %p36, %p37
    %p39 = scmp.ne.s32.totalorder %s31, %s34
    %p40 = scmp.eq.s32.totalorder %s9, 0
    %p41 = por %p39, %p40
    %p42 = scmp.ne.s32.totalorder %s31, %s34
    %p43 = scmp.eq.s32.totalorder %s14, 1
    %p44 = por %p42, %p43
    %p45 = scmp.ne.s32.totalorder %s34, %s35
    %p46 = scmp.eq.s32.totalorder %s14, 0
    %p47 = por %p45, %p46
    %p48 = scmp.ne.s32.totalorder %s34, %s35
    %p49 = scmp.eq.s32.totalorder %s15, 1
    %p50 = por %p48, %p49
    %p52 = scmp.ne.s32.totalorder %s35, %s51
    %p53 = scmp.eq.s32.totalorder %s15, 0
    %p54 = por %p52, %p53
    %s56 = sadd.s32 %s55, 1
    %p59 = scmp.eq.s32.totalorder %s9, 1
    %p60 = scmp.ne.s32.totalorder %s55, %s57
    %p61 = scmp.eq.s32.totalorder %s9, 0
    %p62 = por %p60, %p61
    %p63 = scmp.ne.s32.totalorder %s55, %s57
    %p64 = scmp.eq.s32.totalorder %s14, 1
    %p65 = por %p63, %p64
    %p66 = scmp.ne.s32.totalorder %s57, %s58
    %p67 = scmp.eq.s32.totalorder %s14, 0
    %p68 = por %p66, %p67
    %p69 = scmp.ne.s32.totalorder %s57, %s58
    %p70 = scmp.eq.s32.totalorder %s15, 1
    %p71 = por %p69, %p70
    %p73 = scmp.ne.s32.totalorder %s58, %s72
    %p74 = scmp.eq.s32.totalorder %s15, 0
    %p75 = por %p73, %p74
    %s77 = sadd.s32 %s76, 1
    %p80 = scmp.eq.s32.totalorder %s9, 1
    %p81 = scmp.ne.s32.totalorder %s76, %s78
    %p82 = scmp.eq.s32.totalorder %s9, 0
    %p83 = por %p81, %p82
    %p84 = scmp.ne.s32.totalorder %s76, %s78
    %p85 = scmp.eq.s32.totalorder %s14, 1
    %p86 = por %p84, %p85
    %p87 = scmp.ne.s32.totalorder %s78, %s79
    %p88 = scmp.eq.s32.totalorder %s14, 0
    %p89 = por %p87, %p88
    %p90 = scmp.ne.s32.totalorder %s78, %s79
    %p91 = scmp.eq.s32.totalorder %s15, 1
    %p92 = por %p90, %p91
    %p94 = scmp.ne.s32.totalorder %s79, %s93
    %p95 = scmp.eq.s32.totalorder %s15, 0
    %p96 = por %p94, %p95
    %s97 = ssub.s32 %s16, %s28
    %s98 = ssub.s32 %s17, %s24
    %s99 = sor.u32 %s97, %s98
    %p100 = scmp.eq.s32.totalorder %s99, 0
    %s102 = sadd.s32 %s101, 1
    %s103 = scalar_select %p100, %s101, %s102
    %p106 = pneg %p100
    %p107 = scmp.eq.s32.totalorder %s9, 1
    %p108 = por %p106, %p107
    %p109 = scmp.ne.s32.totalorder %s101, %s104
    %p110 = scmp.eq.s32.totalorder %s9, 0
    %p111 = por %p109, %p110
    %p112 = scmp.ne.s32.totalorder %s101, %s104
    %p113 = scmp.eq.s32.totalorder %s14, 1
    %p114 = por %p112, %p113
    %p115 = scmp.ne.s32.totalorder %s104, %s105
    %p116 = scmp.eq.s32.totalorder %s14, 0
    %p117 = por %p115, %p116
    %p118 = scmp.ne.s32.totalorder %s104, %s105
    %p119 = scmp.eq.s32.totalorder %s15, 1
    %p120 = por %p118, %p119
    %p122 = scmp.ne.s32.totalorder %s105, %s121
    %p123 = scmp.eq.s32.totalorder %s15, 0
    %p124 = por %p122, %p123
    %p125 = scmp.le.s32.totalorder 1, %s9
    %p126 = scmp.lt.s32.totalorder %s9, 3
    %p127 = pnand %p125, %p126
    %p128 = pneg %p127
    // Predicated region
    $region9: #{_lambda_.26} parent=5 // pred_check
      _
    $region10: #{_lambda_.26} parent=5 // pred_check_branch
      %130 = sbr.rel (%p127) target = $region12
    $region11: #{_lambda_.26} parent=5 // pred_region
      %s131 = ssub.s32 %s9, 1
      // Predicated region
      $region13: #{_lambda_.26} parent=11 // pred_check
        %p132 = pneg %p68
      $region14: #{_lambda_.26} parent=11 // pred_check_branch
        %134 = sbr.rel (%p132) target = $region16
      $region15: #{_lambda_.26} parent=11 // pred_region
        _
      $region16: #{_lambda_.26} parent=11 // pred_fallthru
        _
      // Predicated region
      $region17: #{_lambda_.26} parent=11 // pred_check
        %p135 = pneg %p89
      $region18: #{_lambda_.26} parent=11 // pred_check_branch
        %137 = sbr.rel (%p135) target = $region20
      $region19: #{_lambda_.26} parent=11 // pred_region
        _
      $region20: #{_lambda_.26} parent=11 // pred_fallthru
        _
    $region12: #{_lambda_.26} parent=5 // pred_fallthru
      _
    %p138 = scmp.lt.s32.totalorder %s9, 2
    // Predicated region
    $region21: #{_lambda_.26} parent=5 // pred_check
      %p139 = pneg %p138
    $region22: #{_lambda_.26} parent=5 // pred_check_branch
      %141 = sbr.rel (%p139) target = $region24
    $region23: #{_lambda_.26} parent=5 // pred_region
      // Predicated region
      $region25: #{_lambda_.26} parent=23 // pred_check
        %p142 = pneg %p41
      $region26: #{_lambda_.26} parent=23 // pred_check_branch
        %144 = sbr.rel (%p142) target = $region28
      $region27: #{_lambda_.26} parent=23 // pred_region
        %p145 = scmp.lt.s32.totalorder %s16, 1
        %s146 = scalar_select %p145, %s16, 1
        %s147 = smul.addr %s146, 18
        %s148 = smul.addr %s147, 4
        %s149 = scalar_lea.vmem %s0, %s148
      $region28: #{_lambda_.26} parent=23 // pred_fallthru
        _
    $region24: #{_lambda_.26} parent=5 // pred_fallthru
      _
    %p150 = scmp.le.s32.totalorder 1, %s9
    %p151 = scmp.lt.s32.totalorder %s9, 3
    %p152 = pnand %p150, %p151
    %p153 = pneg %p152
    // Predicated region
    $region29: #{_lambda_.26} parent=5 // pred_check
      _
    $region30: #{_lambda_.26} parent=5 // pred_check_branch
      %155 = sbr.rel (%p152) target = $region32
    $region31: #{_lambda_.26} parent=5 // pred_region
      %s156 = ssub.s32 %s9, 1
      %p157 = scmp.lt.s32.totalorder %s18, 1
      %s158 = scalar_select %p157, %s18, 1
      %s159 = smul.addr %s158, 18
      %s160 = smul.addr %s159, 4
      %s161 = scalar_lea.vmem %s0, %s160
      %p162 = pneg %p47
      %p163 = pneg %p44
      %p164 = pneg %p68
      %p165 = pneg %p65
      %p166 = pneg %p89
      %p167 = pneg %p86
      %p168 = pneg %p117
      %p169 = pneg %p114
      %s170 = smul.u32 8, %s19
      %p171 = scmp.lt.s32.totalorder %s18, 1
      %s172 = scalar_select %p171, %s18, 1
      %p173 = scmp.lt.s32.totalorder %s170, 7
      %s174 = scalar_select %p173, %s170, 7
      %s175 = smul.addr %s172, 8
      %s176 = sadd.s32 %s174, %s175
      %s177 = smul.addr %s176, 4
      %s178 = scalar_lea.vmem %s3, %s177
      %p179 = scmp.lt.s32.totalorder %s18, 1
      %s180 = scalar_select %p179, %s18, 1
      %s181 = smul.addr %s180, 18
      %s182 = smul.addr %s181, 4
      %s183 = scalar_lea.vmem %s0, %s182
      %s184 = smul.u32 8, %s19
      %p185 = scmp.lt.s32.totalorder %s18, 1
      %s186 = scalar_select %p185, %s18, 1
      %p187 = scmp.lt.s32.totalorder %s184, 7
      %s188 = scalar_select %p187, %s184, 7
      %s189 = smul.addr %s186, 8
      %s190 = sadd.s32 %s188, %s189
      %s191 = smul.addr %s190, 4
      %s192 = scalar_lea.vmem %s3, %s191
      %s193 = smul.u32 8, %s19
      %s195 = smul.u32 %s19, 8
      %v196 = vld [vmem:[%s2] sm:$0x1]
      %v197 = vld [vmem:[%s1] sm:$0xf]
      %v198 = vld [vmem:[%s1 + $0x4] sm:$0xf]
      %v199 = vld [vmem:[%s1 + $0x8] sm:$0xf]
      %v200 = vld [vmem:[%s1 + $0xc] sm:$0xf]
      %v201 = vld [vmem:[%s1 + $0x10] sm:$0xf]
      %v202 = vld [vmem:[%s1 + $0x14] sm:$0xf]
      %v203 = vld [vmem:[%s1 + $0x18] sm:$0xf]
      %v204 = vld [vmem:[%s1 + $0x1c] sm:$0xf]
      %v205 = vld [vmem:[%s1 + $0x20] sm:$0xf]
      %v206 = vld [vmem:[%s1 + $0x24] sm:$0xf]
      %v207 = vld [vmem:[%s1 + $0x28] sm:$0xf]
      %v208 = vld [vmem:[%s1 + $0x2c] sm:$0xf]
      %v209 = vld [vmem:[%s1 + $0x30] sm:$0xf]
      %v210 = vld [vmem:[%s1 + $0x34] sm:$0xf]
      %v211 = vld [vmem:[%s1 + $0x38] sm:$0xf]
      %v212 = vld [vmem:[%s1 + $0x3c] sm:$0xf]
      loop: start=0, step=1, limit=8
      $region33: #{_lambda_.26} parent=31 // loop_pre_header
        _
      $region34: #{_lambda_.26} parent=31 // loop_header
        %s214 = sphi 0, %s218
        %p215 = scmp.ge.s32.totalorder %s214, 8
      $region35: #{_lambda_.26} parent=31 // loop_header_branch
        %217 = sbr.rel (%p215) target = $region39
      $region36: #{_lambda_.26} parent=31 // loop_body
        %s219 = sadd.s32 %s195, %s214
        %s220 = smul.u32 %s219, 2
        %s221 = smul.addr %s220, 4
        %s222 = scalar_lea.vmem %s183, %s221
        %v223 = vld [vmem:[%s222] sm:$0xf]
        %v224 = vld [vmem:[%s222 + $0x4] sm:$0x1]
        %v227 = vunpack.c.l.b16 %v223
        %v228 = vunpack.c.l.b16 %v224
        %v229 = vpack.c.b16 %v228, %v227
        %v231 = vshrl.u32 %v229, 16
        %v233 = vshll.u32 %v229, 16
        %v235 = vrot.slane %v233, 1
        %v236 = vor.u32 %v231, %v235
        %v241 = vunpack.c.l.b16 %v201
        %v242 = vunpack.c.l.b16 %v202
        %v243 = vunpack.c.l.b16 %v203
        %v244 = vunpack.c.l.b16 %v204
        %v245 = vpack.c.b16 %v242, %v241
        %v246 = vpack.c.b16 %v244, %v243
        %vm249 = vcmask 261120
        %v251 = vsel %vm249, %v236, 0
        %253 = vmatprep.subr.bf16.mxu0 0
        %254 = vmatpush1.bf16.msra.mxu0 0
        %255 = vmatprep.subr.bf16.mxu0 0
        %256 = vmatpush1.bf16.msra.mxu0 0
        %257 = vmatprep.subr.bf16.mxu0 0
        %258 = vmatpush1.bf16.msra.mxu0 0
        %259 = vmatprep.subr.bf16.mxu0 0
        %260 = vmatpush1.bf16.msra.mxu0 0
        %261 = vmatprep.subr.bf16.mxu0 0
        %262 = vmatpush1.bf16.msra.mxu0 0
        %263 = vmatprep.subr.bf16.mxu0 0
        %264 = vmatpush1.bf16.msra.mxu0 0
        %265 = vmatprep.subr.bf16.mxu0 0
        %266 = vmatpush1.bf16.msra.mxu0 %v246
        %267 = vmatprep.subr.bf16.mxu0 0
        %268 = vmatpush1.bf16.msra.mxu0 %v245
        %269 = vmatprep.subr.bf16.mxu0 0
        %270 = vmatpush2.bf16.msra.mxu0 0
        %271 = vmatprep.subr.bf16.mxu0 0
        %272 = vmatpush2.bf16.msra.mxu0 0
        %273 = vmatprep.subr.bf16.mxu0 0
        %274 = vmatpush2.bf16.msra.mxu0 0
        %275 = vmatprep.subr.bf16.mxu0 0
        %276 = vmatpush2.bf16.msra.mxu0 0
        %277 = vmatprep.subr.bf16.mxu0 0
        %278 = vmatpush2.bf16.msra.mxu0 0
        %279 = vmatprep.subr.bf16.mxu0 0
        %280 = vmatpush2.bf16.msra.mxu0 0
        %281 = vmatprep.subr.bf16.mxu0 0
        %282 = vmatpush2.bf16.msra.mxu0 0
        %283 = vmatprep.subr.bf16.mxu0 0
        %284 = vmatpush2.bf16.msra.mxu0 0
        %285 = vmatprep.mubr.bf16.mxu0 0
        %286 = vmatmul.mubr.bf16.gmra.mxu0 %v251
        %v287 = vpop.f32.mrf.mxu0
        %v288 = vadd.f32 0.0, %v287
        %v289 = vpop.f32.mrf.mxu0
        %v290 = vpop.f32.mrf.mxu0
        %v291 = vpop.f32.mrf.mxu0
        %292 = vdwg.mxu0
        %v297 = vunpack.c.l.b16 %v197
        %v298 = vunpack.c.l.b16 %v198
        %v299 = vunpack.c.l.b16 %v199
        %v300 = vunpack.c.l.b16 %v200
        %v301 = vpack.c.b16 %v298, %v297
        %v302 = vpack.c.b16 %v300, %v299
        %v306 = vsel %vm249, %v223, 0
        %308 = vmatprep.subr.bf16.mxu0 0
        %309 = vmatpush1.bf16.msra.mxu0 0
        %310 = vmatprep.subr.bf16.mxu0 0
        %311 = vmatpush1.bf16.msra.mxu0 0
        %312 = vmatprep.subr.bf16.mxu0 0
        %313 = vmatpush1.bf16.msra.mxu0 0
        %314 = vmatprep.subr.bf16.mxu0 0
        %315 = vmatpush1.bf16.msra.mxu0 0
        %316 = vmatprep.subr.bf16.mxu0 0
        %317 = vmatpush1.bf16.msra.mxu0 0
        %318 = vmatprep.subr.bf16.mxu0 0
        %319 = vmatpush1.bf16.msra.mxu0 0
        %320 = vmatprep.subr.bf16.mxu0 0
        %321 = vmatpush1.bf16.msra.mxu0 %v302
        %322 = vmatprep.subr.bf16.mxu0 0
        %323 = vmatpush1.bf16.msra.mxu0 %v301
        %324 = vmatprep.subr.bf16.mxu0 0
        %325 = vmatpush2.bf16.msra.mxu0 0
        %326 = vmatprep.subr.bf16.mxu0 0
        %327 = vmatpush2.bf16.msra.mxu0 0
        %328 = vmatprep.subr.bf16.mxu0 0
        %329 = vmatpush2.bf16.msra.mxu0 0
        %330 = vmatprep.subr.bf16.mxu0 0
        %331 = vmatpush2.bf16.msra.mxu0 0
        %332 = vmatprep.subr.bf16.mxu0 0
        %333 = vmatpush2.bf16.msra.mxu0 0
        %334 = vmatprep.subr.bf16.mxu0 0
        %335 = vmatpush2.bf16.msra.mxu0 0
        %336 = vmatprep.subr.bf16.mxu0 0
        %337 = vmatpush2.bf16.msra.mxu0 0
        %338 = vmatprep.subr.bf16.mxu0 0
        %339 = vmatpush2.bf16.msra.mxu0 0
        %340 = vmatprep.mubr.bf16.mxu0 0
        %341 = vmatmul.mubr.bf16.gmra.mxu0 %v306
        %v342 = vpop.f32.mrf.mxu0
        %v343 = vadd.f32 %v288, %v342
        %v344 = vpop.f32.mrf.mxu0
        %v345 = vpop.f32.mrf.mxu0
        %v346 = vpop.f32.mrf.mxu0
        %347 = vdwg.mxu0
        %s348 = sadd.s32 %s219, 1
        %s349 = smul.u32 %s348, 2
        %s350 = smul.addr %s349, 4
        %s351 = scalar_lea.vmem %s183, %s350
        %v352 = vld [vmem:[%s351] sm:$0xf]
        %v357 = vunpack.c.l.b16 %v205
        %v358 = vunpack.c.l.b16 %v206
        %v359 = vunpack.c.l.b16 %v207
        %v360 = vunpack.c.l.b16 %v208
        %v361 = vpack.c.b16 %v358, %v357
        %v362 = vpack.c.b16 %v360, %v359
        %v366 = vsel %vm249, %v352, 0
        %368 = vmatprep.subr.bf16.mxu0 0
        %369 = vmatpush1.bf16.msra.mxu0 0
        %370 = vmatprep.subr.bf16.mxu0 0
        %371 = vmatpush1.bf16.msra.mxu0 0
        %372 = vmatprep.subr.bf16.mxu0 0
        %373 = vmatpush1.bf16.msra.mxu0 0
        %374 = vmatprep.subr.bf16.mxu0 0
        %375 = vmatpush1.bf16.msra.mxu0 0
        %376 = vmatprep.subr.bf16.mxu0 0
        %377 = vmatpush1.bf16.msra.mxu0 0
        %378 = vmatprep.subr.bf16.mxu0 0
        %379 = vmatpush1.bf16.msra.mxu0 0
        %380 = vmatprep.subr.bf16.mxu0 0
        %381 = vmatpush1.bf16.msra.mxu0 %v362
        %382 = vmatprep.subr.bf16.mxu0 0
        %383 = vmatpush1.bf16.msra.mxu0 %v361
        %384 = vmatprep.subr.bf16.mxu0 0
        %385 = vmatpush2.bf16.msra.mxu0 0
        %386 = vmatprep.subr.bf16.mxu0 0
        %387 = vmatpush2.bf16.msra.mxu0 0
        %388 = vmatprep.subr.bf16.mxu0 0
        %389 = vmatpush2.bf16.msra.mxu0 0
        %390 = vmatprep.subr.bf16.mxu0 0
        %391 = vmatpush2.bf16.msra.mxu0 0
        %392 = vmatprep.subr.bf16.mxu0 0
        %393 = vmatpush2.bf16.msra.mxu0 0
        %394 = vmatprep.subr.bf16.mxu0 0
        %395 = vmatpush2.bf16.msra.mxu0 0
        %396 = vmatprep.subr.bf16.mxu0 0
        %397 = vmatpush2.bf16.msra.mxu0 0
        %398 = vmatprep.subr.bf16.mxu0 0
        %399 = vmatpush2.bf16.msra.mxu0 0
        %400 = vmatprep.mubr.bf16.mxu0 0
        %401 = vmatmul.mubr.bf16.gmra.mxu0 %v366
        %v402 = vpop.f32.mrf.mxu0
        %v403 = vadd.f32 0.0, %v402
        %v404 = vpop.f32.mrf.mxu0
        %v405 = vpop.f32.mrf.mxu0
        %v406 = vpop.f32.mrf.mxu0
        %407 = vdwg.mxu0
        %v408 = vadd.f32 %v343, %v403
        %v409 = vld [vmem:[%s351] sm:$0xf]
        %v410 = vld [vmem:[%s351 + $0x4] sm:$0x1]
        %v413 = vunpack.c.l.b16 %v409
        %v414 = vunpack.c.l.b16 %v410
        %v415 = vpack.c.b16 %v414, %v413
        %v417 = vshrl.u32 %v415, 16
        %v419 = vshll.u32 %v415, 16
        %v421 = vrot.slane %v419, 1
        %v422 = vor.u32 %v417, %v421
        %v427 = vunpack.c.l.b16 %v209
        %v428 = vunpack.c.l.b16 %v210
        %v429 = vunpack.c.l.b16 %v211
        %v430 = vunpack.c.l.b16 %v212
        %v431 = vpack.c.b16 %v428, %v427
        %v432 = vpack.c.b16 %v430, %v429
        %v436 = vsel %vm249, %v422, 0
        %438 = vmatprep.subr.bf16.mxu0 0
        %439 = vmatpush1.bf16.msra.mxu0 0
        %440 = vmatprep.subr.bf16.mxu0 0
        %441 = vmatpush1.bf16.msra.mxu0 0
        %442 = vmatprep.subr.bf16.mxu0 0
        %443 = vmatpush1.bf16.msra.mxu0 0
        %444 = vmatprep.subr.bf16.mxu0 0
        %445 = vmatpush1.bf16.msra.mxu0 0
        %446 = vmatprep.subr.bf16.mxu0 0
        %447 = vmatpush1.bf16.msra.mxu0 0
        %448 = vmatprep.subr.bf16.mxu0 0
        %449 = vmatpush1.bf16.msra.mxu0 0
        %450 = vmatprep.subr.bf16.mxu0 0
        %451 = vmatpush1.bf16.msra.mxu0 %v432
        %452 = vmatprep.subr.bf16.mxu0 0
        %453 = vmatpush1.bf16.msra.mxu0 %v431
        %454 = vmatprep.subr.bf16.mxu0 0
        %455 = vmatpush2.bf16.msra.mxu0 0
        %456 = vmatprep.subr.bf16.mxu0 0
        %457 = vmatpush2.bf16.msra.mxu0 0
        %458 = vmatprep.subr.bf16.mxu0 0
        %459 = vmatpush2.bf16.msra.mxu0 0
        %460 = vmatprep.subr.bf16.mxu0 0
        %461 = vmatpush2.bf16.msra.mxu0 0
        %462 = vmatprep.subr.bf16.mxu0 0
        %463 = vmatpush2.bf16.msra.mxu0 0
        %464 = vmatprep.subr.bf16.mxu0 0
        %465 = vmatpush2.bf16.msra.mxu0 0
        %466 = vmatprep.subr.bf16.mxu0 0
        %467 = vmatpush2.bf16.msra.mxu0 0
        %468 = vmatprep.subr.bf16.mxu0 0
        %469 = vmatpush2.bf16.msra.mxu0 0
        %470 = vmatprep.mubr.bf16.mxu0 0
        %471 = vmatmul.mubr.bf16.gmra.mxu0 %v436
        %v472 = vpop.f32.mrf.mxu0
        %v473 = vadd.f32 0.0, %v472
        %v474 = vpop.f32.mrf.mxu0
        %v475 = vpop.f32.mrf.mxu0
        %v476 = vpop.f32.mrf.mxu0
        %477 = vdwg.mxu0
        %v478 = vadd.f32 %v408, %v473
        %v480 = vlaneseq
        %v481 = vshrl.u32 %v480, 7
        %v482 = vsub.s32 0, %v481
        %v483 = vrot.slane %v196, %v482
        %v485 = vadd.f32 %v478, %v483
        %v486 = vmax.f32 %v485, 0.0
        %v487 = vpack.c.bf16 %v486, %v486
        %s488 = smul.addr %s214, 4
        %s489 = scalar_lea.vmem %s192, %s488
        %vm490 = vcmask 257024
        %491 = vst.msk [vmem:[%s489] sm:$0xf] %vm490, %v487
      $region37: #{_lambda_.26} parent=31 // loop_footer
        %s218 = sadd.s32 1, %s214
      $region38: #{_lambda_.26} parent=31 // loop_footer_branch
        %213 = sbr.rel target = $region34
      $region39: #{_lambda_.26} parent=31 // loop_exit
        _
      %s492 = smul.u32 8, %s19
      %p493 = scmp.lt.s32.totalorder %s18, 1
      %s494 = scalar_select %p493, %s18, 1
      %p495 = scmp.lt.s32.totalorder %s492, 7
      %s496 = scalar_select %p495, %s492, 7
      %s497 = smul.addr %s494, 8
      %s498 = sadd.s32 %s496, %s497
      %s499 = smul.addr %s498, 4
      %s500 = scalar_lea.vmem %s3, %s499
      // Predicated region
      $region40: #{_lambda_.26} parent=31 // pred_check
        %p501 = pneg %p114
      $region41: #{_lambda_.26} parent=31 // pred_check_branch
        %503 = sbr.rel (%p501) target = $region43
      $region42: #{_lambda_.26} parent=31 // pred_region
        %s504 = smul.u32 8, %s19
      $region43: #{_lambda_.26} parent=31 // pred_fallthru
        _
    $region32: #{_lambda_.26} parent=5 // pred_fallthru
      _
    %p505 = scmp.le.s32.totalorder 2, %s9
    // Predicated region
    $region44: #{_lambda_.26} parent=5 // pred_check
      %p506 = pneg %p505
    $region45: #{_lambda_.26} parent=5 // pred_check_branch
      %508 = sbr.rel (%p506) target = $region47
    $region46: #{_lambda_.26} parent=5 // pred_region
      %s509 = ssub.s32 %s9, 2
      // Predicated region
      $region48: #{_lambda_.26} parent=46 // pred_check
        %p510 = pneg %p120
      $region49: #{_lambda_.26} parent=46 // pred_check_branch
        %512 = sbr.rel (%p510) target = $region51
      $region50: #{_lambda_.26} parent=46 // pred_region
        %s513 = smul.u32 8, %s21
        %p514 = scmp.lt.s32.totalorder %s20, 1
        %s515 = scalar_select %p514, %s20, 1
        %p516 = scmp.lt.s32.totalorder %s513, 7
        %s517 = scalar_select %p516, %s513, 7
        %s518 = smul.addr %s515, 8
        %s519 = sadd.s32 %s517, %s518
        %s520 = smul.addr %s519, 4
        %s521 = scalar_lea.vmem %s3, %s520
      $region51: #{_lambda_.26} parent=46 // pred_fallthru
        _
    $region47: #{_lambda_.26} parent=5 // pred_fallthru
      _
  $region6: #{_lambda_.26} parent=0 // loop_footer
    %s13 = sadd.s32 1, %s9
  $region7: #{_lambda_.26} parent=0 // loop_footer_branch
    %8 = sbr.rel target = $region3
  $region8: #{_lambda_.26} parent=0 // loop_exit
    _

// kernel: _lambda_.15
$region0: #{_lambda_.15}
  #allocation0 [shape = 'u32[]', space=smem, size = 0x4, offset = 0x4, fixed_abs, tag = 'smem constant byte address 0x4 - core index']
  #allocation1 [shape = 'u32[144,128]{1,0:T(1,128)}', space=vmem, size = 0x12000, scoped, tag = 'internal scratch']
  %s0 = inlined_call_operand.vmem [shape: bf16[2,18,18,8], index: 0, kind: input, shape index: {}]
  %s1 = inlined_call_operand.vmem [shape: bf16[72,8], index: 1, kind: input, shape index: {}]
  %s2 = inlined_call_operand.vmem [shape: f32[1,8], index: 2, kind: input, shape index: {}]
  %s3 = inlined_call_operand.vmem [shape: bf16[2,16,16,8], index: 3, kind: output, shape index: {}]
  %s4 = sld [smem:[#allocation0]]
  $region52: #{_lambda_.15} parent=0
    _
  %s6 = ssub.s32 1, %s4
  %s7 = scalar_select 0, %s6, %s4
  loop: start=0, step=1, limit=6
  $region2: #{_lambda_.15} parent=0 // loop_pre_header
    _
  $region3: #{_lambda_.15} parent=0 // loop_header
    %s9 = sphi 0, %s13
    %p10 = scmp.ge.s32.totalorder %s9, 6
    %s16 = sphi 0, %s28
    %s17 = sphi 0, %s24
    %s18 = sphi 0, %s16
    %s19 = sphi 0, %s17
    %s20 = sphi 0, %s18
    %s21 = sphi 0, %s19
    %s31 = sphi 0, %s33
    %s34 = sphi 0, %s31
    %s35 = sphi 0, %s34
    %s51 = sphi 0, %s35
    %s55 = sphi 0, %s55
    %s57 = sphi 0, %s55
    %s58 = sphi 0, %s57
    %s72 = sphi 0, %s58
    %s76 = sphi 0, %s76
    %s78 = sphi 0, %s76
    %s79 = sphi 0, %s78
    %s93 = sphi 0, %s79
    %s101 = sphi 0, %s103
    %s104 = sphi 0, %s101
    %s105 = sphi 0, %s104
    %s121 = sphi 0, %s105
  $region4: #{_lambda_.15} parent=0 // loop_header_branch
    %12 = sbr.rel (%p10) target = $region8
  $region5: #{_lambda_.15} parent=0 // loop_body
    %s14 = ssub.s32 %s9, 1
    %s15 = ssub.s32 %s9, 2
    %s22 = sadd.s32 1, %s17
    %p23 = scmp.ge.s32.totalorder %s22, 2
    %s24 = scalar_select %p23, 0, %s22
    %s25 = sadd.s32 1, %s16
    %s26 = scalar_select %p23, %s25, %s16
    %p27 = scmp.ge.s32.totalorder %s26, 2
    %s28 = scalar_select %p27, 0, %s26
    %s29 = ssub.s32 %s16, %s28
    %p30 = scmp.eq.s32.totalorder %s29, 0
    %s32 = sadd.s32 %s31, 1
    %s33 = scalar_select %p30, %s31, %s32
    %p36 = pneg %p30
    %p37 = scmp.eq.s32.totalorder %s9, 3
    %p38 = por %p36, %p37
    %p39 = scmp.ne.s32.totalorder %s31, %s34
    %p40 = scmp.eq.s32.totalorder %s9, 0
    %p41 = por %p39, %p40
    %p42 = scmp.ne.s32.totalorder %s31, %s34
    %p43 = scmp.eq.s32.totalorder %s14, 3
    %p44 = por %p42, %p43
    %p45 = scmp.ne.s32.totalorder %s34, %s35
    %p46 = scmp.eq.s32.totalorder %s14, 0
    %p47 = por %p45, %p46
    %p48 = scmp.ne.s32.totalorder %s34, %s35
    %p49 = scmp.eq.s32.totalorder %s15, 3
    %p50 = por %p48, %p49
    %p52 = scmp.ne.s32.totalorder %s35, %s51
    %p53 = scmp.eq.s32.totalorder %s15, 0
    %p54 = por %p52, %p53
    %s56 = sadd.s32 %s55, 1
    %p59 = scmp.eq.s32.totalorder %s9, 3
    %p60 = scmp.ne.s32.totalorder %s55, %s57
    %p61 = scmp.eq.s32.totalorder %s9, 0
    %p62 = por %p60, %p61
    %p63 = scmp.ne.s32.totalorder %s55, %s57
    %p64 = scmp.eq.s32.totalorder %s14, 3
    %p65 = por %p63, %p64
    %p66 = scmp.ne.s32.totalorder %s57, %s58
    %p67 = scmp.eq.s32.totalorder %s14, 0
    %p68 = por %p66, %p67
    %p69 = scmp.ne.s32.totalorder %s57, %s58
    %p70 = scmp.eq.s32.totalorder %s15, 3
    %p71 = por %p69, %p70
    %p73 = scmp.ne.s32.totalorder %s58, %s72
    %p74 = scmp.eq.s32.totalorder %s15, 0
    %p75 = por %p73, %p74
    %s77 = sadd.s32 %s76, 1
    %p80 = scmp.eq.s32.totalorder %s9, 3
    %p81 = scmp.ne.s32.totalorder %s76, %s78
    %p82 = scmp.eq.s32.totalorder %s9, 0
    %p83 = por %p81, %p82
    %p84 = scmp.ne.s32.totalorder %s76, %s78
    %p85 = scmp.eq.s32.totalorder %s14, 3
    %p86 = por %p84, %p85
    %p87 = scmp.ne.s32.totalorder %s78, %s79
    %p88 = scmp.eq.s32.totalorder %s14, 0
    %p89 = por %p87, %p88
    %p90 = scmp.ne.s32.totalorder %s78, %s79
    %p91 = scmp.eq.s32.totalorder %s15, 3
    %p92 = por %p90, %p91
    %p94 = scmp.ne.s32.totalorder %s79, %s93
    %p95 = scmp.eq.s32.totalorder %s15, 0
    %p96 = por %p94, %p95
    %s97 = ssub.s32 %s16, %s28
    %s98 = ssub.s32 %s17, %s24
    %s99 = sor.u32 %s97, %s98
    %p100 = scmp.eq.s32.totalorder %s99, 0
    %s102 = sadd.s32 %s101, 1
    %s103 = scalar_select %p100, %s101, %s102
    %p106 = pneg %p100
    %p107 = scmp.eq.s32.totalorder %s9, 3
    %p108 = por %p106, %p107
    %p109 = scmp.ne.s32.totalorder %s101, %s104
    %p110 = scmp.eq.s32.totalorder %s9, 0
    %p111 = por %p109, %p110
    %p112 = scmp.ne.s32.totalorder %s101, %s104
    %p113 = scmp.eq.s32.totalorder %s14, 3
    %p114 = por %p112, %p113
    %p115 = scmp.ne.s32.totalorder %s104, %s105
    %p116 = scmp.eq.s32.totalorder %s14, 0
    %p117 = por %p115, %p116
    %p118 = scmp.ne.s32.totalorder %s104, %s105
    %p119 = scmp.eq.s32.totalorder %s15, 3
    %p120 = por %p118, %p119
    %p122 = scmp.ne.s32.totalorder %s105, %s121
    %p123 = scmp.eq.s32.totalorder %s15, 0
    %p124 = por %p122, %p123
    %p125 = scmp.le.s32.totalorder 1, %s9
    %p126 = scmp.lt.s32.totalorder %s9, 5
    %p127 = pnand %p125, %p126
    %p128 = pneg %p127
    // Predicated region
    $region9: #{_lambda_.15} parent=5 // pred_check
      _
    $region10: #{_lambda_.15} parent=5 // pred_check_branch
      %130 = sbr.rel (%p127) target = $region12
    $region11: #{_lambda_.15} parent=5 // pred_region
      %s131 = ssub.s32 %s9, 1
      // Predicated region
      $region13: #{_lambda_.15} parent=11 // pred_check
        %p132 = pneg %p68
      $region14: #{_lambda_.15} parent=11 // pred_check_branch
        %134 = sbr.rel (%p132) target = $region16
      $region15: #{_lambda_.15} parent=11 // pred_region
        _
      $region16: #{_lambda_.15} parent=11 // pred_fallthru
        _
      // Predicated region
      $region17: #{_lambda_.15} parent=11 // pred_check
        %p135 = pneg %p89
      $region18: #{_lambda_.15} parent=11 // pred_check_branch
        %137 = sbr.rel (%p135) target = $region20
      $region19: #{_lambda_.15} parent=11 // pred_region
        _
      $region20: #{_lambda_.15} parent=11 // pred_fallthru
        _
    $region12: #{_lambda_.15} parent=5 // pred_fallthru
      _
    %p138 = scmp.lt.s32.totalorder %s9, 4
    // Predicated region
    $region21: #{_lambda_.15} parent=5 // pred_check
      %p139 = pneg %p138
    $region22: #{_lambda_.15} parent=5 // pred_check_branch
      %141 = sbr.rel (%p139) target = $region24
    $region23: #{_lambda_.15} parent=5 // pred_region
      // Predicated region
      $region25: #{_lambda_.15} parent=23 // pred_check
        %p142 = pneg %p41
      $region26: #{_lambda_.15} parent=23 // pred_check_branch
        %144 = sbr.rel (%p142) target = $region28
      $region27: #{_lambda_.15} parent=23 // pred_region
        %p145 = scmp.lt.s32.totalorder %s16, 1
        %s146 = scalar_select %p145, %s16, 1
        %s147 = smul.addr %s146, 54
        %s148 = smul.addr %s147, 4
        %s149 = scalar_lea.vmem %s0, %s148
      $region28: #{_lambda_.15} parent=23 // pred_fallthru
        _
    $region24: #{_lambda_.15} parent=5 // pred_fallthru
      _
    %p150 = scmp.le.s32.totalorder 1, %s9
    %p151 = scmp.lt.s32.totalorder %s9, 5
    %p152 = pnand %p150, %p151
    %p153 = pneg %p152
    // Predicated region
    $region29: #{_lambda_.15} parent=5 // pred_check
      _
    $region30: #{_lambda_.15} parent=5 // pred_check_branch
      %155 = sbr.rel (%p152) target = $region32
    $region31: #{_lambda_.15} parent=5 // pred_region
      %s156 = ssub.s32 %s9, 1
      %p157 = scmp.lt.s32.totalorder %s18, 1
      %s158 = scalar_select %p157, %s18, 1
      %s159 = smul.addr %s158, 54
      %s160 = smul.addr %s159, 4
      %s161 = scalar_lea.vmem %s0, %s160
      %p162 = pneg %p47
      %p163 = pneg %p44
      %p164 = pneg %p68
      %p165 = pneg %p65
      %p166 = pneg %p89
      %p167 = pneg %p86
      %p168 = pneg %p117
      %p169 = pneg %p114
      %s170 = smul.u32 8, %s19
      %p171 = scmp.lt.s32.totalorder %s18, 1
      %s172 = scalar_select %p171, %s18, 1
      %p173 = scmp.lt.s32.totalorder %s170, 15
      %s174 = scalar_select %p173, %s170, 15
      %s175 = smul.addr %s174, 2
      %s176 = smul.addr %s172, 32
      %s177 = sadd.s32 %s175, %s176
      %s178 = smul.addr %s177, 4
      %s179 = scalar_lea.vmem %s3, %s178
      %p180 = scmp.lt.s32.totalorder %s18, 1
      %s181 = scalar_select %p180, %s18, 1
      %s182 = smul.addr %s181, 54
      %s183 = smul.addr %s182, 4
      %s184 = scalar_lea.vmem %s0, %s183
      %s185 = smul.u32 8, %s19
      %p186 = scmp.lt.s32.totalorder %s18, 1
      %s187 = scalar_select %p186, %s18, 1
      %p188 = scmp.lt.s32.totalorder %s185, 15
      %s189 = scalar_select %p188, %s185, 15
      %s190 = smul.addr %s189, 2
      %s191 = smul.addr %s187, 32
      %s192 = sadd.s32 %s190, %s191
      %s193 = smul.addr %s192, 4
      %s194 = scalar_lea.vmem %s3, %s193
      %s195 = smul.u32 8, %s19
      %s197 = smul.u32 %s19, 8
      %v198 = vld [vmem:[%s2] sm:$0x1]
      %v199 = vld [vmem:[%s1] sm:$0xf]
      %v200 = vld [vmem:[%s1 + $0x4] sm:$0xf]
      %v201 = vld [vmem:[%s1 + $0x8] sm:$0xf]
      %v202 = vld [vmem:[%s1 + $0xc] sm:$0xf]
      %v203 = vld [vmem:[%s1 + $0x10] sm:$0xf]
      %v204 = vld [vmem:[%s1 + $0x14] sm:$0xf]
      %v205 = vld [vmem:[%s1 + $0x18] sm:$0xf]
      %v206 = vld [vmem:[%s1 + $0x1c] sm:$0xf]
      %v207 = vld [vmem:[%s1 + $0x20] sm:$0xf]
      loop: start=0, step=1, limit=8
      $region33: #{_lambda_.15} parent=31 // loop_pre_header
        _
      $region34: #{_lambda_.15} parent=31 // loop_header
        %s209 = sphi 0, %s213
        %p210 = scmp.ge.s32.totalorder %s209, 8
      $region35: #{_lambda_.15} parent=31 // loop_header_branch
        %212 = sbr.rel (%p210) target = $region39
      $region36: #{_lambda_.15} parent=31 // loop_body
        %s214 = sadd.s32 %s197, %s209
        %s215 = smul.u32 %s214, 3
        %s216 = smul.addr %s215, 4
        %s217 = scalar_lea.vmem %s184, %s216
        %v218 = vld [vmem:[%s217] sm:$0xf]
        %v219 = vld [vmem:[%s217 + $0x4] sm:$0xf]
        %v220 = vld [vmem:[%s217 + $0x8] sm:$0x1]
        %v224 = vunpack.c.l.b16 %v218
        %v225 = vunpack.c.l.b16 %v219
        %v226 = vunpack.c.l.b16 %v220
        %v227 = vpack.c.b16 %v225, %v224
        %v228 = vpack.c.b16 %v226, %v226
        %vm229 = vsmask.f32 7424
        %v231 = vshrl.u32 %v227, 16
        %v233 = vshll.u32 %v227, 16
        %v235 = vrot.slane %v233, 1
        %v236 = vor.u32 %v231, %v235
        %v238 = vshll.u32 %v228, 16
        %v240 = vrot.slane %v238, 1
        %v241 = vsel %vm229, %v236, %v240
        %vm242 = vcmask 64512
        %v244 = vsel %vm242, %v241, 0
        %vm246 = vcmask 1043456
        %v248 = vsel %vm246, %v200, 0
        %250 = vmatprep.subr.bf16.mxu0 0
        %251 = vmatpush1.bf16.msra.mxu0 0
        %252 = vmatprep.subr.bf16.mxu0 0
        %253 = vmatpush1.bf16.msra.mxu0 0
        %254 = vmatprep.subr.bf16.mxu0 0
        %255 = vmatpush1.bf16.msra.mxu0 0
        %256 = vmatprep.subr.bf16.mxu0 0
        %257 = vmatpush1.bf16.msra.mxu0 0
        %258 = vmatprep.subr.bf16.mxu0 0
        %259 = vmatpush1.bf16.msra.mxu0 0
        %260 = vmatprep.subr.bf16.mxu0 0
        %261 = vmatpush1.bf16.msra.mxu0 0
        %262 = vmatprep.subr.bf16.mxu0 0
        %263 = vmatpush1.bf16.msra.mxu0 0
        %264 = vmatprep.subr.bf16.mxu0 0
        %265 = vmatpush1.bf16.msra.mxu0 %v248
        %266 = vmatprep.subr.bf16.mxu0 0
        %267 = vmatpush2.bf16.msra.mxu0 0
        %268 = vmatprep.subr.bf16.mxu0 0
        %269 = vmatpush2.bf16.msra.mxu0 0
        %270 = vmatprep.subr.bf16.mxu0 0
        %271 = vmatpush2.bf16.msra.mxu0 0
        %272 = vmatprep.subr.bf16.mxu0 0
        %273 = vmatpush2.bf16.msra.mxu0 0
        %274 = vmatprep.subr.bf16.mxu0 0
        %275 = vmatpush2.bf16.msra.mxu0 0
        %276 = vmatprep.subr.bf16.mxu0 0
        %277 = vmatpush2.bf16.msra.mxu0 0
        %278 = vmatprep.subr.bf16.mxu0 0
        %279 = vmatpush2.bf16.msra.mxu0 0
        %280 = vmatprep.subr.bf16.mxu0 0
        %281 = vmatpush2.bf16.msra.mxu0 0
        %282 = vmatprep.mubr.bf16.mxu0 0
        %283 = vmatmul.mubr.bf16.gmra.mxu0 %v244
        %v284 = vpop.f32.mrf.mxu0
        %v285 = vadd.f32 0.0, %v284
        %v286 = vpop.f32.mrf.mxu0
        %v287 = vpop.f32.mrf.mxu0
        %v288 = vadd.f32 0.0, %v287
        %v289 = vpop.f32.mrf.mxu0
        %290 = vdwg.mxu0
        %v291 = vsel %vm242, %v227, 0
        %v294 = vsel %vm246, %v199, 0
        %296 = vmatprep.subr.bf16.mxu0 0
        %297 = vmatpush1.bf16.msra.mxu0 0
        %298 = vmatprep.subr.bf16.mxu0 0
        %299 = vmatpush1.bf16.msra.mxu0 0
        %300 = vmatprep.subr.bf16.mxu0 0
        %301 = vmatpush1.bf16.msra.mxu0 0
        %302 = vmatprep.subr.bf16.mxu0 0
        %303 = vmatpush1.bf16.msra.mxu0 0
        %304 = vmatprep.subr.bf16.mxu0 0
        %305 = vmatpush1.bf16.msra.mxu0 0
        %306 = vmatprep.subr.bf16.mxu0 0
        %307 = vmatpush1.bf16.msra.mxu0 0
        %308 = vmatprep.subr.bf16.mxu0 0
        %309 = vmatpush1.bf16.msra.mxu0 0
        %310 = vmatprep.subr.bf16.mxu0 0
        %311 = vmatpush1.bf16.msra.mxu0 %v294
        %312 = vmatprep.subr.bf16.mxu0 0
        %313 = vmatpush2.bf16.msra.mxu0 0
        %314 = vmatprep.subr.bf16.mxu0 0
        %315 = vmatpush2.bf16.msra.mxu0 0
        %316 = vmatprep.subr.bf16.mxu0 0
        %317 = vmatpush2.bf16.msra.mxu0 0
        %318 = vmatprep.subr.bf16.mxu0 0
        %319 = vmatpush2.bf16.msra.mxu0 0
        %320 = vmatprep.subr.bf16.mxu0 0
        %321 = vmatpush2.bf16.msra.mxu0 0
        %322 = vmatprep.subr.bf16.mxu0 0
        %323 = vmatpush2.bf16.msra.mxu0 0
        %324 = vmatprep.subr.bf16.mxu0 0
        %325 = vmatpush2.bf16.msra.mxu0 0
        %326 = vmatprep.subr.bf16.mxu0 0
        %327 = vmatpush2.bf16.msra.mxu0 0
        %328 = vmatprep.mubr.bf16.mxu0 0
        %329 = vmatmul.mubr.bf16.gmra.mxu0 %v291
        %v330 = vpop.f32.mrf.mxu0
        %v331 = vadd.f32 %v285, %v330
        %v332 = vpop.f32.mrf.mxu0
        %v333 = vpop.f32.mrf.mxu0
        %v334 = vadd.f32 %v288, %v333
        %v335 = vpop.f32.mrf.mxu0
        %336 = vdwg.mxu0
        %v337 = vld [vmem:[%s217] sm:$0xe]
        %v339 = vunpack.c.l.b16 %v337
        %v340 = vpack.c.b16 %v225, %v339
        %vm341 = vcmask 1046528
        %v342 = vrot.slane %v340, 1
        %v343 = vrot.slane %v228, 1
        %v344 = vsel %vm341, %v342, %v343
        %v346 = vsel %vm242, %v344, 0
        %v349 = vsel %vm246, %v201, 0
        %351 = vmatprep.subr.bf16.mxu0 0
        %352 = vmatpush1.bf16.msra.mxu0 0
        %353 = vmatprep.subr.bf16.mxu0 0
        %354 = vmatpush1.bf16.msra.mxu0 0
        %355 = vmatprep.subr.bf16.mxu0 0
        %356 = vmatpush1.bf16.msra.mxu0 0
        %357 = vmatprep.subr.bf16.mxu0 0
        %358 = vmatpush1.bf16.msra.mxu0 0
        %359 = vmatprep.subr.bf16.mxu0 0
        %360 = vmatpush1.bf16.msra.mxu0 0
        %361 = vmatprep.subr.bf16.mxu0 0
        %362 = vmatpush1.bf16.msra.mxu0 0
        %363 = vmatprep.subr.bf16.mxu0 0
        %364 = vmatpush1.bf16.msra.mxu0 0
        %365 = vmatprep.subr.bf16.mxu0 0
        %366 = vmatpush1.bf16.msra.mxu0 %v349
        %367 = vmatprep.subr.bf16.mxu0 0
        %368 = vmatpush2.bf16.msra.mxu0 0
        %369 = vmatprep.subr.bf16.mxu0 0
        %370 = vmatpush2.bf16.msra.mxu0 0
        %371 = vmatprep.subr.bf16.mxu0 0
        %372 = vmatpush2.bf16.msra.mxu0 0
        %373 = vmatprep.subr.bf16.mxu0 0
        %374 = vmatpush2.bf16.msra.mxu0 0
        %375 = vmatprep.subr.bf16.mxu0 0
        %376 = vmatpush2.bf16.msra.mxu0 0
        %377 = vmatprep.subr.bf16.mxu0 0
        %378 = vmatpush2.bf16.msra.mxu0 0
        %379 = vmatprep.subr.bf16.mxu0 0
        %380 = vmatpush2.bf16.msra.mxu0 0
        %381 = vmatprep.subr.bf16.mxu0 0
        %382 = vmatpush2.bf16.msra.mxu0 0
        %383 = vmatprep.mubr.bf16.mxu0 0
        %384 = vmatmul.mubr.bf16.gmra.mxu0 %v346
        %v385 = vpop.f32.mrf.mxu0
        %v386 = vadd.f32 0.0, %v385
        %v387 = vpop.f32.mrf.mxu0
        %v388 = vpop.f32.mrf.mxu0
        %v389 = vadd.f32 0.0, %v388
        %v390 = vpop.f32.mrf.mxu0
        %391 = vdwg.mxu0
        %v392 = vadd.f32 %v331, %v386
        %v393 = vadd.f32 %v334, %v389
        %s394 = sadd.s32 %s214, 1
        %s395 = smul.u32 %s394, 3
        %s396 = smul.addr %s395, 4
        %s397 = scalar_lea.vmem %s184, %s396
        %v398 = vld [vmem:[%s397] sm:$0xf]
        %v399 = vld [vmem:[%s397 + $0x4] sm:$0xf]
        %v402 = vunpack.c.l.b16 %v398
        %v403 = vunpack.c.l.b16 %v399
        %v404 = vpack.c.b16 %v403, %v402
        %v406 = vsel %vm242, %v404, 0
        %v409 = vsel %vm246, %v202, 0
        %411 = vmatprep.subr.bf16.mxu0 0
        %412 = vmatpush1.bf16.msra.mxu0 0
        %413 = vmatprep.subr.bf16.mxu0 0
        %414 = vmatpush1.bf16.msra.mxu0 0
        %415 = vmatprep.subr.bf16.mxu0 0
        %416 = vmatpush1.bf16.msra.mxu0 0
        %417 = vmatprep.subr.bf16.mxu0 0
        %418 = vmatpush1.bf16.msra.mxu0 0
        %419 = vmatprep.subr.bf16.mxu0 0
        %420 = vmatpush1.bf16.msra.mxu0 0
        %421 = vmatprep.subr.bf16.mxu0 0
        %422 = vmatpush1.bf16.msra.mxu0 0
        %423 = vmatprep.subr.bf16.mxu0 0
        %424 = vmatpush1.bf16.msra.mxu0 0
        %425 = vmatprep.subr.bf16.mxu0 0
        %426 = vmatpush1.bf16.msra.mxu0 %v409
        %427 = vmatprep.subr.bf16.mxu0 0
        %428 = vmatpush2.bf16.msra.mxu0 0
        %429 = vmatprep.subr.bf16.mxu0 0
        %430 = vmatpush2.bf16.msra.mxu0 0
        %431 = vmatprep.subr.bf16.mxu0 0
        %432 = vmatpush2.bf16.msra.mxu0 0
        %433 = vmatprep.subr.bf16.mxu0 0
        %434 = vmatpush2.bf16.msra.mxu0 0
        %435 = vmatprep.subr.bf16.mxu0 0
        %436 = vmatpush2.bf16.msra.mxu0 0
        %437 = vmatprep.subr.bf16.mxu0 0
        %438 = vmatpush2.bf16.msra.mxu0 0
        %439 = vmatprep.subr.bf16.mxu0 0
        %440 = vmatpush2.bf16.msra.mxu0 0
        %441 = vmatprep.subr.bf16.mxu0 0
        %442 = vmatpush2.bf16.msra.mxu0 0
        %443 = vmatprep.mubr.bf16.mxu0 0
        %444 = vmatmul.mubr.bf16.gmra.mxu0 %v406
        %v445 = vpop.f32.mrf.mxu0
        %v446 = vadd.f32 0.0, %v445
        %v447 = vpop.f32.mrf.mxu0
        %v448 = vpop.f32.mrf.mxu0
        %v449 = vadd.f32 0.0, %v448
        %v450 = vpop.f32.mrf.mxu0
        %451 = vdwg.mxu0
        %v452 = vadd.f32 %v392, %v446
        %v453 = vadd.f32 %v393, %v449
        %v454 = vld [vmem:[%s397] sm:$0xf]
        %v455 = vld [vmem:[%s397 + $0x4] sm:$0xf]
        %v456 = vld [vmem:[%s397 + $0x8] sm:$0x1]
        %v460 = vunpack.c.l.b16 %v454
        %v461 = vunpack.c.l.b16 %v455
        %v462 = vunpack.c.l.b16 %v456
        %v463 = vpack.c.b16 %v461, %v460
        %v464 = vpack.c.b16 %v462, %v462
        %v466 = vshrl.u32 %v463, 16
        %v468 = vshll.u32 %v463, 16
        %v470 = vrot.slane %v468, 1
        %v471 = vor.u32 %v466, %v470
        %v473 = vshll.u32 %v464, 16
        %v475 = vrot.slane %v473, 1
        %v476 = vsel %vm229, %v471, %v475
        %v478 = vsel %vm242, %v476, 0
        %v481 = vsel %vm246, %v203, 0
        %483 = vmatprep.subr.bf16.mxu0 0
        %484 = vmatpush1.bf16.msra.mxu0 0
        %485 = vmatprep.subr.bf16.mxu0 0
        %486 = vmatpush1.bf16.msra.mxu0 0
        %487 = vmatprep.subr.bf16.mxu0 0
        %488 = vmatpush1.bf16.msra.mxu0 0
        %489 = vmatprep.subr.bf16.mxu0 0
        %490 = vmatpush1.bf16.msra.mxu0 0
        %491 = vmatprep.subr.bf16.mxu0 0
        %492 = vmatpush1.bf16.msra.mxu0 0
        %493 = vmatprep.subr.bf16.mxu0 0
        %494 = vmatpush1.bf16.msra.mxu0 0
        %495 = vmatprep.subr.bf16.mxu0 0
        %496 = vmatpush1.bf16.msra.mxu0 0
        %497 = vmatprep.subr.bf16.mxu0 0
        %498 = vmatpush1.bf16.msra.mxu0 %v481
        %499 = vmatprep.subr.bf16.mxu0 0
        %500 = vmatpush2.bf16.msra.mxu0 0
        %501 = vmatprep.subr.bf16.mxu0 0
        %502 = vmatpush2.bf16.msra.mxu0 0
        %503 = vmatprep.subr.bf16.mxu0 0
        %504 = vmatpush2.bf16.msra.mxu0 0
        %505 = vmatprep.subr.bf16.mxu0 0
        %506 = vmatpush2.bf16.msra.mxu0 0
        %507 = vmatprep.subr.bf16.mxu0 0
        %508 = vmatpush2.bf16.msra.mxu0 0
        %509 = vmatprep.subr.bf16.mxu0 0
        %510 = vmatpush2.bf16.msra.mxu0 0
        %511 = vmatprep.subr.bf16.mxu0 0
        %512 = vmatpush2.bf16.msra.mxu0 0
        %513 = vmatprep.subr.bf16.mxu0 0
        %514 = vmatpush2.bf16.msra.mxu0 0
        %515 = vmatprep.mubr.bf16.mxu0 0
        %516 = vmatmul.mubr.bf16.gmra.mxu0 %v478
        %v517 = vpop.f32.mrf.mxu0
        %v518 = vadd.f32 0.0, %v517
        %v519 = vpop.f32.mrf.mxu0
        %v520 = vpop.f32.mrf.mxu0
        %v521 = vadd.f32 0.0, %v520
        %v522 = vpop.f32.mrf.mxu0
        %523 = vdwg.mxu0
        %v524 = vadd.f32 %v452, %v518
        %v525 = vadd.f32 %v453, %v521
        %v526 = vld [vmem:[%s397] sm:$0xe]
        %v528 = vunpack.c.l.b16 %v526
        %v529 = vpack.c.b16 %v461, %v528
        %v530 = vrot.slane %v529, 1
        %v531 = vrot.slane %v464, 1
        %v532 = vsel %vm341, %v530, %v531
        %v534 = vsel %vm242, %v532, 0
        %v537 = vsel %vm246, %v204, 0
        %539 = vmatprep.subr.bf16.mxu0 0
        %540 = vmatpush1.bf16.msra.mxu0 0
        %541 = vmatprep.subr.bf16.mxu0 0
        %542 = vmatpush1.bf16.msra.mxu0 0
        %543 = vmatprep.subr.bf16.mxu0 0
        %544 = vmatpush1.bf16.msra.mxu0 0
        %545 = vmatprep.subr.bf16.mxu0 0
        %546 = vmatpush1.bf16.msra.mxu0 0
        %547 = vmatprep.subr.bf16.mxu0 0
        %548 = vmatpush1.bf16.msra.mxu0 0
        %549 = vmatprep.subr.bf16.mxu0 0
        %550 = vmatpush1.bf16.msra.mxu0 0
        %551 = vmatprep.subr.bf16.mxu0 0
        %552 = vmatpush1.bf16.msra.mxu0 0
        %553 = vmatprep.subr.bf16.mxu0 0
        %554 = vmatpush1.bf16.msra.mxu0 %v537
        %555 = vmatprep.subr.bf16.mxu0 0
        %556 = vmatpush2.bf16.msra.mxu0 0
        %557 = vmatprep.subr.bf16.mxu0 0
        %558 = vmatpush2.bf16.msra.mxu0 0
        %559 = vmatprep.subr.bf16.mxu0 0
        %560 = vmatpush2.bf16.msra.mxu0 0
        %561 = vmatprep.subr.bf16.mxu0 0
        %562 = vmatpush2.bf16.msra.mxu0 0
        %563 = vmatprep.subr.bf16.mxu0 0
        %564 = vmatpush2.bf16.msra.mxu0 0
        %565 = vmatprep.subr.bf16.mxu0 0
        %566 = vmatpush2.bf16.msra.mxu0 0
        %567 = vmatprep.subr.bf16.mxu0 0
        %568 = vmatpush2.bf16.msra.mxu0 0
        %569 = vmatprep.subr.bf16.mxu0 0
        %570 = vmatpush2.bf16.msra.mxu0 0
        %571 = vmatprep.mubr.bf16.mxu0 0
        %572 = vmatmul.mubr.bf16.gmra.mxu0 %v534
        %v573 = vpop.f32.mrf.mxu0
        %v574 = vadd.f32 0.0, %v573
        %v575 = vpop.f32.mrf.mxu0
        %v576 = vpop.f32.mrf.mxu0
        %v577 = vadd.f32 0.0, %v576
        %v578 = vpop.f32.mrf.mxu0
        %579 = vdwg.mxu0
        %v580 = vadd.f32 %v524, %v574
        %v581 = vadd.f32 %v525, %v577
        %s582 = sadd.s32 %s214, 2
        %s583 = smul.u32 %s582, 3
        %s584 = smul.addr %s583, 4
        %s585 = scalar_lea.vmem %s184, %s584
        %v586 = vld [vmem:[%s585] sm:$0xf]
        %v587 = vld [vmem:[%s585 + $0x4] sm:$0xf]
        %v590 = vunpack.c.l.b16 %v586
        %v591 = vunpack.c.l.b16 %v587
        %v592 = vpack.c.b16 %v591, %v590
        %v594 = vsel %vm242, %v592, 0
        %v597 = vsel %vm246, %v205, 0
        %599 = vmatprep.subr.bf16.mxu0 0
        %600 = vmatpush1.bf16.msra.mxu0 0
        %601 = vmatprep.subr.bf16.mxu0 0
        %602 = vmatpush1.bf16.msra.mxu0 0
        %603 = vmatprep.subr.bf16.mxu0 0
        %604 = vmatpush1.bf16.msra.mxu0 0
        %605 = vmatprep.subr.bf16.mxu0 0
        %606 = vmatpush1.bf16.msra.mxu0 0
        %607 = vmatprep.subr.bf16.mxu0 0
        %608 = vmatpush1.bf16.msra.mxu0 0
        %609 = vmatprep.subr.bf16.mxu0 0
        %610 = vmatpush1.bf16.msra.mxu0 0
        %611 = vmatprep.subr.bf16.mxu0 0
        %612 = vmatpush1.bf16.msra.mxu0 0
        %613 = vmatprep.subr.bf16.mxu0 0
        %614 = vmatpush1.bf16.msra.mxu0 %v597
        %615 = vmatprep.subr.bf16.mxu0 0
        %616 = vmatpush2.bf16.msra.mxu0 0
        %617 = vmatprep.subr.bf16.mxu0 0
        %618 = vmatpush2.bf16.msra.mxu0 0
        %619 = vmatprep.subr.bf16.mxu0 0
        %620 = vmatpush2.bf16.msra.mxu0 0
        %621 = vmatprep.subr.bf16.mxu0 0
        %622 = vmatpush2.bf16.msra.mxu0 0
        %623 = vmatprep.subr.bf16.mxu0 0
        %624 = vmatpush2.bf16.msra.mxu0 0
        %625 = vmatprep.subr.bf16.mxu0 0
        %626 = vmatpush2.bf16.msra.mxu0 0
        %627 = vmatprep.subr.bf16.mxu0 0
        %628 = vmatpush2.bf16.msra.mxu0 0
        %629 = vmatprep.subr.bf16.mxu0 0
        %630 = vmatpush2.bf16.msra.mxu0 0
        %631 = vmatprep.mubr.bf16.mxu0 0
        %632 = vmatmul.mubr.bf16.gmra.mxu0 %v594
        %v633 = vpop.f32.mrf.mxu0
        %v634 = vadd.f32 0.0, %v633
        %v635 = vpop.f32.mrf.mxu0
        %v636 = vpop.f32.mrf.mxu0
        %v637 = vadd.f32 0.0, %v636
        %v638 = vpop.f32.mrf.mxu0
        %639 = vdwg.mxu0
        %v640 = vadd.f32 %v580, %v634
        %v641 = vadd.f32 %v581, %v637
        %v642 = vld [vmem:[%s585] sm:$0xf]
        %v643 = vld [vmem:[%s585 + $0x4] sm:$0xf]
        %v644 = vld [vmem:[%s585 + $0x8] sm:$0x1]
        %v648 = vunpack.c.l.b16 %v642
        %v649 = vunpack.c.l.b16 %v643
        %v650 = vunpack.c.l.b16 %v644
        %v651 = vpack.c.b16 %v649, %v648
        %v652 = vpack.c.b16 %v650, %v650
        %v654 = vshrl.u32 %v651, 16
        %v656 = vshll.u32 %v651, 16
        %v658 = vrot.slane %v656, 1
        %v659 = vor.u32 %v654, %v658
        %v661 = vshll.u32 %v652, 16
        %v663 = vrot.slane %v661, 1
        %v664 = vsel %vm229, %v659, %v663
        %v666 = vsel %vm242, %v664, 0
        %v669 = vsel %vm246, %v206, 0
        %671 = vmatprep.subr.bf16.mxu0 0
        %672 = vmatpush1.bf16.msra.mxu0 0
        %673 = vmatprep.subr.bf16.mxu0 0
        %674 = vmatpush1.bf16.msra.mxu0 0
        %675 = vmatprep.subr.bf16.mxu0 0
        %676 = vmatpush1.bf16.msra.mxu0 0
        %677 = vmatprep.subr.bf16.mxu0 0
        %678 = vmatpush1.bf16.msra.mxu0 0
        %679 = vmatprep.subr.bf16.mxu0 0
        %680 = vmatpush1.bf16.msra.mxu0 0
        %681 = vmatprep.subr.bf16.mxu0 0
        %682 = vmatpush1.bf16.msra.mxu0 0
        %683 = vmatprep.subr.bf16.mxu0 0
        %684 = vmatpush1.bf16.msra.mxu0 0
        %685 = vmatprep.subr.bf16.mxu0 0
        %686 = vmatpush1.bf16.msra.mxu0 %v669
        %687 = vmatprep.subr.bf16.mxu0 0
        %688 = vmatpush2.bf16.msra.mxu0 0
        %689 = vmatprep.subr.bf16.mxu0 0
        %690 = vmatpush2.bf16.msra.mxu0 0
        %691 = vmatprep.subr.bf16.mxu0 0
        %692 = vmatpush2.bf16.msra.mxu0 0
        %693 = vmatprep.subr.bf16.mxu0 0
        %694 = vmatpush2.bf16.msra.mxu0 0
        %695 = vmatprep.subr.bf16.mxu0 0
        %696 = vmatpush2.bf16.msra.mxu0 0
        %697 = vmatprep.subr.bf16.mxu0 0
        %698 = vmatpush2.bf16.msra.mxu0 0
        %699 = vmatprep.subr.bf16.mxu0 0
        %700 = vmatpush2.bf16.msra.mxu0 0
        %701 = vmatprep.subr.bf16.mxu0 0
        %702 = vmatpush2.bf16.msra.mxu0 0
        %703 = vmatprep.mubr.bf16.mxu0 0
        %704 = vmatmul.mubr.bf16.gmra.mxu0 %v666
        %v705 = vpop.f32.mrf.mxu0
        %v706 = vadd.f32 0.0, %v705
        %v707 = vpop.f32.mrf.mxu0
        %v708 = vpop.f32.mrf.mxu0
        %v709 = vadd.f32 0.0, %v708
        %v710 = vpop.f32.mrf.mxu0
        %711 = vdwg.mxu0
        %v712 = vadd.f32 %v640, %v706
        %v713 = vadd.f32 %v641, %v709
        %v714 = vld [vmem:[%s585] sm:$0xe]
        %v716 = vunpack.c.l.b16 %v714
        %v717 = vpack.c.b16 %v649, %v716
        %v718 = vrot.slane %v717, 1
        %v719 = vrot.slane %v652, 1
        %v720 = vsel %vm341, %v718, %v719
        %v722 = vsel %vm242, %v720, 0
        %v725 = vsel %vm246, %v207, 0
        %727 = vmatprep.subr.bf16.mxu0 0
        %728 = vmatpush1.bf16.msra.mxu0 0
        %729 = vmatprep.subr.bf16.mxu0 0
        %730 = vmatpush1.bf16.msra.mxu0 0
        %731 = vmatprep.subr.bf16.mxu0 0
        %732 = vmatpush1.bf16.msra.mxu0 0
        %733 = vmatprep.subr.bf16.mxu0 0
        %734 = vmatpush1.bf16.msra.mxu0 0
        %735 = vmatprep.subr.bf16.mxu0 0
        %736 = vmatpush1.bf16.msra.mxu0 0
        %737 = vmatprep.subr.bf16.mxu0 0
        %738 = vmatpush1.bf16.msra.mxu0 0
        %739 = vmatprep.subr.bf16.mxu0 0
        %740 = vmatpush1.bf16.msra.mxu0 0
        %741 = vmatprep.subr.bf16.mxu0 0
        %742 = vmatpush1.bf16.msra.mxu0 %v725
        %743 = vmatprep.subr.bf16.mxu0 0
        %744 = vmatpush2.bf16.msra.mxu0 0
        %745 = vmatprep.subr.bf16.mxu0 0
        %746 = vmatpush2.bf16.msra.mxu0 0
        %747 = vmatprep.subr.bf16.mxu0 0
        %748 = vmatpush2.bf16.msra.mxu0 0
        %749 = vmatprep.subr.bf16.mxu0 0
        %750 = vmatpush2.bf16.msra.mxu0 0
        %751 = vmatprep.subr.bf16.mxu0 0
        %752 = vmatpush2.bf16.msra.mxu0 0
        %753 = vmatprep.subr.bf16.mxu0 0
        %754 = vmatpush2.bf16.msra.mxu0 0
        %755 = vmatprep.subr.bf16.mxu0 0
        %756 = vmatpush2.bf16.msra.mxu0 0
        %757 = vmatprep.subr.bf16.mxu0 0
        %758 = vmatpush2.bf16.msra.mxu0 0
        %759 = vmatprep.mubr.bf16.mxu0 0
        %760 = vmatmul.mubr.bf16.gmra.mxu0 %v722
        %v761 = vpop.f32.mrf.mxu0
        %v762 = vadd.f32 0.0, %v761
        %v763 = vpop.f32.mrf.mxu0
        %v764 = vpop.f32.mrf.mxu0
        %v765 = vadd.f32 0.0, %v764
        %v766 = vpop.f32.mrf.mxu0
        %767 = vdwg.mxu0
        %v768 = vadd.f32 %v712, %v762
        %v769 = vadd.f32 %v713, %v765
        %v771 = vlaneseq
        %v772 = vshrl.u32 %v771, 7
        %v773 = vsub.s32 0, %v772
        %v774 = vrot.slane %v198, %v773
        %v776 = vadd.f32 %v768, %v774
        %v777 = vadd.f32 %v769, %v774
        %v778 = vmax.f32 %v776, 0.0
        %v779 = vmax.f32 %v777, 0.0
        %v780 = vpack.c.bf16 %v779, %v778
        %v782 = vunpack.c.l.b16 %v780
        %v783 = vunpack.c.h.b16 %v780
        %v784 = vpack.c.b16 %v782, %v782
        %v785 = vpack.c.b16 %v783, %v783
        %s788 = smul.u32 %s209, 2
        %s789 = smul.addr %s788, 4
        %s790 = scalar_lea.vmem %s194, %s789
        %vm791 = vcmask 60416
        %792 = vst.msk [vmem:[%s790] sm:$0xf] %vm791, %v784
        %793 = vst.msk [vmem:[%s790 + $0x4] sm:$0xf] %vm791, %v785
      $region37: #{_lambda_.15} parent=31 // loop_footer
        %s213 = sadd.s32 1, %s209
      $region38: #{_lambda_.15} parent=31 // loop_footer_branch
        %208 = sbr.rel target = $region34
      $region39: #{_lambda_.15} parent=31 // loop_exit
        _
      %s794 = smul.u32 8, %s19
      %p795 = scmp.lt.s32.totalorder %s18, 1
      %s796 = scalar_select %p795, %s18, 1
      %p797 = scmp.lt.s32.totalorder %s794, 15
      %s798 = scalar_select %p797, %s794, 15
      %s799 = smul.addr %s798, 2
      %s800 = smul.addr %s796, 32
      %s801 = sadd.s32 %s799, %s800
      %s802 = smul.addr %s801, 4
      %s803 = scalar_lea.vmem %s3, %s802
      // Predicated region
      $region40: #{_lambda_.15} parent=31 // pred_check
        %p804 = pneg %p114
      $region41: #{_lambda_.15} parent=31 // pred_check_branch
        %806 = sbr.rel (%p804) target = $region43
      $region42: #{_lambda_.15} parent=31 // pred_region
        %s807 = smul.u32 8, %s19
      $region43: #{_lambda_.15} parent=31 // pred_fallthru
        _
    $region32: #{_lambda_.15} parent=5 // pred_fallthru
      _
    %p808 = scmp.le.s32.totalorder 2, %s9
    // Predicated region
    $region44: #{_lambda_.15} parent=5 // pred_check
      %p809 = pneg %p808
    $region45: #{_lambda_.15} parent=5 // pred_check_branch
      %811 = sbr.rel (%p809) target = $region47
    $region46: #{_lambda_.15} parent=5 // pred_region
      %s812 = ssub.s32 %s9, 2
      // Predicated region
      $region48: #{_lambda_.15} parent=46 // pred_check
        %p813 = pneg %p120
      $region49: #{_lambda_.15} parent=46 // pred_check_branch
        %815 = sbr.rel (%p813) target = $region51
      $region50: #{_lambda_.15} parent=46 // pred_region
        %s816 = smul.u32 8, %s21
        %p817 = scmp.lt.s32.totalorder %s20, 1
        %s818 = scalar_select %p817, %s20, 1
        %p819 = scmp.lt.s32.totalorder %s816, 15
        %s820 = scalar_select %p819, %s816, 15
        %s821 = smul.addr %s820, 2
        %s822 = smul.addr %s818, 32
        %s823 = sadd.s32 %s821, %s822
        %s824 = smul.addr %s823, 4
        %s825 = scalar_lea.vmem %s3, %s824
      $region51: #{_lambda_.15} parent=46 // pred_fallthru
        _
    $region47: #{_lambda_.15} parent=5 // pred_fallthru
      _
  $region6: #{_lambda_.15} parent=0 // loop_footer
    %s13 = sadd.s32 1, %s9
  $region7: #{_lambda_.15} parent=0 // loop_footer_branch
    %8 = sbr.rel target = $region3
  $region8: #{_lambda_.15} parent=0 // loop_exit
    _

// kernel: custom-call.2
$region0: #{custom-call.2}
  %s0 = inlined_call_operand.vmem [shape: f32[2,16,16], index: 0, kind: input, shape index: {}]
  %s1 = inlined_call_operand.vmem [shape: f32[2,16,16], index: 1, kind: input, shape index: {}]
  %s2 = inlined_call_operand.hbm [shape: c64[2,16,16], index: 2, kind: output, shape index: {}]
  %s3 = scalar_lea.hbm %s2, 512
  $region1: #{custom-call.2} parent=0
    #allocation0 [shape = 's32[1]{0}', space=sflag, size = 0x4, scoped, tag = 'scoped memory for custom-call.2']
    %4 = vsyncpa [#allocation0], 0
    %s5 = sshll.u32 %s0, 4
    %s6 = int_to_ptr.vmem [resolvable:$true] %s5
    %8 = dma.vmem_to_hbm [thread:$0]  %s6, 512, %s2, [#allocation0]
    %9 = dma.done [#allocation0], 512
    %10 = vsyncpa [#allocation0], 1
  $region2: #{custom-call.2} parent=0
    #allocation1 [shape = 's32[1]{0}', space=sflag, size = 0x4, scoped, tag = 'scoped memory for custom-call.2']
    %11 = vsyncpa [#allocation1], 0
    %s12 = sshll.u32 %s1, 4
    %s13 = int_to_ptr.vmem [resolvable:$true] %s12
    %15 = dma.vmem_to_hbm [thread:$0]  %s13, 512, %s3, [#allocation1]
    %16 = dma.done [#allocation1], 512
    %17 = vsyncpa [#allocation1], 1

// kernel: _lambda_.27
$region0: #{_lambda_.27}
  #allocation0 [shape = 'u32[]', space=smem, size = 0x4, offset = 0x4, fixed_abs, tag = 'smem constant byte address 0x4 - core index']
  #allocation1 [shape = 'u32[144,128]{1,0:T(1,128)}', space=vmem, size = 0x12000, scoped, tag = 'internal scratch']
  %s0 = inlined_call_operand.vmem [shape: bf16[2,18,18,16], index: 0, kind: input, shape index: {}]
  %s1 = inlined_call_operand.vmem [shape: bf16[144,2], index: 1, kind: input, shape index: {}]
  %s2 = inlined_call_operand.vmem [shape: f32[1,2], index: 2, kind: input, shape index: {}]
  %s3 = inlined_call_operand.vmem [shape: f32[2,16,16,2], index: 3, kind: output, shape index: {}]
  %s4 = sld [smem:[#allocation0]]
  $region52: #{_lambda_.27} parent=0
    _
  %s6 = ssub.s32 1, %s4
  %s7 = scalar_select 0, %s6, %s4
  loop: start=0, step=1, limit=6
  $region2: #{_lambda_.27} parent=0 // loop_pre_header
    _
  $region3: #{_lambda_.27} parent=0 // loop_header
    %s9 = sphi 0, %s13
    %p10 = scmp.ge.s32.totalorder %s9, 6
    %s16 = sphi 0, %s28
    %s17 = sphi 0, %s24
    %s18 = sphi 0, %s16
    %s19 = sphi 0, %s17
    %s20 = sphi 0, %s18
    %s21 = sphi 0, %s19
    %s31 = sphi 0, %s33
    %s34 = sphi 0, %s31
    %s35 = sphi 0, %s34
    %s51 = sphi 0, %s35
    %s55 = sphi 0, %s55
    %s57 = sphi 0, %s55
    %s58 = sphi 0, %s57
    %s72 = sphi 0, %s58
    %s76 = sphi 0, %s76
    %s78 = sphi 0, %s76
    %s79 = sphi 0, %s78
    %s93 = sphi 0, %s79
    %s101 = sphi 0, %s103
    %s104 = sphi 0, %s101
    %s105 = sphi 0, %s104
    %s121 = sphi 0, %s105
  $region4: #{_lambda_.27} parent=0 // loop_header_branch
    %12 = sbr.rel (%p10) target = $region8
  $region5: #{_lambda_.27} parent=0 // loop_body
    %s14 = ssub.s32 %s9, 1
    %s15 = ssub.s32 %s9, 2
    %s22 = sadd.s32 1, %s17
    %p23 = scmp.ge.s32.totalorder %s22, 2
    %s24 = scalar_select %p23, 0, %s22
    %s25 = sadd.s32 1, %s16
    %s26 = scalar_select %p23, %s25, %s16
    %p27 = scmp.ge.s32.totalorder %s26, 2
    %s28 = scalar_select %p27, 0, %s26
    %s29 = ssub.s32 %s16, %s28
    %p30 = scmp.eq.s32.totalorder %s29, 0
    %s32 = sadd.s32 %s31, 1
    %s33 = scalar_select %p30, %s31, %s32
    %p36 = pneg %p30
    %p37 = scmp.eq.s32.totalorder %s9, 3
    %p38 = por %p36, %p37
    %p39 = scmp.ne.s32.totalorder %s31, %s34
    %p40 = scmp.eq.s32.totalorder %s9, 0
    %p41 = por %p39, %p40
    %p42 = scmp.ne.s32.totalorder %s31, %s34
    %p43 = scmp.eq.s32.totalorder %s14, 3
    %p44 = por %p42, %p43
    %p45 = scmp.ne.s32.totalorder %s34, %s35
    %p46 = scmp.eq.s32.totalorder %s14, 0
    %p47 = por %p45, %p46
    %p48 = scmp.ne.s32.totalorder %s34, %s35
    %p49 = scmp.eq.s32.totalorder %s15, 3
    %p50 = por %p48, %p49
    %p52 = scmp.ne.s32.totalorder %s35, %s51
    %p53 = scmp.eq.s32.totalorder %s15, 0
    %p54 = por %p52, %p53
    %s56 = sadd.s32 %s55, 1
    %p59 = scmp.eq.s32.totalorder %s9, 3
    %p60 = scmp.ne.s32.totalorder %s55, %s57
    %p61 = scmp.eq.s32.totalorder %s9, 0
    %p62 = por %p60, %p61
    %p63 = scmp.ne.s32.totalorder %s55, %s57
    %p64 = scmp.eq.s32.totalorder %s14, 3
    %p65 = por %p63, %p64
    %p66 = scmp.ne.s32.totalorder %s57, %s58
    %p67 = scmp.eq.s32.totalorder %s14, 0
    %p68 = por %p66, %p67
    %p69 = scmp.ne.s32.totalorder %s57, %s58
    %p70 = scmp.eq.s32.totalorder %s15, 3
    %p71 = por %p69, %p70
    %p73 = scmp.ne.s32.totalorder %s58, %s72
    %p74 = scmp.eq.s32.totalorder %s15, 0
    %p75 = por %p73, %p74
    %s77 = sadd.s32 %s76, 1
    %p80 = scmp.eq.s32.totalorder %s9, 3
    %p81 = scmp.ne.s32.totalorder %s76, %s78
    %p82 = scmp.eq.s32.totalorder %s9, 0
    %p83 = por %p81, %p82
    %p84 = scmp.ne.s32.totalorder %s76, %s78
    %p85 = scmp.eq.s32.totalorder %s14, 3
    %p86 = por %p84, %p85
    %p87 = scmp.ne.s32.totalorder %s78, %s79
    %p88 = scmp.eq.s32.totalorder %s14, 0
    %p89 = por %p87, %p88
    %p90 = scmp.ne.s32.totalorder %s78, %s79
    %p91 = scmp.eq.s32.totalorder %s15, 3
    %p92 = por %p90, %p91
    %p94 = scmp.ne.s32.totalorder %s79, %s93
    %p95 = scmp.eq.s32.totalorder %s15, 0
    %p96 = por %p94, %p95
    %s97 = ssub.s32 %s16, %s28
    %s98 = ssub.s32 %s17, %s24
    %s99 = sor.u32 %s97, %s98
    %p100 = scmp.eq.s32.totalorder %s99, 0
    %s102 = sadd.s32 %s101, 1
    %s103 = scalar_select %p100, %s101, %s102
    %p106 = pneg %p100
    %p107 = scmp.eq.s32.totalorder %s9, 3
    %p108 = por %p106, %p107
    %p109 = scmp.ne.s32.totalorder %s101, %s104
    %p110 = scmp.eq.s32.totalorder %s9, 0
    %p111 = por %p109, %p110
    %p112 = scmp.ne.s32.totalorder %s101, %s104
    %p113 = scmp.eq.s32.totalorder %s14, 3
    %p114 = por %p112, %p113
    %p115 = scmp.ne.s32.totalorder %s104, %s105
    %p116 = scmp.eq.s32.totalorder %s14, 0
    %p117 = por %p115, %p116
    %p118 = scmp.ne.s32.totalorder %s104, %s105
    %p119 = scmp.eq.s32.totalorder %s15, 3
    %p120 = por %p118, %p119
    %p122 = scmp.ne.s32.totalorder %s105, %s121
    %p123 = scmp.eq.s32.totalorder %s15, 0
    %p124 = por %p122, %p123
    %p125 = scmp.le.s32.totalorder 1, %s9
    %p126 = scmp.lt.s32.totalorder %s9, 5
    %p127 = pnand %p125, %p126
    %p128 = pneg %p127
    // Predicated region
    $region9: #{_lambda_.27} parent=5 // pred_check
      _
    $region10: #{_lambda_.27} parent=5 // pred_check_branch
      %130 = sbr.rel (%p127) target = $region12
    $region11: #{_lambda_.27} parent=5 // pred_region
      %s131 = ssub.s32 %s9, 1
      // Predicated region
      $region13: #{_lambda_.27} parent=11 // pred_check
        %p132 = pneg %p68
      $region14: #{_lambda_.27} parent=11 // pred_check_branch
        %134 = sbr.rel (%p132) target = $region16
      $region15: #{_lambda_.27} parent=11 // pred_region
        _
      $region16: #{_lambda_.27} parent=11 // pred_fallthru
        _
      // Predicated region
      $region17: #{_lambda_.27} parent=11 // pred_check
        %p135 = pneg %p89
      $region18: #{_lambda_.27} parent=11 // pred_check_branch
        %137 = sbr.rel (%p135) target = $region20
      $region19: #{_lambda_.27} parent=11 // pred_region
        _
      $region20: #{_lambda_.27} parent=11 // pred_fallthru
        _
    $region12: #{_lambda_.27} parent=5 // pred_fallthru
      _
    %p138 = scmp.lt.s32.totalorder %s9, 4
    // Predicated region
    $region21: #{_lambda_.27} parent=5 // pred_check
      %p139 = pneg %p138
    $region22: #{_lambda_.27} parent=5 // pred_check_branch
      %141 = sbr.rel (%p139) target = $region24
    $region23: #{_lambda_.27} parent=5 // pred_region
      // Predicated region
      $region25: #{_lambda_.27} parent=23 // pred_check
        %p142 = pneg %p41
      $region26: #{_lambda_.27} parent=23 // pred_check_branch
        %144 = sbr.rel (%p142) target = $region28
      $region27: #{_lambda_.27} parent=23 // pred_region
        %p145 = scmp.lt.s32.totalorder %s16, 1
        %s146 = scalar_select %p145, %s16, 1
        %s147 = smul.addr %s146, 54
        %s148 = smul.addr %s147, 4
        %s149 = scalar_lea.vmem %s0, %s148
      $region28: #{_lambda_.27} parent=23 // pred_fallthru
        _
    $region24: #{_lambda_.27} parent=5 // pred_fallthru
      _
    %p150 = scmp.le.s32.totalorder 1, %s9
    %p151 = scmp.lt.s32.totalorder %s9, 5
    %p152 = pnand %p150, %p151
    %p153 = pneg %p152
    // Predicated region
    $region29: #{_lambda_.27} parent=5 // pred_check
      _
    $region30: #{_lambda_.27} parent=5 // pred_check_branch
      %155 = sbr.rel (%p152) target = $region32
    $region31: #{_lambda_.27} parent=5 // pred_region
      %s156 = ssub.s32 %s9, 1
      %p157 = scmp.lt.s32.totalorder %s18, 1
      %s158 = scalar_select %p157, %s18, 1
      %s159 = smul.addr %s158, 54
      %s160 = smul.addr %s159, 4
      %s161 = scalar_lea.vmem %s0, %s160
      %p162 = pneg %p47
      %p163 = pneg %p44
      %p164 = pneg %p68
      %p165 = pneg %p65
      %p166 = pneg %p89
      %p167 = pneg %p86
      %p168 = pneg %p117
      %p169 = pneg %p114
      %s170 = smul.u32 8, %s19
      %p171 = scmp.lt.s32.totalorder %s18, 1
      %s172 = scalar_select %p171, %s18, 1
      %p173 = scmp.lt.s32.totalorder %s170, 15
      %s174 = scalar_select %p173, %s170, 15
      %s175 = smul.addr %s174, 2
      %s176 = smul.addr %s172, 32
      %s177 = sadd.s32 %s175, %s176
      %s178 = smul.addr %s177, 8
      %s179 = scalar_lea.vmem %s3, %s178
      %p180 = scmp.lt.s32.totalorder %s18, 1
      %s181 = scalar_select %p180, %s18, 1
      %s182 = smul.addr %s181, 54
      %s183 = smul.addr %s182, 4
      %s184 = scalar_lea.vmem %s0, %s183
      %s185 = smul.u32 8, %s19
      %p186 = scmp.lt.s32.totalorder %s18, 1
      %s187 = scalar_select %p186, %s18, 1
      %p188 = scmp.lt.s32.totalorder %s185, 15
      %s189 = scalar_select %p188, %s185, 15
      %s190 = smul.addr %s189, 2
      %s191 = smul.addr %s187, 32
      %s192 = sadd.s32 %s190, %s191
      %s193 = smul.addr %s192, 8
      %s194 = scalar_lea.vmem %s3, %s193
      %s195 = smul.u32 8, %s19
      %s197 = smul.u32 %s19, 8
      %v198 = vld [vmem:[%s2] sm:$0x1]
      %v199 = vld [vmem:[%s1] sm:$0xf]
      %v200 = vld [vmem:[%s1 + $0x4] sm:$0xf]
      %v201 = vld [vmem:[%s1 + $0x8] sm:$0xf]
      %v202 = vld [vmem:[%s1 + $0xc] sm:$0xf]
      %v203 = vld [vmem:[%s1 + $0x10] sm:$0xf]
      %v204 = vld [vmem:[%s1 + $0x14] sm:$0xf]
      %v205 = vld [vmem:[%s1 + $0x18] sm:$0xf]
      %v206 = vld [vmem:[%s1 + $0x1c] sm:$0xf]
      %v207 = vld [vmem:[%s1 + $0x20] sm:$0xf]
      %v208 = vld [vmem:[%s1 + $0x24] sm:$0xf]
      %v209 = vld [vmem:[%s1 + $0x28] sm:$0xf]
      %v210 = vld [vmem:[%s1 + $0x2c] sm:$0xf]
      %v211 = vld [vmem:[%s1 + $0x30] sm:$0xf]
      %v212 = vld [vmem:[%s1 + $0x34] sm:$0xf]
      %v213 = vld [vmem:[%s1 + $0x38] sm:$0xf]
      %v214 = vld [vmem:[%s1 + $0x3c] sm:$0xf]
      %v215 = vld [vmem:[%s1 + $0x40] sm:$0xf]
      %v216 = vld [vmem:[%s1 + $0x44] sm:$0xf]
      loop: start=0, step=1, limit=8
      $region33: #{_lambda_.27} parent=31 // loop_pre_header
        _
      $region34: #{_lambda_.27} parent=31 // loop_header
        %s218 = sphi 0, %s222
        %p219 = scmp.ge.s32.totalorder %s218, 8
      $region35: #{_lambda_.27} parent=31 // loop_header_branch
        %221 = sbr.rel (%p219) target = $region39
      $region36: #{_lambda_.27} parent=31 // loop_body
        %s223 = sadd.s32 %s197, %s218
        %s224 = smul.u32 %s223, 3
        %s225 = smul.addr %s224, 4
        %s226 = scalar_lea.vmem %s184, %s225
        %v227 = vld [vmem:[%s226] sm:$0xf]
        %v228 = vld [vmem:[%s226 + $0x4] sm:$0xf]
        %v229 = vld [vmem:[%s226 + $0x8] sm:$0x1]
        %v233 = vunpack.c.l.b16 %v227
        %v234 = vunpack.c.l.b16 %v228
        %v235 = vunpack.c.l.b16 %v229
        %v236 = vpack.c.b16 %v234, %v233
        %v237 = vpack.c.b16 %v235, %v235
        %vm238 = vsmask.f32 7424
        %v240 = vshrl.u32 %v236, 16
        %v242 = vshll.u32 %v236, 16
        %v244 = vrot.slane %v242, 1
        %v245 = vor.u32 %v240, %v244
        %v247 = vshll.u32 %v237, 16
        %v249 = vrot.slane %v247, 1
        %v250 = vsel %vm238, %v245, %v249
        %v253 = vunpack.c.l.b16 %v201
        %v254 = vunpack.c.l.b16 %v202
        %v255 = vpack.c.b16 %v254, %v253
        %vm257 = vcmask 130048
        %v259 = vsel %vm257, %v250, 0
        %261 = vmatprep.subr.bf16.mxu0 0
        %262 = vmatpush1.bf16.msra.mxu0 0
        %263 = vmatprep.subr.bf16.mxu0 0
        %264 = vmatpush1.bf16.msra.mxu0 0
        %265 = vmatprep.subr.bf16.mxu0 0
        %266 = vmatpush1.bf16.msra.mxu0 0
        %267 = vmatprep.subr.bf16.mxu0 0
        %268 = vmatpush1.bf16.msra.mxu0 0
        %269 = vmatprep.subr.bf16.mxu0 0
        %270 = vmatpush1.bf16.msra.mxu0 0
        %271 = vmatprep.subr.bf16.mxu0 0
        %272 = vmatpush1.bf16.msra.mxu0 0
        %273 = vmatprep.subr.bf16.mxu0 0
        %274 = vmatpush1.bf16.msra.mxu0 0
        %275 = vmatprep.subr.bf16.mxu0 0
        %276 = vmatpush1.bf16.msra.mxu0 %v255
        %277 = vmatprep.subr.bf16.mxu0 0
        %278 = vmatpush2.bf16.msra.mxu0 0
        %279 = vmatprep.subr.bf16.mxu0 0
        %280 = vmatpush2.bf16.msra.mxu0 0
        %281 = vmatprep.subr.bf16.mxu0 0
        %282 = vmatpush2.bf16.msra.mxu0 0
        %283 = vmatprep.subr.bf16.mxu0 0
        %284 = vmatpush2.bf16.msra.mxu0 0
        %285 = vmatprep.subr.bf16.mxu0 0
        %286 = vmatpush2.bf16.msra.mxu0 0
        %287 = vmatprep.subr.bf16.mxu0 0
        %288 = vmatpush2.bf16.msra.mxu0 0
        %289 = vmatprep.subr.bf16.mxu0 0
        %290 = vmatpush2.bf16.msra.mxu0 0
        %291 = vmatprep.subr.bf16.mxu0 0
        %292 = vmatpush2.bf16.msra.mxu0 0
        %293 = vmatprep.mubr.bf16.mxu0 0
        %294 = vmatmul.mubr.bf16.gmra.mxu0 %v259
        %v295 = vpop.f32.mrf.mxu0
        %v296 = vadd.f32 0.0, %v295
        %v297 = vpop.f32.mrf.mxu0
        %v298 = vpop.f32.mrf.mxu0
        %v299 = vadd.f32 0.0, %v298
        %v300 = vpop.f32.mrf.mxu0
        %301 = vdwg.mxu0
        %v304 = vunpack.c.l.b16 %v199
        %v305 = vunpack.c.l.b16 %v200
        %v306 = vpack.c.b16 %v305, %v304
        %v308 = vsel %vm257, %v236, 0
        %310 = vmatprep.subr.bf16.mxu0 0
        %311 = vmatpush1.bf16.msra.mxu0 0
        %312 = vmatprep.subr.bf16.mxu0 0
        %313 = vmatpush1.bf16.msra.mxu0 0
        %314 = vmatprep.subr.bf16.mxu0 0
        %315 = vmatpush1.bf16.msra.mxu0 0
        %316 = vmatprep.subr.bf16.mxu0 0
        %317 = vmatpush1.bf16.msra.mxu0 0
        %318 = vmatprep.subr.bf16.mxu0 0
        %319 = vmatpush1.bf16.msra.mxu0 0
        %320 = vmatprep.subr.bf16.mxu0 0
        %321 = vmatpush1.bf16.msra.mxu0 0
        %322 = vmatprep.subr.bf16.mxu0 0
        %323 = vmatpush1.bf16.msra.mxu0 0
        %324 = vmatprep.subr.bf16.mxu0 0
        %325 = vmatpush1.bf16.msra.mxu0 %v306
        %326 = vmatprep.subr.bf16.mxu0 0
        %327 = vmatpush2.bf16.msra.mxu0 0
        %328 = vmatprep.subr.bf16.mxu0 0
        %329 = vmatpush2.bf16.msra.mxu0 0
        %330 = vmatprep.subr.bf16.mxu0 0
        %331 = vmatpush2.bf16.msra.mxu0 0
        %332 = vmatprep.subr.bf16.mxu0 0
        %333 = vmatpush2.bf16.msra.mxu0 0
        %334 = vmatprep.subr.bf16.mxu0 0
        %335 = vmatpush2.bf16.msra.mxu0 0
        %336 = vmatprep.subr.bf16.mxu0 0
        %337 = vmatpush2.bf16.msra.mxu0 0
        %338 = vmatprep.subr.bf16.mxu0 0
        %339 = vmatpush2.bf16.msra.mxu0 0
        %340 = vmatprep.subr.bf16.mxu0 0
        %341 = vmatpush2.bf16.msra.mxu0 0
        %342 = vmatprep.mubr.bf16.mxu0 0
        %343 = vmatmul.mubr.bf16.gmra.mxu0 %v308
        %v344 = vpop.f32.mrf.mxu0
        %v345 = vadd.f32 %v296, %v344
        %v346 = vpop.f32.mrf.mxu0
        %v347 = vpop.f32.mrf.mxu0
        %v348 = vadd.f32 %v299, %v347
        %v349 = vpop.f32.mrf.mxu0
        %350 = vdwg.mxu0
        %v351 = vld [vmem:[%s226] sm:$0xe]
        %v353 = vunpack.c.l.b16 %v351
        %v354 = vpack.c.b16 %v234, %v353
        %vm355 = vcmask 1046528
        %v356 = vrot.slane %v354, 1
        %v357 = vrot.slane %v237, 1
        %v358 = vsel %vm355, %v356, %v357
        %v361 = vunpack.c.l.b16 %v203
        %v362 = vunpack.c.l.b16 %v204
        %v363 = vpack.c.b16 %v362, %v361
        %v366 = vsel %vm257, %v358, 0
        %368 = vmatprep.subr.bf16.mxu0 0
        %369 = vmatpush1.bf16.msra.mxu0 0
        %370 = vmatprep.subr.bf16.mxu0 0
        %371 = vmatpush1.bf16.msra.mxu0 0
        %372 = vmatprep.subr.bf16.mxu0 0
        %373 = vmatpush1.bf16.msra.mxu0 0
        %374 = vmatprep.subr.bf16.mxu0 0
        %375 = vmatpush1.bf16.msra.mxu0 0
        %376 = vmatprep.subr.bf16.mxu0 0
        %377 = vmatpush1.bf16.msra.mxu0 0
        %378 = vmatprep.subr.bf16.mxu0 0
        %379 = vmatpush1.bf16.msra.mxu0 0
        %380 = vmatprep.subr.bf16.mxu0 0
        %381 = vmatpush1.bf16.msra.mxu0 0
        %382 = vmatprep.subr.bf16.mxu0 0
        %383 = vmatpush1.bf16.msra.mxu0 %v363
        %384 = vmatprep.subr.bf16.mxu0 0
        %385 = vmatpush2.bf16.msra.mxu0 0
        %386 = vmatprep.subr.bf16.mxu0 0
        %387 = vmatpush2.bf16.msra.mxu0 0
        %388 = vmatprep.subr.bf16.mxu0 0
        %389 = vmatpush2.bf16.msra.mxu0 0
        %390 = vmatprep.subr.bf16.mxu0 0
        %391 = vmatpush2.bf16.msra.mxu0 0
        %392 = vmatprep.subr.bf16.mxu0 0
        %393 = vmatpush2.bf16.msra.mxu0 0
        %394 = vmatprep.subr.bf16.mxu0 0
        %395 = vmatpush2.bf16.msra.mxu0 0
        %396 = vmatprep.subr.bf16.mxu0 0
        %397 = vmatpush2.bf16.msra.mxu0 0
        %398 = vmatprep.subr.bf16.mxu0 0
        %399 = vmatpush2.bf16.msra.mxu0 0
        %400 = vmatprep.mubr.bf16.mxu0 0
        %401 = vmatmul.mubr.bf16.gmra.mxu0 %v366
        %v402 = vpop.f32.mrf.mxu0
        %v403 = vadd.f32 0.0, %v402
        %v404 = vpop.f32.mrf.mxu0
        %v405 = vpop.f32.mrf.mxu0
        %v406 = vadd.f32 0.0, %v405
        %v407 = vpop.f32.mrf.mxu0
        %408 = vdwg.mxu0
        %v409 = vadd.f32 %v345, %v403
        %v410 = vadd.f32 %v348, %v406
        %s411 = sadd.s32 %s223, 1
        %s412 = smul.u32 %s411, 3
        %s413 = smul.addr %s412, 4
        %s414 = scalar_lea.vmem %s184, %s413
        %v415 = vld [vmem:[%s414] sm:$0xf]
        %v416 = vld [vmem:[%s414 + $0x4] sm:$0xf]
        %v419 = vunpack.c.l.b16 %v415
        %v420 = vunpack.c.l.b16 %v416
        %v421 = vpack.c.b16 %v420, %v419
        %v424 = vunpack.c.l.b16 %v205
        %v425 = vunpack.c.l.b16 %v206
        %v426 = vpack.c.b16 %v425, %v424
        %v429 = vsel %vm257, %v421, 0
        %431 = vmatprep.subr.bf16.mxu0 0
        %432 = vmatpush1.bf16.msra.mxu0 0
        %433 = vmatprep.subr.bf16.mxu0 0
        %434 = vmatpush1.bf16.msra.mxu0 0
        %435 = vmatprep.subr.bf16.mxu0 0
        %436 = vmatpush1.bf16.msra.mxu0 0
        %437 = vmatprep.subr.bf16.mxu0 0
        %438 = vmatpush1.bf16.msra.mxu0 0
        %439 = vmatprep.subr.bf16.mxu0 0
        %440 = vmatpush1.bf16.msra.mxu0 0
        %441 = vmatprep.subr.bf16.mxu0 0
        %442 = vmatpush1.bf16.msra.mxu0 0
        %443 = vmatprep.subr.bf16.mxu0 0
        %444 = vmatpush1.bf16.msra.mxu0 0
        %445 = vmatprep.subr.bf16.mxu0 0
        %446 = vmatpush1.bf16.msra.mxu0 %v426
        %447 = vmatprep.subr.bf16.mxu0 0
        %448 = vmatpush2.bf16.msra.mxu0 0
        %449 = vmatprep.subr.bf16.mxu0 0
        %450 = vmatpush2.bf16.msra.mxu0 0
        %451 = vmatprep.subr.bf16.mxu0 0
        %452 = vmatpush2.bf16.msra.mxu0 0
        %453 = vmatprep.subr.bf16.mxu0 0
        %454 = vmatpush2.bf16.msra.mxu0 0
        %455 = vmatprep.subr.bf16.mxu0 0
        %456 = vmatpush2.bf16.msra.mxu0 0
        %457 = vmatprep.subr.bf16.mxu0 0
        %458 = vmatpush2.bf16.msra.mxu0 0
        %459 = vmatprep.subr.bf16.mxu0 0
        %460 = vmatpush2.bf16.msra.mxu0 0
        %461 = vmatprep.subr.bf16.mxu0 0
        %462 = vmatpush2.bf16.msra.mxu0 0
        %463 = vmatprep.mubr.bf16.mxu0 0
        %464 = vmatmul.mubr.bf16.gmra.mxu0 %v429
        %v465 = vpop.f32.mrf.mxu0
        %v466 = vadd.f32 0.0, %v465
        %v467 = vpop.f32.mrf.mxu0
        %v468 = vpop.f32.mrf.mxu0
        %v469 = vadd.f32 0.0, %v468
        %v470 = vpop.f32.mrf.mxu0
        %471 = vdwg.mxu0
        %v472 = vadd.f32 %v409, %v466
        %v473 = vadd.f32 %v410, %v469
        %v474 = vld [vmem:[%s414] sm:$0xf]
        %v475 = vld [vmem:[%s414 + $0x4] sm:$0xf]
        %v476 = vld [vmem:[%s414 + $0x8] sm:$0x1]
        %v480 = vunpack.c.l.b16 %v474
        %v481 = vunpack.c.l.b16 %v475
        %v482 = vunpack.c.l.b16 %v476
        %v483 = vpack.c.b16 %v481, %v480
        %v484 = vpack.c.b16 %v482, %v482
        %v486 = vshrl.u32 %v483, 16
        %v488 = vshll.u32 %v483, 16
        %v490 = vrot.slane %v488, 1
        %v491 = vor.u32 %v486, %v490
        %v493 = vshll.u32 %v484, 16
        %v495 = vrot.slane %v493, 1
        %v496 = vsel %vm238, %v491, %v495
        %v499 = vunpack.c.l.b16 %v207
        %v500 = vunpack.c.l.b16 %v208
        %v501 = vpack.c.b16 %v500, %v499
        %v504 = vsel %vm257, %v496, 0
        %506 = vmatprep.subr.bf16.mxu0 0
        %507 = vmatpush1.bf16.msra.mxu0 0
        %508 = vmatprep.subr.bf16.mxu0 0
        %509 = vmatpush1.bf16.msra.mxu0 0
        %510 = vmatprep.subr.bf16.mxu0 0
        %511 = vmatpush1.bf16.msra.mxu0 0
        %512 = vmatprep.subr.bf16.mxu0 0
        %513 = vmatpush1.bf16.msra.mxu0 0
        %514 = vmatprep.subr.bf16.mxu0 0
        %515 = vmatpush1.bf16.msra.mxu0 0
        %516 = vmatprep.subr.bf16.mxu0 0
        %517 = vmatpush1.bf16.msra.mxu0 0
        %518 = vmatprep.subr.bf16.mxu0 0
        %519 = vmatpush1.bf16.msra.mxu0 0
        %520 = vmatprep.subr.bf16.mxu0 0
        %521 = vmatpush1.bf16.msra.mxu0 %v501
        %522 = vmatprep.subr.bf16.mxu0 0
        %523 = vmatpush2.bf16.msra.mxu0 0
        %524 = vmatprep.subr.bf16.mxu0 0
        %525 = vmatpush2.bf16.msra.mxu0 0
        %526 = vmatprep.subr.bf16.mxu0 0
        %527 = vmatpush2.bf16.msra.mxu0 0
        %528 = vmatprep.subr.bf16.mxu0 0
        %529 = vmatpush2.bf16.msra.mxu0 0
        %530 = vmatprep.subr.bf16.mxu0 0
        %531 = vmatpush2.bf16.msra.mxu0 0
        %532 = vmatprep.subr.bf16.mxu0 0
        %533 = vmatpush2.bf16.msra.mxu0 0
        %534 = vmatprep.subr.bf16.mxu0 0
        %535 = vmatpush2.bf16.msra.mxu0 0
        %536 = vmatprep.subr.bf16.mxu0 0
        %537 = vmatpush2.bf16.msra.mxu0 0
        %538 = vmatprep.mubr.bf16.mxu0 0
        %539 = vmatmul.mubr.bf16.gmra.mxu0 %v504
        %v540 = vpop.f32.mrf.mxu0
        %v541 = vadd.f32 0.0, %v540
        %v542 = vpop.f32.mrf.mxu0
        %v543 = vpop.f32.mrf.mxu0
        %v544 = vadd.f32 0.0, %v543
        %v545 = vpop.f32.mrf.mxu0
        %546 = vdwg.mxu0
        %v547 = vadd.f32 %v472, %v541
        %v548 = vadd.f32 %v473, %v544
        %v549 = vld [vmem:[%s414] sm:$0xe]
        %v551 = vunpack.c.l.b16 %v549
        %v552 = vpack.c.b16 %v481, %v551
        %v553 = vrot.slane %v552, 1
        %v554 = vrot.slane %v484, 1
        %v555 = vsel %vm355, %v553, %v554
        %v558 = vunpack.c.l.b16 %v209
        %v559 = vunpack.c.l.b16 %v210
        %v560 = vpack.c.b16 %v559, %v558
        %v563 = vsel %vm257, %v555, 0
        %565 = vmatprep.subr.bf16.mxu0 0
        %566 = vmatpush1.bf16.msra.mxu0 0
        %567 = vmatprep.subr.bf16.mxu0 0
        %568 = vmatpush1.bf16.msra.mxu0 0
        %569 = vmatprep.subr.bf16.mxu0 0
        %570 = vmatpush1.bf16.msra.mxu0 0
        %571 = vmatprep.subr.bf16.mxu0 0
        %572 = vmatpush1.bf16.msra.mxu0 0
        %573 = vmatprep.subr.bf16.mxu0 0
        %574 = vmatpush1.bf16.msra.mxu0 0
        %575 = vmatprep.subr.bf16.mxu0 0
        %576 = vmatpush1.bf16.msra.mxu0 0
        %577 = vmatprep.subr.bf16.mxu0 0
        %578 = vmatpush1.bf16.msra.mxu0 0
        %579 = vmatprep.subr.bf16.mxu0 0
        %580 = vmatpush1.bf16.msra.mxu0 %v560
        %581 = vmatprep.subr.bf16.mxu0 0
        %582 = vmatpush2.bf16.msra.mxu0 0
        %583 = vmatprep.subr.bf16.mxu0 0
        %584 = vmatpush2.bf16.msra.mxu0 0
        %585 = vmatprep.subr.bf16.mxu0 0
        %586 = vmatpush2.bf16.msra.mxu0 0
        %587 = vmatprep.subr.bf16.mxu0 0
        %588 = vmatpush2.bf16.msra.mxu0 0
        %589 = vmatprep.subr.bf16.mxu0 0
        %590 = vmatpush2.bf16.msra.mxu0 0
        %591 = vmatprep.subr.bf16.mxu0 0
        %592 = vmatpush2.bf16.msra.mxu0 0
        %593 = vmatprep.subr.bf16.mxu0 0
        %594 = vmatpush2.bf16.msra.mxu0 0
        %595 = vmatprep.subr.bf16.mxu0 0
        %596 = vmatpush2.bf16.msra.mxu0 0
        %597 = vmatprep.mubr.bf16.mxu0 0
        %598 = vmatmul.mubr.bf16.gmra.mxu0 %v563
        %v599 = vpop.f32.mrf.mxu0
        %v600 = vadd.f32 0.0, %v599
        %v601 = vpop.f32.mrf.mxu0
        %v602 = vpop.f32.mrf.mxu0
        %v603 = vadd.f32 0.0, %v602
        %v604 = vpop.f32.mrf.mxu0
        %605 = vdwg.mxu0
        %v606 = vadd.f32 %v547, %v600
        %v607 = vadd.f32 %v548, %v603
        %s608 = sadd.s32 %s223, 2
        %s609 = smul.u32 %s608, 3
        %s610 = smul.addr %s609, 4
        %s611 = scalar_lea.vmem %s184, %s610
        %v612 = vld [vmem:[%s611] sm:$0xf]
        %v613 = vld [vmem:[%s611 + $0x4] sm:$0xf]
        %v616 = vunpack.c.l.b16 %v612
        %v617 = vunpack.c.l.b16 %v613
        %v618 = vpack.c.b16 %v617, %v616
        %v621 = vunpack.c.l.b16 %v211
        %v622 = vunpack.c.l.b16 %v212
        %v623 = vpack.c.b16 %v622, %v621
        %v626 = vsel %vm257, %v618, 0
        %628 = vmatprep.subr.bf16.mxu0 0
        %629 = vmatpush1.bf16.msra.mxu0 0
        %630 = vmatprep.subr.bf16.mxu0 0
        %631 = vmatpush1.bf16.msra.mxu0 0
        %632 = vmatprep.subr.bf16.mxu0 0
        %633 = vmatpush1.bf16.msra.mxu0 0
        %634 = vmatprep.subr.bf16.mxu0 0
        %635 = vmatpush1.bf16.msra.mxu0 0
        %636 = vmatprep.subr.bf16.mxu0 0
        %637 = vmatpush1.bf16.msra.mxu0 0
        %638 = vmatprep.subr.bf16.mxu0 0
        %639 = vmatpush1.bf16.msra.mxu0 0
        %640 = vmatprep.subr.bf16.mxu0 0
        %641 = vmatpush1.bf16.msra.mxu0 0
        %642 = vmatprep.subr.bf16.mxu0 0
        %643 = vmatpush1.bf16.msra.mxu0 %v623
        %644 = vmatprep.subr.bf16.mxu0 0
        %645 = vmatpush2.bf16.msra.mxu0 0
        %646 = vmatprep.subr.bf16.mxu0 0
        %647 = vmatpush2.bf16.msra.mxu0 0
        %648 = vmatprep.subr.bf16.mxu0 0
        %649 = vmatpush2.bf16.msra.mxu0 0
        %650 = vmatprep.subr.bf16.mxu0 0
        %651 = vmatpush2.bf16.msra.mxu0 0
        %652 = vmatprep.subr.bf16.mxu0 0
        %653 = vmatpush2.bf16.msra.mxu0 0
        %654 = vmatprep.subr.bf16.mxu0 0
        %655 = vmatpush2.bf16.msra.mxu0 0
        %656 = vmatprep.subr.bf16.mxu0 0
        %657 = vmatpush2.bf16.msra.mxu0 0
        %658 = vmatprep.subr.bf16.mxu0 0
        %659 = vmatpush2.bf16.msra.mxu0 0
        %660 = vmatprep.mubr.bf16.mxu0 0
        %661 = vmatmul.mubr.bf16.gmra.mxu0 %v626
        %v662 = vpop.f32.mrf.mxu0
        %v663 = vadd.f32 0.0, %v662
        %v664 = vpop.f32.mrf.mxu0
        %v665 = vpop.f32.mrf.mxu0
        %v666 = vadd.f32 0.0, %v665
        %v667 = vpop.f32.mrf.mxu0
        %668 = vdwg.mxu0
        %v669 = vadd.f32 %v606, %v663
        %v670 = vadd.f32 %v607, %v666
        %v671 = vld [vmem:[%s611] sm:$0xf]
        %v672 = vld [vmem:[%s611 + $0x4] sm:$0xf]
        %v673 = vld [vmem:[%s611 + $0x8] sm:$0x1]
        %v677 = vunpack.c.l.b16 %v671
        %v678 = vunpack.c.l.b16 %v672
        %v679 = vunpack.c.l.b16 %v673
        %v680 = vpack.c.b16 %v678, %v677
        %v681 = vpack.c.b16 %v679, %v679
        %v683 = vshrl.u32 %v680, 16
        %v685 = vshll.u32 %v680, 16
        %v687 = vrot.slane %v685, 1
        %v688 = vor.u32 %v683, %v687
        %v690 = vshll.u32 %v681, 16
        %v692 = vrot.slane %v690, 1
        %v693 = vsel %vm238, %v688, %v692
        %v696 = vunpack.c.l.b16 %v213
        %v697 = vunpack.c.l.b16 %v214
        %v698 = vpack.c.b16 %v697, %v696
        %v701 = vsel %vm257, %v693, 0
        %703 = vmatprep.subr.bf16.mxu0 0
        %704 = vmatpush1.bf16.msra.mxu0 0
        %705 = vmatprep.subr.bf16.mxu0 0
        %706 = vmatpush1.bf16.msra.mxu0 0
        %707 = vmatprep.subr.bf16.mxu0 0
        %708 = vmatpush1.bf16.msra.mxu0 0
        %709 = vmatprep.subr.bf16.mxu0 0
        %710 = vmatpush1.bf16.msra.mxu0 0
        %711 = vmatprep.subr.bf16.mxu0 0
        %712 = vmatpush1.bf16.msra.mxu0 0
        %713 = vmatprep.subr.bf16.mxu0 0
        %714 = vmatpush1.bf16.msra.mxu0 0
        %715 = vmatprep.subr.bf16.mxu0 0
        %716 = vmatpush1.bf16.msra.mxu0 0
        %717 = vmatprep.subr.bf16.mxu0 0
        %718 = vmatpush1.bf16.msra.mxu0 %v698
        %719 = vmatprep.subr.bf16.mxu0 0
        %720 = vmatpush2.bf16.msra.mxu0 0
        %721 = vmatprep.subr.bf16.mxu0 0
        %722 = vmatpush2.bf16.msra.mxu0 0
        %723 = vmatprep.subr.bf16.mxu0 0
        %724 = vmatpush2.bf16.msra.mxu0 0
        %725 = vmatprep.subr.bf16.mxu0 0
        %726 = vmatpush2.bf16.msra.mxu0 0
        %727 = vmatprep.subr.bf16.mxu0 0
        %728 = vmatpush2.bf16.msra.mxu0 0
        %729 = vmatprep.subr.bf16.mxu0 0
        %730 = vmatpush2.bf16.msra.mxu0 0
        %731 = vmatprep.subr.bf16.mxu0 0
        %732 = vmatpush2.bf16.msra.mxu0 0
        %733 = vmatprep.subr.bf16.mxu0 0
        %734 = vmatpush2.bf16.msra.mxu0 0
        %735 = vmatprep.mubr.bf16.mxu0 0
        %736 = vmatmul.mubr.bf16.gmra.mxu0 %v701
        %v737 = vpop.f32.mrf.mxu0
        %v738 = vadd.f32 0.0, %v737
        %v739 = vpop.f32.mrf.mxu0
        %v740 = vpop.f32.mrf.mxu0
        %v741 = vadd.f32 0.0, %v740
        %v742 = vpop.f32.mrf.mxu0
        %743 = vdwg.mxu0
        %v744 = vadd.f32 %v669, %v738
        %v745 = vadd.f32 %v670, %v741
        %v746 = vld [vmem:[%s611] sm:$0xe]
        %v748 = vunpack.c.l.b16 %v746
        %v749 = vpack.c.b16 %v678, %v748
        %v750 = vrot.slane %v749, 1
        %v751 = vrot.slane %v681, 1
        %v752 = vsel %vm355, %v750, %v751
        %v755 = vunpack.c.l.b16 %v215
        %v756 = vunpack.c.l.b16 %v216
        %v757 = vpack.c.b16 %v756, %v755
        %v760 = vsel %vm257, %v752, 0
        %762 = vmatprep.subr.bf16.mxu0 0
        %763 = vmatpush1.bf16.msra.mxu0 0
        %764 = vmatprep.subr.bf16.mxu0 0
        %765 = vmatpush1.bf16.msra.mxu0 0
        %766 = vmatprep.subr.bf16.mxu0 0
        %767 = vmatpush1.bf16.msra.mxu0 0
        %768 = vmatprep.subr.bf16.mxu0 0
        %769 = vmatpush1.bf16.msra.mxu0 0
        %770 = vmatprep.subr.bf16.mxu0 0
        %771 = vmatpush1.bf16.msra.mxu0 0
        %772 = vmatprep.subr.bf16.mxu0 0
        %773 = vmatpush1.bf16.msra.mxu0 0
        %774 = vmatprep.subr.bf16.mxu0 0
        %775 = vmatpush1.bf16.msra.mxu0 0
        %776 = vmatprep.subr.bf16.mxu0 0
        %777 = vmatpush1.bf16.msra.mxu0 %v757
        %778 = vmatprep.subr.bf16.mxu0 0
        %779 = vmatpush2.bf16.msra.mxu0 0
        %780 = vmatprep.subr.bf16.mxu0 0
        %781 = vmatpush2.bf16.msra.mxu0 0
        %782 = vmatprep.subr.bf16.mxu0 0
        %783 = vmatpush2.bf16.msra.mxu0 0
        %784 = vmatprep.subr.bf16.mxu0 0
        %785 = vmatpush2.bf16.msra.mxu0 0
        %786 = vmatprep.subr.bf16.mxu0 0
        %787 = vmatpush2.bf16.msra.mxu0 0
        %788 = vmatprep.subr.bf16.mxu0 0
        %789 = vmatpush2.bf16.msra.mxu0 0
        %790 = vmatprep.subr.bf16.mxu0 0
        %791 = vmatpush2.bf16.msra.mxu0 0
        %792 = vmatprep.subr.bf16.mxu0 0
        %793 = vmatpush2.bf16.msra.mxu0 0
        %794 = vmatprep.mubr.bf16.mxu0 0
        %795 = vmatmul.mubr.bf16.gmra.mxu0 %v760
        %v796 = vpop.f32.mrf.mxu0
        %v797 = vadd.f32 0.0, %v796
        %v798 = vpop.f32.mrf.mxu0
        %v799 = vpop.f32.mrf.mxu0
        %v800 = vadd.f32 0.0, %v799
        %v801 = vpop.f32.mrf.mxu0
        %802 = vdwg.mxu0
        %v803 = vadd.f32 %v744, %v797
        %v804 = vadd.f32 %v745, %v800
        %v806 = vlaneseq
        %v807 = vshrl.u32 %v806, 7
        %v808 = vsub.s32 0, %v807
        %v809 = vrot.slane %v198, %v808
        %v811 = vadd.f32 %v803, %v809
        %v812 = vadd.f32 %v804, %v809
        %s813 = smul.u32 %s218, 16
        %s814 = scalar_lea.vmem %s194, %s813
        %vm815 = vcmask 15360
        %816 = vst.msk [vmem:[%s814] sm:$0xff] %vm815, %v811
        %817 = vst.msk [vmem:[%s814 + $0x8] sm:$0xff] %vm815, %v812
      $region37: #{_lambda_.27} parent=31 // loop_footer
        %s222 = sadd.s32 1, %s218
      $region38: #{_lambda_.27} parent=31 // loop_footer_branch
        %217 = sbr.rel target = $region34
      $region39: #{_lambda_.27} parent=31 // loop_exit
        _
      %s818 = smul.u32 8, %s19
      %p819 = scmp.lt.s32.totalorder %s18, 1
      %s820 = scalar_select %p819, %s18, 1
      %p821 = scmp.lt.s32.totalorder %s818, 15
      %s822 = scalar_select %p821, %s818, 15
      %s823 = smul.addr %s822, 2
      %s824 = smul.addr %s820, 32
      %s825 = sadd.s32 %s823, %s824
      %s826 = smul.addr %s825, 8
      %s827 = scalar_lea.vmem %s3, %s826
      // Predicated region
      $region40: #{_lambda_.27} parent=31 // pred_check
        %p828 = pneg %p114
      $region41: #{_lambda_.27} parent=31 // pred_check_branch
        %830 = sbr.rel (%p828) target = $region43
      $region42: #{_lambda_.27} parent=31 // pred_region
        %s831 = smul.u32 8, %s19
      $region43: #{_lambda_.27} parent=31 // pred_fallthru
        _
    $region32: #{_lambda_.27} parent=5 // pred_fallthru
      _
    %p832 = scmp.le.s32.totalorder 2, %s9
    // Predicated region
    $region44: #{_lambda_.27} parent=5 // pred_check
      %p833 = pneg %p832
    $region45: #{_lambda_.27} parent=5 // pred_check_branch
      %835 = sbr.rel (%p833) target = $region47
    $region46: #{_lambda_.27} parent=5 // pred_region
      %s836 = ssub.s32 %s9, 2
      // Predicated region
      $region48: #{_lambda_.27} parent=46 // pred_check
        %p837 = pneg %p120
      $region49: #{_lambda_.27} parent=46 // pred_check_branch
        %839 = sbr.rel (%p837) target = $region51
      $region50: #{_lambda_.27} parent=46 // pred_region
        %s840 = smul.u32 8, %s21
        %p841 = scmp.lt.s32.totalorder %s20, 1
        %s842 = scalar_select %p841, %s20, 1
        %p843 = scmp.lt.s32.totalorder %s840, 15
        %s844 = scalar_select %p843, %s840, 15
        %s845 = smul.addr %s844, 2
        %s846 = smul.addr %s842, 32
        %s847 = sadd.s32 %s845, %s846
        %s848 = smul.addr %s847, 8
        %s849 = scalar_lea.vmem %s3, %s848
      $region51: #{_lambda_.27} parent=46 // pred_fallthru
        _
    $region47: #{_lambda_.27} parent=5 // pred_fallthru
      _
  $region6: #{_lambda_.27} parent=0 // loop_footer
    %s13 = sadd.s32 1, %s9
  $region7: #{_lambda_.27} parent=0 // loop_footer_branch
    %8 = sbr.rel target = $region3
  $region8: #{_lambda_.27} parent=0 // loop_exit
    _

</llo_original>
